<compile_context>
chip_gen: v6e
topology: v6e:2x2x1
jax: 0.10.0
libtpu: 0.0.40
codegen_flags: <defaults>
</compile_context>

<pallas_src>
import numpy as np
import jax
import jax.numpy as jnp
from jax import lax
from jax.experimental import pallas as pl
from jax.experimental.pallas import tpu as pltpu

H = 128                                  # LSTM hidden size (nn.LSTM(..., 128, ...))
EMO_MIN = -2.0
EMO_MAX = 2.0
EMO_SCALE = 0.5 * (EMO_MAX - EMO_MIN)    # folded into the projection weights
EMO_SHIFT = EMO_SCALE + EMO_MIN          # added in the kernel epilogue


def emo_lstm_kernel(x_ref, wih_ref, b_ref, whhf_ref, whhb_ref, whrf_ref, whrb_ref,
                    out_ref, gxf_ref, gxb_ref, hf_all, hb_all):
    # x_ref:    (T, B, C)    time-major input (B padded to a multiple of 8)
    # wih_ref:  (C, 8H)      [W_ih_fwd^T | W_ih_bwd^T]
    # b_ref:    (1, 8H)      summed biases (ih + hh) for both directions
    # whhf_ref: (H, 4H)      fused recurrent weight  W_hr_f^T @ W_hh_f^T  (K = 128)
    # whhb_ref: (H, 4H)      fused recurrent weight  (backward direction)
    # whrf_ref: (H, Ppad)    W_hr_f^T * EMO_SCALE, zero-padded to 128 lanes
    # whrb_ref: (H, Ppad)    W_hr_b^T * EMO_SCALE, zero-padded to 128 lanes
    # out_ref:  (T, B, Ppad) lane-dense output slab (emo affine already applied)
    # gxf/gxb:  (T, B, 4H)   precomputed per-direction input projections
    # hf_all/hb_all: (T, B, H) per-direction pre-projection hidden states
    T, B, C = x_ref.shape
    H4 = 4 * H

    # ---- 1) input projection hoisted out of the recurrence ------------------
    x_flat = x_ref[...].reshape(T * B, C)
    gx = jnp.dot(x_flat, wih_ref[...],
                 preferred_element_type=jnp.float32) + b_ref[...]
    gx = gx.reshape(T, B, 2 * H4)
    gxf_ref[...] = gx[:, :, :H4]
    gxb_ref[...] = gx[:, :, H4:]

    # ---- 2) recurrence: fwd and bwd chains interleaved in one loop ----------
    def cell(gates_x, h_tilde, c, whh_fused):
        # PyTorch gate order i, f, g, o; W_hr projection folded into whh_fused.
        gates = gates_x + jnp.dot(h_tilde, whh_fused,
                                  preferred_element_type=jnp.float32)
        i = jax.nn.sigmoid(gates[:, 0:H])
        f = jax.nn.sigmoid(gates[:, H:2 * H])
        g = jnp.tanh(gates[:, 2 * H:3 * H])
        o = jax.nn.sigmoid(gates[:, 3 * H:4 * H])
        c_new = f * c + i * g
        h_tilde_new = o * jnp.tanh(c_new)     # (B, H); W_hr projection deferred
        return h_tilde_new, c_new

    def body(t, carry):
        hf, cf, hb, cb = carry
        tt = T - 1 - t
        # Recurrent weights read from VMEM inside the loop (no vreg hoisting).
        hf_new, cf_new = cell(gxf_ref[t], hf, cf, whhf_ref[...])
        hb_new, cb_new = cell(gxb_ref[tt], hb, cb, whhb_ref[...])
        hf_all[t] = hf_new          # lane-dense (B, 128) stores
        hb_all[tt] = hb_new
        return (hf_new, cf_new, hb_new, cb_new)

    z = jnp.zeros((B, H), jnp.float32)
    lax.fori_loop(0, T, body, (z, z, z, z), unroll=(T <= 16))

    # ---- 3) epilogue: V-mask blend + projection + emo-range affine ----------
    # torch.linspace(0, T, steps=T) / T  ==  t / (T - 1)
    denom = float(max(T - 1, 1))
    m = lax.broadcasted_iota(jnp.int32, (T, B, H), 0).astype(jnp.float32) * (1.0 / denom)
    hf_flat = (hf_all[...] * m).reshape(T * B, H)
    hb_flat = (hb_all[...] * (1.0 - m)).reshape(T * B, H)
    proj = (jnp.dot(hf_flat, whrf_ref[...], preferred_element_type=jnp.float32)
            + jnp.dot(hb_flat, whrb_ref[...], preferred_element_type=jnp.float32))
    out_ref[...] = (proj + EMO_SHIFT).reshape(out_ref.shape)


def init_params(key, in_channels, out_channels):
    # Deterministic synthetic init mirroring nn.LSTM's U(-1/sqrt(H), 1/sqrt(H)).
    k = 1.0 / np.sqrt(H)
    keys = jax.random.split(key, 10)

    def u(kk, shape):
        return jax.random.uniform(kk, shape, jnp.float32, -k, k)

    return {
        # stored transposed w.r.t. PyTorch so the kernel does x @ W directly
        'wih_f': u(keys[0], (in_channels, 4 * H)),      # weight_ih_l0^T
        'whh_f': u(keys[1], (out_channels, 4 * H)),     # weight_hh_l0^T
        'b_f':   u(keys[2], (1, 4 * H)) + u(keys[3], (1, 4 * H)),  # bias_ih + bias_hh
        'whr_f': u(keys[4], (H, out_channels)),         # weight_hr_l0^T
        'wih_b': u(keys[5], (in_channels, 4 * H)),
        'whh_b': u(keys[6], (out_channels, 4 * H)),
        'b_b':   u(keys[7], (1, 4 * H)) + u(keys[8], (1, 4 * H)),
        'whr_b': u(keys[9], (H, out_channels)),
    }


def emo_pred_layer(x, seq_lens, params):
    """x: (B, T, C) float32; seq_lens: python list of per-sequence lengths."""
    B, T, C = x.shape
    P = params['whr_f'].shape[1]
    p_pad = ((P + 127) // 128) * 128        # lane-dense output width
    B_pad = int(np.ceil(B / 8) * 8)         # sublane-aligned batch

    # dropout(p=0.1) is identity at inference time.
    # TODO(synk): training-mode dropout (p=0.1) not implemented (inference only).

    # --- host-side weight fusion (done once per parameter set) ---------------
    wih_cat = jnp.concatenate([params['wih_f'], params['wih_b']], axis=1)   # (C, 8H)
    b_cat = jnp.concatenate([params['b_f'], params['b_b']], axis=1)         # (1, 8H)
    whhf = jnp.dot(params['whr_f'], params['whh_f'])                        # (H, 4H)
    whhb = jnp.dot(params['whr_b'], params['whh_b'])                        # (H, 4H)
    whrf = jnp.pad(params['whr_f'] * EMO_SCALE, ((0, 0), (0, p_pad - P)))   # (H, 128)
    whrb = jnp.pad(params['whr_b'] * EMO_SCALE, ((0, 0), (0, p_pad - P)))   # (H, 128)

    vspec = pl.BlockSpec(memory_space=pltpu.MemorySpace.VMEM)

    @jax.jit
    def run(x, wih_cat, b_cat, whhf, whhb, whrf, whrb):
        x_tbc = jnp.transpose(x, (1, 0, 2)).astype(jnp.float32)             # (T, B, C)
        if B_pad > B:
            x_tbc = jnp.pad(x_tbc, ((0, 0), (0, B_pad - B), (0, 0)))
        out_tbp = pl.pallas_call(
            emo_lstm_kernel,
            out_shape=jax.ShapeDtypeStruct((T, B_pad, p_pad), jnp.float32),
            in_specs=[vspec] * 7,
            out_specs=vspec,
            scratch_shapes=[pltpu.VMEM((T, B_pad, 4 * H), jnp.float32),   # gx fwd
                            pltpu.VMEM((T, B_pad, 4 * H), jnp.float32),   # gx bwd
                            pltpu.VMEM((T, B_pad, H), jnp.float32),       # h_tilde fwd
                            pltpu.VMEM((T, B_pad, H), jnp.float32)],      # h_tilde bwd
            compiler_params=pltpu.CompilerParams(
                vmem_limit_bytes=64 * 1024 * 1024),
        )(x_tbc, wih_cat, b_cat, whhf, whhb, whrf, whrb)
        return jnp.transpose(out_tbp, (1, 0, 2))[:B, :, :P]                 # (B, T, P)

    out_btp = run(x, wih_cat, b_cat, whhf, whhb, whrf, whrb)

    # Pack variable-length sequences (static lens -> host-side gather indices).
    # The reference module also runs the LSTM over the full padded tensor and
    # only packs the *output*, so ignoring seq_lens in the recurrence matches.
    rows = np.concatenate([np.full((l,), b, np.int32) for b, l in enumerate(seq_lens)])
    cols = np.concatenate([np.arange(l, dtype=np.int32) for l in seq_lens])
    return out_btp[rows, cols, :]                                           # (sum(lens), P)


def emo_pred_ref(x, seq_lens, params):
    """Pure-JAX reference (unfused weights) for correctness checking."""
    B, T, C = x.shape
    P = params['whr_f'].shape[1]

    def run_dir(xs, wih, whh, b, whr):
        def step(carry, x_t):
            h, c = carry
            gates = x_t @ wih + h @ whh + b[0]
            i = jax.nn.sigmoid(gates[:, 0:H])
            f = jax.nn.sigmoid(gates[:, H:2 * H])
            g = jnp.tanh(gates[:, 2 * H:3 * H])
            o = jax.nn.sigmoid(gates[:, 3 * H:4 * H])
            c = f * c + i * g
            h = (o * jnp.tanh(c)) @ whr
            return (h, c), h
        h0 = jnp.zeros((B, P), jnp.float32)
        c0 = jnp.zeros((B, H), jnp.float32)
        _, hs = lax.scan(step, (h0, c0), xs)
        return hs                                                  # (T, B, P)

    x_t = jnp.transpose(x, (1, 0, 2)).astype(jnp.float32)
    hf = run_dir(x_t, params['wih_f'], params['whh_f'], params['b_f'], params['whr_f'])
    hb = run_dir(x_t[::-1], params['wih_b'], params['whh_b'], params['b_b'],
                 params['whr_b'])[::-1]
    m = (jnp.linspace(0.0, float(T), T) / float(T)).reshape(T, 1, 1)
    out = hf * m + hb * (1.0 - m)
    out = (out + 1.0) * 0.5 * (EMO_MAX - EMO_MIN) + EMO_MIN
    out = jnp.transpose(out, (1, 0, 2))                            # (B, T, P)
    rows = np.concatenate([np.full((l,), b, np.int32) for b, l in enumerate(seq_lens)])
    cols = np.concatenate([np.arange(l, dtype=np.int32) for l in seq_lens])
    return out[rows, cols, :]


if __name__ == "__main__":
    B, T, C, P = 2, 8, 32, 4          # batch, seq, in_channels, out_channels
    key = jax.random.PRNGKey(0)
    kx, kp = jax.random.split(key)

    x = jax.random.normal(kx, (B, T, C), jnp.float32)
    seq_lens = [5, 7]                 # per-sequence valid lengths (<= T)

    params = init_params(kp, C, P)
    out = emo_pred_layer(x, seq_lens, params)
    out = jax.block_until_ready(out)

    assert out.shape == (sum(seq_lens), P), out.shape
    assert bool(jnp.all(jnp.isfinite(out)))

    ref = jax.block_until_ready(emo_pred_ref(x, seq_lens, params))
    max_err = float(jnp.max(jnp.abs(out - ref)))
    assert max_err < 5e-2, f"mismatch vs reference: {max_err}"

    print("KERNEL_OK")
</pallas_src>

<mosaic_0001>
module attributes {stable_mosaic.version = 11 : i64} {
  func.func @emo_lstm_kernel(%arg0: memref<8x8x32xf32, #tpu.memory_space<vmem>>, %arg1: memref<32x1024xf32, #tpu.memory_space<vmem>>, %arg2: memref<1x1024xf32, #tpu.memory_space<vmem>>, %arg3: memref<128x512xf32, #tpu.memory_space<vmem>>, %arg4: memref<128x512xf32, #tpu.memory_space<vmem>>, %arg5: memref<128x128xf32, #tpu.memory_space<vmem>>, %arg6: memref<128x128xf32, #tpu.memory_space<vmem>>, %arg7: memref<8x8x128xf32, #tpu.memory_space<vmem>>, %arg8: memref<8x8x512xf32, #tpu.memory_space<vmem>>, %arg9: memref<8x8x512xf32, #tpu.memory_space<vmem>>, %arg10: memref<8x8x128xf32, #tpu.memory_space<vmem>>, %arg11: memref<8x8x128xf32, #tpu.memory_space<vmem>>) attributes {dimension_semantics = [], scalar_prefetch = 0 : i64, scratch_operands = 4 : i64, tpu.core_type = #tpu.core_type<tc>} {
    %c0 = arith.constant 0 : index
    %c0_0 = arith.constant 0 : index
    %c0_1 = arith.constant 0 : index
    %0 = vector.load %arg0[%c0, %c0_0, %c0_1] : memref<8x8x32xf32, #tpu.memory_space<vmem>>, vector<8x8x32xf32>
    %1 = vector.shape_cast %0 : vector<8x8x32xf32> to vector<64x32xf32>
    %c0_2 = arith.constant 0 : index
    %c0_3 = arith.constant 0 : index
    %2 = vector.load %arg1[%c0_2, %c0_3] : memref<32x1024xf32, #tpu.memory_space<vmem>>, vector<32x1024xf32>
    %cst = arith.constant dense<0.000000e+00> : vector<64x1024xf32>
    %3 = tpu.matmul %1, %2, %cst {dimension_numbers = #tpu.dot_dimension_numbers<[1], [0], [0], [1], [0, 0, 1, 1], [], []>} : vector<64x32xf32>, vector<32x1024xf32>, vector<64x1024xf32> -> vector<64x1024xf32>
    %c0_4 = arith.constant 0 : index
    %c0_5 = arith.constant 0 : index
    %4 = vector.load %arg2[%c0_4, %c0_5] : memref<1x1024xf32, #tpu.memory_space<vmem>>, vector<1x1024xf32>
    %5 = vector.broadcast %4 : vector<1x1024xf32> to vector<64x1024xf32>
    %6 = arith.addf %3, %5 : vector<64x1024xf32>
    %7 = vector.shape_cast %6 : vector<64x1024xf32> to vector<8x8x1024xf32>
    %8 = vector.extract_strided_slice %7 {offsets = [0, 0, 0], sizes = [8, 8, 512], strides = [1, 1, 1]} : vector<8x8x1024xf32> to vector<8x8x512xf32>
    %c0_6 = arith.constant 0 : index
    %c0_7 = arith.constant 0 : index
    %c0_8 = arith.constant 0 : index
    %9 = vector.load %arg8[%c0_6, %c0_7, %c0_8] : memref<8x8x512xf32, #tpu.memory_space<vmem>>, vector<8x8x512xf32>
    tpu.vector_store %arg8[%c0_6, %c0_7, %c0_8], %8 {strides = array<i32>} : memref<8x8x512xf32, #tpu.memory_space<vmem>>, vector<8x8x512xf32>,
    %10 = vector.extract_strided_slice %7 {offsets = [0, 0, 512], sizes = [8, 8, 512], strides = [1, 1, 1]} : vector<8x8x1024xf32> to vector<8x8x512xf32>
    %c0_9 = arith.constant 0 : index
    %c0_10 = arith.constant 0 : index
    %c0_11 = arith.constant 0 : index
    %11 = vector.load %arg9[%c0_9, %c0_10, %c0_11] : memref<8x8x512xf32, #tpu.memory_space<vmem>>, vector<8x8x512xf32>
    tpu.vector_store %arg9[%c0_9, %c0_10, %c0_11], %10 {strides = array<i32>} : memref<8x8x512xf32, #tpu.memory_space<vmem>>, vector<8x8x512xf32>,
    %cst_12 = arith.constant 0.000000e+00 : f32
    %12 = vector.broadcast %cst_12 : f32 to vector<8x128xf32>
    %c0_i32 = arith.constant 0 : i32
    %c7_i32 = arith.constant 7 : i32
    %13 = arith.subi %c7_i32, %c0_i32 : i32
    %14 = arith.index_cast %c0_i32 : i32 to index
    %c0_13 = arith.constant 0 : index
    %c0_14 = arith.constant 0 : index
    %15 = vector.load %arg8[%14, %c0_13, %c0_14] : memref<8x8x512xf32, #tpu.memory_space<vmem>>, vector<1x8x512xf32>
    %16 = vector.shape_cast %15 : vector<1x8x512xf32> to vector<8x512xf32>
    %c0_15 = arith.constant 0 : index
    %c0_16 = arith.constant 0 : index
    %17 = vector.load %arg3[%c0_15, %c0_16] : memref<128x512xf32, #tpu.memory_space<vmem>>, vector<128x512xf32>
    %cst_17 = arith.constant dense<0.000000e+00> : vector<8x512xf32>
    %18 = tpu.matmul %12, %17, %cst_17 {dimension_numbers = #tpu.dot_dimension_numbers<[1], [0], [0], [1], [0, 0, 1, 1], [], []>} : vector<8x128xf32>, vector<128x512xf32>, vector<8x512xf32> -> vector<8x512xf32>
    %19 = arith.addf %16, %18 : vector<8x512xf32>
    %20 = vector.extract_strided_slice %19 {offsets = [0, 0], sizes = [8, 128], strides = [1, 1]} : vector<8x512xf32> to vector<8x128xf32>
    %21 = arith.negf %20 : vector<8x128xf32>
    %22 = math.exp %21 : vector<8x128xf32>
    %cst_18 = arith.constant 1.000000e+00 : f32
    %23 = vector.broadcast %cst_18 : f32 to vector<8x128xf32>
    %24 = arith.addf %23, %22 : vector<8x128xf32>
    %25 = arith.divf %23, %24 : vector<8x128xf32>
    %26 = vector.extract_strided_slice %19 {offsets = [0, 128], sizes = [8, 128], strides = [1, 1]} : vector<8x512xf32> to vector<8x128xf32>
    %27 = arith.negf %26 : vector<8x128xf32>
    %28 = math.exp %27 : vector<8x128xf32>
    %cst_19 = arith.constant 1.000000e+00 : f32
    %29 = vector.broadcast %cst_19 : f32 to vector<8x128xf32>
    %30 = arith.addf %29, %28 : vector<8x128xf32>
    %31 = arith.divf %29, %30 : vector<8x128xf32>
    %32 = vector.extract_strided_slice %19 {offsets = [0, 256], sizes = [8, 128], strides = [1, 1]} : vector<8x512xf32> to vector<8x128xf32>
    %33 = math.tanh %32 : vector<8x128xf32>
    %34 = vector.extract_strided_slice %19 {offsets = [0, 384], sizes = [8, 128], strides = [1, 1]} : vector<8x512xf32> to vector<8x128xf32>
    %35 = arith.negf %34 : vector<8x128xf32>
    %36 = math.exp %35 : vector<8x128xf32>
    %cst_20 = arith.constant 1.000000e+00 : f32
    %37 = vector.broadcast %cst_20 : f32 to vector<8x128xf32>
    %38 = arith.addf %37, %36 : vector<8x128xf32>
    %39 = arith.divf %37, %38 : vector<8x128xf32>
    %40 = arith.mulf %31, %12 : vector<8x128xf32>
    %41 = arith.mulf %25, %33 : vector<8x128xf32>
    %42 = arith.addf %40, %41 : vector<8x128xf32>
    %43 = math.tanh %42 : vector<8x128xf32>
    %44 = arith.mulf %39, %43 : vector<8x128xf32>
    %45 = arith.index_cast %13 : i32 to index
    %c0_21 = arith.constant 0 : index
    %c0_22 = arith.constant 0 : index
    %46 = vector.load %arg9[%45, %c0_21, %c0_22] : memref<8x8x512xf32, #tpu.memory_space<vmem>>, vector<1x8x512xf32>
    %47 = vector.shape_cast %46 : vector<1x8x512xf32> to vector<8x512xf32>
    %c0_23 = arith.constant 0 : index
    %c0_24 = arith.constant 0 : index
    %48 = vector.load %arg4[%c0_23, %c0_24] : memref<128x512xf32, #tpu.memory_space<vmem>>, vector<128x512xf32>
    %cst_25 = arith.constant dense<0.000000e+00> : vector<8x512xf32>
    %49 = tpu.matmul %12, %48, %cst_25 {dimension_numbers = #tpu.dot_dimension_numbers<[1], [0], [0], [1], [0, 0, 1, 1], [], []>} : vector<8x128xf32>, vector<128x512xf32>, vector<8x512xf32> -> vector<8x512xf32>
    %50 = arith.addf %47, %49 : vector<8x512xf32>
    %51 = vector.extract_strided_slice %50 {offsets = [0, 0], sizes = [8, 128], strides = [1, 1]} : vector<8x512xf32> to vector<8x128xf32>
    %52 = arith.negf %51 : vector<8x128xf32>
    %53 = math.exp %52 : vector<8x128xf32>
    %cst_26 = arith.constant 1.000000e+00 : f32
    %54 = vector.broadcast %cst_26 : f32 to vector<8x128xf32>
    %55 = arith.addf %54, %53 : vector<8x128xf32>
    %56 = arith.divf %54, %55 : vector<8x128xf32>
    %57 = vector.extract_strided_slice %50 {offsets = [0, 128], sizes = [8, 128], strides = [1, 1]} : vector<8x512xf32> to vector<8x128xf32>
    %58 = arith.negf %57 : vector<8x128xf32>
    %59 = math.exp %58 : vector<8x128xf32>
    %cst_27 = arith.constant 1.000000e+00 : f32
    %60 = vector.broadcast %cst_27 : f32 to vector<8x128xf32>
    %61 = arith.addf %60, %59 : vector<8x128xf32>
    %62 = arith.divf %60, %61 : vector<8x128xf32>
    %63 = vector.extract_strided_slice %50 {offsets = [0, 256], sizes = [8, 128], strides = [1, 1]} : vector<8x512xf32> to vector<8x128xf32>
    %64 = math.tanh %63 : vector<8x128xf32>
    %65 = vector.extract_strided_slice %50 {offsets = [0, 384], sizes = [8, 128], strides = [1, 1]} : vector<8x512xf32> to vector<8x128xf32>
    %66 = arith.negf %65 : vector<8x128xf32>
    %67 = math.exp %66 : vector<8x128xf32>
    %cst_28 = arith.constant 1.000000e+00 : f32
    %68 = vector.broadcast %cst_28 : f32 to vector<8x128xf32>
    %69 = arith.addf %68, %67 : vector<8x128xf32>
    %70 = arith.divf %68, %69 : vector<8x128xf32>
    %71 = arith.mulf %62, %12 : vector<8x128xf32>
    %72 = arith.mulf %56, %64 : vector<8x128xf32>
    %73 = arith.addf %71, %72 : vector<8x128xf32>
    %74 = math.tanh %73 : vector<8x128xf32>
    %75 = arith.mulf %70, %74 : vector<8x128xf32>
    %76 = arith.index_cast %c0_i32 : i32 to index
    %c0_29 = arith.constant 0 : index
    %c0_30 = arith.constant 0 : index
    %77 = vector.load %arg10[%76, %c0_29, %c0_30] : memref<8x8x128xf32, #tpu.memory_space<vmem>>, vector<1x8x128xf32>
    %78 = vector.shape_cast %77 : vector<1x8x128xf32> to vector<8x128xf32>
    %79 = vector.shape_cast %44 : vector<8x128xf32> to vector<1x8x128xf32>
    tpu.vector_store %arg10[%76, %c0_29, %c0_30], %79 {strides = array<i32>} : memref<8x8x128xf32, #tpu.memory_space<vmem>>, vector<1x8x128xf32>,
    %80 = arith.index_cast %13 : i32 to index
    %c0_31 = arith.constant 0 : index
    %c0_32 = arith.constant 0 : index
    %81 = vector.load %arg11[%80, %c0_31, %c0_32] : memref<8x8x128xf32, #tpu.memory_space<vmem>>, vector<1x8x128xf32>
    %82 = vector.shape_cast %81 : vector<1x8x128xf32> to vector<8x128xf32>
    %83 = vector.shape_cast %75 : vector<8x128xf32> to vector<1x8x128xf32>
    tpu.vector_store %arg11[%80, %c0_31, %c0_32], %83 {strides = array<i32>} : memref<8x8x128xf32, #tpu.memory_space<vmem>>, vector<1x8x128xf32>,
    %c1_i32 = arith.constant 1 : i32
    %c7_i32_33 = arith.constant 7 : i32
    %84 = arith.subi %c7_i32_33, %c1_i32 : i32
    %85 = arith.index_cast %c1_i32 : i32 to index
    %c0_34 = arith.constant 0 : index
    %c0_35 = arith.constant 0 : index
    %86 = vector.load %arg8[%85, %c0_34, %c0_35] : memref<8x8x512xf32, #tpu.memory_space<vmem>>, vector<1x8x512xf32>
    %87 = vector.shape_cast %86 : vector<1x8x512xf32> to vector<8x512xf32>
    %c0_36 = arith.constant 0 : index
    %c0_37 = arith.constant 0 : index
    %88 = vector.load %arg3[%c0_36, %c0_37] : memref<128x512xf32, #tpu.memory_space<vmem>>, vector<128x512xf32>
    %cst_38 = arith.constant dense<0.000000e+00> : vector<8x512xf32>
    %89 = tpu.matmul %44, %88, %cst_38 {dimension_numbers = #tpu.dot_dimension_numbers<[1], [0], [0], [1], [0, 0, 1, 1], [], []>} : vector<8x128xf32>, vector<128x512xf32>, vector<8x512xf32> -> vector<8x512xf32>
    %90 = arith.addf %87, %89 : vector<8x512xf32>
    %91 = vector.extract_strided_slice %90 {offsets = [0, 0], sizes = [8, 128], strides = [1, 1]} : vector<8x512xf32> to vector<8x128xf32>
    %92 = arith.negf %91 : vector<8x128xf32>
    %93 = math.exp %92 : vector<8x128xf32>
    %cst_39 = arith.constant 1.000000e+00 : f32
    %94 = vector.broadcast %cst_39 : f32 to vector<8x128xf32>
    %95 = arith.addf %94, %93 : vector<8x128xf32>
    %96 = arith.divf %94, %95 : vector<8x128xf32>
    %97 = vector.extract_strided_slice %90 {offsets = [0, 128], sizes = [8, 128], strides = [1, 1]} : vector<8x512xf32> to vector<8x128xf32>
    %98 = arith.negf %97 : vector<8x128xf32>
    %99 = math.exp %98 : vector<8x128xf32>
    %cst_40 = arith.constant 1.000000e+00 : f32
    %100 = vector.broadcast %cst_40 : f32 to vector<8x128xf32>
    %101 = arith.addf %100, %99 : vector<8x128xf32>
    %102 = arith.divf %100, %101 : vector<8x128xf32>
    %103 = vector.extract_strided_slice %90 {offsets = [0, 256], sizes = [8, 128], strides = [1, 1]} : vector<8x512xf32> to vector<8x128xf32>
    %104 = math.tanh %103 : vector<8x128xf32>
    %105 = vector.extract_strided_slice %90 {offsets = [0, 384], sizes = [8, 128], strides = [1, 1]} : vector<8x512xf32> to vector<8x128xf32>
    %106 = arith.negf %105 : vector<8x128xf32>
    %107 = math.exp %106 : vector<8x128xf32>
    %cst_41 = arith.constant 1.000000e+00 : f32
    %108 = vector.broadcast %cst_41 : f32 to vector<8x128xf32>
    %109 = arith.addf %108, %107 : vector<8x128xf32>
    %110 = arith.divf %108, %109 : vector<8x128xf32>
    %111 = arith.mulf %102, %42 : vector<8x128xf32>
    %112 = arith.mulf %96, %104 : vector<8x128xf32>
    %113 = arith.addf %111, %112 : vector<8x128xf32>
    %114 = math.tanh %113 : vector<8x128xf32>
    %115 = arith.mulf %110, %114 : vector<8x128xf32>
    %116 = arith.index_cast %84 : i32 to index
    %c0_42 = arith.constant 0 : index
    %c0_43 = arith.constant 0 : index
    %117 = vector.load %arg9[%116, %c0_42, %c0_43] : memref<8x8x512xf32, #tpu.memory_space<vmem>>, vector<1x8x512xf32>
    %118 = vector.shape_cast %117 : vector<1x8x512xf32> to vector<8x512xf32>
    %c0_44 = arith.constant 0 : index
    %c0_45 = arith.constant 0 : index
    %119 = vector.load %arg4[%c0_44, %c0_45] : memref<128x512xf32, #tpu.memory_space<vmem>>, vector<128x512xf32>
    %cst_46 = arith.constant dense<0.000000e+00> : vector<8x512xf32>
    %120 = tpu.matmul %75, %119, %cst_46 {dimension_numbers = #tpu.dot_dimension_numbers<[1], [0], [0], [1], [0, 0, 1, 1], [], []>} : vector<8x128xf32>, vector<128x512xf32>, vector<8x512xf32> -> vector<8x512xf32>
    %121 = arith.addf %118, %120 : vector<8x512xf32>
    %122 = vector.extract_strided_slice %121 {offsets = [0, 0], sizes = [8, 128], strides = [1, 1]} : vector<8x512xf32> to vector<8x128xf32>
    %123 = arith.negf %122 : vector<8x128xf32>
    %124 = math.exp %123 : vector<8x128xf32>
    %cst_47 = arith.constant 1.000000e+00 : f32
    %125 = vector.broadcast %cst_47 : f32 to vector<8x128xf32>
    %126 = arith.addf %125, %124 : vector<8x128xf32>
    %127 = arith.divf %125, %126 : vector<8x128xf32>
    %128 = vector.extract_strided_slice %121 {offsets = [0, 128], sizes = [8, 128], strides = [1, 1]} : vector<8x512xf32> to vector<8x128xf32>
    %129 = arith.negf %128 : vector<8x128xf32>
    %130 = math.exp %129 : vector<8x128xf32>
    %cst_48 = arith.constant 1.000000e+00 : f32
    %131 = vector.broadcast %cst_48 : f32 to vector<8x128xf32>
    %132 = arith.addf %131, %130 : vector<8x128xf32>
    %133 = arith.divf %131, %132 : vector<8x128xf32>
    %134 = vector.extract_strided_slice %121 {offsets = [0, 256], sizes = [8, 128], strides = [1, 1]} : vector<8x512xf32> to vector<8x128xf32>
    %135 = math.tanh %134 : vector<8x128xf32>
    %136 = vector.extract_strided_slice %121 {offsets = [0, 384], sizes = [8, 128], strides = [1, 1]} : vector<8x512xf32> to vector<8x128xf32>
    %137 = arith.negf %136 : vector<8x128xf32>
    %138 = math.exp %137 : vector<8x128xf32>
    %cst_49 = arith.constant 1.000000e+00 : f32
    %139 = vector.broadcast %cst_49 : f32 to vector<8x128xf32>
    %140 = arith.addf %139, %138 : vector<8x128xf32>
    %141 = arith.divf %139, %140 : vector<8x128xf32>
    %142 = arith.mulf %133, %73 : vector<8x128xf32>
    %143 = arith.mulf %127, %135 : vector<8x128xf32>
    %144 = arith.addf %142, %143 : vector<8x128xf32>
    %145 = math.tanh %144 : vector<8x128xf32>
    %146 = arith.mulf %141, %145 : vector<8x128xf32>
    %147 = arith.index_cast %c1_i32 : i32 to index
    %c0_50 = arith.constant 0 : index
    %c0_51 = arith.constant 0 : index
    %148 = vector.load %arg10[%147, %c0_50, %c0_51] : memref<8x8x128xf32, #tpu.memory_space<vmem>>, vector<1x8x128xf32>
    %149 = vector.shape_cast %148 : vector<1x8x128xf32> to vector<8x128xf32>
    %150 = vector.shape_cast %115 : vector<8x128xf32> to vector<1x8x128xf32>
    tpu.vector_store %arg10[%147, %c0_50, %c0_51], %150 {strides = array<i32>} : memref<8x8x128xf32, #tpu.memory_space<vmem>>, vector<1x8x128xf32>,
    %151 = arith.index_cast %84 : i32 to index
    %c0_52 = arith.constant 0 : index
    %c0_53 = arith.constant 0 : index
    %152 = vector.load %arg11[%151, %c0_52, %c0_53] : memref<8x8x128xf32, #tpu.memory_space<vmem>>, vector<1x8x128xf32>
    %153 = vector.shape_cast %152 : vector<1x8x128xf32> to vector<8x128xf32>
    %154 = vector.shape_cast %146 : vector<8x128xf32> to vector<1x8x128xf32>
    tpu.vector_store %arg11[%151, %c0_52, %c0_53], %154 {strides = array<i32>} : memref<8x8x128xf32, #tpu.memory_space<vmem>>, vector<1x8x128xf32>,
    %c2_i32 = arith.constant 2 : i32
    %c7_i32_54 = arith.constant 7 : i32
    %155 = arith.subi %c7_i32_54, %c2_i32 : i32
    %156 = arith.index_cast %c2_i32 : i32 to index
    %c0_55 = arith.constant 0 : index
    %c0_56 = arith.constant 0 : index
    %157 = vector.load %arg8[%156, %c0_55, %c0_56] : memref<8x8x512xf32, #tpu.memory_space<vmem>>, vector<1x8x512xf32>
    %158 = vector.shape_cast %157 : vector<1x8x512xf32> to vector<8x512xf32>
    %c0_57 = arith.constant 0 : index
    %c0_58 = arith.constant 0 : index
    %159 = vector.load %arg3[%c0_57, %c0_58] : memref<128x512xf32, #tpu.memory_space<vmem>>, vector<128x512xf32>
    %cst_59 = arith.constant dense<0.000000e+00> : vector<8x512xf32>
    %160 = tpu.matmul %115, %159, %cst_59 {dimension_numbers = #tpu.dot_dimension_numbers<[1], [0], [0], [1], [0, 0, 1, 1], [], []>} : vector<8x128xf32>, vector<128x512xf32>, vector<8x512xf32> -> vector<8x512xf32>
    %161 = arith.addf %158, %160 : vector<8x512xf32>
    %162 = vector.extract_strided_slice %161 {offsets = [0, 0], sizes = [8, 128], strides = [1, 1]} : vector<8x512xf32> to vector<8x128xf32>
    %163 = arith.negf %162 : vector<8x128xf32>
    %164 = math.exp %163 : vector<8x128xf32>
    %cst_60 = arith.constant 1.000000e+00 : f32
    %165 = vector.broadcast %cst_60 : f32 to vector<8x128xf32>
    %166 = arith.addf %165, %164 : vector<8x128xf32>
    %167 = arith.divf %165, %166 : vector<8x128xf32>
    %168 = vector.extract_strided_slice %161 {offsets = [0, 128], sizes = [8, 128], strides = [1, 1]} : vector<8x512xf32> to vector<8x128xf32>
    %169 = arith.negf %168 : vector<8x128xf32>
    %170 = math.exp %169 : vector<8x128xf32>
    %cst_61 = arith.constant 1.000000e+00 : f32
    %171 = vector.broadcast %cst_61 : f32 to vector<8x128xf32>
    %172 = arith.addf %171, %170 : vector<8x128xf32>
    %173 = arith.divf %171, %172 : vector<8x128xf32>
    %174 = vector.extract_strided_slice %161 {offsets = [0, 256], sizes = [8, 128], strides = [1, 1]} : vector<8x512xf32> to vector<8x128xf32>
    %175 = math.tanh %174 : vector<8x128xf32>
    %176 = vector.extract_strided_slice %161 {offsets = [0, 384], sizes = [8, 128], strides = [1, 1]} : vector<8x512xf32> to vector<8x128xf32>
    %177 = arith.negf %176 : vector<8x128xf32>
    %178 = math.exp %177 : vector<8x128xf32>
    %cst_62 = arith.constant 1.000000e+00 : f32
    %179 = vector.broadcast %cst_62 : f32 to vector<8x128xf32>
    %180 = arith.addf %179, %178 : vector<8x128xf32>
    %181 = arith.divf %179, %180 : vector<8x128xf32>
    %182 = arith.mulf %173, %113 : vector<8x128xf32>
    %183 = arith.mulf %167, %175 : vector<8x128xf32>
    %184 = arith.addf %182, %183 : vector<8x128xf32>
    %185 = math.tanh %184 : vector<8x128xf32>
    %186 = arith.mulf %181, %185 : vector<8x128xf32>
    %187 = arith.index_cast %155 : i32 to index
    %c0_63 = arith.constant 0 : index
    %c0_64 = arith.constant 0 : index
    %188 = vector.load %arg9[%187, %c0_63, %c0_64] : memref<8x8x512xf32, #tpu.memory_space<vmem>>, vector<1x8x512xf32>
    %189 = vector.shape_cast %188 : vector<1x8x512xf32> to vector<8x512xf32>
    %c0_65 = arith.constant 0 : index
    %c0_66 = arith.constant 0 : index
    %190 = vector.load %arg4[%c0_65, %c0_66] : memref<128x512xf32, #tpu.memory_space<vmem>>, vector<128x512xf32>
    %cst_67 = arith.constant dense<0.000000e+00> : vector<8x512xf32>
    %191 = tpu.matmul %146, %190, %cst_67 {dimension_numbers = #tpu.dot_dimension_numbers<[1], [0], [0], [1], [0, 0, 1, 1], [], []>} : vector<8x128xf32>, vector<128x512xf32>, vector<8x512xf32> -> vector<8x512xf32>
    %192 = arith.addf %189, %191 : vector<8x512xf32>
    %193 = vector.extract_strided_slice %192 {offsets = [0, 0], sizes = [8, 128], strides = [1, 1]} : vector<8x512xf32> to vector<8x128xf32>
    %194 = arith.negf %193 : vector<8x128xf32>
    %195 = math.exp %194 : vector<8x128xf32>
    %cst_68 = arith.constant 1.000000e+00 : f32
    %196 = vector.broadcast %cst_68 : f32 to vector<8x128xf32>
    %197 = arith.addf %196, %195 : vector<8x128xf32>
    %198 = arith.divf %196, %197 : vector<8x128xf32>
    %199 = vector.extract_strided_slice %192 {offsets = [0, 128], sizes = [8, 128], strides = [1, 1]} : vector<8x512xf32> to vector<8x128xf32>
    %200 = arith.negf %199 : vector<8x128xf32>
    %201 = math.exp %200 : vector<8x128xf32>
    %cst_69 = arith.constant 1.000000e+00 : f32
    %202 = vector.broadcast %cst_69 : f32 to vector<8x128xf32>
    %203 = arith.addf %202, %201 : vector<8x128xf32>
    %204 = arith.divf %202, %203 : vector<8x128xf32>
    %205 = vector.extract_strided_slice %192 {offsets = [0, 256], sizes = [8, 128], strides = [1, 1]} : vector<8x512xf32> to vector<8x128xf32>
    %206 = math.tanh %205 : vector<8x128xf32>
    %207 = vector.extract_strided_slice %192 {offsets = [0, 384], sizes = [8, 128], strides = [1, 1]} : vector<8x512xf32> to vector<8x128xf32>
    %208 = arith.negf %207 : vector<8x128xf32>
    %209 = math.exp %208 : vector<8x128xf32>
    %cst_70 = arith.constant 1.000000e+00 : f32
    %210 = vector.broadcast %cst_70 : f32 to vector<8x128xf32>
    %211 = arith.addf %210, %209 : vector<8x128xf32>
    %212 = arith.divf %210, %211 : vector<8x128xf32>
    %213 = arith.mulf %204, %144 : vector<8x128xf32>
    %214 = arith.mulf %198, %206 : vector<8x128xf32>
    %215 = arith.addf %213, %214 : vector<8x128xf32>
    %216 = math.tanh %215 : vector<8x128xf32>
    %217 = arith.mulf %212, %216 : vector<8x128xf32>
    %218 = arith.index_cast %c2_i32 : i32 to index
    %c0_71 = arith.constant 0 : index
    %c0_72 = arith.constant 0 : index
    %219 = vector.load %arg10[%218, %c0_71, %c0_72] : memref<8x8x128xf32, #tpu.memory_space<vmem>>, vector<1x8x128xf32>
    %220 = vector.shape_cast %219 : vector<1x8x128xf32> to vector<8x128xf32>
    %221 = vector.shape_cast %186 : vector<8x128xf32> to vector<1x8x128xf32>
    tpu.vector_store %arg10[%218, %c0_71, %c0_72], %221 {strides = array<i32>} : memref<8x8x128xf32, #tpu.memory_space<vmem>>, vector<1x8x128xf32>,
    %222 = arith.index_cast %155 : i32 to index
    %c0_73 = arith.constant 0 : index
    %c0_74 = arith.constant 0 : index
    %223 = vector.load %arg11[%222, %c0_73, %c0_74] : memref<8x8x128xf32, #tpu.memory_space<vmem>>, vector<1x8x128xf32>
    %224 = vector.shape_cast %223 : vector<1x8x128xf32> to vector<8x128xf32>
    %225 = vector.shape_cast %217 : vector<8x128xf32> to vector<1x8x128xf32>
    tpu.vector_store %arg11[%222, %c0_73, %c0_74], %225 {strides = array<i32>} : memref<8x8x128xf32, #tpu.memory_space<vmem>>, vector<1x8x128xf32>,
    %c3_i32 = arith.constant 3 : i32
    %c7_i32_75 = arith.constant 7 : i32
    %226 = arith.subi %c7_i32_75, %c3_i32 : i32
    %227 = arith.index_cast %c3_i32 : i32 to index
    %c0_76 = arith.constant 0 : index
    %c0_77 = arith.constant 0 : index
    %228 = vector.load %arg8[%227, %c0_76, %c0_77] : memref<8x8x512xf32, #tpu.memory_space<vmem>>, vector<1x8x512xf32>
    %229 = vector.shape_cast %228 : vector<1x8x512xf32> to vector<8x512xf32>
    %c0_78 = arith.constant 0 : index
    %c0_79 = arith.constant 0 : index
    %230 = vector.load %arg3[%c0_78, %c0_79] : memref<128x512xf32, #tpu.memory_space<vmem>>, vector<128x512xf32>
    %cst_80 = arith.constant dense<0.000000e+00> : vector<8x512xf32>
    %231 = tpu.matmul %186, %230, %cst_80 {dimension_numbers = #tpu.dot_dimension_numbers<[1], [0], [0], [1], [0, 0, 1, 1], [], []>} : vector<8x128xf32>, vector<128x512xf32>, vector<8x512xf32> -> vector<8x512xf32>
    %232 = arith.addf %229, %231 : vector<8x512xf32>
    %233 = vector.extract_strided_slice %232 {offsets = [0, 0], sizes = [8, 128], strides = [1, 1]} : vector<8x512xf32> to vector<8x128xf32>
    %234 = arith.negf %233 : vector<8x128xf32>
    %235 = math.exp %234 : vector<8x128xf32>
    %cst_81 = arith.constant 1.000000e+00 : f32
    %236 = vector.broadcast %cst_81 : f32 to vector<8x128xf32>
    %237 = arith.addf %236, %235 : vector<8x128xf32>
    %238 = arith.divf %236, %237 : vector<8x128xf32>
    %239 = vector.extract_strided_slice %232 {offsets = [0, 128], sizes = [8, 128], strides = [1, 1]} : vector<8x512xf32> to vector<8x128xf32>
    %240 = arith.negf %239 : vector<8x128xf32>
    %241 = math.exp %240 : vector<8x128xf32>
    %cst_82 = arith.constant 1.000000e+00 : f32
    %242 = vector.broadcast %cst_82 : f32 to vector<8x128xf32>
    %243 = arith.addf %242, %241 : vector<8x128xf32>
    %244 = arith.divf %242, %243 : vector<8x128xf32>
    %245 = vector.extract_strided_slice %232 {offsets = [0, 256], sizes = [8, 128], strides = [1, 1]} : vector<8x512xf32> to vector<8x128xf32>
    %246 = math.tanh %245 : vector<8x128xf32>
    %247 = vector.extract_strided_slice %232 {offsets = [0, 384], sizes = [8, 128], strides = [1, 1]} : vector<8x512xf32> to vector<8x128xf32>
    %248 = arith.negf %247 : vector<8x128xf32>
    %249 = math.exp %248 : vector<8x128xf32>
    %cst_83 = arith.constant 1.000000e+00 : f32
    %250 = vector.broadcast %cst_83 : f32 to vector<8x128xf32>
    %251 = arith.addf %250, %249 : vector<8x128xf32>
    %252 = arith.divf %250, %251 : vector<8x128xf32>
    %253 = arith.mulf %244, %184 : vector<8x128xf32>
    %254 = arith.mulf %238, %246 : vector<8x128xf32>
    %255 = arith.addf %253, %254 : vector<8x128xf32>
    %256 = math.tanh %255 : vector<8x128xf32>
    %257 = arith.mulf %252, %256 : vector<8x128xf32>
    %258 = arith.index_cast %226 : i32 to index
    %c0_84 = arith.constant 0 : index
    %c0_85 = arith.constant 0 : index
    %259 = vector.load %arg9[%258, %c0_84, %c0_85] : memref<8x8x512xf32, #tpu.memory_space<vmem>>, vector<1x8x512xf32>
    %260 = vector.shape_cast %259 : vector<1x8x512xf32> to vector<8x512xf32>
    %c0_86 = arith.constant 0 : index
    %c0_87 = arith.constant 0 : index
    %261 = vector.load %arg4[%c0_86, %c0_87] : memref<128x512xf32, #tpu.memory_space<vmem>>, vector<128x512xf32>
    %cst_88 = arith.constant dense<0.000000e+00> : vector<8x512xf32>
    %262 = tpu.matmul %217, %261, %cst_88 {dimension_numbers = #tpu.dot_dimension_numbers<[1], [0], [0], [1], [0, 0, 1, 1], [], []>} : vector<8x128xf32>, vector<128x512xf32>, vector<8x512xf32> -> vector<8x512xf32>
    %263 = arith.addf %260, %262 : vector<8x512xf32>
    %264 = vector.extract_strided_slice %263 {offsets = [0, 0], sizes = [8, 128], strides = [1, 1]} : vector<8x512xf32> to vector<8x128xf32>
    %265 = arith.negf %264 : vector<8x128xf32>
    %266 = math.exp %265 : vector<8x128xf32>
    %cst_89 = arith.constant 1.000000e+00 : f32
    %267 = vector.broadcast %cst_89 : f32 to vector<8x128xf32>
    %268 = arith.addf %267, %266 : vector<8x128xf32>
    %269 = arith.divf %267, %268 : vector<8x128xf32>
    %270 = vector.extract_strided_slice %263 {offsets = [0, 128], sizes = [8, 128], strides = [1, 1]} : vector<8x512xf32> to vector<8x128xf32>
    %271 = arith.negf %270 : vector<8x128xf32>
    %272 = math.exp %271 : vector<8x128xf32>
    %cst_90 = arith.constant 1.000000e+00 : f32
    %273 = vector.broadcast %cst_90 : f32 to vector<8x128xf32>
    %274 = arith.addf %273, %272 : vector<8x128xf32>
    %275 = arith.divf %273, %274 : vector<8x128xf32>
    %276 = vector.extract_strided_slice %263 {offsets = [0, 256], sizes = [8, 128], strides = [1, 1]} : vector<8x512xf32> to vector<8x128xf32>
    %277 = math.tanh %276 : vector<8x128xf32>
    %278 = vector.extract_strided_slice %263 {offsets = [0, 384], sizes = [8, 128], strides = [1, 1]} : vector<8x512xf32> to vector<8x128xf32>
    %279 = arith.negf %278 : vector<8x128xf32>
    %280 = math.exp %279 : vector<8x128xf32>
    %cst_91 = arith.constant 1.000000e+00 : f32
    %281 = vector.broadcast %cst_91 : f32 to vector<8x128xf32>
    %282 = arith.addf %281, %280 : vector<8x128xf32>
    %283 = arith.divf %281, %282 : vector<8x128xf32>
    %284 = arith.mulf %275, %215 : vector<8x128xf32>
    %285 = arith.mulf %269, %277 : vector<8x128xf32>
    %286 = arith.addf %284, %285 : vector<8x128xf32>
    %287 = math.tanh %286 : vector<8x128xf32>
    %288 = arith.mulf %283, %287 : vector<8x128xf32>
    %289 = arith.index_cast %c3_i32 : i32 to index
    %c0_92 = arith.constant 0 : index
    %c0_93 = arith.constant 0 : index
    %290 = vector.load %arg10[%289, %c0_92, %c0_93] : memref<8x8x128xf32, #tpu.memory_space<vmem>>, vector<1x8x128xf32>
    %291 = vector.shape_cast %290 : vector<1x8x128xf32> to vector<8x128xf32>
    %292 = vector.shape_cast %257 : vector<8x128xf32> to vector<1x8x128xf32>
    tpu.vector_store %arg10[%289, %c0_92, %c0_93], %292 {strides = array<i32>} : memref<8x8x128xf32, #tpu.memory_space<vmem>>, vector<1x8x128xf32>,
    %293 = arith.index_cast %226 : i32 to index
    %c0_94 = arith.constant 0 : index
    %c0_95 = arith.constant 0 : index
    %294 = vector.load %arg11[%293, %c0_94, %c0_95] : memref<8x8x128xf32, #tpu.memory_space<vmem>>, vector<1x8x128xf32>
    %295 = vector.shape_cast %294 : vector<1x8x128xf32> to vector<8x128xf32>
    %296 = vector.shape_cast %288 : vector<8x128xf32> to vector<1x8x128xf32>
    tpu.vector_store %arg11[%293, %c0_94, %c0_95], %296 {strides = array<i32>} : memref<8x8x128xf32, #tpu.memory_space<vmem>>, vector<1x8x128xf32>,
    %c4_i32 = arith.constant 4 : i32
    %c7_i32_96 = arith.constant 7 : i32
    %297 = arith.subi %c7_i32_96, %c4_i32 : i32
    %298 = arith.index_cast %c4_i32 : i32 to index
    %c0_97 = arith.constant 0 : index
    %c0_98 = arith.constant 0 : index
    %299 = vector.load %arg8[%298, %c0_97, %c0_98] : memref<8x8x512xf32, #tpu.memory_space<vmem>>, vector<1x8x512xf32>
    %300 = vector.shape_cast %299 : vector<1x8x512xf32> to vector<8x512xf32>
    %c0_99 = arith.constant 0 : index
    %c0_100 = arith.constant 0 : index
    %301 = vector.load %arg3[%c0_99, %c0_100] : memref<128x512xf32, #tpu.memory_space<vmem>>, vector<128x512xf32>
    %cst_101 = arith.constant dense<0.000000e+00> : vector<8x512xf32>
    %302 = tpu.matmul %257, %301, %cst_101 {dimension_numbers = #tpu.dot_dimension_numbers<[1], [0], [0], [1], [0, 0, 1, 1], [], []>} : vector<8x128xf32>, vector<128x512xf32>, vector<8x512xf32> -> vector<8x512xf32>
    %303 = arith.addf %300, %302 : vector<8x512xf32>
    %304 = vector.extract_strided_slice %303 {offsets = [0, 0], sizes = [8, 128], strides = [1, 1]} : vector<8x512xf32> to vector<8x128xf32>
    %305 = arith.negf %304 : vector<8x128xf32>
    %306 = math.exp %305 : vector<8x128xf32>
    %cst_102 = arith.constant 1.000000e+00 : f32
    %307 = vector.broadcast %cst_102 : f32 to vector<8x128xf32>
    %308 = arith.addf %307, %306 : vector<8x128xf32>
    %309 = arith.divf %307, %308 : vector<8x128xf32>
    %310 = vector.extract_strided_slice %303 {offsets = [0, 128], sizes = [8, 128], strides = [1, 1]} : vector<8x512xf32> to vector<8x128xf32>
    %311 = arith.negf %310 : vector<8x128xf32>
    %312 = math.exp %311 : vector<8x128xf32>
    %cst_103 = arith.constant 1.000000e+00 : f32
    %313 = vector.broadcast %cst_103 : f32 to vector<8x128xf32>
    %314 = arith.addf %313, %312 : vector<8x128xf32>
    %315 = arith.divf %313, %314 : vector<8x128xf32>
    %316 = vector.extract_strided_slice %303 {offsets = [0, 256], sizes = [8, 128], strides = [1, 1]} : vector<8x512xf32> to vector<8x128xf32>
    %317 = math.tanh %316 : vector<8x128xf32>
    %318 = vector.extract_strided_slice %303 {offsets = [0, 384], sizes = [8, 128], strides = [1, 1]} : vector<8x512xf32> to vector<8x128xf32>
    %319 = arith.negf %318 : vector<8x128xf32>
    %320 = math.exp %319 : vector<8x128xf32>
    %cst_104 = arith.constant 1.000000e+00 : f32
    %321 = vector.broadcast %cst_104 : f32 to vector<8x128xf32>
    %322 = arith.addf %321, %320 : vector<8x128xf32>
    %323 = arith.divf %321, %322 : vector<8x128xf32>
    %324 = arith.mulf %315, %255 : vector<8x128xf32>
    %325 = arith.mulf %309, %317 : vector<8x128xf32>
    %326 = arith.addf %324, %325 : vector<8x128xf32>
    %327 = math.tanh %326 : vector<8x128xf32>
    %328 = arith.mulf %323, %327 : vector<8x128xf32>
    %329 = arith.index_cast %297 : i32 to index
    %c0_105 = arith.constant 0 : index
    %c0_106 = arith.constant 0 : index
    %330 = vector.load %arg9[%329, %c0_105, %c0_106] : memref<8x8x512xf32, #tpu.memory_space<vmem>>, vector<1x8x512xf32>
    %331 = vector.shape_cast %330 : vector<1x8x512xf32> to vector<8x512xf32>
    %c0_107 = arith.constant 0 : index
    %c0_108 = arith.constant 0 : index
    %332 = vector.load %arg4[%c0_107, %c0_108] : memref<128x512xf32, #tpu.memory_space<vmem>>, vector<128x512xf32>
    %cst_109 = arith.constant dense<0.000000e+00> : vector<8x512xf32>
    %333 = tpu.matmul %288, %332, %cst_109 {dimension_numbers = #tpu.dot_dimension_numbers<[1], [0], [0], [1], [0, 0, 1, 1], [], []>} : vector<8x128xf32>, vector<128x512xf32>, vector<8x512xf32> -> vector<8x512xf32>
    %334 = arith.addf %331, %333 : vector<8x512xf32>
    %335 = vector.extract_strided_slice %334 {offsets = [0, 0], sizes = [8, 128], strides = [1, 1]} : vector<8x512xf32> to vector<8x128xf32>
    %336 = arith.negf %335 : vector<8x128xf32>
    %337 = math.exp %336 : vector<8x128xf32>
    %cst_110 = arith.constant 1.000000e+00 : f32
    %338 = vector.broadcast %cst_110 : f32 to vector<8x128xf32>
    %339 = arith.addf %338, %337 : vector<8x128xf32>
    %340 = arith.divf %338, %339 : vector<8x128xf32>
    %341 = vector.extract_strided_slice %334 {offsets = [0, 128], sizes = [8, 128], strides = [1, 1]} : vector<8x512xf32> to vector<8x128xf32>
    %342 = arith.negf %341 : vector<8x128xf32>
    %343 = math.exp %342 : vector<8x128xf32>
    %cst_111 = arith.constant 1.000000e+00 : f32
    %344 = vector.broadcast %cst_111 : f32 to vector<8x128xf32>
    %345 = arith.addf %344, %343 : vector<8x128xf32>
    %346 = arith.divf %344, %345 : vector<8x128xf32>
    %347 = vector.extract_strided_slice %334 {offsets = [0, 256], sizes = [8, 128], strides = [1, 1]} : vector<8x512xf32> to vector<8x128xf32>
    %348 = math.tanh %347 : vector<8x128xf32>
    %349 = vector.extract_strided_slice %334 {offsets = [0, 384], sizes = [8, 128], strides = [1, 1]} : vector<8x512xf32> to vector<8x128xf32>
    %350 = arith.negf %349 : vector<8x128xf32>
    %351 = math.exp %350 : vector<8x128xf32>
    %cst_112 = arith.constant 1.000000e+00 : f32
    %352 = vector.broadcast %cst_112 : f32 to vector<8x128xf32>
    %353 = arith.addf %352, %351 : vector<8x128xf32>
    %354 = arith.divf %352, %353 : vector<8x128xf32>
    %355 = arith.mulf %346, %286 : vector<8x128xf32>
    %356 = arith.mulf %340, %348 : vector<8x128xf32>
    %357 = arith.addf %355, %356 : vector<8x128xf32>
    %358 = math.tanh %357 : vector<8x128xf32>
    %359 = arith.mulf %354, %358 : vector<8x128xf32>
    %360 = arith.index_cast %c4_i32 : i32 to index
    %c0_113 = arith.constant 0 : index
    %c0_114 = arith.constant 0 : index
    %361 = vector.load %arg10[%360, %c0_113, %c0_114] : memref<8x8x128xf32, #tpu.memory_space<vmem>>, vector<1x8x128xf32>
    %362 = vector.shape_cast %361 : vector<1x8x128xf32> to vector<8x128xf32>
    %363 = vector.shape_cast %328 : vector<8x128xf32> to vector<1x8x128xf32>
    tpu.vector_store %arg10[%360, %c0_113, %c0_114], %363 {strides = array<i32>} : memref<8x8x128xf32, #tpu.memory_space<vmem>>, vector<1x8x128xf32>,
    %364 = arith.index_cast %297 : i32 to index
    %c0_115 = arith.constant 0 : index
    %c0_116 = arith.constant 0 : index
    %365 = vector.load %arg11[%364, %c0_115, %c0_116] : memref<8x8x128xf32, #tpu.memory_space<vmem>>, vector<1x8x128xf32>
    %366 = vector.shape_cast %365 : vector<1x8x128xf32> to vector<8x128xf32>
    %367 = vector.shape_cast %359 : vector<8x128xf32> to vector<1x8x128xf32>
    tpu.vector_store %arg11[%364, %c0_115, %c0_116], %367 {strides = array<i32>} : memref<8x8x128xf32, #tpu.memory_space<vmem>>, vector<1x8x128xf32>,
    %c5_i32 = arith.constant 5 : i32
    %c7_i32_117 = arith.constant 7 : i32
    %368 = arith.subi %c7_i32_117, %c5_i32 : i32
    %369 = arith.index_cast %c5_i32 : i32 to index
    %c0_118 = arith.constant 0 : index
    %c0_119 = arith.constant 0 : index
    %370 = vector.load %arg8[%369, %c0_118, %c0_119] : memref<8x8x512xf32, #tpu.memory_space<vmem>>, vector<1x8x512xf32>
    %371 = vector.shape_cast %370 : vector<1x8x512xf32> to vector<8x512xf32>
    %c0_120 = arith.constant 0 : index
    %c0_121 = arith.constant 0 : index
    %372 = vector.load %arg3[%c0_120, %c0_121] : memref<128x512xf32, #tpu.memory_space<vmem>>, vector<128x512xf32>
    %cst_122 = arith.constant dense<0.000000e+00> : vector<8x512xf32>
    %373 = tpu.matmul %328, %372, %cst_122 {dimension_numbers = #tpu.dot_dimension_numbers<[1], [0], [0], [1], [0, 0, 1, 1], [], []>} : vector<8x128xf32>, vector<128x512xf32>, vector<8x512xf32> -> vector<8x512xf32>
    %374 = arith.addf %371, %373 : vector<8x512xf32>
    %375 = vector.extract_strided_slice %374 {offsets = [0, 0], sizes = [8, 128], strides = [1, 1]} : vector<8x512xf32> to vector<8x128xf32>
    %376 = arith.negf %375 : vector<8x128xf32>
    %377 = math.exp %376 : vector<8x128xf32>
    %cst_123 = arith.constant 1.000000e+00 : f32
    %378 = vector.broadcast %cst_123 : f32 to vector<8x128xf32>
    %379 = arith.addf %378, %377 : vector<8x128xf32>
    %380 = arith.divf %378, %379 : vector<8x128xf32>
    %381 = vector.extract_strided_slice %374 {offsets = [0, 128], sizes = [8, 128], strides = [1, 1]} : vector<8x512xf32> to vector<8x128xf32>
    %382 = arith.negf %381 : vector<8x128xf32>
    %383 = math.exp %382 : vector<8x128xf32>
    %cst_124 = arith.constant 1.000000e+00 : f32
    %384 = vector.broadcast %cst_124 : f32 to vector<8x128xf32>
    %385 = arith.addf %384, %383 : vector<8x128xf32>
    %386 = arith.divf %384, %385 : vector<8x128xf32>
    %387 = vector.extract_strided_slice %374 {offsets = [0, 256], sizes = [8, 128], strides = [1, 1]} : vector<8x512xf32> to vector<8x128xf32>
    %388 = math.tanh %387 : vector<8x128xf32>
    %389 = vector.extract_strided_slice %374 {offsets = [0, 384], sizes = [8, 128], strides = [1, 1]} : vector<8x512xf32> to vector<8x128xf32>
    %390 = arith.negf %389 : vector<8x128xf32>
    %391 = math.exp %390 : vector<8x128xf32>
    %cst_125 = arith.constant 1.000000e+00 : f32
    %392 = vector.broadcast %cst_125 : f32 to vector<8x128xf32>
    %393 = arith.addf %392, %391 : vector<8x128xf32>
    %394 = arith.divf %392, %393 : vector<8x128xf32>
    %395 = arith.mulf %386, %326 : vector<8x128xf32>
    %396 = arith.mulf %380, %388 : vector<8x128xf32>
    %397 = arith.addf %395, %396 : vector<8x128xf32>
    %398 = math.tanh %397 : vector<8x128xf32>
    %399 = arith.mulf %394, %398 : vector<8x128xf32>
    %400 = arith.index_cast %368 : i32 to index
    %c0_126 = arith.constant 0 : index
    %c0_127 = arith.constant 0 : index
    %401 = vector.load %arg9[%400, %c0_126, %c0_127] : memref<8x8x512xf32, #tpu.memory_space<vmem>>, vector<1x8x512xf32>
    %402 = vector.shape_cast %401 : vector<1x8x512xf32> to vector<8x512xf32>
    %c0_128 = arith.constant 0 : index
    %c0_129 = arith.constant 0 : index
    %403 = vector.load %arg4[%c0_128, %c0_129] : memref<128x512xf32, #tpu.memory_space<vmem>>, vector<128x512xf32>
    %cst_130 = arith.constant dense<0.000000e+00> : vector<8x512xf32>
    %404 = tpu.matmul %359, %403, %cst_130 {dimension_numbers = #tpu.dot_dimension_numbers<[1], [0], [0], [1], [0, 0, 1, 1], [], []>} : vector<8x128xf32>, vector<128x512xf32>, vector<8x512xf32> -> vector<8x512xf32>
    %405 = arith.addf %402, %404 : vector<8x512xf32>
    %406 = vector.extract_strided_slice %405 {offsets = [0, 0], sizes = [8, 128], strides = [1, 1]} : vector<8x512xf32> to vector<8x128xf32>
    %407 = arith.negf %406 : vector<8x128xf32>
    %408 = math.exp %407 : vector<8x128xf32>
    %cst_131 = arith.constant 1.000000e+00 : f32
    %409 = vector.broadcast %cst_131 : f32 to vector<8x128xf32>
    %410 = arith.addf %409, %408 : vector<8x128xf32>
    %411 = arith.divf %409, %410 : vector<8x128xf32>
    %412 = vector.extract_strided_slice %405 {offsets = [0, 128], sizes = [8, 128], strides = [1, 1]} : vector<8x512xf32> to vector<8x128xf32>
    %413 = arith.negf %412 : vector<8x128xf32>
    %414 = math.exp %413 : vector<8x128xf32>
    %cst_132 = arith.constant 1.000000e+00 : f32
    %415 = vector.broadcast %cst_132 : f32 to vector<8x128xf32>
    %416 = arith.addf %415, %414 : vector<8x128xf32>
    %417 = arith.divf %415, %416 : vector<8x128xf32>
    %418 = vector.extract_strided_slice %405 {offsets = [0, 256], sizes = [8, 128], strides = [1, 1]} : vector<8x512xf32> to vector<8x128xf32>
    %419 = math.tanh %418 : vector<8x128xf32>
    %420 = vector.extract_strided_slice %405 {offsets = [0, 384], sizes = [8, 128], strides = [1, 1]} : vector<8x512xf32> to vector<8x128xf32>
    %421 = arith.negf %420 : vector<8x128xf32>
    %422 = math.exp %421 : vector<8x128xf32>
    %cst_133 = arith.constant 1.000000e+00 : f32
    %423 = vector.broadcast %cst_133 : f32 to vector<8x128xf32>
    %424 = arith.addf %423, %422 : vector<8x128xf32>
    %425 = arith.divf %423, %424 : vector<8x128xf32>
    %426 = arith.mulf %417, %357 : vector<8x128xf32>
    %427 = arith.mulf %411, %419 : vector<8x128xf32>
    %428 = arith.addf %426, %427 : vector<8x128xf32>
    %429 = math.tanh %428 : vector<8x128xf32>
    %430 = arith.mulf %425, %429 : vector<8x128xf32>
    %431 = arith.index_cast %c5_i32 : i32 to index
    %c0_134 = arith.constant 0 : index
    %c0_135 = arith.constant 0 : index
    %432 = vector.load %arg10[%431, %c0_134, %c0_135] : memref<8x8x128xf32, #tpu.memory_space<vmem>>, vector<1x8x128xf32>
    %433 = vector.shape_cast %432 : vector<1x8x128xf32> to vector<8x128xf32>
    %434 = vector.shape_cast %399 : vector<8x128xf32> to vector<1x8x128xf32>
    tpu.vector_store %arg10[%431, %c0_134, %c0_135], %434 {strides = array<i32>} : memref<8x8x128xf32, #tpu.memory_space<vmem>>, vector<1x8x128xf32>,
    %435 = arith.index_cast %368 : i32 to index
    %c0_136 = arith.constant 0 : index
    %c0_137 = arith.constant 0 : index
    %436 = vector.load %arg11[%435, %c0_136, %c0_137] : memref<8x8x128xf32, #tpu.memory_space<vmem>>, vector<1x8x128xf32>
    %437 = vector.shape_cast %436 : vector<1x8x128xf32> to vector<8x128xf32>
    %438 = vector.shape_cast %430 : vector<8x128xf32> to vector<1x8x128xf32>
    tpu.vector_store %arg11[%435, %c0_136, %c0_137], %438 {strides = array<i32>} : memref<8x8x128xf32, #tpu.memory_space<vmem>>, vector<1x8x128xf32>,
    %c6_i32 = arith.constant 6 : i32
    %c7_i32_138 = arith.constant 7 : i32
    %439 = arith.subi %c7_i32_138, %c6_i32 : i32
    %440 = arith.index_cast %c6_i32 : i32 to index
    %c0_139 = arith.constant 0 : index
    %c0_140 = arith.constant 0 : index
    %441 = vector.load %arg8[%440, %c0_139, %c0_140] : memref<8x8x512xf32, #tpu.memory_space<vmem>>, vector<1x8x512xf32>
    %442 = vector.shape_cast %441 : vector<1x8x512xf32> to vector<8x512xf32>
    %c0_141 = arith.constant 0 : index
    %c0_142 = arith.constant 0 : index
    %443 = vector.load %arg3[%c0_141, %c0_142] : memref<128x512xf32, #tpu.memory_space<vmem>>, vector<128x512xf32>
    %cst_143 = arith.constant dense<0.000000e+00> : vector<8x512xf32>
    %444 = tpu.matmul %399, %443, %cst_143 {dimension_numbers = #tpu.dot_dimension_numbers<[1], [0], [0], [1], [0, 0, 1, 1], [], []>} : vector<8x128xf32>, vector<128x512xf32>, vector<8x512xf32> -> vector<8x512xf32>
    %445 = arith.addf %442, %444 : vector<8x512xf32>
    %446 = vector.extract_strided_slice %445 {offsets = [0, 0], sizes = [8, 128], strides = [1, 1]} : vector<8x512xf32> to vector<8x128xf32>
    %447 = arith.negf %446 : vector<8x128xf32>
    %448 = math.exp %447 : vector<8x128xf32>
    %cst_144 = arith.constant 1.000000e+00 : f32
    %449 = vector.broadcast %cst_144 : f32 to vector<8x128xf32>
    %450 = arith.addf %449, %448 : vector<8x128xf32>
    %451 = arith.divf %449, %450 : vector<8x128xf32>
    %452 = vector.extract_strided_slice %445 {offsets = [0, 128], sizes = [8, 128], strides = [1, 1]} : vector<8x512xf32> to vector<8x128xf32>
    %453 = arith.negf %452 : vector<8x128xf32>
    %454 = math.exp %453 : vector<8x128xf32>
    %cst_145 = arith.constant 1.000000e+00 : f32
    %455 = vector.broadcast %cst_145 : f32 to vector<8x128xf32>
    %456 = arith.addf %455, %454 : vector<8x128xf32>
    %457 = arith.divf %455, %456 : vector<8x128xf32>
    %458 = vector.extract_strided_slice %445 {offsets = [0, 256], sizes = [8, 128], strides = [1, 1]} : vector<8x512xf32> to vector<8x128xf32>
    %459 = math.tanh %458 : vector<8x128xf32>
    %460 = vector.extract_strided_slice %445 {offsets = [0, 384], sizes = [8, 128], strides = [1, 1]} : vector<8x512xf32> to vector<8x128xf32>
    %461 = arith.negf %460 : vector<8x128xf32>
    %462 = math.exp %461 : vector<8x128xf32>
    %cst_146 = arith.constant 1.000000e+00 : f32
    %463 = vector.broadcast %cst_146 : f32 to vector<8x128xf32>
    %464 = arith.addf %463, %462 : vector<8x128xf32>
    %465 = arith.divf %463, %464 : vector<8x128xf32>
    %466 = arith.mulf %457, %397 : vector<8x128xf32>
    %467 = arith.mulf %451, %459 : vector<8x128xf32>
    %468 = arith.addf %466, %467 : vector<8x128xf32>
    %469 = math.tanh %468 : vector<8x128xf32>
    %470 = arith.mulf %465, %469 : vector<8x128xf32>
    %471 = arith.index_cast %439 : i32 to index
    %c0_147 = arith.constant 0 : index
    %c0_148 = arith.constant 0 : index
    %472 = vector.load %arg9[%471, %c0_147, %c0_148] : memref<8x8x512xf32, #tpu.memory_space<vmem>>, vector<1x8x512xf32>
    %473 = vector.shape_cast %472 : vector<1x8x512xf32> to vector<8x512xf32>
    %c0_149 = arith.constant 0 : index
    %c0_150 = arith.constant 0 : index
    %474 = vector.load %arg4[%c0_149, %c0_150] : memref<128x512xf32, #tpu.memory_space<vmem>>, vector<128x512xf32>
    %cst_151 = arith.constant dense<0.000000e+00> : vector<8x512xf32>
    %475 = tpu.matmul %430, %474, %cst_151 {dimension_numbers = #tpu.dot_dimension_numbers<[1], [0], [0], [1], [0, 0, 1, 1], [], []>} : vector<8x128xf32>, vector<128x512xf32>, vector<8x512xf32> -> vector<8x512xf32>
    %476 = arith.addf %473, %475 : vector<8x512xf32>
    %477 = vector.extract_strided_slice %476 {offsets = [0, 0], sizes = [8, 128], strides = [1, 1]} : vector<8x512xf32> to vector<8x128xf32>
    %478 = arith.negf %477 : vector<8x128xf32>
    %479 = math.exp %478 : vector<8x128xf32>
    %cst_152 = arith.constant 1.000000e+00 : f32
    %480 = vector.broadcast %cst_152 : f32 to vector<8x128xf32>
    %481 = arith.addf %480, %479 : vector<8x128xf32>
    %482 = arith.divf %480, %481 : vector<8x128xf32>
    %483 = vector.extract_strided_slice %476 {offsets = [0, 128], sizes = [8, 128], strides = [1, 1]} : vector<8x512xf32> to vector<8x128xf32>
    %484 = arith.negf %483 : vector<8x128xf32>
    %485 = math.exp %484 : vector<8x128xf32>
    %cst_153 = arith.constant 1.000000e+00 : f32
    %486 = vector.broadcast %cst_153 : f32 to vector<8x128xf32>
    %487 = arith.addf %486, %485 : vector<8x128xf32>
    %488 = arith.divf %486, %487 : vector<8x128xf32>
    %489 = vector.extract_strided_slice %476 {offsets = [0, 256], sizes = [8, 128], strides = [1, 1]} : vector<8x512xf32> to vector<8x128xf32>
    %490 = math.tanh %489 : vector<8x128xf32>
    %491 = vector.extract_strided_slice %476 {offsets = [0, 384], sizes = [8, 128], strides = [1, 1]} : vector<8x512xf32> to vector<8x128xf32>
    %492 = arith.negf %491 : vector<8x128xf32>
    %493 = math.exp %492 : vector<8x128xf32>
    %cst_154 = arith.constant 1.000000e+00 : f32
    %494 = vector.broadcast %cst_154 : f32 to vector<8x128xf32>
    %495 = arith.addf %494, %493 : vector<8x128xf32>
    %496 = arith.divf %494, %495 : vector<8x128xf32>
    %497 = arith.mulf %488, %428 : vector<8x128xf32>
    %498 = arith.mulf %482, %490 : vector<8x128xf32>
    %499 = arith.addf %497, %498 : vector<8x128xf32>
    %500 = math.tanh %499 : vector<8x128xf32>
    %501 = arith.mulf %496, %500 : vector<8x128xf32>
    %502 = arith.index_cast %c6_i32 : i32 to index
    %c0_155 = arith.constant 0 : index
    %c0_156 = arith.constant 0 : index
    %503 = vector.load %arg10[%502, %c0_155, %c0_156] : memref<8x8x128xf32, #tpu.memory_space<vmem>>, vector<1x8x128xf32>
    %504 = vector.shape_cast %503 : vector<1x8x128xf32> to vector<8x128xf32>
    %505 = vector.shape_cast %470 : vector<8x128xf32> to vector<1x8x128xf32>
    tpu.vector_store %arg10[%502, %c0_155, %c0_156], %505 {strides = array<i32>} : memref<8x8x128xf32, #tpu.memory_space<vmem>>, vector<1x8x128xf32>,
    %506 = arith.index_cast %439 : i32 to index
    %c0_157 = arith.constant 0 : index
    %c0_158 = arith.constant 0 : index
    %507 = vector.load %arg11[%506, %c0_157, %c0_158] : memref<8x8x128xf32, #tpu.memory_space<vmem>>, vector<1x8x128xf32>
    %508 = vector.shape_cast %507 : vector<1x8x128xf32> to vector<8x128xf32>
    %509 = vector.shape_cast %501 : vector<8x128xf32> to vector<1x8x128xf32>
    tpu.vector_store %arg11[%506, %c0_157, %c0_158], %509 {strides = array<i32>} : memref<8x8x128xf32, #tpu.memory_space<vmem>>, vector<1x8x128xf32>,
    %c7_i32_159 = arith.constant 7 : i32
    %c7_i32_160 = arith.constant 7 : i32
    %510 = arith.subi %c7_i32_160, %c7_i32_159 : i32
    %511 = arith.index_cast %c7_i32_159 : i32 to index
    %c0_161 = arith.constant 0 : index
    %c0_162 = arith.constant 0 : index
    %512 = vector.load %arg8[%511, %c0_161, %c0_162] : memref<8x8x512xf32, #tpu.memory_space<vmem>>, vector<1x8x512xf32>
    %513 = vector.shape_cast %512 : vector<1x8x512xf32> to vector<8x512xf32>
    %c0_163 = arith.constant 0 : index
    %c0_164 = arith.constant 0 : index
    %514 = vector.load %arg3[%c0_163, %c0_164] : memref<128x512xf32, #tpu.memory_space<vmem>>, vector<128x512xf32>
    %cst_165 = arith.constant dense<0.000000e+00> : vector<8x512xf32>
    %515 = tpu.matmul %470, %514, %cst_165 {dimension_numbers = #tpu.dot_dimension_numbers<[1], [0], [0], [1], [0, 0, 1, 1], [], []>} : vector<8x128xf32>, vector<128x512xf32>, vector<8x512xf32> -> vector<8x512xf32>
    %516 = arith.addf %513, %515 : vector<8x512xf32>
    %517 = vector.extract_strided_slice %516 {offsets = [0, 0], sizes = [8, 128], strides = [1, 1]} : vector<8x512xf32> to vector<8x128xf32>
    %518 = arith.negf %517 : vector<8x128xf32>
    %519 = math.exp %518 : vector<8x128xf32>
    %cst_166 = arith.constant 1.000000e+00 : f32
    %520 = vector.broadcast %cst_166 : f32 to vector<8x128xf32>
    %521 = arith.addf %520, %519 : vector<8x128xf32>
    %522 = arith.divf %520, %521 : vector<8x128xf32>
    %523 = vector.extract_strided_slice %516 {offsets = [0, 128], sizes = [8, 128], strides = [1, 1]} : vector<8x512xf32> to vector<8x128xf32>
    %524 = arith.negf %523 : vector<8x128xf32>
    %525 = math.exp %524 : vector<8x128xf32>
    %cst_167 = arith.constant 1.000000e+00 : f32
    %526 = vector.broadcast %cst_167 : f32 to vector<8x128xf32>
    %527 = arith.addf %526, %525 : vector<8x128xf32>
    %528 = arith.divf %526, %527 : vector<8x128xf32>
    %529 = vector.extract_strided_slice %516 {offsets = [0, 256], sizes = [8, 128], strides = [1, 1]} : vector<8x512xf32> to vector<8x128xf32>
    %530 = math.tanh %529 : vector<8x128xf32>
    %531 = vector.extract_strided_slice %516 {offsets = [0, 384], sizes = [8, 128], strides = [1, 1]} : vector<8x512xf32> to vector<8x128xf32>
    %532 = arith.negf %531 : vector<8x128xf32>
    %533 = math.exp %532 : vector<8x128xf32>
    %cst_168 = arith.constant 1.000000e+00 : f32
    %534 = vector.broadcast %cst_168 : f32 to vector<8x128xf32>
    %535 = arith.addf %534, %533 : vector<8x128xf32>
    %536 = arith.divf %534, %535 : vector<8x128xf32>
    %537 = arith.mulf %528, %468 : vector<8x128xf32>
    %538 = arith.mulf %522, %530 : vector<8x128xf32>
    %539 = arith.addf %537, %538 : vector<8x128xf32>
    %540 = math.tanh %539 : vector<8x128xf32>
    %541 = arith.mulf %536, %540 : vector<8x128xf32>
    %542 = arith.index_cast %510 : i32 to index
    %c0_169 = arith.constant 0 : index
    %c0_170 = arith.constant 0 : index
    %543 = vector.load %arg9[%542, %c0_169, %c0_170] : memref<8x8x512xf32, #tpu.memory_space<vmem>>, vector<1x8x512xf32>
    %544 = vector.shape_cast %543 : vector<1x8x512xf32> to vector<8x512xf32>
    %c0_171 = arith.constant 0 : index
    %c0_172 = arith.constant 0 : index
    %545 = vector.load %arg4[%c0_171, %c0_172] : memref<128x512xf32, #tpu.memory_space<vmem>>, vector<128x512xf32>
    %cst_173 = arith.constant dense<0.000000e+00> : vector<8x512xf32>
    %546 = tpu.matmul %501, %545, %cst_173 {dimension_numbers = #tpu.dot_dimension_numbers<[1], [0], [0], [1], [0, 0, 1, 1], [], []>} : vector<8x128xf32>, vector<128x512xf32>, vector<8x512xf32> -> vector<8x512xf32>
    %547 = arith.addf %544, %546 : vector<8x512xf32>
    %548 = vector.extract_strided_slice %547 {offsets = [0, 0], sizes = [8, 128], strides = [1, 1]} : vector<8x512xf32> to vector<8x128xf32>
    %549 = arith.negf %548 : vector<8x128xf32>
    %550 = math.exp %549 : vector<8x128xf32>
    %cst_174 = arith.constant 1.000000e+00 : f32
    %551 = vector.broadcast %cst_174 : f32 to vector<8x128xf32>
    %552 = arith.addf %551, %550 : vector<8x128xf32>
    %553 = arith.divf %551, %552 : vector<8x128xf32>
    %554 = vector.extract_strided_slice %547 {offsets = [0, 128], sizes = [8, 128], strides = [1, 1]} : vector<8x512xf32> to vector<8x128xf32>
    %555 = arith.negf %554 : vector<8x128xf32>
    %556 = math.exp %555 : vector<8x128xf32>
    %cst_175 = arith.constant 1.000000e+00 : f32
    %557 = vector.broadcast %cst_175 : f32 to vector<8x128xf32>
    %558 = arith.addf %557, %556 : vector<8x128xf32>
    %559 = arith.divf %557, %558 : vector<8x128xf32>
    %560 = vector.extract_strided_slice %547 {offsets = [0, 256], sizes = [8, 128], strides = [1, 1]} : vector<8x512xf32> to vector<8x128xf32>
    %561 = math.tanh %560 : vector<8x128xf32>
    %562 = vector.extract_strided_slice %547 {offsets = [0, 384], sizes = [8, 128], strides = [1, 1]} : vector<8x512xf32> to vector<8x128xf32>
    %563 = arith.negf %562 : vector<8x128xf32>
    %564 = math.exp %563 : vector<8x128xf32>
    %cst_176 = arith.constant 1.000000e+00 : f32
    %565 = vector.broadcast %cst_176 : f32 to vector<8x128xf32>
    %566 = arith.addf %565, %564 : vector<8x128xf32>
    %567 = arith.divf %565, %566 : vector<8x128xf32>
    %568 = arith.mulf %559, %499 : vector<8x128xf32>
    %569 = arith.mulf %553, %561 : vector<8x128xf32>
    %570 = arith.addf %568, %569 : vector<8x128xf32>
    %571 = math.tanh %570 : vector<8x128xf32>
    %572 = arith.mulf %567, %571 : vector<8x128xf32>
    %573 = arith.index_cast %c7_i32_159 : i32 to index
    %c0_177 = arith.constant 0 : index
    %c0_178 = arith.constant 0 : index
    %574 = vector.load %arg10[%573, %c0_177, %c0_178] : memref<8x8x128xf32, #tpu.memory_space<vmem>>, vector<1x8x128xf32>
    %575 = vector.shape_cast %574 : vector<1x8x128xf32> to vector<8x128xf32>
    %576 = vector.shape_cast %541 : vector<8x128xf32> to vector<1x8x128xf32>
    tpu.vector_store %arg10[%573, %c0_177, %c0_178], %576 {strides = array<i32>} : memref<8x8x128xf32, #tpu.memory_space<vmem>>, vector<1x8x128xf32>,
    %577 = arith.index_cast %510 : i32 to index
    %c0_179 = arith.constant 0 : index
    %c0_180 = arith.constant 0 : index
    %578 = vector.load %arg11[%577, %c0_179, %c0_180] : memref<8x8x128xf32, #tpu.memory_space<vmem>>, vector<1x8x128xf32>
    %579 = vector.shape_cast %578 : vector<1x8x128xf32> to vector<8x128xf32>
    %580 = vector.shape_cast %572 : vector<8x128xf32> to vector<1x8x128xf32>
    tpu.vector_store %arg11[%577, %c0_179, %c0_180], %580 {strides = array<i32>} : memref<8x8x128xf32, #tpu.memory_space<vmem>>, vector<1x8x128xf32>,
    %c8_i32 = arith.constant 8 : i32
    %581 = tpu.iota {dimensions = array<i32: 0>} : vector<8x8x128xi32>
    %582 = arith.sitofp %581 : vector<8x8x128xi32> to vector<8x8x128xf32>
    %cst_181 = arith.constant 0.142857149 : f32
    %583 = vector.broadcast %cst_181 : f32 to vector<8x8x128xf32>
    %584 = arith.mulf %582, %583 : vector<8x8x128xf32>
    %c0_182 = arith.constant 0 : index
    %c0_183 = arith.constant 0 : index
    %c0_184 = arith.constant 0 : index
    %585 = vector.load %arg10[%c0_182, %c0_183, %c0_184] : memref<8x8x128xf32, #tpu.memory_space<vmem>>, vector<8x8x128xf32>
    %586 = arith.mulf %585, %584 : vector<8x8x128xf32>
    %587 = vector.shape_cast %586 : vector<8x8x128xf32> to vector<64x128xf32>
    %c0_185 = arith.constant 0 : index
    %c0_186 = arith.constant 0 : index
    %c0_187 = arith.constant 0 : index
    %588 = vector.load %arg11[%c0_185, %c0_186, %c0_187] : memref<8x8x128xf32, #tpu.memory_space<vmem>>, vector<8x8x128xf32>
    %cst_188 = arith.constant 1.000000e+00 : f32
    %589 = vector.broadcast %cst_188 : f32 to vector<8x8x128xf32>
    %590 = arith.subf %589, %584 : vector<8x8x128xf32>
    %591 = arith.mulf %588, %590 : vector<8x8x128xf32>
    %592 = vector.shape_cast %591 : vector<8x8x128xf32> to vector<64x128xf32>
    %c0_189 = arith.constant 0 : index
    %c0_190 = arith.constant 0 : index
    %593 = vector.load %arg5[%c0_189, %c0_190] : memref<128x128xf32, #tpu.memory_space<vmem>>, vector<128x128xf32>
    %cst_191 = arith.constant dense<0.000000e+00> : vector<64x128xf32>
    %594 = tpu.matmul %587, %593, %cst_191 {dimension_numbers = #tpu.dot_dimension_numbers<[1], [0], [0], [1], [0, 0, 1, 1], [], []>} : vector<64x128xf32>, vector<128x128xf32>, vector<64x128xf32> -> vector<64x128xf32>
    %c0_192 = arith.constant 0 : index
    %c0_193 = arith.constant 0 : index
    %595 = vector.load %arg6[%c0_192, %c0_193] : memref<128x128xf32, #tpu.memory_space<vmem>>, vector<128x128xf32>
    %cst_194 = arith.constant dense<0.000000e+00> : vector<64x128xf32>
    %596 = tpu.matmul %592, %595, %cst_194 {dimension_numbers = #tpu.dot_dimension_numbers<[1], [0], [0], [1], [0, 0, 1, 1], [], []>} : vector<64x128xf32>, vector<128x128xf32>, vector<64x128xf32> -> vector<64x128xf32>
    %597 = arith.addf %594, %596 : vector<64x128xf32>
    %cst_195 = arith.constant 0.000000e+00 : f32
    %598 = vector.broadcast %cst_195 : f32 to vector<64x128xf32>
    %599 = arith.addf %597, %598 : vector<64x128xf32>
    %600 = vector.shape_cast %599 : vector<64x128xf32> to vector<8x8x128xf32>
    %c0_196 = arith.constant 0 : index
    %c0_197 = arith.constant 0 : index
    %c0_198 = arith.constant 0 : index
    %601 = vector.load %arg7[%c0_196, %c0_197, %c0_198] : memref<8x8x128xf32, #tpu.memory_space<vmem>>, vector<8x8x128xf32>
    tpu.vector_store %arg7[%c0_196, %c0_197, %c0_198], %600 {strides = array<i32>} : memref<8x8x128xf32, #tpu.memory_space<vmem>>, vector<8x8x128xf32>,
    return
  }
}

</mosaic_0001>

<llo_original>
// kernel: run.1
$region0: #{run.1}
  #allocation0 [shape = 'u32[]', space=smem, size = 0x4, offset = 0x4, fixed_abs, tag = 'smem constant byte address 0x4 - core index']
  #allocation1 [shape = 'u32[144,128]{1,0:T(1,128)}', space=vmem, size = 0x12000, scoped, tag = 'internal scratch']
  #allocation2 [shape = 'f32[8,8,512]{2,1,0:T(8,128)}', space=vmem, size = 0x20000, scoped, tag = 'scratch operand']
  #allocation3 [shape = 'f32[8,8,512]{2,1,0:T(8,128)}', space=vmem, size = 0x20000, scoped, tag = 'scratch operand']
  #allocation4 [shape = 'f32[8,8,128]{2,1,0:T(8,128)}', space=vmem, size = 0x8000, scoped, tag = 'scratch operand']
  #allocation5 [shape = 'f32[8,8,128]{2,1,0:T(8,128)}', space=vmem, size = 0x8000, scoped, tag = 'scratch operand']
  %s0 = inlined_call_operand.vmem [shape: f32[8,8,32], index: 0, kind: input, shape index: {}]
  %s1 = inlined_call_operand.hbm [shape: f32[32,1024], index: 1, kind: input, shape index: {}]
  %s2 = inlined_call_operand.vmem [shape: f32[1,1024], index: 2, kind: input, shape index: {}]
  %s3 = inlined_call_operand.hbm [shape: f32[128,512], index: 3, kind: input, shape index: {}]
  %s4 = inlined_call_operand.hbm [shape: f32[128,512], index: 4, kind: input, shape index: {}]
  %s5 = inlined_call_operand.hbm [shape: f32[128,128], index: 5, kind: input, shape index: {}]
  %s6 = inlined_call_operand.hbm [shape: f32[128,128], index: 6, kind: input, shape index: {}]
  %s7 = inlined_call_operand.vmem [shape: f32[8,8,128], index: 7, kind: output, shape index: {}]
  %s8 = sld [smem:[#allocation0]]
  $region58: #{run.1} parent=0
    _
  %s10 = ssub.s32 1, %s8
  %s11 = scalar_select 0, %s10, %s8
  $region1: #{run.1} parent=0
    #allocation6 [shape = 'u8[131072]{0}', space=vmem, size = 0x20000, scoped, tag = 'input window, operand 1, single buffered']
    #allocation7 [shape = 's32[1]{0}', space=sflag, size = 0x4, scoped, tag = 'scoped memory for run.1']
    #allocation8 [shape = 'u8[262144]{0}', space=vmem, size = 0x40000, scoped, tag = 'input window, operand 3, single buffered']
    #allocation9 [shape = 's32[1]{0}', space=sflag, size = 0x4, scoped, tag = 'scoped memory for run.1']
    #allocation10 [shape = 'u8[262144]{0}', space=vmem, size = 0x40000, scoped, tag = 'input window, operand 4, single buffered']
    #allocation11 [shape = 'u8[65536]{0}', space=vmem, size = 0x10000, scoped, tag = 'input window, operand 5, single buffered']
    #allocation12 [shape = 's32[1]{0}', space=sflag, size = 0x4, scoped, tag = 'scoped memory for run.1']
    #allocation13 [shape = 'u8[65536]{0}', space=vmem, size = 0x10000, scoped, tag = 'input window, operand 6, single buffered']
    %12 = vsyncpa [#allocation7], 0
    %13 = vsyncpa [#allocation9], 0
    %14 = vsyncpa [#allocation12], 0
    // Predicated region
    $region2: #{run.1} parent=1 // pred_check
      _
    $region3: #{run.1} parent=1 // pred_check_branch
      %16 = sbr.rel (0) target = $region5
    $region4: #{run.1} parent=1 // pred_region
      _
    $region5: #{run.1} parent=1 // pred_fallthru
      _
    // Predicated region
    $region6: #{run.1} parent=1 // pred_check
      _
    $region7: #{run.1} parent=1 // pred_check_branch
      %18 = sbr.rel (0) target = $region9
    $region8: #{run.1} parent=1 // pred_region
      %s20 = ssub.s32 4096, 4096
      %21 = vsyncadd [#allocation7], %s20
      %s22 = sshll.u32 [#allocation6], 4
      %s23 = int_to_ptr.vmem [resolvable:$true] %s22
      %28 = dma.hbm_to_vmem [thread:$0]  %s1, 4096, %s23, [#allocation7], 1024, 1024, 64
    $region9: #{run.1} parent=1 // pred_fallthru
      _
    // Predicated region
    $region10: #{run.1} parent=1 // pred_check
      _
    $region11: #{run.1} parent=1 // pred_check_branch
      %30 = sbr.rel (0) target = $region13
    $region12: #{run.1} parent=1 // pred_region
      _
    $region13: #{run.1} parent=1 // pred_fallthru
      _
    // Predicated region
    $region14: #{run.1} parent=1 // pred_check
      _
    $region15: #{run.1} parent=1 // pred_check_branch
      %32 = sbr.rel (0) target = $region17
    $region16: #{run.1} parent=1 // pred_region
      %s34 = ssub.s32 8192, 8192
      %35 = vsyncadd [#allocation9], %s34
      %s36 = sshll.u32 [#allocation8], 4
      %s37 = int_to_ptr.vmem [resolvable:$true] %s36
      %42 = dma.hbm_to_vmem [thread:$0]  %s3, 8192, %s37, [#allocation9], 512, 512, 32
    $region17: #{run.1} parent=1 // pred_fallthru
      _
    // Predicated region
    $region18: #{run.1} parent=1 // pred_check
      _
    $region19: #{run.1} parent=1 // pred_check_branch
      %44 = sbr.rel (0) target = $region21
    $region20: #{run.1} parent=1 // pred_region
      %s46 = ssub.s32 8192, 8192
      %47 = vsyncadd [#allocation9], %s46
      %s48 = sshll.u32 [#allocation10], 4
      %s49 = int_to_ptr.vmem [resolvable:$true] %s48
      %54 = dma.hbm_to_vmem [thread:$0]  %s4, 8192, %s49, [#allocation9], 512, 512, 32
    $region21: #{run.1} parent=1 // pred_fallthru
      _
    // Predicated region
    $region22: #{run.1} parent=1 // pred_check
      _
    $region23: #{run.1} parent=1 // pred_check_branch
      %56 = sbr.rel (0) target = $region25
    $region24: #{run.1} parent=1 // pred_region
      %s58 = ssub.s32 2048, 2048
      %59 = vsyncadd [#allocation12], %s58
      %s60 = sshll.u32 [#allocation11], 4
      %s61 = int_to_ptr.vmem [resolvable:$true] %s60
      %66 = dma.hbm_to_vmem [thread:$0]  %s5, 2048, %s61, [#allocation12], 128, 128, 8
    $region25: #{run.1} parent=1 // pred_fallthru
      _
    // Predicated region
    $region26: #{run.1} parent=1 // pred_check
      _
    $region27: #{run.1} parent=1 // pred_check_branch
      %68 = sbr.rel (0) target = $region29
    $region28: #{run.1} parent=1 // pred_region
      %s70 = ssub.s32 2048, 2048
      %71 = vsyncadd [#allocation12], %s70
      %s72 = sshll.u32 [#allocation13], 4
      %s73 = int_to_ptr.vmem [resolvable:$true] %s72
      %78 = dma.hbm_to_vmem [thread:$0]  %s6, 2048, %s73, [#allocation12], 128, 128, 8
    $region29: #{run.1} parent=1 // pred_fallthru
      _
    // Predicated region
    $region30: #{run.1} parent=1 // pred_check
      _
    $region31: #{run.1} parent=1 // pred_check_branch
      %80 = sbr.rel (0) target = $region33
    $region32: #{run.1} parent=1 // pred_region
      %81 = dma.done [#allocation7], 4096
    $region33: #{run.1} parent=1 // pred_fallthru
      _
    // Predicated region
    $region34: #{run.1} parent=1 // pred_check
      _
    $region35: #{run.1} parent=1 // pred_check_branch
      %83 = sbr.rel (0) target = $region37
    $region36: #{run.1} parent=1 // pred_region
      %84 = dma.done [#allocation9], 8192
    $region37: #{run.1} parent=1 // pred_fallthru
      _
    // Predicated region
    $region38: #{run.1} parent=1 // pred_check
      _
    $region39: #{run.1} parent=1 // pred_check_branch
      %86 = sbr.rel (0) target = $region41
    $region40: #{run.1} parent=1 // pred_region
      %87 = dma.done [#allocation9], 8192
    $region41: #{run.1} parent=1 // pred_fallthru
      _
    // Predicated region
    $region42: #{run.1} parent=1 // pred_check
      _
    $region43: #{run.1} parent=1 // pred_check_branch
      %89 = sbr.rel (0) target = $region45
    $region44: #{run.1} parent=1 // pred_region
      %90 = dma.done [#allocation12], 2048
    $region45: #{run.1} parent=1 // pred_fallthru
      _
    // Predicated region
    $region46: #{run.1} parent=1 // pred_check
      _
    $region47: #{run.1} parent=1 // pred_check_branch
      %92 = sbr.rel (0) target = $region49
    $region48: #{run.1} parent=1 // pred_region
      %93 = dma.done [#allocation12], 2048
    $region49: #{run.1} parent=1 // pred_fallthru
      _
    %v94 = vld [vmem:[%s0] sm:$0xff]
    %v95 = vld [vmem:[%s0 + $0x8] sm:$0xff]
    %v96 = vld [vmem:[%s0 + $0x10] sm:$0xff]
    %v97 = vld [vmem:[%s0 + $0x18] sm:$0xff]
    %v98 = vld [vmem:[%s0 + $0x20] sm:$0xff]
    %v99 = vld [vmem:[%s0 + $0x28] sm:$0xff]
    %v100 = vld [vmem:[%s0 + $0x30] sm:$0xff]
    %v101 = vld [vmem:[%s0 + $0x38] sm:$0xff]
    %v102 = vld [vmem:[#allocation6] sm:$0xff]
    %v103 = vld [vmem:[#allocation6 + $0x8] sm:$0xff]
    %v104 = vld [vmem:[#allocation6 + $0x10] sm:$0xff]
    %v105 = vld [vmem:[#allocation6 + $0x18] sm:$0xff]
    %v106 = vld [vmem:[#allocation6 + $0x20] sm:$0xff]
    %v107 = vld [vmem:[#allocation6 + $0x28] sm:$0xff]
    %v108 = vld [vmem:[#allocation6 + $0x30] sm:$0xff]
    %v109 = vld [vmem:[#allocation6 + $0x38] sm:$0xff]
    %v110 = vld [vmem:[#allocation6 + $0x40] sm:$0xff]
    %v111 = vld [vmem:[#allocation6 + $0x48] sm:$0xff]
    %v112 = vld [vmem:[#allocation6 + $0x50] sm:$0xff]
    %v113 = vld [vmem:[#allocation6 + $0x58] sm:$0xff]
    %v114 = vld [vmem:[#allocation6 + $0x60] sm:$0xff]
    %v115 = vld [vmem:[#allocation6 + $0x68] sm:$0xff]
    %v116 = vld [vmem:[#allocation6 + $0x70] sm:$0xff]
    %v117 = vld [vmem:[#allocation6 + $0x78] sm:$0xff]
    %v118 = vld [vmem:[#allocation6 + $0x80] sm:$0xff]
    %v119 = vld [vmem:[#allocation6 + $0x88] sm:$0xff]
    %v120 = vld [vmem:[#allocation6 + $0x90] sm:$0xff]
    %v121 = vld [vmem:[#allocation6 + $0x98] sm:$0xff]
    %v122 = vld [vmem:[#allocation6 + $0xa0] sm:$0xff]
    %v123 = vld [vmem:[#allocation6 + $0xa8] sm:$0xff]
    %v124 = vld [vmem:[#allocation6 + $0xb0] sm:$0xff]
    %v125 = vld [vmem:[#allocation6 + $0xb8] sm:$0xff]
    %v126 = vld [vmem:[#allocation6 + $0xc0] sm:$0xff]
    %v127 = vld [vmem:[#allocation6 + $0xc8] sm:$0xff]
    %v128 = vld [vmem:[#allocation6 + $0xd0] sm:$0xff]
    %v129 = vld [vmem:[#allocation6 + $0xd8] sm:$0xff]
    %v130 = vld [vmem:[#allocation6 + $0xe0] sm:$0xff]
    %v131 = vld [vmem:[#allocation6 + $0xe8] sm:$0xff]
    %v132 = vld [vmem:[#allocation6 + $0xf0] sm:$0xff]
    %v133 = vld [vmem:[#allocation6 + $0xf8] sm:$0xff]
    %v134 = vld [vmem:[%s2] sm:$0xff]
    %v136 = vlaneseq
    %v137 = vshrl.u32 %v136, 7
    %v138 = vsub.s32 0, %v137
    %v139 = vrot.slane %v134, %v138
    %v140 = vlaneseq
    %v141 = vshrl.u32 %v140, 7
    %v142 = vsub.s32 1, %v141
    %v143 = vrot.slane %v134, %v142
    %v144 = vlaneseq
    %v145 = vshrl.u32 %v144, 7
    %v146 = vsub.s32 2, %v145
    %v147 = vrot.slane %v134, %v146
    %v148 = vlaneseq
    %v149 = vshrl.u32 %v148, 7
    %v150 = vsub.s32 3, %v149
    %v151 = vrot.slane %v134, %v150
    %v152 = vlaneseq
    %v153 = vshrl.u32 %v152, 7
    %v154 = vsub.s32 4, %v153
    %v155 = vrot.slane %v134, %v154
    %v156 = vlaneseq
    %v157 = vshrl.u32 %v156, 7
    %v158 = vsub.s32 5, %v157
    %v159 = vrot.slane %v134, %v158
    %v160 = vlaneseq
    %v161 = vshrl.u32 %v160, 7
    %v162 = vsub.s32 6, %v161
    %v163 = vrot.slane %v134, %v162
    %v164 = vlaneseq
    %v165 = vshrl.u32 %v164, 7
    %v166 = vsub.s32 7, %v165
    %v167 = vrot.slane %v134, %v166
    %vm176 = vcmask 261120
    %v178 = vsel %vm176, %v94, 0
    %v181 = vsel %vm176, %v95, 0
    %v184 = vsel %vm176, %v96, 0
    %v187 = vsel %vm176, %v97, 0
    %v190 = vsel %vm176, %v98, 0
    %v193 = vsel %vm176, %v99, 0
    %v196 = vsel %vm176, %v100, 0
    %v199 = vsel %vm176, %v101, 0
    %201 = vmatprep.subr.mxu0 0.0
    %202 = vmatpush1.msra.mxu0 0.0
    %203 = vmatprep.subr.mxu0 0.0
    %204 = vmatpush1.msra.mxu0 0.0
    %205 = vmatprep.subr.mxu0 0.0
    %206 = vmatpush1.msra.mxu0 0.0
    %207 = vmatprep.subr.mxu0 0.0
    %208 = vmatpush1.msra.mxu0 0.0
    %209 = vmatprep.subr.mxu0 0.0
    %210 = vmatpush1.msra.mxu0 0.0
    %211 = vmatprep.subr.mxu0 0.0
    %212 = vmatpush1.msra.mxu0 0.0
    %213 = vmatprep.subr.mxu0 0.0
    %214 = vmatpush1.msra.mxu0 0.0
    %215 = vmatprep.subr.mxu0 0.0
    %216 = vmatpush1.msra.mxu0 0.0
    %217 = vmatprep.subr.mxu0 0.0
    %218 = vmatpush1.msra.mxu0 0.0
    %219 = vmatprep.subr.mxu0 0.0
    %220 = vmatpush1.msra.mxu0 0.0
    %221 = vmatprep.subr.mxu0 0.0
    %222 = vmatpush1.msra.mxu0 0.0
    %223 = vmatprep.subr.mxu0 0.0
    %224 = vmatpush1.msra.mxu0 0.0
    %225 = vmatprep.subr.mxu0 %v127
    %226 = vmatpush1.msra.mxu0 %v126
    %227 = vmatprep.subr.mxu0 %v119
    %228 = vmatpush1.msra.mxu0 %v118
    %229 = vmatprep.subr.mxu0 %v111
    %230 = vmatpush1.msra.mxu0 %v110
    %231 = vmatprep.subr.mxu0 %v103
    %232 = vmatpush1.msra.mxu0 %v102
    %233 = vmatprep.subr.mxu0 0.0
    %234 = vmatpush2.msra.mxu0 0.0
    %235 = vmatprep.subr.mxu0 0.0
    %236 = vmatpush2.msra.mxu0 0.0
    %237 = vmatprep.subr.mxu0 0.0
    %238 = vmatpush2.msra.mxu0 0.0
    %239 = vmatprep.subr.mxu0 0.0
    %240 = vmatpush2.msra.mxu0 0.0
    %241 = vmatprep.subr.mxu0 0.0
    %242 = vmatpush2.msra.mxu0 0.0
    %243 = vmatprep.subr.mxu0 0.0
    %244 = vmatpush2.msra.mxu0 0.0
    %245 = vmatprep.subr.mxu0 0.0
    %246 = vmatpush2.msra.mxu0 0.0
    %247 = vmatprep.subr.mxu0 0.0
    %248 = vmatpush2.msra.mxu0 0.0
    %249 = vmatprep.subr.mxu0 0.0
    %250 = vmatpush2.msra.mxu0 0.0
    %251 = vmatprep.subr.mxu0 0.0
    %252 = vmatpush2.msra.mxu0 0.0
    %253 = vmatprep.subr.mxu0 0.0
    %254 = vmatpush2.msra.mxu0 0.0
    %255 = vmatprep.subr.mxu0 0.0
    %256 = vmatpush2.msra.mxu0 0.0
    %257 = vmatprep.subr.mxu0 0.0
    %258 = vmatpush2.msra.mxu0 0.0
    %259 = vmatprep.subr.mxu0 0.0
    %260 = vmatpush2.msra.mxu0 0.0
    %261 = vmatprep.subr.mxu0 0.0
    %262 = vmatpush2.msra.mxu0 0.0
    %263 = vmatprep.subr.mxu0 0.0
    %264 = vmatpush2.msra.mxu0 0.0
    %265 = vmatprep.mubr.f32.mxu0 0.0
    %266 = vmatmul.mubr.f32.gmra.mxu0 %v178
    %v267 = vpop.f32.mrf.mxu0
    %v268 = vadd.f32 %v139, %v267
    %v269 = vpop.f32.mrf.mxu0
    %v270 = vadd.f32 %v143, %v269
    %271 = vmatprep.mubr.f32.mxu0 0.0
    %272 = vmatmul.mubr.f32.gmra.mxu0 %v181
    %v273 = vpop.f32.mrf.mxu0
    %v274 = vadd.f32 %v139, %v273
    %v275 = vpop.f32.mrf.mxu0
    %v276 = vadd.f32 %v143, %v275
    %277 = vmatprep.mubr.f32.mxu0 0.0
    %278 = vmatmul.mubr.f32.gmra.mxu0 %v184
    %v279 = vpop.f32.mrf.mxu0
    %v280 = vadd.f32 %v139, %v279
    %v281 = vpop.f32.mrf.mxu0
    %v282 = vadd.f32 %v143, %v281
    %283 = vmatprep.mubr.f32.mxu0 0.0
    %284 = vmatmul.mubr.f32.gmra.mxu0 %v187
    %v285 = vpop.f32.mrf.mxu0
    %v286 = vadd.f32 %v139, %v285
    %v287 = vpop.f32.mrf.mxu0
    %v288 = vadd.f32 %v143, %v287
    %289 = vmatprep.mubr.f32.mxu0 0.0
    %290 = vmatmul.mubr.f32.gmra.mxu0 %v190
    %v291 = vpop.f32.mrf.mxu0
    %v292 = vadd.f32 %v139, %v291
    %v293 = vpop.f32.mrf.mxu0
    %v294 = vadd.f32 %v143, %v293
    %295 = vmatprep.mubr.f32.mxu0 0.0
    %296 = vmatmul.mubr.f32.gmra.mxu0 %v193
    %v297 = vpop.f32.mrf.mxu0
    %v298 = vadd.f32 %v139, %v297
    %v299 = vpop.f32.mrf.mxu0
    %v300 = vadd.f32 %v143, %v299
    %301 = vmatprep.mubr.f32.mxu0 0.0
    %302 = vmatmul.mubr.f32.gmra.mxu0 %v196
    %v303 = vpop.f32.mrf.mxu0
    %v304 = vadd.f32 %v139, %v303
    %v305 = vpop.f32.mrf.mxu0
    %v306 = vadd.f32 %v143, %v305
    %307 = vmatprep.mubr.f32.mxu0 0.0
    %308 = vmatmul.mubr.f32.gmra.mxu0 %v199
    %v309 = vpop.f32.mrf.mxu0
    %v310 = vadd.f32 %v139, %v309
    %v311 = vpop.f32.mrf.mxu0
    %v312 = vadd.f32 %v143, %v311
    %313 = vdwg.mxu0
    %314 = vmatprep.subr.mxu0 0.0
    %315 = vmatpush1.msra.mxu0 0.0
    %316 = vmatprep.subr.mxu0 0.0
    %317 = vmatpush1.msra.mxu0 0.0
    %318 = vmatprep.subr.mxu0 0.0
    %319 = vmatpush1.msra.mxu0 0.0
    %320 = vmatprep.subr.mxu0 0.0
    %321 = vmatpush1.msra.mxu0 0.0
    %322 = vmatprep.subr.mxu0 0.0
    %323 = vmatpush1.msra.mxu0 0.0
    %324 = vmatprep.subr.mxu0 0.0
    %325 = vmatpush1.msra.mxu0 0.0
    %326 = vmatprep.subr.mxu0 0.0
    %327 = vmatpush1.msra.mxu0 0.0
    %328 = vmatprep.subr.mxu0 0.0
    %329 = vmatpush1.msra.mxu0 0.0
    %330 = vmatprep.subr.mxu0 0.0
    %331 = vmatpush1.msra.mxu0 0.0
    %332 = vmatprep.subr.mxu0 0.0
    %333 = vmatpush1.msra.mxu0 0.0
    %334 = vmatprep.subr.mxu0 0.0
    %335 = vmatpush1.msra.mxu0 0.0
    %336 = vmatprep.subr.mxu0 0.0
    %337 = vmatpush1.msra.mxu0 0.0
    %338 = vmatprep.subr.mxu0 %v129
    %339 = vmatpush1.msra.mxu0 %v128
    %340 = vmatprep.subr.mxu0 %v121
    %341 = vmatpush1.msra.mxu0 %v120
    %342 = vmatprep.subr.mxu0 %v113
    %343 = vmatpush1.msra.mxu0 %v112
    %344 = vmatprep.subr.mxu0 %v105
    %345 = vmatpush1.msra.mxu0 %v104
    %346 = vmatprep.subr.mxu0 0.0
    %347 = vmatpush2.msra.mxu0 0.0
    %348 = vmatprep.subr.mxu0 0.0
    %349 = vmatpush2.msra.mxu0 0.0
    %350 = vmatprep.subr.mxu0 0.0
    %351 = vmatpush2.msra.mxu0 0.0
    %352 = vmatprep.subr.mxu0 0.0
    %353 = vmatpush2.msra.mxu0 0.0
    %354 = vmatprep.subr.mxu0 0.0
    %355 = vmatpush2.msra.mxu0 0.0
    %356 = vmatprep.subr.mxu0 0.0
    %357 = vmatpush2.msra.mxu0 0.0
    %358 = vmatprep.subr.mxu0 0.0
    %359 = vmatpush2.msra.mxu0 0.0
    %360 = vmatprep.subr.mxu0 0.0
    %361 = vmatpush2.msra.mxu0 0.0
    %362 = vmatprep.subr.mxu0 0.0
    %363 = vmatpush2.msra.mxu0 0.0
    %364 = vmatprep.subr.mxu0 0.0
    %365 = vmatpush2.msra.mxu0 0.0
    %366 = vmatprep.subr.mxu0 0.0
    %367 = vmatpush2.msra.mxu0 0.0
    %368 = vmatprep.subr.mxu0 0.0
    %369 = vmatpush2.msra.mxu0 0.0
    %370 = vmatprep.subr.mxu0 0.0
    %371 = vmatpush2.msra.mxu0 0.0
    %372 = vmatprep.subr.mxu0 0.0
    %373 = vmatpush2.msra.mxu0 0.0
    %374 = vmatprep.subr.mxu0 0.0
    %375 = vmatpush2.msra.mxu0 0.0
    %376 = vmatprep.subr.mxu0 0.0
    %377 = vmatpush2.msra.mxu0 0.0
    %378 = vmatprep.mubr.f32.mxu0 0.0
    %379 = vmatmul.mubr.f32.gmra.mxu0 %v178
    %v380 = vpop.f32.mrf.mxu0
    %v381 = vadd.f32 %v147, %v380
    %v382 = vpop.f32.mrf.mxu0
    %v383 = vadd.f32 %v151, %v382
    %384 = vmatprep.mubr.f32.mxu0 0.0
    %385 = vmatmul.mubr.f32.gmra.mxu0 %v181
    %v386 = vpop.f32.mrf.mxu0
    %v387 = vadd.f32 %v147, %v386
    %v388 = vpop.f32.mrf.mxu0
    %v389 = vadd.f32 %v151, %v388
    %390 = vmatprep.mubr.f32.mxu0 0.0
    %391 = vmatmul.mubr.f32.gmra.mxu0 %v184
    %v392 = vpop.f32.mrf.mxu0
    %v393 = vadd.f32 %v147, %v392
    %v394 = vpop.f32.mrf.mxu0
    %v395 = vadd.f32 %v151, %v394
    %396 = vmatprep.mubr.f32.mxu0 0.0
    %397 = vmatmul.mubr.f32.gmra.mxu0 %v187
    %v398 = vpop.f32.mrf.mxu0
    %v399 = vadd.f32 %v147, %v398
    %v400 = vpop.f32.mrf.mxu0
    %v401 = vadd.f32 %v151, %v400
    %402 = vmatprep.mubr.f32.mxu0 0.0
    %403 = vmatmul.mubr.f32.gmra.mxu0 %v190
    %v404 = vpop.f32.mrf.mxu0
    %v405 = vadd.f32 %v147, %v404
    %v406 = vpop.f32.mrf.mxu0
    %v407 = vadd.f32 %v151, %v406
    %408 = vmatprep.mubr.f32.mxu0 0.0
    %409 = vmatmul.mubr.f32.gmra.mxu0 %v193
    %v410 = vpop.f32.mrf.mxu0
    %v411 = vadd.f32 %v147, %v410
    %v412 = vpop.f32.mrf.mxu0
    %v413 = vadd.f32 %v151, %v412
    %414 = vmatprep.mubr.f32.mxu0 0.0
    %415 = vmatmul.mubr.f32.gmra.mxu0 %v196
    %v416 = vpop.f32.mrf.mxu0
    %v417 = vadd.f32 %v147, %v416
    %v418 = vpop.f32.mrf.mxu0
    %v419 = vadd.f32 %v151, %v418
    %420 = vmatprep.mubr.f32.mxu0 0.0
    %421 = vmatmul.mubr.f32.gmra.mxu0 %v199
    %v422 = vpop.f32.mrf.mxu0
    %v423 = vadd.f32 %v147, %v422
    %v424 = vpop.f32.mrf.mxu0
    %v425 = vadd.f32 %v151, %v424
    %426 = vdwg.mxu0
    %427 = vmatprep.subr.mxu0 0.0
    %428 = vmatpush1.msra.mxu0 0.0
    %429 = vmatprep.subr.mxu0 0.0
    %430 = vmatpush1.msra.mxu0 0.0
    %431 = vmatprep.subr.mxu0 0.0
    %432 = vmatpush1.msra.mxu0 0.0
    %433 = vmatprep.subr.mxu0 0.0
    %434 = vmatpush1.msra.mxu0 0.0
    %435 = vmatprep.subr.mxu0 0.0
    %436 = vmatpush1.msra.mxu0 0.0
    %437 = vmatprep.subr.mxu0 0.0
    %438 = vmatpush1.msra.mxu0 0.0
    %439 = vmatprep.subr.mxu0 0.0
    %440 = vmatpush1.msra.mxu0 0.0
    %441 = vmatprep.subr.mxu0 0.0
    %442 = vmatpush1.msra.mxu0 0.0
    %443 = vmatprep.subr.mxu0 0.0
    %444 = vmatpush1.msra.mxu0 0.0
    %445 = vmatprep.subr.mxu0 0.0
    %446 = vmatpush1.msra.mxu0 0.0
    %447 = vmatprep.subr.mxu0 0.0
    %448 = vmatpush1.msra.mxu0 0.0
    %449 = vmatprep.subr.mxu0 0.0
    %450 = vmatpush1.msra.mxu0 0.0
    %451 = vmatprep.subr.mxu0 %v131
    %452 = vmatpush1.msra.mxu0 %v130
    %453 = vmatprep.subr.mxu0 %v123
    %454 = vmatpush1.msra.mxu0 %v122
    %455 = vmatprep.subr.mxu0 %v115
    %456 = vmatpush1.msra.mxu0 %v114
    %457 = vmatprep.subr.mxu0 %v107
    %458 = vmatpush1.msra.mxu0 %v106
    %459 = vmatprep.subr.mxu0 0.0
    %460 = vmatpush2.msra.mxu0 0.0
    %461 = vmatprep.subr.mxu0 0.0
    %462 = vmatpush2.msra.mxu0 0.0
    %463 = vmatprep.subr.mxu0 0.0
    %464 = vmatpush2.msra.mxu0 0.0
    %465 = vmatprep.subr.mxu0 0.0
    %466 = vmatpush2.msra.mxu0 0.0
    %467 = vmatprep.subr.mxu0 0.0
    %468 = vmatpush2.msra.mxu0 0.0
    %469 = vmatprep.subr.mxu0 0.0
    %470 = vmatpush2.msra.mxu0 0.0
    %471 = vmatprep.subr.mxu0 0.0
    %472 = vmatpush2.msra.mxu0 0.0
    %473 = vmatprep.subr.mxu0 0.0
    %474 = vmatpush2.msra.mxu0 0.0
    %475 = vmatprep.subr.mxu0 0.0
    %476 = vmatpush2.msra.mxu0 0.0
    %477 = vmatprep.subr.mxu0 0.0
    %478 = vmatpush2.msra.mxu0 0.0
    %479 = vmatprep.subr.mxu0 0.0
    %480 = vmatpush2.msra.mxu0 0.0
    %481 = vmatprep.subr.mxu0 0.0
    %482 = vmatpush2.msra.mxu0 0.0
    %483 = vmatprep.subr.mxu0 0.0
    %484 = vmatpush2.msra.mxu0 0.0
    %485 = vmatprep.subr.mxu0 0.0
    %486 = vmatpush2.msra.mxu0 0.0
    %487 = vmatprep.subr.mxu0 0.0
    %488 = vmatpush2.msra.mxu0 0.0
    %489 = vmatprep.subr.mxu0 0.0
    %490 = vmatpush2.msra.mxu0 0.0
    %491 = vmatprep.mubr.f32.mxu0 0.0
    %492 = vmatmul.mubr.f32.gmra.mxu0 %v178
    %v493 = vpop.f32.mrf.mxu0
    %v494 = vadd.f32 %v155, %v493
    %v495 = vpop.f32.mrf.mxu0
    %v496 = vadd.f32 %v159, %v495
    %497 = vmatprep.mubr.f32.mxu0 0.0
    %498 = vmatmul.mubr.f32.gmra.mxu0 %v181
    %v499 = vpop.f32.mrf.mxu0
    %v500 = vadd.f32 %v155, %v499
    %v501 = vpop.f32.mrf.mxu0
    %v502 = vadd.f32 %v159, %v501
    %503 = vmatprep.mubr.f32.mxu0 0.0
    %504 = vmatmul.mubr.f32.gmra.mxu0 %v184
    %v505 = vpop.f32.mrf.mxu0
    %v506 = vadd.f32 %v155, %v505
    %v507 = vpop.f32.mrf.mxu0
    %v508 = vadd.f32 %v159, %v507
    %509 = vmatprep.mubr.f32.mxu0 0.0
    %510 = vmatmul.mubr.f32.gmra.mxu0 %v187
    %v511 = vpop.f32.mrf.mxu0
    %v512 = vadd.f32 %v155, %v511
    %v513 = vpop.f32.mrf.mxu0
    %v514 = vadd.f32 %v159, %v513
    %515 = vmatprep.mubr.f32.mxu0 0.0
    %516 = vmatmul.mubr.f32.gmra.mxu0 %v190
    %v517 = vpop.f32.mrf.mxu0
    %v518 = vadd.f32 %v155, %v517
    %v519 = vpop.f32.mrf.mxu0
    %v520 = vadd.f32 %v159, %v519
    %521 = vmatprep.mubr.f32.mxu0 0.0
    %522 = vmatmul.mubr.f32.gmra.mxu0 %v193
    %v523 = vpop.f32.mrf.mxu0
    %v524 = vadd.f32 %v155, %v523
    %v525 = vpop.f32.mrf.mxu0
    %v526 = vadd.f32 %v159, %v525
    %527 = vmatprep.mubr.f32.mxu0 0.0
    %528 = vmatmul.mubr.f32.gmra.mxu0 %v196
    %v529 = vpop.f32.mrf.mxu0
    %v530 = vadd.f32 %v155, %v529
    %v531 = vpop.f32.mrf.mxu0
    %v532 = vadd.f32 %v159, %v531
    %533 = vmatprep.mubr.f32.mxu0 0.0
    %534 = vmatmul.mubr.f32.gmra.mxu0 %v199
    %v535 = vpop.f32.mrf.mxu0
    %v536 = vadd.f32 %v155, %v535
    %v537 = vpop.f32.mrf.mxu0
    %v538 = vadd.f32 %v159, %v537
    %539 = vdwg.mxu0
    %540 = vmatprep.subr.mxu0 0.0
    %541 = vmatpush1.msra.mxu0 0.0
    %542 = vmatprep.subr.mxu0 0.0
    %543 = vmatpush1.msra.mxu0 0.0
    %544 = vmatprep.subr.mxu0 0.0
    %545 = vmatpush1.msra.mxu0 0.0
    %546 = vmatprep.subr.mxu0 0.0
    %547 = vmatpush1.msra.mxu0 0.0
    %548 = vmatprep.subr.mxu0 0.0
    %549 = vmatpush1.msra.mxu0 0.0
    %550 = vmatprep.subr.mxu0 0.0
    %551 = vmatpush1.msra.mxu0 0.0
    %552 = vmatprep.subr.mxu0 0.0
    %553 = vmatpush1.msra.mxu0 0.0
    %554 = vmatprep.subr.mxu0 0.0
    %555 = vmatpush1.msra.mxu0 0.0
    %556 = vmatprep.subr.mxu0 0.0
    %557 = vmatpush1.msra.mxu0 0.0
    %558 = vmatprep.subr.mxu0 0.0
    %559 = vmatpush1.msra.mxu0 0.0
    %560 = vmatprep.subr.mxu0 0.0
    %561 = vmatpush1.msra.mxu0 0.0
    %562 = vmatprep.subr.mxu0 0.0
    %563 = vmatpush1.msra.mxu0 0.0
    %564 = vmatprep.subr.mxu0 %v133
    %565 = vmatpush1.msra.mxu0 %v132
    %566 = vmatprep.subr.mxu0 %v125
    %567 = vmatpush1.msra.mxu0 %v124
    %568 = vmatprep.subr.mxu0 %v117
    %569 = vmatpush1.msra.mxu0 %v116
    %570 = vmatprep.subr.mxu0 %v109
    %571 = vmatpush1.msra.mxu0 %v108
    %572 = vmatprep.subr.mxu0 0.0
    %573 = vmatpush2.msra.mxu0 0.0
    %574 = vmatprep.subr.mxu0 0.0
    %575 = vmatpush2.msra.mxu0 0.0
    %576 = vmatprep.subr.mxu0 0.0
    %577 = vmatpush2.msra.mxu0 0.0
    %578 = vmatprep.subr.mxu0 0.0
    %579 = vmatpush2.msra.mxu0 0.0
    %580 = vmatprep.subr.mxu0 0.0
    %581 = vmatpush2.msra.mxu0 0.0
    %582 = vmatprep.subr.mxu0 0.0
    %583 = vmatpush2.msra.mxu0 0.0
    %584 = vmatprep.subr.mxu0 0.0
    %585 = vmatpush2.msra.mxu0 0.0
    %586 = vmatprep.subr.mxu0 0.0
    %587 = vmatpush2.msra.mxu0 0.0
    %588 = vmatprep.subr.mxu0 0.0
    %589 = vmatpush2.msra.mxu0 0.0
    %590 = vmatprep.subr.mxu0 0.0
    %591 = vmatpush2.msra.mxu0 0.0
    %592 = vmatprep.subr.mxu0 0.0
    %593 = vmatpush2.msra.mxu0 0.0
    %594 = vmatprep.subr.mxu0 0.0
    %595 = vmatpush2.msra.mxu0 0.0
    %596 = vmatprep.subr.mxu0 0.0
    %597 = vmatpush2.msra.mxu0 0.0
    %598 = vmatprep.subr.mxu0 0.0
    %599 = vmatpush2.msra.mxu0 0.0
    %600 = vmatprep.subr.mxu0 0.0
    %601 = vmatpush2.msra.mxu0 0.0
    %602 = vmatprep.subr.mxu0 0.0
    %603 = vmatpush2.msra.mxu0 0.0
    %604 = vmatprep.mubr.f32.mxu0 0.0
    %605 = vmatmul.mubr.f32.gmra.mxu0 %v178
    %v606 = vpop.f32.mrf.mxu0
    %v607 = vadd.f32 %v163, %v606
    %v608 = vpop.f32.mrf.mxu0
    %v609 = vadd.f32 %v167, %v608
    %610 = vmatprep.mubr.f32.mxu0 0.0
    %611 = vmatmul.mubr.f32.gmra.mxu0 %v181
    %v612 = vpop.f32.mrf.mxu0
    %v613 = vadd.f32 %v163, %v612
    %v614 = vpop.f32.mrf.mxu0
    %v615 = vadd.f32 %v167, %v614
    %616 = vmatprep.mubr.f32.mxu0 0.0
    %617 = vmatmul.mubr.f32.gmra.mxu0 %v184
    %v618 = vpop.f32.mrf.mxu0
    %v619 = vadd.f32 %v163, %v618
    %v620 = vpop.f32.mrf.mxu0
    %v621 = vadd.f32 %v167, %v620
    %622 = vmatprep.mubr.f32.mxu0 0.0
    %623 = vmatmul.mubr.f32.gmra.mxu0 %v187
    %v624 = vpop.f32.mrf.mxu0
    %v625 = vadd.f32 %v163, %v624
    %v626 = vpop.f32.mrf.mxu0
    %v627 = vadd.f32 %v167, %v626
    %628 = vmatprep.mubr.f32.mxu0 0.0
    %629 = vmatmul.mubr.f32.gmra.mxu0 %v190
    %v630 = vpop.f32.mrf.mxu0
    %v631 = vadd.f32 %v163, %v630
    %v632 = vpop.f32.mrf.mxu0
    %v633 = vadd.f32 %v167, %v632
    %634 = vmatprep.mubr.f32.mxu0 0.0
    %635 = vmatmul.mubr.f32.gmra.mxu0 %v193
    %v636 = vpop.f32.mrf.mxu0
    %v637 = vadd.f32 %v163, %v636
    %v638 = vpop.f32.mrf.mxu0
    %v639 = vadd.f32 %v167, %v638
    %640 = vmatprep.mubr.f32.mxu0 0.0
    %641 = vmatmul.mubr.f32.gmra.mxu0 %v196
    %v642 = vpop.f32.mrf.mxu0
    %v643 = vadd.f32 %v163, %v642
    %v644 = vpop.f32.mrf.mxu0
    %v645 = vadd.f32 %v167, %v644
    %646 = vmatprep.mubr.f32.mxu0 0.0
    %647 = vmatmul.mubr.f32.gmra.mxu0 %v199
    %v648 = vpop.f32.mrf.mxu0
    %v649 = vadd.f32 %v163, %v648
    %v650 = vpop.f32.mrf.mxu0
    %v651 = vadd.f32 %v167, %v650
    %652 = vdwg.mxu0
    %653 = vst [vmem:[#allocation2] sm:$0xff] %v268
    %654 = vst [vmem:[#allocation2 + $0x8] sm:$0xff] %v270
    %655 = vst [vmem:[#allocation2 + $0x10] sm:$0xff] %v381
    %656 = vst [vmem:[#allocation2 + $0x18] sm:$0xff] %v383
    %657 = vst [vmem:[#allocation2 + $0x20] sm:$0xff] %v274
    %658 = vst [vmem:[#allocation2 + $0x28] sm:$0xff] %v276
    %659 = vst [vmem:[#allocation2 + $0x30] sm:$0xff] %v387
    %660 = vst [vmem:[#allocation2 + $0x38] sm:$0xff] %v389
    %661 = vst [vmem:[#allocation2 + $0x40] sm:$0xff] %v280
    %662 = vst [vmem:[#allocation2 + $0x48] sm:$0xff] %v282
    %663 = vst [vmem:[#allocation2 + $0x50] sm:$0xff] %v393
    %664 = vst [vmem:[#allocation2 + $0x58] sm:$0xff] %v395
    %665 = vst [vmem:[#allocation2 + $0x60] sm:$0xff] %v286
    %666 = vst [vmem:[#allocation2 + $0x68] sm:$0xff] %v288
    %667 = vst [vmem:[#allocation2 + $0x70] sm:$0xff] %v399
    %668 = vst [vmem:[#allocation2 + $0x78] sm:$0xff] %v401
    %669 = vst [vmem:[#allocation2 + $0x80] sm:$0xff] %v292
    %670 = vst [vmem:[#allocation2 + $0x88] sm:$0xff] %v294
    %671 = vst [vmem:[#allocation2 + $0x90] sm:$0xff] %v405
    %672 = vst [vmem:[#allocation2 + $0x98] sm:$0xff] %v407
    %673 = vst [vmem:[#allocation2 + $0xa0] sm:$0xff] %v298
    %674 = vst [vmem:[#allocation2 + $0xa8] sm:$0xff] %v300
    %675 = vst [vmem:[#allocation2 + $0xb0] sm:$0xff] %v411
    %676 = vst [vmem:[#allocation2 + $0xb8] sm:$0xff] %v413
    %677 = vst [vmem:[#allocation2 + $0xc0] sm:$0xff] %v304
    %678 = vst [vmem:[#allocation2 + $0xc8] sm:$0xff] %v306
    %679 = vst [vmem:[#allocation2 + $0xd0] sm:$0xff] %v417
    %680 = vst [vmem:[#allocation2 + $0xd8] sm:$0xff] %v419
    %681 = vst [vmem:[#allocation2 + $0xe0] sm:$0xff] %v310
    %682 = vst [vmem:[#allocation2 + $0xe8] sm:$0xff] %v312
    %683 = vst [vmem:[#allocation2 + $0xf0] sm:$0xff] %v423
    %684 = vst [vmem:[#allocation2 + $0xf8] sm:$0xff] %v425
    %685 = vst [vmem:[#allocation3] sm:$0xff] %v494
    %686 = vst [vmem:[#allocation3 + $0x8] sm:$0xff] %v496
    %687 = vst [vmem:[#allocation3 + $0x10] sm:$0xff] %v607
    %688 = vst [vmem:[#allocation3 + $0x18] sm:$0xff] %v609
    %689 = vst [vmem:[#allocation3 + $0x20] sm:$0xff] %v500
    %690 = vst [vmem:[#allocation3 + $0x28] sm:$0xff] %v502
    %691 = vst [vmem:[#allocation3 + $0x30] sm:$0xff] %v613
    %692 = vst [vmem:[#allocation3 + $0x38] sm:$0xff] %v615
    %693 = vst [vmem:[#allocation3 + $0x40] sm:$0xff] %v506
    %694 = vst [vmem:[#allocation3 + $0x48] sm:$0xff] %v508
    %695 = vst [vmem:[#allocation3 + $0x50] sm:$0xff] %v619
    %696 = vst [vmem:[#allocation3 + $0x58] sm:$0xff] %v621
    %697 = vst [vmem:[#allocation3 + $0x60] sm:$0xff] %v512
    %698 = vst [vmem:[#allocation3 + $0x68] sm:$0xff] %v514
    %699 = vst [vmem:[#allocation3 + $0x70] sm:$0xff] %v625
    %700 = vst [vmem:[#allocation3 + $0x78] sm:$0xff] %v627
    %701 = vst [vmem:[#allocation3 + $0x80] sm:$0xff] %v518
    %702 = vst [vmem:[#allocation3 + $0x88] sm:$0xff] %v520
    %703 = vst [vmem:[#allocation3 + $0x90] sm:$0xff] %v631
    %704 = vst [vmem:[#allocation3 + $0x98] sm:$0xff] %v633
    %705 = vst [vmem:[#allocation3 + $0xa0] sm:$0xff] %v524
    %706 = vst [vmem:[#allocation3 + $0xa8] sm:$0xff] %v526
    %707 = vst [vmem:[#allocation3 + $0xb0] sm:$0xff] %v637
    %708 = vst [vmem:[#allocation3 + $0xb8] sm:$0xff] %v639
    %709 = vst [vmem:[#allocation3 + $0xc0] sm:$0xff] %v530
    %710 = vst [vmem:[#allocation3 + $0xc8] sm:$0xff] %v532
    %711 = vst [vmem:[#allocation3 + $0xd0] sm:$0xff] %v643
    %712 = vst [vmem:[#allocation3 + $0xd8] sm:$0xff] %v645
    %713 = vst [vmem:[#allocation3 + $0xe0] sm:$0xff] %v536
    %714 = vst [vmem:[#allocation3 + $0xe8] sm:$0xff] %v538
    %715 = vst [vmem:[#allocation3 + $0xf0] sm:$0xff] %v649
    %716 = vst [vmem:[#allocation3 + $0xf8] sm:$0xff] %v651
    %v717 = vld [vmem:[#allocation2] sm:$0xff]
    %v718 = vld [vmem:[#allocation2 + $0x8] sm:$0xff]
    %v719 = vld [vmem:[#allocation2 + $0x10] sm:$0xff]
    %v720 = vld [vmem:[#allocation2 + $0x18] sm:$0xff]
    %v721 = vld [vmem:[#allocation8] sm:$0xff]
    %v722 = vld [vmem:[#allocation8 + $0x8] sm:$0xff]
    %v723 = vld [vmem:[#allocation8 + $0x10] sm:$0xff]
    %v724 = vld [vmem:[#allocation8 + $0x18] sm:$0xff]
    %v725 = vld [vmem:[#allocation8 + $0x20] sm:$0xff]
    %v726 = vld [vmem:[#allocation8 + $0x28] sm:$0xff]
    %v727 = vld [vmem:[#allocation8 + $0x30] sm:$0xff]
    %v728 = vld [vmem:[#allocation8 + $0x38] sm:$0xff]
    %v729 = vld [vmem:[#allocation8 + $0x40] sm:$0xff]
    %v730 = vld [vmem:[#allocation8 + $0x48] sm:$0xff]
    %v731 = vld [vmem:[#allocation8 + $0x50] sm:$0xff]
    %v732 = vld [vmem:[#allocation8 + $0x58] sm:$0xff]
    %v733 = vld [vmem:[#allocation8 + $0x60] sm:$0xff]
    %v734 = vld [vmem:[#allocation8 + $0x68] sm:$0xff]
    %v735 = vld [vmem:[#allocation8 + $0x70] sm:$0xff]
    %v736 = vld [vmem:[#allocation8 + $0x78] sm:$0xff]
    %v737 = vld [vmem:[#allocation8 + $0x80] sm:$0xff]
    %v738 = vld [vmem:[#allocation8 + $0x88] sm:$0xff]
    %v739 = vld [vmem:[#allocation8 + $0x90] sm:$0xff]
    %v740 = vld [vmem:[#allocation8 + $0x98] sm:$0xff]
    %v741 = vld [vmem:[#allocation8 + $0xa0] sm:$0xff]
    %v742 = vld [vmem:[#allocation8 + $0xa8] sm:$0xff]
    %v743 = vld [vmem:[#allocation8 + $0xb0] sm:$0xff]
    %v744 = vld [vmem:[#allocation8 + $0xb8] sm:$0xff]
    %v745 = vld [vmem:[#allocation8 + $0xc0] sm:$0xff]
    %v746 = vld [vmem:[#allocation8 + $0xc8] sm:$0xff]
    %v747 = vld [vmem:[#allocation8 + $0xd0] sm:$0xff]
    %v748 = vld [vmem:[#allocation8 + $0xd8] sm:$0xff]
    %v749 = vld [vmem:[#allocation8 + $0xe0] sm:$0xff]
    %v750 = vld [vmem:[#allocation8 + $0xe8] sm:$0xff]
    %v751 = vld [vmem:[#allocation8 + $0xf0] sm:$0xff]
    %v752 = vld [vmem:[#allocation8 + $0xf8] sm:$0xff]
    %v753 = vld [vmem:[#allocation8 + $0x100] sm:$0xff]
    %v754 = vld [vmem:[#allocation8 + $0x108] sm:$0xff]
    %v755 = vld [vmem:[#allocation8 + $0x110] sm:$0xff]
    %v756 = vld [vmem:[#allocation8 + $0x118] sm:$0xff]
    %v757 = vld [vmem:[#allocation8 + $0x120] sm:$0xff]
    %v758 = vld [vmem:[#allocation8 + $0x128] sm:$0xff]
    %v759 = vld [vmem:[#allocation8 + $0x130] sm:$0xff]
    %v760 = vld [vmem:[#allocation8 + $0x138] sm:$0xff]
    %v761 = vld [vmem:[#allocation8 + $0x140] sm:$0xff]
    %v762 = vld [vmem:[#allocation8 + $0x148] sm:$0xff]
    %v763 = vld [vmem:[#allocation8 + $0x150] sm:$0xff]
    %v764 = vld [vmem:[#allocation8 + $0x158] sm:$0xff]
    %v765 = vld [vmem:[#allocation8 + $0x160] sm:$0xff]
    %v766 = vld [vmem:[#allocation8 + $0x168] sm:$0xff]
    %v767 = vld [vmem:[#allocation8 + $0x170] sm:$0xff]
    %v768 = vld [vmem:[#allocation8 + $0x178] sm:$0xff]
    %v769 = vld [vmem:[#allocation8 + $0x180] sm:$0xff]
    %v770 = vld [vmem:[#allocation8 + $0x188] sm:$0xff]
    %v771 = vld [vmem:[#allocation8 + $0x190] sm:$0xff]
    %v772 = vld [vmem:[#allocation8 + $0x198] sm:$0xff]
    %v773 = vld [vmem:[#allocation8 + $0x1a0] sm:$0xff]
    %v774 = vld [vmem:[#allocation8 + $0x1a8] sm:$0xff]
    %v775 = vld [vmem:[#allocation8 + $0x1b0] sm:$0xff]
    %v776 = vld [vmem:[#allocation8 + $0x1b8] sm:$0xff]
    %v777 = vld [vmem:[#allocation8 + $0x1c0] sm:$0xff]
    %v778 = vld [vmem:[#allocation8 + $0x1c8] sm:$0xff]
    %v779 = vld [vmem:[#allocation8 + $0x1d0] sm:$0xff]
    %v780 = vld [vmem:[#allocation8 + $0x1d8] sm:$0xff]
    %v781 = vld [vmem:[#allocation8 + $0x1e0] sm:$0xff]
    %v782 = vld [vmem:[#allocation8 + $0x1e8] sm:$0xff]
    %v783 = vld [vmem:[#allocation8 + $0x1f0] sm:$0xff]
    %v784 = vld [vmem:[#allocation8 + $0x1f8] sm:$0xff]
    %785 = vmatprep.subr.mxu0 %v782
    %786 = vmatpush1.msra.mxu0 %v781
    %787 = vmatprep.subr.mxu0 %v778
    %788 = vmatpush1.msra.mxu0 %v777
    %789 = vmatprep.subr.mxu0 %v774
    %790 = vmatpush1.msra.mxu0 %v773
    %791 = vmatprep.subr.mxu0 %v770
    %792 = vmatpush1.msra.mxu0 %v769
    %793 = vmatprep.subr.mxu0 %v766
    %794 = vmatpush1.msra.mxu0 %v765
    %795 = vmatprep.subr.mxu0 %v762
    %796 = vmatpush1.msra.mxu0 %v761
    %797 = vmatprep.subr.mxu0 %v758
    %798 = vmatpush1.msra.mxu0 %v757
    %799 = vmatprep.subr.mxu0 %v754
    %800 = vmatpush1.msra.mxu0 %v753
    %801 = vmatprep.subr.mxu0 %v750
    %802 = vmatpush1.msra.mxu0 %v749
    %803 = vmatprep.subr.mxu0 %v746
    %804 = vmatpush1.msra.mxu0 %v745
    %805 = vmatprep.subr.mxu0 %v742
    %806 = vmatpush1.msra.mxu0 %v741
    %807 = vmatprep.subr.mxu0 %v738
    %808 = vmatpush1.msra.mxu0 %v737
    %809 = vmatprep.subr.mxu0 %v734
    %810 = vmatpush1.msra.mxu0 %v733
    %811 = vmatprep.subr.mxu0 %v730
    %812 = vmatpush1.msra.mxu0 %v729
    %813 = vmatprep.subr.mxu0 %v726
    %814 = vmatpush1.msra.mxu0 %v725
    %815 = vmatprep.subr.mxu0 %v722
    %816 = vmatpush1.msra.mxu0 %v721
    %817 = vmatprep.subr.mxu0 0.0
    %818 = vmatpush2.msra.mxu0 0.0
    %819 = vmatprep.subr.mxu0 0.0
    %820 = vmatpush2.msra.mxu0 0.0
    %821 = vmatprep.subr.mxu0 0.0
    %822 = vmatpush2.msra.mxu0 0.0
    %823 = vmatprep.subr.mxu0 0.0
    %824 = vmatpush2.msra.mxu0 0.0
    %825 = vmatprep.subr.mxu0 0.0
    %826 = vmatpush2.msra.mxu0 0.0
    %827 = vmatprep.subr.mxu0 0.0
    %828 = vmatpush2.msra.mxu0 0.0
    %829 = vmatprep.subr.mxu0 0.0
    %830 = vmatpush2.msra.mxu0 0.0
    %831 = vmatprep.subr.mxu0 0.0
    %832 = vmatpush2.msra.mxu0 0.0
    %833 = vmatprep.subr.mxu0 0.0
    %834 = vmatpush2.msra.mxu0 0.0
    %835 = vmatprep.subr.mxu0 0.0
    %836 = vmatpush2.msra.mxu0 0.0
    %837 = vmatprep.subr.mxu0 0.0
    %838 = vmatpush2.msra.mxu0 0.0
    %839 = vmatprep.subr.mxu0 0.0
    %840 = vmatpush2.msra.mxu0 0.0
    %841 = vmatprep.subr.mxu0 0.0
    %842 = vmatpush2.msra.mxu0 0.0
    %843 = vmatprep.subr.mxu0 0.0
    %844 = vmatpush2.msra.mxu0 0.0
    %845 = vmatprep.subr.mxu0 0.0
    %846 = vmatpush2.msra.mxu0 0.0
    %847 = vmatprep.subr.mxu0 0.0
    %848 = vmatpush2.msra.mxu0 0.0
    %849 = vmatprep.mubr.f32.mxu0 0.0
    %850 = vmatmul.mubr.f32.gmra.mxu0 0.0
    %v851 = vpop.f32.mrf.mxu0
    %v852 = vadd.f32 0.0, %v851
    %v853 = vpop.f32.mrf.mxu0
    %v854 = vadd.f32 0.0, %v853
    %855 = vdwg.mxu0
    %856 = vmatprep.subr.mxu0 %v784
    %857 = vmatpush1.msra.mxu0 %v783
    %858 = vmatprep.subr.mxu0 %v780
    %859 = vmatpush1.msra.mxu0 %v779
    %860 = vmatprep.subr.mxu0 %v776
    %861 = vmatpush1.msra.mxu0 %v775
    %862 = vmatprep.subr.mxu0 %v772
    %863 = vmatpush1.msra.mxu0 %v771
    %864 = vmatprep.subr.mxu0 %v768
    %865 = vmatpush1.msra.mxu0 %v767
    %866 = vmatprep.subr.mxu0 %v764
    %867 = vmatpush1.msra.mxu0 %v763
    %868 = vmatprep.subr.mxu0 %v760
    %869 = vmatpush1.msra.mxu0 %v759
    %870 = vmatprep.subr.mxu0 %v756
    %871 = vmatpush1.msra.mxu0 %v755
    %872 = vmatprep.subr.mxu0 %v752
    %873 = vmatpush1.msra.mxu0 %v751
    %874 = vmatprep.subr.mxu0 %v748
    %875 = vmatpush1.msra.mxu0 %v747
    %876 = vmatprep.subr.mxu0 %v744
    %877 = vmatpush1.msra.mxu0 %v743
    %878 = vmatprep.subr.mxu0 %v740
    %879 = vmatpush1.msra.mxu0 %v739
    %880 = vmatprep.subr.mxu0 %v736
    %881 = vmatpush1.msra.mxu0 %v735
    %882 = vmatprep.subr.mxu0 %v732
    %883 = vmatpush1.msra.mxu0 %v731
    %884 = vmatprep.subr.mxu0 %v728
    %885 = vmatpush1.msra.mxu0 %v727
    %886 = vmatprep.subr.mxu0 %v724
    %887 = vmatpush1.msra.mxu0 %v723
    %888 = vmatprep.subr.mxu0 0.0
    %889 = vmatpush2.msra.mxu0 0.0
    %890 = vmatprep.subr.mxu0 0.0
    %891 = vmatpush2.msra.mxu0 0.0
    %892 = vmatprep.subr.mxu0 0.0
    %893 = vmatpush2.msra.mxu0 0.0
    %894 = vmatprep.subr.mxu0 0.0
    %895 = vmatpush2.msra.mxu0 0.0
    %896 = vmatprep.subr.mxu0 0.0
    %897 = vmatpush2.msra.mxu0 0.0
    %898 = vmatprep.subr.mxu0 0.0
    %899 = vmatpush2.msra.mxu0 0.0
    %900 = vmatprep.subr.mxu0 0.0
    %901 = vmatpush2.msra.mxu0 0.0
    %902 = vmatprep.subr.mxu0 0.0
    %903 = vmatpush2.msra.mxu0 0.0
    %904 = vmatprep.subr.mxu0 0.0
    %905 = vmatpush2.msra.mxu0 0.0
    %906 = vmatprep.subr.mxu0 0.0
    %907 = vmatpush2.msra.mxu0 0.0
    %908 = vmatprep.subr.mxu0 0.0
    %909 = vmatpush2.msra.mxu0 0.0
    %910 = vmatprep.subr.mxu0 0.0
    %911 = vmatpush2.msra.mxu0 0.0
    %912 = vmatprep.subr.mxu0 0.0
    %913 = vmatpush2.msra.mxu0 0.0
    %914 = vmatprep.subr.mxu0 0.0
    %915 = vmatpush2.msra.mxu0 0.0
    %916 = vmatprep.subr.mxu0 0.0
    %917 = vmatpush2.msra.mxu0 0.0
    %918 = vmatprep.subr.mxu0 0.0
    %919 = vmatpush2.msra.mxu0 0.0
    %920 = vmatprep.mubr.f32.mxu0 0.0
    %921 = vmatmul.mubr.f32.gmra.mxu0 0.0
    %v922 = vpop.f32.mrf.mxu0
    %v923 = vadd.f32 0.0, %v922
    %v924 = vpop.f32.mrf.mxu0
    %v925 = vadd.f32 0.0, %v924
    %926 = vdwg.mxu0
    %v927 = vadd.f32 %v717, %v852
    %v928 = vadd.f32 %v718, %v854
    %v929 = vadd.f32 %v719, %v923
    %v930 = vadd.f32 %v720, %v925
    %v931 = vxor.u32 %v927, 2147483648
    %v932 = vmul.f32 %v931, 1.442695
    %v933 = vpow.pop %v932
    %v934 = vadd.f32 %v933, 1.0
    %v935 = vrcp.pop %v934
    %v936 = vmul.f32 1.0, %v935
    %v937 = vxor.u32 %v928, 2147483648
    %v938 = vmul.f32 %v937, 1.442695
    %v939 = vpow.pop %v938
    %v940 = vadd.f32 %v939, 1.0
    %v941 = vrcp.pop %v940
    %v942 = vmul.f32 1.0, %v941
    %v943 = vtanh.pop %v929
    %v944 = vxor.u32 %v930, 2147483648
    %v945 = vmul.f32 %v944, 1.442695
    %v946 = vpow.pop %v945
    %v947 = vadd.f32 %v946, 1.0
    %v948 = vrcp.pop %v947
    %v949 = vmul.f32 1.0, %v948
    %v950 = vmul.f32 %v942, 0.0
    %v951 = vmul.f32 %v936, %v943
    %v952 = vadd.f32 %v950, %v951
    %v953 = vtanh.pop %v952
    %v954 = vmul.f32 %v949, %v953
    %s955 = scalar_lea.vmem [#allocation3], 224
    %v956 = vld [vmem:[%s955] sm:$0xff]
    %v957 = vld [vmem:[%s955 + $0x8] sm:$0xff]
    %v958 = vld [vmem:[%s955 + $0x10] sm:$0xff]
    %v959 = vld [vmem:[%s955 + $0x18] sm:$0xff]
    %v960 = vld [vmem:[#allocation10] sm:$0xff]
    %v961 = vld [vmem:[#allocation10 + $0x8] sm:$0xff]
    %v962 = vld [vmem:[#allocation10 + $0x10] sm:$0xff]
    %v963 = vld [vmem:[#allocation10 + $0x18] sm:$0xff]
    %v964 = vld [vmem:[#allocation10 + $0x20] sm:$0xff]
    %v965 = vld [vmem:[#allocation10 + $0x28] sm:$0xff]
    %v966 = vld [vmem:[#allocation10 + $0x30] sm:$0xff]
    %v967 = vld [vmem:[#allocation10 + $0x38] sm:$0xff]
    %v968 = vld [vmem:[#allocation10 + $0x40] sm:$0xff]
    %v969 = vld [vmem:[#allocation10 + $0x48] sm:$0xff]
    %v970 = vld [vmem:[#allocation10 + $0x50] sm:$0xff]
    %v971 = vld [vmem:[#allocation10 + $0x58] sm:$0xff]
    %v972 = vld [vmem:[#allocation10 + $0x60] sm:$0xff]
    %v973 = vld [vmem:[#allocation10 + $0x68] sm:$0xff]
    %v974 = vld [vmem:[#allocation10 + $0x70] sm:$0xff]
    %v975 = vld [vmem:[#allocation10 + $0x78] sm:$0xff]
    %v976 = vld [vmem:[#allocation10 + $0x80] sm:$0xff]
    %v977 = vld [vmem:[#allocation10 + $0x88] sm:$0xff]
    %v978 = vld [vmem:[#allocation10 + $0x90] sm:$0xff]
    %v979 = vld [vmem:[#allocation10 + $0x98] sm:$0xff]
    %v980 = vld [vmem:[#allocation10 + $0xa0] sm:$0xff]
    %v981 = vld [vmem:[#allocation10 + $0xa8] sm:$0xff]
    %v982 = vld [vmem:[#allocation10 + $0xb0] sm:$0xff]
    %v983 = vld [vmem:[#allocation10 + $0xb8] sm:$0xff]
    %v984 = vld [vmem:[#allocation10 + $0xc0] sm:$0xff]
    %v985 = vld [vmem:[#allocation10 + $0xc8] sm:$0xff]
    %v986 = vld [vmem:[#allocation10 + $0xd0] sm:$0xff]
    %v987 = vld [vmem:[#allocation10 + $0xd8] sm:$0xff]
    %v988 = vld [vmem:[#allocation10 + $0xe0] sm:$0xff]
    %v989 = vld [vmem:[#allocation10 + $0xe8] sm:$0xff]
    %v990 = vld [vmem:[#allocation10 + $0xf0] sm:$0xff]
    %v991 = vld [vmem:[#allocation10 + $0xf8] sm:$0xff]
    %v992 = vld [vmem:[#allocation10 + $0x100] sm:$0xff]
    %v993 = vld [vmem:[#allocation10 + $0x108] sm:$0xff]
    %v994 = vld [vmem:[#allocation10 + $0x110] sm:$0xff]
    %v995 = vld [vmem:[#allocation10 + $0x118] sm:$0xff]
    %v996 = vld [vmem:[#allocation10 + $0x120] sm:$0xff]
    %v997 = vld [vmem:[#allocation10 + $0x128] sm:$0xff]
    %v998 = vld [vmem:[#allocation10 + $0x130] sm:$0xff]
    %v999 = vld [vmem:[#allocation10 + $0x138] sm:$0xff]
    %v1000 = vld [vmem:[#allocation10 + $0x140] sm:$0xff]
    %v1001 = vld [vmem:[#allocation10 + $0x148] sm:$0xff]
    %v1002 = vld [vmem:[#allocation10 + $0x150] sm:$0xff]
    %v1003 = vld [vmem:[#allocation10 + $0x158] sm:$0xff]
    %v1004 = vld [vmem:[#allocation10 + $0x160] sm:$0xff]
    %v1005 = vld [vmem:[#allocation10 + $0x168] sm:$0xff]
    %v1006 = vld [vmem:[#allocation10 + $0x170] sm:$0xff]
    %v1007 = vld [vmem:[#allocation10 + $0x178] sm:$0xff]
    %v1008 = vld [vmem:[#allocation10 + $0x180] sm:$0xff]
    %v1009 = vld [vmem:[#allocation10 + $0x188] sm:$0xff]
    %v1010 = vld [vmem:[#allocation10 + $0x190] sm:$0xff]
    %v1011 = vld [vmem:[#allocation10 + $0x198] sm:$0xff]
    %v1012 = vld [vmem:[#allocation10 + $0x1a0] sm:$0xff]
    %v1013 = vld [vmem:[#allocation10 + $0x1a8] sm:$0xff]
    %v1014 = vld [vmem:[#allocation10 + $0x1b0] sm:$0xff]
    %v1015 = vld [vmem:[#allocation10 + $0x1b8] sm:$0xff]
    %v1016 = vld [vmem:[#allocation10 + $0x1c0] sm:$0xff]
    %v1017 = vld [vmem:[#allocation10 + $0x1c8] sm:$0xff]
    %v1018 = vld [vmem:[#allocation10 + $0x1d0] sm:$0xff]
    %v1019 = vld [vmem:[#allocation10 + $0x1d8] sm:$0xff]
    %v1020 = vld [vmem:[#allocation10 + $0x1e0] sm:$0xff]
    %v1021 = vld [vmem:[#allocation10 + $0x1e8] sm:$0xff]
    %v1022 = vld [vmem:[#allocation10 + $0x1f0] sm:$0xff]
    %v1023 = vld [vmem:[#allocation10 + $0x1f8] sm:$0xff]
    %1024 = vmatprep.subr.mxu0 %v1021
    %1025 = vmatpush1.msra.mxu0 %v1020
    %1026 = vmatprep.subr.mxu0 %v1017
    %1027 = vmatpush1.msra.mxu0 %v1016
    %1028 = vmatprep.subr.mxu0 %v1013
    %1029 = vmatpush1.msra.mxu0 %v1012
    %1030 = vmatprep.subr.mxu0 %v1009
    %1031 = vmatpush1.msra.mxu0 %v1008
    %1032 = vmatprep.subr.mxu0 %v1005
    %1033 = vmatpush1.msra.mxu0 %v1004
    %1034 = vmatprep.subr.mxu0 %v1001
    %1035 = vmatpush1.msra.mxu0 %v1000
    %1036 = vmatprep.subr.mxu0 %v997
    %1037 = vmatpush1.msra.mxu0 %v996
    %1038 = vmatprep.subr.mxu0 %v993
    %1039 = vmatpush1.msra.mxu0 %v992
    %1040 = vmatprep.subr.mxu0 %v989
    %1041 = vmatpush1.msra.mxu0 %v988
    %1042 = vmatprep.subr.mxu0 %v985
    %1043 = vmatpush1.msra.mxu0 %v984
    %1044 = vmatprep.subr.mxu0 %v981
    %1045 = vmatpush1.msra.mxu0 %v980
    %1046 = vmatprep.subr.mxu0 %v977
    %1047 = vmatpush1.msra.mxu0 %v976
    %1048 = vmatprep.subr.mxu0 %v973
    %1049 = vmatpush1.msra.mxu0 %v972
    %1050 = vmatprep.subr.mxu0 %v969
    %1051 = vmatpush1.msra.mxu0 %v968
    %1052 = vmatprep.subr.mxu0 %v965
    %1053 = vmatpush1.msra.mxu0 %v964
    %1054 = vmatprep.subr.mxu0 %v961
    %1055 = vmatpush1.msra.mxu0 %v960
    %1056 = vmatprep.subr.mxu0 0.0
    %1057 = vmatpush2.msra.mxu0 0.0
    %1058 = vmatprep.subr.mxu0 0.0
    %1059 = vmatpush2.msra.mxu0 0.0
    %1060 = vmatprep.subr.mxu0 0.0
    %1061 = vmatpush2.msra.mxu0 0.0
    %1062 = vmatprep.subr.mxu0 0.0
    %1063 = vmatpush2.msra.mxu0 0.0
    %1064 = vmatprep.subr.mxu0 0.0
    %1065 = vmatpush2.msra.mxu0 0.0
    %1066 = vmatprep.subr.mxu0 0.0
    %1067 = vmatpush2.msra.mxu0 0.0
    %1068 = vmatprep.subr.mxu0 0.0
    %1069 = vmatpush2.msra.mxu0 0.0
    %1070 = vmatprep.subr.mxu0 0.0
    %1071 = vmatpush2.msra.mxu0 0.0
    %1072 = vmatprep.subr.mxu0 0.0
    %1073 = vmatpush2.msra.mxu0 0.0
    %1074 = vmatprep.subr.mxu0 0.0
    %1075 = vmatpush2.msra.mxu0 0.0
    %1076 = vmatprep.subr.mxu0 0.0
    %1077 = vmatpush2.msra.mxu0 0.0
    %1078 = vmatprep.subr.mxu0 0.0
    %1079 = vmatpush2.msra.mxu0 0.0
    %1080 = vmatprep.subr.mxu0 0.0
    %1081 = vmatpush2.msra.mxu0 0.0
    %1082 = vmatprep.subr.mxu0 0.0
    %1083 = vmatpush2.msra.mxu0 0.0
    %1084 = vmatprep.subr.mxu0 0.0
    %1085 = vmatpush2.msra.mxu0 0.0
    %1086 = vmatprep.subr.mxu0 0.0
    %1087 = vmatpush2.msra.mxu0 0.0
    %1088 = vmatprep.mubr.f32.mxu0 0.0
    %1089 = vmatmul.mubr.f32.gmra.mxu0 0.0
    %v1090 = vpop.f32.mrf.mxu0
    %v1091 = vadd.f32 0.0, %v1090
    %v1092 = vpop.f32.mrf.mxu0
    %v1093 = vadd.f32 0.0, %v1092
    %1094 = vdwg.mxu0
    %1095 = vmatprep.subr.mxu0 %v1023
    %1096 = vmatpush1.msra.mxu0 %v1022
    %1097 = vmatprep.subr.mxu0 %v1019
    %1098 = vmatpush1.msra.mxu0 %v1018
    %1099 = vmatprep.subr.mxu0 %v1015
    %1100 = vmatpush1.msra.mxu0 %v1014
    %1101 = vmatprep.subr.mxu0 %v1011
    %1102 = vmatpush1.msra.mxu0 %v1010
    %1103 = vmatprep.subr.mxu0 %v1007
    %1104 = vmatpush1.msra.mxu0 %v1006
    %1105 = vmatprep.subr.mxu0 %v1003
    %1106 = vmatpush1.msra.mxu0 %v1002
    %1107 = vmatprep.subr.mxu0 %v999
    %1108 = vmatpush1.msra.mxu0 %v998
    %1109 = vmatprep.subr.mxu0 %v995
    %1110 = vmatpush1.msra.mxu0 %v994
    %1111 = vmatprep.subr.mxu0 %v991
    %1112 = vmatpush1.msra.mxu0 %v990
    %1113 = vmatprep.subr.mxu0 %v987
    %1114 = vmatpush1.msra.mxu0 %v986
    %1115 = vmatprep.subr.mxu0 %v983
    %1116 = vmatpush1.msra.mxu0 %v982
    %1117 = vmatprep.subr.mxu0 %v979
    %1118 = vmatpush1.msra.mxu0 %v978
    %1119 = vmatprep.subr.mxu0 %v975
    %1120 = vmatpush1.msra.mxu0 %v974
    %1121 = vmatprep.subr.mxu0 %v971
    %1122 = vmatpush1.msra.mxu0 %v970
    %1123 = vmatprep.subr.mxu0 %v967
    %1124 = vmatpush1.msra.mxu0 %v966
    %1125 = vmatprep.subr.mxu0 %v963
    %1126 = vmatpush1.msra.mxu0 %v962
    %1127 = vmatprep.subr.mxu0 0.0
    %1128 = vmatpush2.msra.mxu0 0.0
    %1129 = vmatprep.subr.mxu0 0.0
    %1130 = vmatpush2.msra.mxu0 0.0
    %1131 = vmatprep.subr.mxu0 0.0
    %1132 = vmatpush2.msra.mxu0 0.0
    %1133 = vmatprep.subr.mxu0 0.0
    %1134 = vmatpush2.msra.mxu0 0.0
    %1135 = vmatprep.subr.mxu0 0.0
    %1136 = vmatpush2.msra.mxu0 0.0
    %1137 = vmatprep.subr.mxu0 0.0
    %1138 = vmatpush2.msra.mxu0 0.0
    %1139 = vmatprep.subr.mxu0 0.0
    %1140 = vmatpush2.msra.mxu0 0.0
    %1141 = vmatprep.subr.mxu0 0.0
    %1142 = vmatpush2.msra.mxu0 0.0
    %1143 = vmatprep.subr.mxu0 0.0
    %1144 = vmatpush2.msra.mxu0 0.0
    %1145 = vmatprep.subr.mxu0 0.0
    %1146 = vmatpush2.msra.mxu0 0.0
    %1147 = vmatprep.subr.mxu0 0.0
    %1148 = vmatpush2.msra.mxu0 0.0
    %1149 = vmatprep.subr.mxu0 0.0
    %1150 = vmatpush2.msra.mxu0 0.0
    %1151 = vmatprep.subr.mxu0 0.0
    %1152 = vmatpush2.msra.mxu0 0.0
    %1153 = vmatprep.subr.mxu0 0.0
    %1154 = vmatpush2.msra.mxu0 0.0
    %1155 = vmatprep.subr.mxu0 0.0
    %1156 = vmatpush2.msra.mxu0 0.0
    %1157 = vmatprep.subr.mxu0 0.0
    %1158 = vmatpush2.msra.mxu0 0.0
    %1159 = vmatprep.mubr.f32.mxu0 0.0
    %1160 = vmatmul.mubr.f32.gmra.mxu0 0.0
    %v1161 = vpop.f32.mrf.mxu0
    %v1162 = vadd.f32 0.0, %v1161
    %v1163 = vpop.f32.mrf.mxu0
    %v1164 = vadd.f32 0.0, %v1163
    %1165 = vdwg.mxu0
    %v1166 = vadd.f32 %v956, %v1091
    %v1167 = vadd.f32 %v957, %v1093
    %v1168 = vadd.f32 %v958, %v1162
    %v1169 = vadd.f32 %v959, %v1164
    %v1170 = vxor.u32 %v1166, 2147483648
    %v1171 = vmul.f32 %v1170, 1.442695
    %v1172 = vpow.pop %v1171
    %v1173 = vadd.f32 %v1172, 1.0
    %v1174 = vrcp.pop %v1173
    %v1175 = vmul.f32 1.0, %v1174
    %v1176 = vxor.u32 %v1167, 2147483648
    %v1177 = vmul.f32 %v1176, 1.442695
    %v1178 = vpow.pop %v1177
    %v1179 = vadd.f32 %v1178, 1.0
    %v1180 = vrcp.pop %v1179
    %v1181 = vmul.f32 1.0, %v1180
    %v1182 = vtanh.pop %v1168
    %v1183 = vxor.u32 %v1169, 2147483648
    %v1184 = vmul.f32 %v1183, 1.442695
    %v1185 = vpow.pop %v1184
    %v1186 = vadd.f32 %v1185, 1.0
    %v1187 = vrcp.pop %v1186
    %v1188 = vmul.f32 1.0, %v1187
    %v1189 = vmul.f32 %v1181, 0.0
    %v1190 = vmul.f32 %v1175, %v1182
    %v1191 = vadd.f32 %v1189, %v1190
    %v1192 = vtanh.pop %v1191
    %v1193 = vmul.f32 %v1188, %v1192
    %1194 = vst [vmem:[#allocation4] sm:$0xff] %v954
    %s1195 = scalar_lea.vmem [#allocation5], 56
    %1196 = vst [vmem:[%s1195] sm:$0xff] %v1193
    %s1197 = scalar_lea.vmem [#allocation2], 32
    %v1198 = vld [vmem:[%s1197] sm:$0xff]
    %v1199 = vld [vmem:[%s1197 + $0x8] sm:$0xff]
    %v1200 = vld [vmem:[%s1197 + $0x10] sm:$0xff]
    %v1201 = vld [vmem:[%s1197 + $0x18] sm:$0xff]
    %v1202 = vld [vmem:[#allocation8] sm:$0xff]
    %v1203 = vld [vmem:[#allocation8 + $0x8] sm:$0xff]
    %v1204 = vld [vmem:[#allocation8 + $0x10] sm:$0xff]
    %v1205 = vld [vmem:[#allocation8 + $0x18] sm:$0xff]
    %v1206 = vld [vmem:[#allocation8 + $0x20] sm:$0xff]
    %v1207 = vld [vmem:[#allocation8 + $0x28] sm:$0xff]
    %v1208 = vld [vmem:[#allocation8 + $0x30] sm:$0xff]
    %v1209 = vld [vmem:[#allocation8 + $0x38] sm:$0xff]
    %v1210 = vld [vmem:[#allocation8 + $0x40] sm:$0xff]
    %v1211 = vld [vmem:[#allocation8 + $0x48] sm:$0xff]
    %v1212 = vld [vmem:[#allocation8 + $0x50] sm:$0xff]
    %v1213 = vld [vmem:[#allocation8 + $0x58] sm:$0xff]
    %v1214 = vld [vmem:[#allocation8 + $0x60] sm:$0xff]
    %v1215 = vld [vmem:[#allocation8 + $0x68] sm:$0xff]
    %v1216 = vld [vmem:[#allocation8 + $0x70] sm:$0xff]
    %v1217 = vld [vmem:[#allocation8 + $0x78] sm:$0xff]
    %v1218 = vld [vmem:[#allocation8 + $0x80] sm:$0xff]
    %v1219 = vld [vmem:[#allocation8 + $0x88] sm:$0xff]
    %v1220 = vld [vmem:[#allocation8 + $0x90] sm:$0xff]
    %v1221 = vld [vmem:[#allocation8 + $0x98] sm:$0xff]
    %v1222 = vld [vmem:[#allocation8 + $0xa0] sm:$0xff]
    %v1223 = vld [vmem:[#allocation8 + $0xa8] sm:$0xff]
    %v1224 = vld [vmem:[#allocation8 + $0xb0] sm:$0xff]
    %v1225 = vld [vmem:[#allocation8 + $0xb8] sm:$0xff]
    %v1226 = vld [vmem:[#allocation8 + $0xc0] sm:$0xff]
    %v1227 = vld [vmem:[#allocation8 + $0xc8] sm:$0xff]
    %v1228 = vld [vmem:[#allocation8 + $0xd0] sm:$0xff]
    %v1229 = vld [vmem:[#allocation8 + $0xd8] sm:$0xff]
    %v1230 = vld [vmem:[#allocation8 + $0xe0] sm:$0xff]
    %v1231 = vld [vmem:[#allocation8 + $0xe8] sm:$0xff]
    %v1232 = vld [vmem:[#allocation8 + $0xf0] sm:$0xff]
    %v1233 = vld [vmem:[#allocation8 + $0xf8] sm:$0xff]
    %v1234 = vld [vmem:[#allocation8 + $0x100] sm:$0xff]
    %v1235 = vld [vmem:[#allocation8 + $0x108] sm:$0xff]
    %v1236 = vld [vmem:[#allocation8 + $0x110] sm:$0xff]
    %v1237 = vld [vmem:[#allocation8 + $0x118] sm:$0xff]
    %v1238 = vld [vmem:[#allocation8 + $0x120] sm:$0xff]
    %v1239 = vld [vmem:[#allocation8 + $0x128] sm:$0xff]
    %v1240 = vld [vmem:[#allocation8 + $0x130] sm:$0xff]
    %v1241 = vld [vmem:[#allocation8 + $0x138] sm:$0xff]
    %v1242 = vld [vmem:[#allocation8 + $0x140] sm:$0xff]
    %v1243 = vld [vmem:[#allocation8 + $0x148] sm:$0xff]
    %v1244 = vld [vmem:[#allocation8 + $0x150] sm:$0xff]
    %v1245 = vld [vmem:[#allocation8 + $0x158] sm:$0xff]
    %v1246 = vld [vmem:[#allocation8 + $0x160] sm:$0xff]
    %v1247 = vld [vmem:[#allocation8 + $0x168] sm:$0xff]
    %v1248 = vld [vmem:[#allocation8 + $0x170] sm:$0xff]
    %v1249 = vld [vmem:[#allocation8 + $0x178] sm:$0xff]
    %v1250 = vld [vmem:[#allocation8 + $0x180] sm:$0xff]
    %v1251 = vld [vmem:[#allocation8 + $0x188] sm:$0xff]
    %v1252 = vld [vmem:[#allocation8 + $0x190] sm:$0xff]
    %v1253 = vld [vmem:[#allocation8 + $0x198] sm:$0xff]
    %v1254 = vld [vmem:[#allocation8 + $0x1a0] sm:$0xff]
    %v1255 = vld [vmem:[#allocation8 + $0x1a8] sm:$0xff]
    %v1256 = vld [vmem:[#allocation8 + $0x1b0] sm:$0xff]
    %v1257 = vld [vmem:[#allocation8 + $0x1b8] sm:$0xff]
    %v1258 = vld [vmem:[#allocation8 + $0x1c0] sm:$0xff]
    %v1259 = vld [vmem:[#allocation8 + $0x1c8] sm:$0xff]
    %v1260 = vld [vmem:[#allocation8 + $0x1d0] sm:$0xff]
    %v1261 = vld [vmem:[#allocation8 + $0x1d8] sm:$0xff]
    %v1262 = vld [vmem:[#allocation8 + $0x1e0] sm:$0xff]
    %v1263 = vld [vmem:[#allocation8 + $0x1e8] sm:$0xff]
    %v1264 = vld [vmem:[#allocation8 + $0x1f0] sm:$0xff]
    %v1265 = vld [vmem:[#allocation8 + $0x1f8] sm:$0xff]
    %1266 = vmatprep.subr.mxu0 %v1263
    %1267 = vmatpush1.msra.mxu0 %v1262
    %1268 = vmatprep.subr.mxu0 %v1259
    %1269 = vmatpush1.msra.mxu0 %v1258
    %1270 = vmatprep.subr.mxu0 %v1255
    %1271 = vmatpush1.msra.mxu0 %v1254
    %1272 = vmatprep.subr.mxu0 %v1251
    %1273 = vmatpush1.msra.mxu0 %v1250
    %1274 = vmatprep.subr.mxu0 %v1247
    %1275 = vmatpush1.msra.mxu0 %v1246
    %1276 = vmatprep.subr.mxu0 %v1243
    %1277 = vmatpush1.msra.mxu0 %v1242
    %1278 = vmatprep.subr.mxu0 %v1239
    %1279 = vmatpush1.msra.mxu0 %v1238
    %1280 = vmatprep.subr.mxu0 %v1235
    %1281 = vmatpush1.msra.mxu0 %v1234
    %1282 = vmatprep.subr.mxu0 %v1231
    %1283 = vmatpush1.msra.mxu0 %v1230
    %1284 = vmatprep.subr.mxu0 %v1227
    %1285 = vmatpush1.msra.mxu0 %v1226
    %1286 = vmatprep.subr.mxu0 %v1223
    %1287 = vmatpush1.msra.mxu0 %v1222
    %1288 = vmatprep.subr.mxu0 %v1219
    %1289 = vmatpush1.msra.mxu0 %v1218
    %1290 = vmatprep.subr.mxu0 %v1215
    %1291 = vmatpush1.msra.mxu0 %v1214
    %1292 = vmatprep.subr.mxu0 %v1211
    %1293 = vmatpush1.msra.mxu0 %v1210
    %1294 = vmatprep.subr.mxu0 %v1207
    %1295 = vmatpush1.msra.mxu0 %v1206
    %1296 = vmatprep.subr.mxu0 %v1203
    %1297 = vmatpush1.msra.mxu0 %v1202
    %1298 = vmatprep.subr.mxu0 0.0
    %1299 = vmatpush2.msra.mxu0 0.0
    %1300 = vmatprep.subr.mxu0 0.0
    %1301 = vmatpush2.msra.mxu0 0.0
    %1302 = vmatprep.subr.mxu0 0.0
    %1303 = vmatpush2.msra.mxu0 0.0
    %1304 = vmatprep.subr.mxu0 0.0
    %1305 = vmatpush2.msra.mxu0 0.0
    %1306 = vmatprep.subr.mxu0 0.0
    %1307 = vmatpush2.msra.mxu0 0.0
    %1308 = vmatprep.subr.mxu0 0.0
    %1309 = vmatpush2.msra.mxu0 0.0
    %1310 = vmatprep.subr.mxu0 0.0
    %1311 = vmatpush2.msra.mxu0 0.0
    %1312 = vmatprep.subr.mxu0 0.0
    %1313 = vmatpush2.msra.mxu0 0.0
    %1314 = vmatprep.subr.mxu0 0.0
    %1315 = vmatpush2.msra.mxu0 0.0
    %1316 = vmatprep.subr.mxu0 0.0
    %1317 = vmatpush2.msra.mxu0 0.0
    %1318 = vmatprep.subr.mxu0 0.0
    %1319 = vmatpush2.msra.mxu0 0.0
    %1320 = vmatprep.subr.mxu0 0.0
    %1321 = vmatpush2.msra.mxu0 0.0
    %1322 = vmatprep.subr.mxu0 0.0
    %1323 = vmatpush2.msra.mxu0 0.0
    %1324 = vmatprep.subr.mxu0 0.0
    %1325 = vmatpush2.msra.mxu0 0.0
    %1326 = vmatprep.subr.mxu0 0.0
    %1327 = vmatpush2.msra.mxu0 0.0
    %1328 = vmatprep.subr.mxu0 0.0
    %1329 = vmatpush2.msra.mxu0 0.0
    %1330 = vmatprep.mubr.f32.mxu0 0.0
    %1331 = vmatmul.mubr.f32.gmra.mxu0 %v954
    %v1332 = vpop.f32.mrf.mxu0
    %v1333 = vadd.f32 0.0, %v1332
    %v1334 = vpop.f32.mrf.mxu0
    %v1335 = vadd.f32 0.0, %v1334
    %1336 = vdwg.mxu0
    %1337 = vmatprep.subr.mxu0 %v1265
    %1338 = vmatpush1.msra.mxu0 %v1264
    %1339 = vmatprep.subr.mxu0 %v1261
    %1340 = vmatpush1.msra.mxu0 %v1260
    %1341 = vmatprep.subr.mxu0 %v1257
    %1342 = vmatpush1.msra.mxu0 %v1256
    %1343 = vmatprep.subr.mxu0 %v1253
    %1344 = vmatpush1.msra.mxu0 %v1252
    %1345 = vmatprep.subr.mxu0 %v1249
    %1346 = vmatpush1.msra.mxu0 %v1248
    %1347 = vmatprep.subr.mxu0 %v1245
    %1348 = vmatpush1.msra.mxu0 %v1244
    %1349 = vmatprep.subr.mxu0 %v1241
    %1350 = vmatpush1.msra.mxu0 %v1240
    %1351 = vmatprep.subr.mxu0 %v1237
    %1352 = vmatpush1.msra.mxu0 %v1236
    %1353 = vmatprep.subr.mxu0 %v1233
    %1354 = vmatpush1.msra.mxu0 %v1232
    %1355 = vmatprep.subr.mxu0 %v1229
    %1356 = vmatpush1.msra.mxu0 %v1228
    %1357 = vmatprep.subr.mxu0 %v1225
    %1358 = vmatpush1.msra.mxu0 %v1224
    %1359 = vmatprep.subr.mxu0 %v1221
    %1360 = vmatpush1.msra.mxu0 %v1220
    %1361 = vmatprep.subr.mxu0 %v1217
    %1362 = vmatpush1.msra.mxu0 %v1216
    %1363 = vmatprep.subr.mxu0 %v1213
    %1364 = vmatpush1.msra.mxu0 %v1212
    %1365 = vmatprep.subr.mxu0 %v1209
    %1366 = vmatpush1.msra.mxu0 %v1208
    %1367 = vmatprep.subr.mxu0 %v1205
    %1368 = vmatpush1.msra.mxu0 %v1204
    %1369 = vmatprep.subr.mxu0 0.0
    %1370 = vmatpush2.msra.mxu0 0.0
    %1371 = vmatprep.subr.mxu0 0.0
    %1372 = vmatpush2.msra.mxu0 0.0
    %1373 = vmatprep.subr.mxu0 0.0
    %1374 = vmatpush2.msra.mxu0 0.0
    %1375 = vmatprep.subr.mxu0 0.0
    %1376 = vmatpush2.msra.mxu0 0.0
    %1377 = vmatprep.subr.mxu0 0.0
    %1378 = vmatpush2.msra.mxu0 0.0
    %1379 = vmatprep.subr.mxu0 0.0
    %1380 = vmatpush2.msra.mxu0 0.0
    %1381 = vmatprep.subr.mxu0 0.0
    %1382 = vmatpush2.msra.mxu0 0.0
    %1383 = vmatprep.subr.mxu0 0.0
    %1384 = vmatpush2.msra.mxu0 0.0
    %1385 = vmatprep.subr.mxu0 0.0
    %1386 = vmatpush2.msra.mxu0 0.0
    %1387 = vmatprep.subr.mxu0 0.0
    %1388 = vmatpush2.msra.mxu0 0.0
    %1389 = vmatprep.subr.mxu0 0.0
    %1390 = vmatpush2.msra.mxu0 0.0
    %1391 = vmatprep.subr.mxu0 0.0
    %1392 = vmatpush2.msra.mxu0 0.0
    %1393 = vmatprep.subr.mxu0 0.0
    %1394 = vmatpush2.msra.mxu0 0.0
    %1395 = vmatprep.subr.mxu0 0.0
    %1396 = vmatpush2.msra.mxu0 0.0
    %1397 = vmatprep.subr.mxu0 0.0
    %1398 = vmatpush2.msra.mxu0 0.0
    %1399 = vmatprep.subr.mxu0 0.0
    %1400 = vmatpush2.msra.mxu0 0.0
    %1401 = vmatprep.mubr.f32.mxu0 0.0
    %1402 = vmatmul.mubr.f32.gmra.mxu0 %v954
    %v1403 = vpop.f32.mrf.mxu0
    %v1404 = vadd.f32 0.0, %v1403
    %v1405 = vpop.f32.mrf.mxu0
    %v1406 = vadd.f32 0.0, %v1405
    %1407 = vdwg.mxu0
    %v1408 = vadd.f32 %v1198, %v1333
    %v1409 = vadd.f32 %v1199, %v1335
    %v1410 = vadd.f32 %v1200, %v1404
    %v1411 = vadd.f32 %v1201, %v1406
    %v1412 = vxor.u32 %v1408, 2147483648
    %v1413 = vmul.f32 %v1412, 1.442695
    %v1414 = vpow.pop %v1413
    %v1415 = vadd.f32 %v1414, 1.0
    %v1416 = vrcp.pop %v1415
    %v1417 = vmul.f32 1.0, %v1416
    %v1418 = vxor.u32 %v1409, 2147483648
    %v1419 = vmul.f32 %v1418, 1.442695
    %v1420 = vpow.pop %v1419
    %v1421 = vadd.f32 %v1420, 1.0
    %v1422 = vrcp.pop %v1421
    %v1423 = vmul.f32 1.0, %v1422
    %v1424 = vtanh.pop %v1410
    %v1425 = vxor.u32 %v1411, 2147483648
    %v1426 = vmul.f32 %v1425, 1.442695
    %v1427 = vpow.pop %v1426
    %v1428 = vadd.f32 %v1427, 1.0
    %v1429 = vrcp.pop %v1428
    %v1430 = vmul.f32 1.0, %v1429
    %v1431 = vmul.f32 %v1423, %v952
    %v1432 = vmul.f32 %v1417, %v1424
    %v1433 = vadd.f32 %v1431, %v1432
    %v1434 = vtanh.pop %v1433
    %v1435 = vmul.f32 %v1430, %v1434
    %s1436 = scalar_lea.vmem [#allocation3], 192
    %v1437 = vld [vmem:[%s1436] sm:$0xff]
    %v1438 = vld [vmem:[%s1436 + $0x8] sm:$0xff]
    %v1439 = vld [vmem:[%s1436 + $0x10] sm:$0xff]
    %v1440 = vld [vmem:[%s1436 + $0x18] sm:$0xff]
    %v1441 = vld [vmem:[#allocation10] sm:$0xff]
    %v1442 = vld [vmem:[#allocation10 + $0x8] sm:$0xff]
    %v1443 = vld [vmem:[#allocation10 + $0x10] sm:$0xff]
    %v1444 = vld [vmem:[#allocation10 + $0x18] sm:$0xff]
    %v1445 = vld [vmem:[#allocation10 + $0x20] sm:$0xff]
    %v1446 = vld [vmem:[#allocation10 + $0x28] sm:$0xff]
    %v1447 = vld [vmem:[#allocation10 + $0x30] sm:$0xff]
    %v1448 = vld [vmem:[#allocation10 + $0x38] sm:$0xff]
    %v1449 = vld [vmem:[#allocation10 + $0x40] sm:$0xff]
    %v1450 = vld [vmem:[#allocation10 + $0x48] sm:$0xff]
    %v1451 = vld [vmem:[#allocation10 + $0x50] sm:$0xff]
    %v1452 = vld [vmem:[#allocation10 + $0x58] sm:$0xff]
    %v1453 = vld [vmem:[#allocation10 + $0x60] sm:$0xff]
    %v1454 = vld [vmem:[#allocation10 + $0x68] sm:$0xff]
    %v1455 = vld [vmem:[#allocation10 + $0x70] sm:$0xff]
    %v1456 = vld [vmem:[#allocation10 + $0x78] sm:$0xff]
    %v1457 = vld [vmem:[#allocation10 + $0x80] sm:$0xff]
    %v1458 = vld [vmem:[#allocation10 + $0x88] sm:$0xff]
    %v1459 = vld [vmem:[#allocation10 + $0x90] sm:$0xff]
    %v1460 = vld [vmem:[#allocation10 + $0x98] sm:$0xff]
    %v1461 = vld [vmem:[#allocation10 + $0xa0] sm:$0xff]
    %v1462 = vld [vmem:[#allocation10 + $0xa8] sm:$0xff]
    %v1463 = vld [vmem:[#allocation10 + $0xb0] sm:$0xff]
    %v1464 = vld [vmem:[#allocation10 + $0xb8] sm:$0xff]
    %v1465 = vld [vmem:[#allocation10 + $0xc0] sm:$0xff]
    %v1466 = vld [vmem:[#allocation10 + $0xc8] sm:$0xff]
    %v1467 = vld [vmem:[#allocation10 + $0xd0] sm:$0xff]
    %v1468 = vld [vmem:[#allocation10 + $0xd8] sm:$0xff]
    %v1469 = vld [vmem:[#allocation10 + $0xe0] sm:$0xff]
    %v1470 = vld [vmem:[#allocation10 + $0xe8] sm:$0xff]
    %v1471 = vld [vmem:[#allocation10 + $0xf0] sm:$0xff]
    %v1472 = vld [vmem:[#allocation10 + $0xf8] sm:$0xff]
    %v1473 = vld [vmem:[#allocation10 + $0x100] sm:$0xff]
    %v1474 = vld [vmem:[#allocation10 + $0x108] sm:$0xff]
    %v1475 = vld [vmem:[#allocation10 + $0x110] sm:$0xff]
    %v1476 = vld [vmem:[#allocation10 + $0x118] sm:$0xff]
    %v1477 = vld [vmem:[#allocation10 + $0x120] sm:$0xff]
    %v1478 = vld [vmem:[#allocation10 + $0x128] sm:$0xff]
    %v1479 = vld [vmem:[#allocation10 + $0x130] sm:$0xff]
    %v1480 = vld [vmem:[#allocation10 + $0x138] sm:$0xff]
    %v1481 = vld [vmem:[#allocation10 + $0x140] sm:$0xff]
    %v1482 = vld [vmem:[#allocation10 + $0x148] sm:$0xff]
    %v1483 = vld [vmem:[#allocation10 + $0x150] sm:$0xff]
    %v1484 = vld [vmem:[#allocation10 + $0x158] sm:$0xff]
    %v1485 = vld [vmem:[#allocation10 + $0x160] sm:$0xff]
    %v1486 = vld [vmem:[#allocation10 + $0x168] sm:$0xff]
    %v1487 = vld [vmem:[#allocation10 + $0x170] sm:$0xff]
    %v1488 = vld [vmem:[#allocation10 + $0x178] sm:$0xff]
    %v1489 = vld [vmem:[#allocation10 + $0x180] sm:$0xff]
    %v1490 = vld [vmem:[#allocation10 + $0x188] sm:$0xff]
    %v1491 = vld [vmem:[#allocation10 + $0x190] sm:$0xff]
    %v1492 = vld [vmem:[#allocation10 + $0x198] sm:$0xff]
    %v1493 = vld [vmem:[#allocation10 + $0x1a0] sm:$0xff]
    %v1494 = vld [vmem:[#allocation10 + $0x1a8] sm:$0xff]
    %v1495 = vld [vmem:[#allocation10 + $0x1b0] sm:$0xff]
    %v1496 = vld [vmem:[#allocation10 + $0x1b8] sm:$0xff]
    %v1497 = vld [vmem:[#allocation10 + $0x1c0] sm:$0xff]
    %v1498 = vld [vmem:[#allocation10 + $0x1c8] sm:$0xff]
    %v1499 = vld [vmem:[#allocation10 + $0x1d0] sm:$0xff]
    %v1500 = vld [vmem:[#allocation10 + $0x1d8] sm:$0xff]
    %v1501 = vld [vmem:[#allocation10 + $0x1e0] sm:$0xff]
    %v1502 = vld [vmem:[#allocation10 + $0x1e8] sm:$0xff]
    %v1503 = vld [vmem:[#allocation10 + $0x1f0] sm:$0xff]
    %v1504 = vld [vmem:[#allocation10 + $0x1f8] sm:$0xff]
    %1505 = vmatprep.subr.mxu0 %v1502
    %1506 = vmatpush1.msra.mxu0 %v1501
    %1507 = vmatprep.subr.mxu0 %v1498
    %1508 = vmatpush1.msra.mxu0 %v1497
    %1509 = vmatprep.subr.mxu0 %v1494
    %1510 = vmatpush1.msra.mxu0 %v1493
    %1511 = vmatprep.subr.mxu0 %v1490
    %1512 = vmatpush1.msra.mxu0 %v1489
    %1513 = vmatprep.subr.mxu0 %v1486
    %1514 = vmatpush1.msra.mxu0 %v1485
    %1515 = vmatprep.subr.mxu0 %v1482
    %1516 = vmatpush1.msra.mxu0 %v1481
    %1517 = vmatprep.subr.mxu0 %v1478
    %1518 = vmatpush1.msra.mxu0 %v1477
    %1519 = vmatprep.subr.mxu0 %v1474
    %1520 = vmatpush1.msra.mxu0 %v1473
    %1521 = vmatprep.subr.mxu0 %v1470
    %1522 = vmatpush1.msra.mxu0 %v1469
    %1523 = vmatprep.subr.mxu0 %v1466
    %1524 = vmatpush1.msra.mxu0 %v1465
    %1525 = vmatprep.subr.mxu0 %v1462
    %1526 = vmatpush1.msra.mxu0 %v1461
    %1527 = vmatprep.subr.mxu0 %v1458
    %1528 = vmatpush1.msra.mxu0 %v1457
    %1529 = vmatprep.subr.mxu0 %v1454
    %1530 = vmatpush1.msra.mxu0 %v1453
    %1531 = vmatprep.subr.mxu0 %v1450
    %1532 = vmatpush1.msra.mxu0 %v1449
    %1533 = vmatprep.subr.mxu0 %v1446
    %1534 = vmatpush1.msra.mxu0 %v1445
    %1535 = vmatprep.subr.mxu0 %v1442
    %1536 = vmatpush1.msra.mxu0 %v1441
    %1537 = vmatprep.subr.mxu0 0.0
    %1538 = vmatpush2.msra.mxu0 0.0
    %1539 = vmatprep.subr.mxu0 0.0
    %1540 = vmatpush2.msra.mxu0 0.0
    %1541 = vmatprep.subr.mxu0 0.0
    %1542 = vmatpush2.msra.mxu0 0.0
    %1543 = vmatprep.subr.mxu0 0.0
    %1544 = vmatpush2.msra.mxu0 0.0
    %1545 = vmatprep.subr.mxu0 0.0
    %1546 = vmatpush2.msra.mxu0 0.0
    %1547 = vmatprep.subr.mxu0 0.0
    %1548 = vmatpush2.msra.mxu0 0.0
    %1549 = vmatprep.subr.mxu0 0.0
    %1550 = vmatpush2.msra.mxu0 0.0
    %1551 = vmatprep.subr.mxu0 0.0
    %1552 = vmatpush2.msra.mxu0 0.0
    %1553 = vmatprep.subr.mxu0 0.0
    %1554 = vmatpush2.msra.mxu0 0.0
    %1555 = vmatprep.subr.mxu0 0.0
    %1556 = vmatpush2.msra.mxu0 0.0
    %1557 = vmatprep.subr.mxu0 0.0
    %1558 = vmatpush2.msra.mxu0 0.0
    %1559 = vmatprep.subr.mxu0 0.0
    %1560 = vmatpush2.msra.mxu0 0.0
    %1561 = vmatprep.subr.mxu0 0.0
    %1562 = vmatpush2.msra.mxu0 0.0
    %1563 = vmatprep.subr.mxu0 0.0
    %1564 = vmatpush2.msra.mxu0 0.0
    %1565 = vmatprep.subr.mxu0 0.0
    %1566 = vmatpush2.msra.mxu0 0.0
    %1567 = vmatprep.subr.mxu0 0.0
    %1568 = vmatpush2.msra.mxu0 0.0
    %1569 = vmatprep.mubr.f32.mxu0 0.0
    %1570 = vmatmul.mubr.f32.gmra.mxu0 %v1193
    %v1571 = vpop.f32.mrf.mxu0
    %v1572 = vadd.f32 0.0, %v1571
    %v1573 = vpop.f32.mrf.mxu0
    %v1574 = vadd.f32 0.0, %v1573
    %1575 = vdwg.mxu0
    %1576 = vmatprep.subr.mxu0 %v1504
    %1577 = vmatpush1.msra.mxu0 %v1503
    %1578 = vmatprep.subr.mxu0 %v1500
    %1579 = vmatpush1.msra.mxu0 %v1499
    %1580 = vmatprep.subr.mxu0 %v1496
    %1581 = vmatpush1.msra.mxu0 %v1495
    %1582 = vmatprep.subr.mxu0 %v1492
    %1583 = vmatpush1.msra.mxu0 %v1491
    %1584 = vmatprep.subr.mxu0 %v1488
    %1585 = vmatpush1.msra.mxu0 %v1487
    %1586 = vmatprep.subr.mxu0 %v1484
    %1587 = vmatpush1.msra.mxu0 %v1483
    %1588 = vmatprep.subr.mxu0 %v1480
    %1589 = vmatpush1.msra.mxu0 %v1479
    %1590 = vmatprep.subr.mxu0 %v1476
    %1591 = vmatpush1.msra.mxu0 %v1475
    %1592 = vmatprep.subr.mxu0 %v1472
    %1593 = vmatpush1.msra.mxu0 %v1471
    %1594 = vmatprep.subr.mxu0 %v1468
    %1595 = vmatpush1.msra.mxu0 %v1467
    %1596 = vmatprep.subr.mxu0 %v1464
    %1597 = vmatpush1.msra.mxu0 %v1463
    %1598 = vmatprep.subr.mxu0 %v1460
    %1599 = vmatpush1.msra.mxu0 %v1459
    %1600 = vmatprep.subr.mxu0 %v1456
    %1601 = vmatpush1.msra.mxu0 %v1455
    %1602 = vmatprep.subr.mxu0 %v1452
    %1603 = vmatpush1.msra.mxu0 %v1451
    %1604 = vmatprep.subr.mxu0 %v1448
    %1605 = vmatpush1.msra.mxu0 %v1447
    %1606 = vmatprep.subr.mxu0 %v1444
    %1607 = vmatpush1.msra.mxu0 %v1443
    %1608 = vmatprep.subr.mxu0 0.0
    %1609 = vmatpush2.msra.mxu0 0.0
    %1610 = vmatprep.subr.mxu0 0.0
    %1611 = vmatpush2.msra.mxu0 0.0
    %1612 = vmatprep.subr.mxu0 0.0
    %1613 = vmatpush2.msra.mxu0 0.0
    %1614 = vmatprep.subr.mxu0 0.0
    %1615 = vmatpush2.msra.mxu0 0.0
    %1616 = vmatprep.subr.mxu0 0.0
    %1617 = vmatpush2.msra.mxu0 0.0
    %1618 = vmatprep.subr.mxu0 0.0
    %1619 = vmatpush2.msra.mxu0 0.0
    %1620 = vmatprep.subr.mxu0 0.0
    %1621 = vmatpush2.msra.mxu0 0.0
    %1622 = vmatprep.subr.mxu0 0.0
    %1623 = vmatpush2.msra.mxu0 0.0
    %1624 = vmatprep.subr.mxu0 0.0
    %1625 = vmatpush2.msra.mxu0 0.0
    %1626 = vmatprep.subr.mxu0 0.0
    %1627 = vmatpush2.msra.mxu0 0.0
    %1628 = vmatprep.subr.mxu0 0.0
    %1629 = vmatpush2.msra.mxu0 0.0
    %1630 = vmatprep.subr.mxu0 0.0
    %1631 = vmatpush2.msra.mxu0 0.0
    %1632 = vmatprep.subr.mxu0 0.0
    %1633 = vmatpush2.msra.mxu0 0.0
    %1634 = vmatprep.subr.mxu0 0.0
    %1635 = vmatpush2.msra.mxu0 0.0
    %1636 = vmatprep.subr.mxu0 0.0
    %1637 = vmatpush2.msra.mxu0 0.0
    %1638 = vmatprep.subr.mxu0 0.0
    %1639 = vmatpush2.msra.mxu0 0.0
    %1640 = vmatprep.mubr.f32.mxu0 0.0
    %1641 = vmatmul.mubr.f32.gmra.mxu0 %v1193
    %v1642 = vpop.f32.mrf.mxu0
    %v1643 = vadd.f32 0.0, %v1642
    %v1644 = vpop.f32.mrf.mxu0
    %v1645 = vadd.f32 0.0, %v1644
    %1646 = vdwg.mxu0
    %v1647 = vadd.f32 %v1437, %v1572
    %v1648 = vadd.f32 %v1438, %v1574
    %v1649 = vadd.f32 %v1439, %v1643
    %v1650 = vadd.f32 %v1440, %v1645
    %v1651 = vxor.u32 %v1647, 2147483648
    %v1652 = vmul.f32 %v1651, 1.442695
    %v1653 = vpow.pop %v1652
    %v1654 = vadd.f32 %v1653, 1.0
    %v1655 = vrcp.pop %v1654
    %v1656 = vmul.f32 1.0, %v1655
    %v1657 = vxor.u32 %v1648, 2147483648
    %v1658 = vmul.f32 %v1657, 1.442695
    %v1659 = vpow.pop %v1658
    %v1660 = vadd.f32 %v1659, 1.0
    %v1661 = vrcp.pop %v1660
    %v1662 = vmul.f32 1.0, %v1661
    %v1663 = vtanh.pop %v1649
    %v1664 = vxor.u32 %v1650, 2147483648
    %v1665 = vmul.f32 %v1664, 1.442695
    %v1666 = vpow.pop %v1665
    %v1667 = vadd.f32 %v1666, 1.0
    %v1668 = vrcp.pop %v1667
    %v1669 = vmul.f32 1.0, %v1668
    %v1670 = vmul.f32 %v1662, %v1191
    %v1671 = vmul.f32 %v1656, %v1663
    %v1672 = vadd.f32 %v1670, %v1671
    %v1673 = vtanh.pop %v1672
    %v1674 = vmul.f32 %v1669, %v1673
    %s1675 = scalar_lea.vmem [#allocation4], 8
    %1676 = vst [vmem:[%s1675] sm:$0xff] %v1435
    %s1677 = scalar_lea.vmem [#allocation5], 48
    %1678 = vst [vmem:[%s1677] sm:$0xff] %v1674
    %s1679 = scalar_lea.vmem [#allocation2], 64
    %v1680 = vld [vmem:[%s1679] sm:$0xff]
    %v1681 = vld [vmem:[%s1679 + $0x8] sm:$0xff]
    %v1682 = vld [vmem:[%s1679 + $0x10] sm:$0xff]
    %v1683 = vld [vmem:[%s1679 + $0x18] sm:$0xff]
    %v1684 = vld [vmem:[#allocation8] sm:$0xff]
    %v1685 = vld [vmem:[#allocation8 + $0x8] sm:$0xff]
    %v1686 = vld [vmem:[#allocation8 + $0x10] sm:$0xff]
    %v1687 = vld [vmem:[#allocation8 + $0x18] sm:$0xff]
    %v1688 = vld [vmem:[#allocation8 + $0x20] sm:$0xff]
    %v1689 = vld [vmem:[#allocation8 + $0x28] sm:$0xff]
    %v1690 = vld [vmem:[#allocation8 + $0x30] sm:$0xff]
    %v1691 = vld [vmem:[#allocation8 + $0x38] sm:$0xff]
    %v1692 = vld [vmem:[#allocation8 + $0x40] sm:$0xff]
    %v1693 = vld [vmem:[#allocation8 + $0x48] sm:$0xff]
    %v1694 = vld [vmem:[#allocation8 + $0x50] sm:$0xff]
    %v1695 = vld [vmem:[#allocation8 + $0x58] sm:$0xff]
    %v1696 = vld [vmem:[#allocation8 + $0x60] sm:$0xff]
    %v1697 = vld [vmem:[#allocation8 + $0x68] sm:$0xff]
    %v1698 = vld [vmem:[#allocation8 + $0x70] sm:$0xff]
    %v1699 = vld [vmem:[#allocation8 + $0x78] sm:$0xff]
    %v1700 = vld [vmem:[#allocation8 + $0x80] sm:$0xff]
    %v1701 = vld [vmem:[#allocation8 + $0x88] sm:$0xff]
    %v1702 = vld [vmem:[#allocation8 + $0x90] sm:$0xff]
    %v1703 = vld [vmem:[#allocation8 + $0x98] sm:$0xff]
    %v1704 = vld [vmem:[#allocation8 + $0xa0] sm:$0xff]
    %v1705 = vld [vmem:[#allocation8 + $0xa8] sm:$0xff]
    %v1706 = vld [vmem:[#allocation8 + $0xb0] sm:$0xff]
    %v1707 = vld [vmem:[#allocation8 + $0xb8] sm:$0xff]
    %v1708 = vld [vmem:[#allocation8 + $0xc0] sm:$0xff]
    %v1709 = vld [vmem:[#allocation8 + $0xc8] sm:$0xff]
    %v1710 = vld [vmem:[#allocation8 + $0xd0] sm:$0xff]
    %v1711 = vld [vmem:[#allocation8 + $0xd8] sm:$0xff]
    %v1712 = vld [vmem:[#allocation8 + $0xe0] sm:$0xff]
    %v1713 = vld [vmem:[#allocation8 + $0xe8] sm:$0xff]
    %v1714 = vld [vmem:[#allocation8 + $0xf0] sm:$0xff]
    %v1715 = vld [vmem:[#allocation8 + $0xf8] sm:$0xff]
    %v1716 = vld [vmem:[#allocation8 + $0x100] sm:$0xff]
    %v1717 = vld [vmem:[#allocation8 + $0x108] sm:$0xff]
    %v1718 = vld [vmem:[#allocation8 + $0x110] sm:$0xff]
    %v1719 = vld [vmem:[#allocation8 + $0x118] sm:$0xff]
    %v1720 = vld [vmem:[#allocation8 + $0x120] sm:$0xff]
    %v1721 = vld [vmem:[#allocation8 + $0x128] sm:$0xff]
    %v1722 = vld [vmem:[#allocation8 + $0x130] sm:$0xff]
    %v1723 = vld [vmem:[#allocation8 + $0x138] sm:$0xff]
    %v1724 = vld [vmem:[#allocation8 + $0x140] sm:$0xff]
    %v1725 = vld [vmem:[#allocation8 + $0x148] sm:$0xff]
    %v1726 = vld [vmem:[#allocation8 + $0x150] sm:$0xff]
    %v1727 = vld [vmem:[#allocation8 + $0x158] sm:$0xff]
    %v1728 = vld [vmem:[#allocation8 + $0x160] sm:$0xff]
    %v1729 = vld [vmem:[#allocation8 + $0x168] sm:$0xff]
    %v1730 = vld [vmem:[#allocation8 + $0x170] sm:$0xff]
    %v1731 = vld [vmem:[#allocation8 + $0x178] sm:$0xff]
    %v1732 = vld [vmem:[#allocation8 + $0x180] sm:$0xff]
    %v1733 = vld [vmem:[#allocation8 + $0x188] sm:$0xff]
    %v1734 = vld [vmem:[#allocation8 + $0x190] sm:$0xff]
    %v1735 = vld [vmem:[#allocation8 + $0x198] sm:$0xff]
    %v1736 = vld [vmem:[#allocation8 + $0x1a0] sm:$0xff]
    %v1737 = vld [vmem:[#allocation8 + $0x1a8] sm:$0xff]
    %v1738 = vld [vmem:[#allocation8 + $0x1b0] sm:$0xff]
    %v1739 = vld [vmem:[#allocation8 + $0x1b8] sm:$0xff]
    %v1740 = vld [vmem:[#allocation8 + $0x1c0] sm:$0xff]
    %v1741 = vld [vmem:[#allocation8 + $0x1c8] sm:$0xff]
    %v1742 = vld [vmem:[#allocation8 + $0x1d0] sm:$0xff]
    %v1743 = vld [vmem:[#allocation8 + $0x1d8] sm:$0xff]
    %v1744 = vld [vmem:[#allocation8 + $0x1e0] sm:$0xff]
    %v1745 = vld [vmem:[#allocation8 + $0x1e8] sm:$0xff]
    %v1746 = vld [vmem:[#allocation8 + $0x1f0] sm:$0xff]
    %v1747 = vld [vmem:[#allocation8 + $0x1f8] sm:$0xff]
    %1748 = vmatprep.subr.mxu0 %v1745
    %1749 = vmatpush1.msra.mxu0 %v1744
    %1750 = vmatprep.subr.mxu0 %v1741
    %1751 = vmatpush1.msra.mxu0 %v1740
    %1752 = vmatprep.subr.mxu0 %v1737
    %1753 = vmatpush1.msra.mxu0 %v1736
    %1754 = vmatprep.subr.mxu0 %v1733
    %1755 = vmatpush1.msra.mxu0 %v1732
    %1756 = vmatprep.subr.mxu0 %v1729
    %1757 = vmatpush1.msra.mxu0 %v1728
    %1758 = vmatprep.subr.mxu0 %v1725
    %1759 = vmatpush1.msra.mxu0 %v1724
    %1760 = vmatprep.subr.mxu0 %v1721
    %1761 = vmatpush1.msra.mxu0 %v1720
    %1762 = vmatprep.subr.mxu0 %v1717
    %1763 = vmatpush1.msra.mxu0 %v1716
    %1764 = vmatprep.subr.mxu0 %v1713
    %1765 = vmatpush1.msra.mxu0 %v1712
    %1766 = vmatprep.subr.mxu0 %v1709
    %1767 = vmatpush1.msra.mxu0 %v1708
    %1768 = vmatprep.subr.mxu0 %v1705
    %1769 = vmatpush1.msra.mxu0 %v1704
    %1770 = vmatprep.subr.mxu0 %v1701
    %1771 = vmatpush1.msra.mxu0 %v1700
    %1772 = vmatprep.subr.mxu0 %v1697
    %1773 = vmatpush1.msra.mxu0 %v1696
    %1774 = vmatprep.subr.mxu0 %v1693
    %1775 = vmatpush1.msra.mxu0 %v1692
    %1776 = vmatprep.subr.mxu0 %v1689
    %1777 = vmatpush1.msra.mxu0 %v1688
    %1778 = vmatprep.subr.mxu0 %v1685
    %1779 = vmatpush1.msra.mxu0 %v1684
    %1780 = vmatprep.subr.mxu0 0.0
    %1781 = vmatpush2.msra.mxu0 0.0
    %1782 = vmatprep.subr.mxu0 0.0
    %1783 = vmatpush2.msra.mxu0 0.0
    %1784 = vmatprep.subr.mxu0 0.0
    %1785 = vmatpush2.msra.mxu0 0.0
    %1786 = vmatprep.subr.mxu0 0.0
    %1787 = vmatpush2.msra.mxu0 0.0
    %1788 = vmatprep.subr.mxu0 0.0
    %1789 = vmatpush2.msra.mxu0 0.0
    %1790 = vmatprep.subr.mxu0 0.0
    %1791 = vmatpush2.msra.mxu0 0.0
    %1792 = vmatprep.subr.mxu0 0.0
    %1793 = vmatpush2.msra.mxu0 0.0
    %1794 = vmatprep.subr.mxu0 0.0
    %1795 = vmatpush2.msra.mxu0 0.0
    %1796 = vmatprep.subr.mxu0 0.0
    %1797 = vmatpush2.msra.mxu0 0.0
    %1798 = vmatprep.subr.mxu0 0.0
    %1799 = vmatpush2.msra.mxu0 0.0
    %1800 = vmatprep.subr.mxu0 0.0
    %1801 = vmatpush2.msra.mxu0 0.0
    %1802 = vmatprep.subr.mxu0 0.0
    %1803 = vmatpush2.msra.mxu0 0.0
    %1804 = vmatprep.subr.mxu0 0.0
    %1805 = vmatpush2.msra.mxu0 0.0
    %1806 = vmatprep.subr.mxu0 0.0
    %1807 = vmatpush2.msra.mxu0 0.0
    %1808 = vmatprep.subr.mxu0 0.0
    %1809 = vmatpush2.msra.mxu0 0.0
    %1810 = vmatprep.subr.mxu0 0.0
    %1811 = vmatpush2.msra.mxu0 0.0
    %1812 = vmatprep.mubr.f32.mxu0 0.0
    %1813 = vmatmul.mubr.f32.gmra.mxu0 %v1435
    %v1814 = vpop.f32.mrf.mxu0
    %v1815 = vadd.f32 0.0, %v1814
    %v1816 = vpop.f32.mrf.mxu0
    %v1817 = vadd.f32 0.0, %v1816
    %1818 = vdwg.mxu0
    %1819 = vmatprep.subr.mxu0 %v1747
    %1820 = vmatpush1.msra.mxu0 %v1746
    %1821 = vmatprep.subr.mxu0 %v1743
    %1822 = vmatpush1.msra.mxu0 %v1742
    %1823 = vmatprep.subr.mxu0 %v1739
    %1824 = vmatpush1.msra.mxu0 %v1738
    %1825 = vmatprep.subr.mxu0 %v1735
    %1826 = vmatpush1.msra.mxu0 %v1734
    %1827 = vmatprep.subr.mxu0 %v1731
    %1828 = vmatpush1.msra.mxu0 %v1730
    %1829 = vmatprep.subr.mxu0 %v1727
    %1830 = vmatpush1.msra.mxu0 %v1726
    %1831 = vmatprep.subr.mxu0 %v1723
    %1832 = vmatpush1.msra.mxu0 %v1722
    %1833 = vmatprep.subr.mxu0 %v1719
    %1834 = vmatpush1.msra.mxu0 %v1718
    %1835 = vmatprep.subr.mxu0 %v1715
    %1836 = vmatpush1.msra.mxu0 %v1714
    %1837 = vmatprep.subr.mxu0 %v1711
    %1838 = vmatpush1.msra.mxu0 %v1710
    %1839 = vmatprep.subr.mxu0 %v1707
    %1840 = vmatpush1.msra.mxu0 %v1706
    %1841 = vmatprep.subr.mxu0 %v1703
    %1842 = vmatpush1.msra.mxu0 %v1702
    %1843 = vmatprep.subr.mxu0 %v1699
    %1844 = vmatpush1.msra.mxu0 %v1698
    %1845 = vmatprep.subr.mxu0 %v1695
    %1846 = vmatpush1.msra.mxu0 %v1694
    %1847 = vmatprep.subr.mxu0 %v1691
    %1848 = vmatpush1.msra.mxu0 %v1690
    %1849 = vmatprep.subr.mxu0 %v1687
    %1850 = vmatpush1.msra.mxu0 %v1686
    %1851 = vmatprep.subr.mxu0 0.0
    %1852 = vmatpush2.msra.mxu0 0.0
    %1853 = vmatprep.subr.mxu0 0.0
    %1854 = vmatpush2.msra.mxu0 0.0
    %1855 = vmatprep.subr.mxu0 0.0
    %1856 = vmatpush2.msra.mxu0 0.0
    %1857 = vmatprep.subr.mxu0 0.0
    %1858 = vmatpush2.msra.mxu0 0.0
    %1859 = vmatprep.subr.mxu0 0.0
    %1860 = vmatpush2.msra.mxu0 0.0
    %1861 = vmatprep.subr.mxu0 0.0
    %1862 = vmatpush2.msra.mxu0 0.0
    %1863 = vmatprep.subr.mxu0 0.0
    %1864 = vmatpush2.msra.mxu0 0.0
    %1865 = vmatprep.subr.mxu0 0.0
    %1866 = vmatpush2.msra.mxu0 0.0
    %1867 = vmatprep.subr.mxu0 0.0
    %1868 = vmatpush2.msra.mxu0 0.0
    %1869 = vmatprep.subr.mxu0 0.0
    %1870 = vmatpush2.msra.mxu0 0.0
    %1871 = vmatprep.subr.mxu0 0.0
    %1872 = vmatpush2.msra.mxu0 0.0
    %1873 = vmatprep.subr.mxu0 0.0
    %1874 = vmatpush2.msra.mxu0 0.0
    %1875 = vmatprep.subr.mxu0 0.0
    %1876 = vmatpush2.msra.mxu0 0.0
    %1877 = vmatprep.subr.mxu0 0.0
    %1878 = vmatpush2.msra.mxu0 0.0
    %1879 = vmatprep.subr.mxu0 0.0
    %1880 = vmatpush2.msra.mxu0 0.0
    %1881 = vmatprep.subr.mxu0 0.0
    %1882 = vmatpush2.msra.mxu0 0.0
    %1883 = vmatprep.mubr.f32.mxu0 0.0
    %1884 = vmatmul.mubr.f32.gmra.mxu0 %v1435
    %v1885 = vpop.f32.mrf.mxu0
    %v1886 = vadd.f32 0.0, %v1885
    %v1887 = vpop.f32.mrf.mxu0
    %v1888 = vadd.f32 0.0, %v1887
    %1889 = vdwg.mxu0
    %v1890 = vadd.f32 %v1680, %v1815
    %v1891 = vadd.f32 %v1681, %v1817
    %v1892 = vadd.f32 %v1682, %v1886
    %v1893 = vadd.f32 %v1683, %v1888
    %v1894 = vxor.u32 %v1890, 2147483648
    %v1895 = vmul.f32 %v1894, 1.442695
    %v1896 = vpow.pop %v1895
    %v1897 = vadd.f32 %v1896, 1.0
    %v1898 = vrcp.pop %v1897
    %v1899 = vmul.f32 1.0, %v1898
    %v1900 = vxor.u32 %v1891, 2147483648
    %v1901 = vmul.f32 %v1900, 1.442695
    %v1902 = vpow.pop %v1901
    %v1903 = vadd.f32 %v1902, 1.0
    %v1904 = vrcp.pop %v1903
    %v1905 = vmul.f32 1.0, %v1904
    %v1906 = vtanh.pop %v1892
    %v1907 = vxor.u32 %v1893, 2147483648
    %v1908 = vmul.f32 %v1907, 1.442695
    %v1909 = vpow.pop %v1908
    %v1910 = vadd.f32 %v1909, 1.0
    %v1911 = vrcp.pop %v1910
    %v1912 = vmul.f32 1.0, %v1911
    %v1913 = vmul.f32 %v1905, %v1433
    %v1914 = vmul.f32 %v1899, %v1906
    %v1915 = vadd.f32 %v1913, %v1914
    %v1916 = vtanh.pop %v1915
    %v1917 = vmul.f32 %v1912, %v1916
    %s1918 = scalar_lea.vmem [#allocation3], 160
    %v1919 = vld [vmem:[%s1918] sm:$0xff]
    %v1920 = vld [vmem:[%s1918 + $0x8] sm:$0xff]
    %v1921 = vld [vmem:[%s1918 + $0x10] sm:$0xff]
    %v1922 = vld [vmem:[%s1918 + $0x18] sm:$0xff]
    %v1923 = vld [vmem:[#allocation10] sm:$0xff]
    %v1924 = vld [vmem:[#allocation10 + $0x8] sm:$0xff]
    %v1925 = vld [vmem:[#allocation10 + $0x10] sm:$0xff]
    %v1926 = vld [vmem:[#allocation10 + $0x18] sm:$0xff]
    %v1927 = vld [vmem:[#allocation10 + $0x20] sm:$0xff]
    %v1928 = vld [vmem:[#allocation10 + $0x28] sm:$0xff]
    %v1929 = vld [vmem:[#allocation10 + $0x30] sm:$0xff]
    %v1930 = vld [vmem:[#allocation10 + $0x38] sm:$0xff]
    %v1931 = vld [vmem:[#allocation10 + $0x40] sm:$0xff]
    %v1932 = vld [vmem:[#allocation10 + $0x48] sm:$0xff]
    %v1933 = vld [vmem:[#allocation10 + $0x50] sm:$0xff]
    %v1934 = vld [vmem:[#allocation10 + $0x58] sm:$0xff]
    %v1935 = vld [vmem:[#allocation10 + $0x60] sm:$0xff]
    %v1936 = vld [vmem:[#allocation10 + $0x68] sm:$0xff]
    %v1937 = vld [vmem:[#allocation10 + $0x70] sm:$0xff]
    %v1938 = vld [vmem:[#allocation10 + $0x78] sm:$0xff]
    %v1939 = vld [vmem:[#allocation10 + $0x80] sm:$0xff]
    %v1940 = vld [vmem:[#allocation10 + $0x88] sm:$0xff]
    %v1941 = vld [vmem:[#allocation10 + $0x90] sm:$0xff]
    %v1942 = vld [vmem:[#allocation10 + $0x98] sm:$0xff]
    %v1943 = vld [vmem:[#allocation10 + $0xa0] sm:$0xff]
    %v1944 = vld [vmem:[#allocation10 + $0xa8] sm:$0xff]
    %v1945 = vld [vmem:[#allocation10 + $0xb0] sm:$0xff]
    %v1946 = vld [vmem:[#allocation10 + $0xb8] sm:$0xff]
    %v1947 = vld [vmem:[#allocation10 + $0xc0] sm:$0xff]
    %v1948 = vld [vmem:[#allocation10 + $0xc8] sm:$0xff]
    %v1949 = vld [vmem:[#allocation10 + $0xd0] sm:$0xff]
    %v1950 = vld [vmem:[#allocation10 + $0xd8] sm:$0xff]
    %v1951 = vld [vmem:[#allocation10 + $0xe0] sm:$0xff]
    %v1952 = vld [vmem:[#allocation10 + $0xe8] sm:$0xff]
    %v1953 = vld [vmem:[#allocation10 + $0xf0] sm:$0xff]
    %v1954 = vld [vmem:[#allocation10 + $0xf8] sm:$0xff]
    %v1955 = vld [vmem:[#allocation10 + $0x100] sm:$0xff]
    %v1956 = vld [vmem:[#allocation10 + $0x108] sm:$0xff]
    %v1957 = vld [vmem:[#allocation10 + $0x110] sm:$0xff]
    %v1958 = vld [vmem:[#allocation10 + $0x118] sm:$0xff]
    %v1959 = vld [vmem:[#allocation10 + $0x120] sm:$0xff]
    %v1960 = vld [vmem:[#allocation10 + $0x128] sm:$0xff]
    %v1961 = vld [vmem:[#allocation10 + $0x130] sm:$0xff]
    %v1962 = vld [vmem:[#allocation10 + $0x138] sm:$0xff]
    %v1963 = vld [vmem:[#allocation10 + $0x140] sm:$0xff]
    %v1964 = vld [vmem:[#allocation10 + $0x148] sm:$0xff]
    %v1965 = vld [vmem:[#allocation10 + $0x150] sm:$0xff]
    %v1966 = vld [vmem:[#allocation10 + $0x158] sm:$0xff]
    %v1967 = vld [vmem:[#allocation10 + $0x160] sm:$0xff]
    %v1968 = vld [vmem:[#allocation10 + $0x168] sm:$0xff]
    %v1969 = vld [vmem:[#allocation10 + $0x170] sm:$0xff]
    %v1970 = vld [vmem:[#allocation10 + $0x178] sm:$0xff]
    %v1971 = vld [vmem:[#allocation10 + $0x180] sm:$0xff]
    %v1972 = vld [vmem:[#allocation10 + $0x188] sm:$0xff]
    %v1973 = vld [vmem:[#allocation10 + $0x190] sm:$0xff]
    %v1974 = vld [vmem:[#allocation10 + $0x198] sm:$0xff]
    %v1975 = vld [vmem:[#allocation10 + $0x1a0] sm:$0xff]
    %v1976 = vld [vmem:[#allocation10 + $0x1a8] sm:$0xff]
    %v1977 = vld [vmem:[#allocation10 + $0x1b0] sm:$0xff]
    %v1978 = vld [vmem:[#allocation10 + $0x1b8] sm:$0xff]
    %v1979 = vld [vmem:[#allocation10 + $0x1c0] sm:$0xff]
    %v1980 = vld [vmem:[#allocation10 + $0x1c8] sm:$0xff]
    %v1981 = vld [vmem:[#allocation10 + $0x1d0] sm:$0xff]
    %v1982 = vld [vmem:[#allocation10 + $0x1d8] sm:$0xff]
    %v1983 = vld [vmem:[#allocation10 + $0x1e0] sm:$0xff]
    %v1984 = vld [vmem:[#allocation10 + $0x1e8] sm:$0xff]
    %v1985 = vld [vmem:[#allocation10 + $0x1f0] sm:$0xff]
    %v1986 = vld [vmem:[#allocation10 + $0x1f8] sm:$0xff]
    %1987 = vmatprep.subr.mxu0 %v1984
    %1988 = vmatpush1.msra.mxu0 %v1983
    %1989 = vmatprep.subr.mxu0 %v1980
    %1990 = vmatpush1.msra.mxu0 %v1979
    %1991 = vmatprep.subr.mxu0 %v1976
    %1992 = vmatpush1.msra.mxu0 %v1975
    %1993 = vmatprep.subr.mxu0 %v1972
    %1994 = vmatpush1.msra.mxu0 %v1971
    %1995 = vmatprep.subr.mxu0 %v1968
    %1996 = vmatpush1.msra.mxu0 %v1967
    %1997 = vmatprep.subr.mxu0 %v1964
    %1998 = vmatpush1.msra.mxu0 %v1963
    %1999 = vmatprep.subr.mxu0 %v1960
    %2000 = vmatpush1.msra.mxu0 %v1959
    %2001 = vmatprep.subr.mxu0 %v1956
    %2002 = vmatpush1.msra.mxu0 %v1955
    %2003 = vmatprep.subr.mxu0 %v1952
    %2004 = vmatpush1.msra.mxu0 %v1951
    %2005 = vmatprep.subr.mxu0 %v1948
    %2006 = vmatpush1.msra.mxu0 %v1947
    %2007 = vmatprep.subr.mxu0 %v1944
    %2008 = vmatpush1.msra.mxu0 %v1943
    %2009 = vmatprep.subr.mxu0 %v1940
    %2010 = vmatpush1.msra.mxu0 %v1939
    %2011 = vmatprep.subr.mxu0 %v1936
    %2012 = vmatpush1.msra.mxu0 %v1935
    %2013 = vmatprep.subr.mxu0 %v1932
    %2014 = vmatpush1.msra.mxu0 %v1931
    %2015 = vmatprep.subr.mxu0 %v1928
    %2016 = vmatpush1.msra.mxu0 %v1927
    %2017 = vmatprep.subr.mxu0 %v1924
    %2018 = vmatpush1.msra.mxu0 %v1923
    %2019 = vmatprep.subr.mxu0 0.0
    %2020 = vmatpush2.msra.mxu0 0.0
    %2021 = vmatprep.subr.mxu0 0.0
    %2022 = vmatpush2.msra.mxu0 0.0
    %2023 = vmatprep.subr.mxu0 0.0
    %2024 = vmatpush2.msra.mxu0 0.0
    %2025 = vmatprep.subr.mxu0 0.0
    %2026 = vmatpush2.msra.mxu0 0.0
    %2027 = vmatprep.subr.mxu0 0.0
    %2028 = vmatpush2.msra.mxu0 0.0
    %2029 = vmatprep.subr.mxu0 0.0
    %2030 = vmatpush2.msra.mxu0 0.0
    %2031 = vmatprep.subr.mxu0 0.0
    %2032 = vmatpush2.msra.mxu0 0.0
    %2033 = vmatprep.subr.mxu0 0.0
    %2034 = vmatpush2.msra.mxu0 0.0
    %2035 = vmatprep.subr.mxu0 0.0
    %2036 = vmatpush2.msra.mxu0 0.0
    %2037 = vmatprep.subr.mxu0 0.0
    %2038 = vmatpush2.msra.mxu0 0.0
    %2039 = vmatprep.subr.mxu0 0.0
    %2040 = vmatpush2.msra.mxu0 0.0
    %2041 = vmatprep.subr.mxu0 0.0
    %2042 = vmatpush2.msra.mxu0 0.0
    %2043 = vmatprep.subr.mxu0 0.0
    %2044 = vmatpush2.msra.mxu0 0.0
    %2045 = vmatprep.subr.mxu0 0.0
    %2046 = vmatpush2.msra.mxu0 0.0
    %2047 = vmatprep.subr.mxu0 0.0
    %2048 = vmatpush2.msra.mxu0 0.0
    %2049 = vmatprep.subr.mxu0 0.0
    %2050 = vmatpush2.msra.mxu0 0.0
    %2051 = vmatprep.mubr.f32.mxu0 0.0
    %2052 = vmatmul.mubr.f32.gmra.mxu0 %v1674
    %v2053 = vpop.f32.mrf.mxu0
    %v2054 = vadd.f32 0.0, %v2053
    %v2055 = vpop.f32.mrf.mxu0
    %v2056 = vadd.f32 0.0, %v2055
    %2057 = vdwg.mxu0
    %2058 = vmatprep.subr.mxu0 %v1986
    %2059 = vmatpush1.msra.mxu0 %v1985
    %2060 = vmatprep.subr.mxu0 %v1982
    %2061 = vmatpush1.msra.mxu0 %v1981
    %2062 = vmatprep.subr.mxu0 %v1978
    %2063 = vmatpush1.msra.mxu0 %v1977
    %2064 = vmatprep.subr.mxu0 %v1974
    %2065 = vmatpush1.msra.mxu0 %v1973
    %2066 = vmatprep.subr.mxu0 %v1970
    %2067 = vmatpush1.msra.mxu0 %v1969
    %2068 = vmatprep.subr.mxu0 %v1966
    %2069 = vmatpush1.msra.mxu0 %v1965
    %2070 = vmatprep.subr.mxu0 %v1962
    %2071 = vmatpush1.msra.mxu0 %v1961
    %2072 = vmatprep.subr.mxu0 %v1958
    %2073 = vmatpush1.msra.mxu0 %v1957
    %2074 = vmatprep.subr.mxu0 %v1954
    %2075 = vmatpush1.msra.mxu0 %v1953
    %2076 = vmatprep.subr.mxu0 %v1950
    %2077 = vmatpush1.msra.mxu0 %v1949
    %2078 = vmatprep.subr.mxu0 %v1946
    %2079 = vmatpush1.msra.mxu0 %v1945
    %2080 = vmatprep.subr.mxu0 %v1942
    %2081 = vmatpush1.msra.mxu0 %v1941
    %2082 = vmatprep.subr.mxu0 %v1938
    %2083 = vmatpush1.msra.mxu0 %v1937
    %2084 = vmatprep.subr.mxu0 %v1934
    %2085 = vmatpush1.msra.mxu0 %v1933
    %2086 = vmatprep.subr.mxu0 %v1930
    %2087 = vmatpush1.msra.mxu0 %v1929
    %2088 = vmatprep.subr.mxu0 %v1926
    %2089 = vmatpush1.msra.mxu0 %v1925
    %2090 = vmatprep.subr.mxu0 0.0
    %2091 = vmatpush2.msra.mxu0 0.0
    %2092 = vmatprep.subr.mxu0 0.0
    %2093 = vmatpush2.msra.mxu0 0.0
    %2094 = vmatprep.subr.mxu0 0.0
    %2095 = vmatpush2.msra.mxu0 0.0
    %2096 = vmatprep.subr.mxu0 0.0
    %2097 = vmatpush2.msra.mxu0 0.0
    %2098 = vmatprep.subr.mxu0 0.0
    %2099 = vmatpush2.msra.mxu0 0.0
    %2100 = vmatprep.subr.mxu0 0.0
    %2101 = vmatpush2.msra.mxu0 0.0
    %2102 = vmatprep.subr.mxu0 0.0
    %2103 = vmatpush2.msra.mxu0 0.0
    %2104 = vmatprep.subr.mxu0 0.0
    %2105 = vmatpush2.msra.mxu0 0.0
    %2106 = vmatprep.subr.mxu0 0.0
    %2107 = vmatpush2.msra.mxu0 0.0
    %2108 = vmatprep.subr.mxu0 0.0
    %2109 = vmatpush2.msra.mxu0 0.0
    %2110 = vmatprep.subr.mxu0 0.0
    %2111 = vmatpush2.msra.mxu0 0.0
    %2112 = vmatprep.subr.mxu0 0.0
    %2113 = vmatpush2.msra.mxu0 0.0
    %2114 = vmatprep.subr.mxu0 0.0
    %2115 = vmatpush2.msra.mxu0 0.0
    %2116 = vmatprep.subr.mxu0 0.0
    %2117 = vmatpush2.msra.mxu0 0.0
    %2118 = vmatprep.subr.mxu0 0.0
    %2119 = vmatpush2.msra.mxu0 0.0
    %2120 = vmatprep.subr.mxu0 0.0
    %2121 = vmatpush2.msra.mxu0 0.0
    %2122 = vmatprep.mubr.f32.mxu0 0.0
    %2123 = vmatmul.mubr.f32.gmra.mxu0 %v1674
    %v2124 = vpop.f32.mrf.mxu0
    %v2125 = vadd.f32 0.0, %v2124
    %v2126 = vpop.f32.mrf.mxu0
    %v2127 = vadd.f32 0.0, %v2126
    %2128 = vdwg.mxu0
    %v2129 = vadd.f32 %v1919, %v2054
    %v2130 = vadd.f32 %v1920, %v2056
    %v2131 = vadd.f32 %v1921, %v2125
    %v2132 = vadd.f32 %v1922, %v2127
    %v2133 = vxor.u32 %v2129, 2147483648
    %v2134 = vmul.f32 %v2133, 1.442695
    %v2135 = vpow.pop %v2134
    %v2136 = vadd.f32 %v2135, 1.0
    %v2137 = vrcp.pop %v2136
    %v2138 = vmul.f32 1.0, %v2137
    %v2139 = vxor.u32 %v2130, 2147483648
    %v2140 = vmul.f32 %v2139, 1.442695
    %v2141 = vpow.pop %v2140
    %v2142 = vadd.f32 %v2141, 1.0
    %v2143 = vrcp.pop %v2142
    %v2144 = vmul.f32 1.0, %v2143
    %v2145 = vtanh.pop %v2131
    %v2146 = vxor.u32 %v2132, 2147483648
    %v2147 = vmul.f32 %v2146, 1.442695
    %v2148 = vpow.pop %v2147
    %v2149 = vadd.f32 %v2148, 1.0
    %v2150 = vrcp.pop %v2149
    %v2151 = vmul.f32 1.0, %v2150
    %v2152 = vmul.f32 %v2144, %v1672
    %v2153 = vmul.f32 %v2138, %v2145
    %v2154 = vadd.f32 %v2152, %v2153
    %v2155 = vtanh.pop %v2154
    %v2156 = vmul.f32 %v2151, %v2155
    %s2157 = scalar_lea.vmem [#allocation4], 16
    %2158 = vst [vmem:[%s2157] sm:$0xff] %v1917
    %s2159 = scalar_lea.vmem [#allocation5], 40
    %2160 = vst [vmem:[%s2159] sm:$0xff] %v2156
    %s2161 = scalar_lea.vmem [#allocation2], 96
    %v2162 = vld [vmem:[%s2161] sm:$0xff]
    %v2163 = vld [vmem:[%s2161 + $0x8] sm:$0xff]
    %v2164 = vld [vmem:[%s2161 + $0x10] sm:$0xff]
    %v2165 = vld [vmem:[%s2161 + $0x18] sm:$0xff]
    %v2166 = vld [vmem:[#allocation8] sm:$0xff]
    %v2167 = vld [vmem:[#allocation8 + $0x8] sm:$0xff]
    %v2168 = vld [vmem:[#allocation8 + $0x10] sm:$0xff]
    %v2169 = vld [vmem:[#allocation8 + $0x18] sm:$0xff]
    %v2170 = vld [vmem:[#allocation8 + $0x20] sm:$0xff]
    %v2171 = vld [vmem:[#allocation8 + $0x28] sm:$0xff]
    %v2172 = vld [vmem:[#allocation8 + $0x30] sm:$0xff]
    %v2173 = vld [vmem:[#allocation8 + $0x38] sm:$0xff]
    %v2174 = vld [vmem:[#allocation8 + $0x40] sm:$0xff]
    %v2175 = vld [vmem:[#allocation8 + $0x48] sm:$0xff]
    %v2176 = vld [vmem:[#allocation8 + $0x50] sm:$0xff]
    %v2177 = vld [vmem:[#allocation8 + $0x58] sm:$0xff]
    %v2178 = vld [vmem:[#allocation8 + $0x60] sm:$0xff]
    %v2179 = vld [vmem:[#allocation8 + $0x68] sm:$0xff]
    %v2180 = vld [vmem:[#allocation8 + $0x70] sm:$0xff]
    %v2181 = vld [vmem:[#allocation8 + $0x78] sm:$0xff]
    %v2182 = vld [vmem:[#allocation8 + $0x80] sm:$0xff]
    %v2183 = vld [vmem:[#allocation8 + $0x88] sm:$0xff]
    %v2184 = vld [vmem:[#allocation8 + $0x90] sm:$0xff]
    %v2185 = vld [vmem:[#allocation8 + $0x98] sm:$0xff]
    %v2186 = vld [vmem:[#allocation8 + $0xa0] sm:$0xff]
    %v2187 = vld [vmem:[#allocation8 + $0xa8] sm:$0xff]
    %v2188 = vld [vmem:[#allocation8 + $0xb0] sm:$0xff]
    %v2189 = vld [vmem:[#allocation8 + $0xb8] sm:$0xff]
    %v2190 = vld [vmem:[#allocation8 + $0xc0] sm:$0xff]
    %v2191 = vld [vmem:[#allocation8 + $0xc8] sm:$0xff]
    %v2192 = vld [vmem:[#allocation8 + $0xd0] sm:$0xff]
    %v2193 = vld [vmem:[#allocation8 + $0xd8] sm:$0xff]
    %v2194 = vld [vmem:[#allocation8 + $0xe0] sm:$0xff]
    %v2195 = vld [vmem:[#allocation8 + $0xe8] sm:$0xff]
    %v2196 = vld [vmem:[#allocation8 + $0xf0] sm:$0xff]
    %v2197 = vld [vmem:[#allocation8 + $0xf8] sm:$0xff]
    %v2198 = vld [vmem:[#allocation8 + $0x100] sm:$0xff]
    %v2199 = vld [vmem:[#allocation8 + $0x108] sm:$0xff]
    %v2200 = vld [vmem:[#allocation8 + $0x110] sm:$0xff]
    %v2201 = vld [vmem:[#allocation8 + $0x118] sm:$0xff]
    %v2202 = vld [vmem:[#allocation8 + $0x120] sm:$0xff]
    %v2203 = vld [vmem:[#allocation8 + $0x128] sm:$0xff]
    %v2204 = vld [vmem:[#allocation8 + $0x130] sm:$0xff]
    %v2205 = vld [vmem:[#allocation8 + $0x138] sm:$0xff]
    %v2206 = vld [vmem:[#allocation8 + $0x140] sm:$0xff]
    %v2207 = vld [vmem:[#allocation8 + $0x148] sm:$0xff]
    %v2208 = vld [vmem:[#allocation8 + $0x150] sm:$0xff]
    %v2209 = vld [vmem:[#allocation8 + $0x158] sm:$0xff]
    %v2210 = vld [vmem:[#allocation8 + $0x160] sm:$0xff]
    %v2211 = vld [vmem:[#allocation8 + $0x168] sm:$0xff]
    %v2212 = vld [vmem:[#allocation8 + $0x170] sm:$0xff]
    %v2213 = vld [vmem:[#allocation8 + $0x178] sm:$0xff]
    %v2214 = vld [vmem:[#allocation8 + $0x180] sm:$0xff]
    %v2215 = vld [vmem:[#allocation8 + $0x188] sm:$0xff]
    %v2216 = vld [vmem:[#allocation8 + $0x190] sm:$0xff]
    %v2217 = vld [vmem:[#allocation8 + $0x198] sm:$0xff]
    %v2218 = vld [vmem:[#allocation8 + $0x1a0] sm:$0xff]
    %v2219 = vld [vmem:[#allocation8 + $0x1a8] sm:$0xff]
    %v2220 = vld [vmem:[#allocation8 + $0x1b0] sm:$0xff]
    %v2221 = vld [vmem:[#allocation8 + $0x1b8] sm:$0xff]
    %v2222 = vld [vmem:[#allocation8 + $0x1c0] sm:$0xff]
    %v2223 = vld [vmem:[#allocation8 + $0x1c8] sm:$0xff]
    %v2224 = vld [vmem:[#allocation8 + $0x1d0] sm:$0xff]
    %v2225 = vld [vmem:[#allocation8 + $0x1d8] sm:$0xff]
    %v2226 = vld [vmem:[#allocation8 + $0x1e0] sm:$0xff]
    %v2227 = vld [vmem:[#allocation8 + $0x1e8] sm:$0xff]
    %v2228 = vld [vmem:[#allocation8 + $0x1f0] sm:$0xff]
    %v2229 = vld [vmem:[#allocation8 + $0x1f8] sm:$0xff]
    %2230 = vmatprep.subr.mxu0 %v2227
    %2231 = vmatpush1.msra.mxu0 %v2226
    %2232 = vmatprep.subr.mxu0 %v2223
    %2233 = vmatpush1.msra.mxu0 %v2222
    %2234 = vmatprep.subr.mxu0 %v2219
    %2235 = vmatpush1.msra.mxu0 %v2218
    %2236 = vmatprep.subr.mxu0 %v2215
    %2237 = vmatpush1.msra.mxu0 %v2214
    %2238 = vmatprep.subr.mxu0 %v2211
    %2239 = vmatpush1.msra.mxu0 %v2210
    %2240 = vmatprep.subr.mxu0 %v2207
    %2241 = vmatpush1.msra.mxu0 %v2206
    %2242 = vmatprep.subr.mxu0 %v2203
    %2243 = vmatpush1.msra.mxu0 %v2202
    %2244 = vmatprep.subr.mxu0 %v2199
    %2245 = vmatpush1.msra.mxu0 %v2198
    %2246 = vmatprep.subr.mxu0 %v2195
    %2247 = vmatpush1.msra.mxu0 %v2194
    %2248 = vmatprep.subr.mxu0 %v2191
    %2249 = vmatpush1.msra.mxu0 %v2190
    %2250 = vmatprep.subr.mxu0 %v2187
    %2251 = vmatpush1.msra.mxu0 %v2186
    %2252 = vmatprep.subr.mxu0 %v2183
    %2253 = vmatpush1.msra.mxu0 %v2182
    %2254 = vmatprep.subr.mxu0 %v2179
    %2255 = vmatpush1.msra.mxu0 %v2178
    %2256 = vmatprep.subr.mxu0 %v2175
    %2257 = vmatpush1.msra.mxu0 %v2174
    %2258 = vmatprep.subr.mxu0 %v2171
    %2259 = vmatpush1.msra.mxu0 %v2170
    %2260 = vmatprep.subr.mxu0 %v2167
    %2261 = vmatpush1.msra.mxu0 %v2166
    %2262 = vmatprep.subr.mxu0 0.0
    %2263 = vmatpush2.msra.mxu0 0.0
    %2264 = vmatprep.subr.mxu0 0.0
    %2265 = vmatpush2.msra.mxu0 0.0
    %2266 = vmatprep.subr.mxu0 0.0
    %2267 = vmatpush2.msra.mxu0 0.0
    %2268 = vmatprep.subr.mxu0 0.0
    %2269 = vmatpush2.msra.mxu0 0.0
    %2270 = vmatprep.subr.mxu0 0.0
    %2271 = vmatpush2.msra.mxu0 0.0
    %2272 = vmatprep.subr.mxu0 0.0
    %2273 = vmatpush2.msra.mxu0 0.0
    %2274 = vmatprep.subr.mxu0 0.0
    %2275 = vmatpush2.msra.mxu0 0.0
    %2276 = vmatprep.subr.mxu0 0.0
    %2277 = vmatpush2.msra.mxu0 0.0
    %2278 = vmatprep.subr.mxu0 0.0
    %2279 = vmatpush2.msra.mxu0 0.0
    %2280 = vmatprep.subr.mxu0 0.0
    %2281 = vmatpush2.msra.mxu0 0.0
    %2282 = vmatprep.subr.mxu0 0.0
    %2283 = vmatpush2.msra.mxu0 0.0
    %2284 = vmatprep.subr.mxu0 0.0
    %2285 = vmatpush2.msra.mxu0 0.0
    %2286 = vmatprep.subr.mxu0 0.0
    %2287 = vmatpush2.msra.mxu0 0.0
    %2288 = vmatprep.subr.mxu0 0.0
    %2289 = vmatpush2.msra.mxu0 0.0
    %2290 = vmatprep.subr.mxu0 0.0
    %2291 = vmatpush2.msra.mxu0 0.0
    %2292 = vmatprep.subr.mxu0 0.0
    %2293 = vmatpush2.msra.mxu0 0.0
    %2294 = vmatprep.mubr.f32.mxu0 0.0
    %2295 = vmatmul.mubr.f32.gmra.mxu0 %v1917
    %v2296 = vpop.f32.mrf.mxu0
    %v2297 = vadd.f32 0.0, %v2296
    %v2298 = vpop.f32.mrf.mxu0
    %v2299 = vadd.f32 0.0, %v2298
    %2300 = vdwg.mxu0
    %2301 = vmatprep.subr.mxu0 %v2229
    %2302 = vmatpush1.msra.mxu0 %v2228
    %2303 = vmatprep.subr.mxu0 %v2225
    %2304 = vmatpush1.msra.mxu0 %v2224
    %2305 = vmatprep.subr.mxu0 %v2221
    %2306 = vmatpush1.msra.mxu0 %v2220
    %2307 = vmatprep.subr.mxu0 %v2217
    %2308 = vmatpush1.msra.mxu0 %v2216
    %2309 = vmatprep.subr.mxu0 %v2213
    %2310 = vmatpush1.msra.mxu0 %v2212
    %2311 = vmatprep.subr.mxu0 %v2209
    %2312 = vmatpush1.msra.mxu0 %v2208
    %2313 = vmatprep.subr.mxu0 %v2205
    %2314 = vmatpush1.msra.mxu0 %v2204
    %2315 = vmatprep.subr.mxu0 %v2201
    %2316 = vmatpush1.msra.mxu0 %v2200
    %2317 = vmatprep.subr.mxu0 %v2197
    %2318 = vmatpush1.msra.mxu0 %v2196
    %2319 = vmatprep.subr.mxu0 %v2193
    %2320 = vmatpush1.msra.mxu0 %v2192
    %2321 = vmatprep.subr.mxu0 %v2189
    %2322 = vmatpush1.msra.mxu0 %v2188
    %2323 = vmatprep.subr.mxu0 %v2185
    %2324 = vmatpush1.msra.mxu0 %v2184
    %2325 = vmatprep.subr.mxu0 %v2181
    %2326 = vmatpush1.msra.mxu0 %v2180
    %2327 = vmatprep.subr.mxu0 %v2177
    %2328 = vmatpush1.msra.mxu0 %v2176
    %2329 = vmatprep.subr.mxu0 %v2173
    %2330 = vmatpush1.msra.mxu0 %v2172
    %2331 = vmatprep.subr.mxu0 %v2169
    %2332 = vmatpush1.msra.mxu0 %v2168
    %2333 = vmatprep.subr.mxu0 0.0
    %2334 = vmatpush2.msra.mxu0 0.0
    %2335 = vmatprep.subr.mxu0 0.0
    %2336 = vmatpush2.msra.mxu0 0.0
    %2337 = vmatprep.subr.mxu0 0.0
    %2338 = vmatpush2.msra.mxu0 0.0
    %2339 = vmatprep.subr.mxu0 0.0
    %2340 = vmatpush2.msra.mxu0 0.0
    %2341 = vmatprep.subr.mxu0 0.0
    %2342 = vmatpush2.msra.mxu0 0.0
    %2343 = vmatprep.subr.mxu0 0.0
    %2344 = vmatpush2.msra.mxu0 0.0
    %2345 = vmatprep.subr.mxu0 0.0
    %2346 = vmatpush2.msra.mxu0 0.0
    %2347 = vmatprep.subr.mxu0 0.0
    %2348 = vmatpush2.msra.mxu0 0.0
    %2349 = vmatprep.subr.mxu0 0.0
    %2350 = vmatpush2.msra.mxu0 0.0
    %2351 = vmatprep.subr.mxu0 0.0
    %2352 = vmatpush2.msra.mxu0 0.0
    %2353 = vmatprep.subr.mxu0 0.0
    %2354 = vmatpush2.msra.mxu0 0.0
    %2355 = vmatprep.subr.mxu0 0.0
    %2356 = vmatpush2.msra.mxu0 0.0
    %2357 = vmatprep.subr.mxu0 0.0
    %2358 = vmatpush2.msra.mxu0 0.0
    %2359 = vmatprep.subr.mxu0 0.0
    %2360 = vmatpush2.msra.mxu0 0.0
    %2361 = vmatprep.subr.mxu0 0.0
    %2362 = vmatpush2.msra.mxu0 0.0
    %2363 = vmatprep.subr.mxu0 0.0
    %2364 = vmatpush2.msra.mxu0 0.0
    %2365 = vmatprep.mubr.f32.mxu0 0.0
    %2366 = vmatmul.mubr.f32.gmra.mxu0 %v1917
    %v2367 = vpop.f32.mrf.mxu0
    %v2368 = vadd.f32 0.0, %v2367
    %v2369 = vpop.f32.mrf.mxu0
    %v2370 = vadd.f32 0.0, %v2369
    %2371 = vdwg.mxu0
    %v2372 = vadd.f32 %v2162, %v2297
    %v2373 = vadd.f32 %v2163, %v2299
    %v2374 = vadd.f32 %v2164, %v2368
    %v2375 = vadd.f32 %v2165, %v2370
    %v2376 = vxor.u32 %v2372, 2147483648
    %v2377 = vmul.f32 %v2376, 1.442695
    %v2378 = vpow.pop %v2377
    %v2379 = vadd.f32 %v2378, 1.0
    %v2380 = vrcp.pop %v2379
    %v2381 = vmul.f32 1.0, %v2380
    %v2382 = vxor.u32 %v2373, 2147483648
    %v2383 = vmul.f32 %v2382, 1.442695
    %v2384 = vpow.pop %v2383
    %v2385 = vadd.f32 %v2384, 1.0
    %v2386 = vrcp.pop %v2385
    %v2387 = vmul.f32 1.0, %v2386
    %v2388 = vtanh.pop %v2374
    %v2389 = vxor.u32 %v2375, 2147483648
    %v2390 = vmul.f32 %v2389, 1.442695
    %v2391 = vpow.pop %v2390
    %v2392 = vadd.f32 %v2391, 1.0
    %v2393 = vrcp.pop %v2392
    %v2394 = vmul.f32 1.0, %v2393
    %v2395 = vmul.f32 %v2387, %v1915
    %v2396 = vmul.f32 %v2381, %v2388
    %v2397 = vadd.f32 %v2395, %v2396
    %v2398 = vtanh.pop %v2397
    %v2399 = vmul.f32 %v2394, %v2398
    %s2400 = scalar_lea.vmem [#allocation3], 128
    %v2401 = vld [vmem:[%s2400] sm:$0xff]
    %v2402 = vld [vmem:[%s2400 + $0x8] sm:$0xff]
    %v2403 = vld [vmem:[%s2400 + $0x10] sm:$0xff]
    %v2404 = vld [vmem:[%s2400 + $0x18] sm:$0xff]
    %v2405 = vld [vmem:[#allocation10] sm:$0xff]
    %v2406 = vld [vmem:[#allocation10 + $0x8] sm:$0xff]
    %v2407 = vld [vmem:[#allocation10 + $0x10] sm:$0xff]
    %v2408 = vld [vmem:[#allocation10 + $0x18] sm:$0xff]
    %v2409 = vld [vmem:[#allocation10 + $0x20] sm:$0xff]
    %v2410 = vld [vmem:[#allocation10 + $0x28] sm:$0xff]
    %v2411 = vld [vmem:[#allocation10 + $0x30] sm:$0xff]
    %v2412 = vld [vmem:[#allocation10 + $0x38] sm:$0xff]
    %v2413 = vld [vmem:[#allocation10 + $0x40] sm:$0xff]
    %v2414 = vld [vmem:[#allocation10 + $0x48] sm:$0xff]
    %v2415 = vld [vmem:[#allocation10 + $0x50] sm:$0xff]
    %v2416 = vld [vmem:[#allocation10 + $0x58] sm:$0xff]
    %v2417 = vld [vmem:[#allocation10 + $0x60] sm:$0xff]
    %v2418 = vld [vmem:[#allocation10 + $0x68] sm:$0xff]
    %v2419 = vld [vmem:[#allocation10 + $0x70] sm:$0xff]
    %v2420 = vld [vmem:[#allocation10 + $0x78] sm:$0xff]
    %v2421 = vld [vmem:[#allocation10 + $0x80] sm:$0xff]
    %v2422 = vld [vmem:[#allocation10 + $0x88] sm:$0xff]
    %v2423 = vld [vmem:[#allocation10 + $0x90] sm:$0xff]
    %v2424 = vld [vmem:[#allocation10 + $0x98] sm:$0xff]
    %v2425 = vld [vmem:[#allocation10 + $0xa0] sm:$0xff]
    %v2426 = vld [vmem:[#allocation10 + $0xa8] sm:$0xff]
    %v2427 = vld [vmem:[#allocation10 + $0xb0] sm:$0xff]
    %v2428 = vld [vmem:[#allocation10 + $0xb8] sm:$0xff]
    %v2429 = vld [vmem:[#allocation10 + $0xc0] sm:$0xff]
    %v2430 = vld [vmem:[#allocation10 + $0xc8] sm:$0xff]
    %v2431 = vld [vmem:[#allocation10 + $0xd0] sm:$0xff]
    %v2432 = vld [vmem:[#allocation10 + $0xd8] sm:$0xff]
    %v2433 = vld [vmem:[#allocation10 + $0xe0] sm:$0xff]
    %v2434 = vld [vmem:[#allocation10 + $0xe8] sm:$0xff]
    %v2435 = vld [vmem:[#allocation10 + $0xf0] sm:$0xff]
    %v2436 = vld [vmem:[#allocation10 + $0xf8] sm:$0xff]
    %v2437 = vld [vmem:[#allocation10 + $0x100] sm:$0xff]
    %v2438 = vld [vmem:[#allocation10 + $0x108] sm:$0xff]
    %v2439 = vld [vmem:[#allocation10 + $0x110] sm:$0xff]
    %v2440 = vld [vmem:[#allocation10 + $0x118] sm:$0xff]
    %v2441 = vld [vmem:[#allocation10 + $0x120] sm:$0xff]
    %v2442 = vld [vmem:[#allocation10 + $0x128] sm:$0xff]
    %v2443 = vld [vmem:[#allocation10 + $0x130] sm:$0xff]
    %v2444 = vld [vmem:[#allocation10 + $0x138] sm:$0xff]
    %v2445 = vld [vmem:[#allocation10 + $0x140] sm:$0xff]
    %v2446 = vld [vmem:[#allocation10 + $0x148] sm:$0xff]
    %v2447 = vld [vmem:[#allocation10 + $0x150] sm:$0xff]
    %v2448 = vld [vmem:[#allocation10 + $0x158] sm:$0xff]
    %v2449 = vld [vmem:[#allocation10 + $0x160] sm:$0xff]
    %v2450 = vld [vmem:[#allocation10 + $0x168] sm:$0xff]
    %v2451 = vld [vmem:[#allocation10 + $0x170] sm:$0xff]
    %v2452 = vld [vmem:[#allocation10 + $0x178] sm:$0xff]
    %v2453 = vld [vmem:[#allocation10 + $0x180] sm:$0xff]
    %v2454 = vld [vmem:[#allocation10 + $0x188] sm:$0xff]
    %v2455 = vld [vmem:[#allocation10 + $0x190] sm:$0xff]
    %v2456 = vld [vmem:[#allocation10 + $0x198] sm:$0xff]
    %v2457 = vld [vmem:[#allocation10 + $0x1a0] sm:$0xff]
    %v2458 = vld [vmem:[#allocation10 + $0x1a8] sm:$0xff]
    %v2459 = vld [vmem:[#allocation10 + $0x1b0] sm:$0xff]
    %v2460 = vld [vmem:[#allocation10 + $0x1b8] sm:$0xff]
    %v2461 = vld [vmem:[#allocation10 + $0x1c0] sm:$0xff]
    %v2462 = vld [vmem:[#allocation10 + $0x1c8] sm:$0xff]
    %v2463 = vld [vmem:[#allocation10 + $0x1d0] sm:$0xff]
    %v2464 = vld [vmem:[#allocation10 + $0x1d8] sm:$0xff]
    %v2465 = vld [vmem:[#allocation10 + $0x1e0] sm:$0xff]
    %v2466 = vld [vmem:[#allocation10 + $0x1e8] sm:$0xff]
    %v2467 = vld [vmem:[#allocation10 + $0x1f0] sm:$0xff]
    %v2468 = vld [vmem:[#allocation10 + $0x1f8] sm:$0xff]
    %2469 = vmatprep.subr.mxu0 %v2466
    %2470 = vmatpush1.msra.mxu0 %v2465
    %2471 = vmatprep.subr.mxu0 %v2462
    %2472 = vmatpush1.msra.mxu0 %v2461
    %2473 = vmatprep.subr.mxu0 %v2458
    %2474 = vmatpush1.msra.mxu0 %v2457
    %2475 = vmatprep.subr.mxu0 %v2454
    %2476 = vmatpush1.msra.mxu0 %v2453
    %2477 = vmatprep.subr.mxu0 %v2450
    %2478 = vmatpush1.msra.mxu0 %v2449
    %2479 = vmatprep.subr.mxu0 %v2446
    %2480 = vmatpush1.msra.mxu0 %v2445
    %2481 = vmatprep.subr.mxu0 %v2442
    %2482 = vmatpush1.msra.mxu0 %v2441
    %2483 = vmatprep.subr.mxu0 %v2438
    %2484 = vmatpush1.msra.mxu0 %v2437
    %2485 = vmatprep.subr.mxu0 %v2434
    %2486 = vmatpush1.msra.mxu0 %v2433
    %2487 = vmatprep.subr.mxu0 %v2430
    %2488 = vmatpush1.msra.mxu0 %v2429
    %2489 = vmatprep.subr.mxu0 %v2426
    %2490 = vmatpush1.msra.mxu0 %v2425
    %2491 = vmatprep.subr.mxu0 %v2422
    %2492 = vmatpush1.msra.mxu0 %v2421
    %2493 = vmatprep.subr.mxu0 %v2418
    %2494 = vmatpush1.msra.mxu0 %v2417
    %2495 = vmatprep.subr.mxu0 %v2414
    %2496 = vmatpush1.msra.mxu0 %v2413
    %2497 = vmatprep.subr.mxu0 %v2410
    %2498 = vmatpush1.msra.mxu0 %v2409
    %2499 = vmatprep.subr.mxu0 %v2406
    %2500 = vmatpush1.msra.mxu0 %v2405
    %2501 = vmatprep.subr.mxu0 0.0
    %2502 = vmatpush2.msra.mxu0 0.0
    %2503 = vmatprep.subr.mxu0 0.0
    %2504 = vmatpush2.msra.mxu0 0.0
    %2505 = vmatprep.subr.mxu0 0.0
    %2506 = vmatpush2.msra.mxu0 0.0
    %2507 = vmatprep.subr.mxu0 0.0
    %2508 = vmatpush2.msra.mxu0 0.0
    %2509 = vmatprep.subr.mxu0 0.0
    %2510 = vmatpush2.msra.mxu0 0.0
    %2511 = vmatprep.subr.mxu0 0.0
    %2512 = vmatpush2.msra.mxu0 0.0
    %2513 = vmatprep.subr.mxu0 0.0
    %2514 = vmatpush2.msra.mxu0 0.0
    %2515 = vmatprep.subr.mxu0 0.0
    %2516 = vmatpush2.msra.mxu0 0.0
    %2517 = vmatprep.subr.mxu0 0.0
    %2518 = vmatpush2.msra.mxu0 0.0
    %2519 = vmatprep.subr.mxu0 0.0
    %2520 = vmatpush2.msra.mxu0 0.0
    %2521 = vmatprep.subr.mxu0 0.0
    %2522 = vmatpush2.msra.mxu0 0.0
    %2523 = vmatprep.subr.mxu0 0.0
    %2524 = vmatpush2.msra.mxu0 0.0
    %2525 = vmatprep.subr.mxu0 0.0
    %2526 = vmatpush2.msra.mxu0 0.0
    %2527 = vmatprep.subr.mxu0 0.0
    %2528 = vmatpush2.msra.mxu0 0.0
    %2529 = vmatprep.subr.mxu0 0.0
    %2530 = vmatpush2.msra.mxu0 0.0
    %2531 = vmatprep.subr.mxu0 0.0
    %2532 = vmatpush2.msra.mxu0 0.0
    %2533 = vmatprep.mubr.f32.mxu0 0.0
    %2534 = vmatmul.mubr.f32.gmra.mxu0 %v2156
    %v2535 = vpop.f32.mrf.mxu0
    %v2536 = vadd.f32 0.0, %v2535
    %v2537 = vpop.f32.mrf.mxu0
    %v2538 = vadd.f32 0.0, %v2537
    %2539 = vdwg.mxu0
    %2540 = vmatprep.subr.mxu0 %v2468
    %2541 = vmatpush1.msra.mxu0 %v2467
    %2542 = vmatprep.subr.mxu0 %v2464
    %2543 = vmatpush1.msra.mxu0 %v2463
    %2544 = vmatprep.subr.mxu0 %v2460
    %2545 = vmatpush1.msra.mxu0 %v2459
    %2546 = vmatprep.subr.mxu0 %v2456
    %2547 = vmatpush1.msra.mxu0 %v2455
    %2548 = vmatprep.subr.mxu0 %v2452
    %2549 = vmatpush1.msra.mxu0 %v2451
    %2550 = vmatprep.subr.mxu0 %v2448
    %2551 = vmatpush1.msra.mxu0 %v2447
    %2552 = vmatprep.subr.mxu0 %v2444
    %2553 = vmatpush1.msra.mxu0 %v2443
    %2554 = vmatprep.subr.mxu0 %v2440
    %2555 = vmatpush1.msra.mxu0 %v2439
    %2556 = vmatprep.subr.mxu0 %v2436
    %2557 = vmatpush1.msra.mxu0 %v2435
    %2558 = vmatprep.subr.mxu0 %v2432
    %2559 = vmatpush1.msra.mxu0 %v2431
    %2560 = vmatprep.subr.mxu0 %v2428
    %2561 = vmatpush1.msra.mxu0 %v2427
    %2562 = vmatprep.subr.mxu0 %v2424
    %2563 = vmatpush1.msra.mxu0 %v2423
    %2564 = vmatprep.subr.mxu0 %v2420
    %2565 = vmatpush1.msra.mxu0 %v2419
    %2566 = vmatprep.subr.mxu0 %v2416
    %2567 = vmatpush1.msra.mxu0 %v2415
    %2568 = vmatprep.subr.mxu0 %v2412
    %2569 = vmatpush1.msra.mxu0 %v2411
    %2570 = vmatprep.subr.mxu0 %v2408
    %2571 = vmatpush1.msra.mxu0 %v2407
    %2572 = vmatprep.subr.mxu0 0.0
    %2573 = vmatpush2.msra.mxu0 0.0
    %2574 = vmatprep.subr.mxu0 0.0
    %2575 = vmatpush2.msra.mxu0 0.0
    %2576 = vmatprep.subr.mxu0 0.0
    %2577 = vmatpush2.msra.mxu0 0.0
    %2578 = vmatprep.subr.mxu0 0.0
    %2579 = vmatpush2.msra.mxu0 0.0
    %2580 = vmatprep.subr.mxu0 0.0
    %2581 = vmatpush2.msra.mxu0 0.0
    %2582 = vmatprep.subr.mxu0 0.0
    %2583 = vmatpush2.msra.mxu0 0.0
    %2584 = vmatprep.subr.mxu0 0.0
    %2585 = vmatpush2.msra.mxu0 0.0
    %2586 = vmatprep.subr.mxu0 0.0
    %2587 = vmatpush2.msra.mxu0 0.0
    %2588 = vmatprep.subr.mxu0 0.0
    %2589 = vmatpush2.msra.mxu0 0.0
    %2590 = vmatprep.subr.mxu0 0.0
    %2591 = vmatpush2.msra.mxu0 0.0
    %2592 = vmatprep.subr.mxu0 0.0
    %2593 = vmatpush2.msra.mxu0 0.0
    %2594 = vmatprep.subr.mxu0 0.0
    %2595 = vmatpush2.msra.mxu0 0.0
    %2596 = vmatprep.subr.mxu0 0.0
    %2597 = vmatpush2.msra.mxu0 0.0
    %2598 = vmatprep.subr.mxu0 0.0
    %2599 = vmatpush2.msra.mxu0 0.0
    %2600 = vmatprep.subr.mxu0 0.0
    %2601 = vmatpush2.msra.mxu0 0.0
    %2602 = vmatprep.subr.mxu0 0.0
    %2603 = vmatpush2.msra.mxu0 0.0
    %2604 = vmatprep.mubr.f32.mxu0 0.0
    %2605 = vmatmul.mubr.f32.gmra.mxu0 %v2156
    %v2606 = vpop.f32.mrf.mxu0
    %v2607 = vadd.f32 0.0, %v2606
    %v2608 = vpop.f32.mrf.mxu0
    %v2609 = vadd.f32 0.0, %v2608
    %2610 = vdwg.mxu0
    %v2611 = vadd.f32 %v2401, %v2536
    %v2612 = vadd.f32 %v2402, %v2538
    %v2613 = vadd.f32 %v2403, %v2607
    %v2614 = vadd.f32 %v2404, %v2609
    %v2615 = vxor.u32 %v2611, 2147483648
    %v2616 = vmul.f32 %v2615, 1.442695
    %v2617 = vpow.pop %v2616
    %v2618 = vadd.f32 %v2617, 1.0
    %v2619 = vrcp.pop %v2618
    %v2620 = vmul.f32 1.0, %v2619
    %v2621 = vxor.u32 %v2612, 2147483648
    %v2622 = vmul.f32 %v2621, 1.442695
    %v2623 = vpow.pop %v2622
    %v2624 = vadd.f32 %v2623, 1.0
    %v2625 = vrcp.pop %v2624
    %v2626 = vmul.f32 1.0, %v2625
    %v2627 = vtanh.pop %v2613
    %v2628 = vxor.u32 %v2614, 2147483648
    %v2629 = vmul.f32 %v2628, 1.442695
    %v2630 = vpow.pop %v2629
    %v2631 = vadd.f32 %v2630, 1.0
    %v2632 = vrcp.pop %v2631
    %v2633 = vmul.f32 1.0, %v2632
    %v2634 = vmul.f32 %v2626, %v2154
    %v2635 = vmul.f32 %v2620, %v2627
    %v2636 = vadd.f32 %v2634, %v2635
    %v2637 = vtanh.pop %v2636
    %v2638 = vmul.f32 %v2633, %v2637
    %s2639 = scalar_lea.vmem [#allocation4], 24
    %2640 = vst [vmem:[%s2639] sm:$0xff] %v2399
    %s2641 = scalar_lea.vmem [#allocation5], 32
    %2642 = vst [vmem:[%s2641] sm:$0xff] %v2638
    %s2643 = scalar_lea.vmem [#allocation2], 128
    %v2644 = vld [vmem:[%s2643] sm:$0xff]
    %v2645 = vld [vmem:[%s2643 + $0x8] sm:$0xff]
    %v2646 = vld [vmem:[%s2643 + $0x10] sm:$0xff]
    %v2647 = vld [vmem:[%s2643 + $0x18] sm:$0xff]
    %v2648 = vld [vmem:[#allocation8] sm:$0xff]
    %v2649 = vld [vmem:[#allocation8 + $0x8] sm:$0xff]
    %v2650 = vld [vmem:[#allocation8 + $0x10] sm:$0xff]
    %v2651 = vld [vmem:[#allocation8 + $0x18] sm:$0xff]
    %v2652 = vld [vmem:[#allocation8 + $0x20] sm:$0xff]
    %v2653 = vld [vmem:[#allocation8 + $0x28] sm:$0xff]
    %v2654 = vld [vmem:[#allocation8 + $0x30] sm:$0xff]
    %v2655 = vld [vmem:[#allocation8 + $0x38] sm:$0xff]
    %v2656 = vld [vmem:[#allocation8 + $0x40] sm:$0xff]
    %v2657 = vld [vmem:[#allocation8 + $0x48] sm:$0xff]
    %v2658 = vld [vmem:[#allocation8 + $0x50] sm:$0xff]
    %v2659 = vld [vmem:[#allocation8 + $0x58] sm:$0xff]
    %v2660 = vld [vmem:[#allocation8 + $0x60] sm:$0xff]
    %v2661 = vld [vmem:[#allocation8 + $0x68] sm:$0xff]
    %v2662 = vld [vmem:[#allocation8 + $0x70] sm:$0xff]
    %v2663 = vld [vmem:[#allocation8 + $0x78] sm:$0xff]
    %v2664 = vld [vmem:[#allocation8 + $0x80] sm:$0xff]
    %v2665 = vld [vmem:[#allocation8 + $0x88] sm:$0xff]
    %v2666 = vld [vmem:[#allocation8 + $0x90] sm:$0xff]
    %v2667 = vld [vmem:[#allocation8 + $0x98] sm:$0xff]
    %v2668 = vld [vmem:[#allocation8 + $0xa0] sm:$0xff]
    %v2669 = vld [vmem:[#allocation8 + $0xa8] sm:$0xff]
    %v2670 = vld [vmem:[#allocation8 + $0xb0] sm:$0xff]
    %v2671 = vld [vmem:[#allocation8 + $0xb8] sm:$0xff]
    %v2672 = vld [vmem:[#allocation8 + $0xc0] sm:$0xff]
    %v2673 = vld [vmem:[#allocation8 + $0xc8] sm:$0xff]
    %v2674 = vld [vmem:[#allocation8 + $0xd0] sm:$0xff]
    %v2675 = vld [vmem:[#allocation8 + $0xd8] sm:$0xff]
    %v2676 = vld [vmem:[#allocation8 + $0xe0] sm:$0xff]
    %v2677 = vld [vmem:[#allocation8 + $0xe8] sm:$0xff]
    %v2678 = vld [vmem:[#allocation8 + $0xf0] sm:$0xff]
    %v2679 = vld [vmem:[#allocation8 + $0xf8] sm:$0xff]
    %v2680 = vld [vmem:[#allocation8 + $0x100] sm:$0xff]
    %v2681 = vld [vmem:[#allocation8 + $0x108] sm:$0xff]
    %v2682 = vld [vmem:[#allocation8 + $0x110] sm:$0xff]
    %v2683 = vld [vmem:[#allocation8 + $0x118] sm:$0xff]
    %v2684 = vld [vmem:[#allocation8 + $0x120] sm:$0xff]
    %v2685 = vld [vmem:[#allocation8 + $0x128] sm:$0xff]
    %v2686 = vld [vmem:[#allocation8 + $0x130] sm:$0xff]
    %v2687 = vld [vmem:[#allocation8 + $0x138] sm:$0xff]
    %v2688 = vld [vmem:[#allocation8 + $0x140] sm:$0xff]
    %v2689 = vld [vmem:[#allocation8 + $0x148] sm:$0xff]
    %v2690 = vld [vmem:[#allocation8 + $0x150] sm:$0xff]
    %v2691 = vld [vmem:[#allocation8 + $0x158] sm:$0xff]
    %v2692 = vld [vmem:[#allocation8 + $0x160] sm:$0xff]
    %v2693 = vld [vmem:[#allocation8 + $0x168] sm:$0xff]
    %v2694 = vld [vmem:[#allocation8 + $0x170] sm:$0xff]
    %v2695 = vld [vmem:[#allocation8 + $0x178] sm:$0xff]
    %v2696 = vld [vmem:[#allocation8 + $0x180] sm:$0xff]
    %v2697 = vld [vmem:[#allocation8 + $0x188] sm:$0xff]
    %v2698 = vld [vmem:[#allocation8 + $0x190] sm:$0xff]
    %v2699 = vld [vmem:[#allocation8 + $0x198] sm:$0xff]
    %v2700 = vld [vmem:[#allocation8 + $0x1a0] sm:$0xff]
    %v2701 = vld [vmem:[#allocation8 + $0x1a8] sm:$0xff]
    %v2702 = vld [vmem:[#allocation8 + $0x1b0] sm:$0xff]
    %v2703 = vld [vmem:[#allocation8 + $0x1b8] sm:$0xff]
    %v2704 = vld [vmem:[#allocation8 + $0x1c0] sm:$0xff]
    %v2705 = vld [vmem:[#allocation8 + $0x1c8] sm:$0xff]
    %v2706 = vld [vmem:[#allocation8 + $0x1d0] sm:$0xff]
    %v2707 = vld [vmem:[#allocation8 + $0x1d8] sm:$0xff]
    %v2708 = vld [vmem:[#allocation8 + $0x1e0] sm:$0xff]
    %v2709 = vld [vmem:[#allocation8 + $0x1e8] sm:$0xff]
    %v2710 = vld [vmem:[#allocation8 + $0x1f0] sm:$0xff]
    %v2711 = vld [vmem:[#allocation8 + $0x1f8] sm:$0xff]
    %2712 = vmatprep.subr.mxu0 %v2709
    %2713 = vmatpush1.msra.mxu0 %v2708
    %2714 = vmatprep.subr.mxu0 %v2705
    %2715 = vmatpush1.msra.mxu0 %v2704
    %2716 = vmatprep.subr.mxu0 %v2701
    %2717 = vmatpush1.msra.mxu0 %v2700
    %2718 = vmatprep.subr.mxu0 %v2697
    %2719 = vmatpush1.msra.mxu0 %v2696
    %2720 = vmatprep.subr.mxu0 %v2693
    %2721 = vmatpush1.msra.mxu0 %v2692
    %2722 = vmatprep.subr.mxu0 %v2689
    %2723 = vmatpush1.msra.mxu0 %v2688
    %2724 = vmatprep.subr.mxu0 %v2685
    %2725 = vmatpush1.msra.mxu0 %v2684
    %2726 = vmatprep.subr.mxu0 %v2681
    %2727 = vmatpush1.msra.mxu0 %v2680
    %2728 = vmatprep.subr.mxu0 %v2677
    %2729 = vmatpush1.msra.mxu0 %v2676
    %2730 = vmatprep.subr.mxu0 %v2673
    %2731 = vmatpush1.msra.mxu0 %v2672
    %2732 = vmatprep.subr.mxu0 %v2669
    %2733 = vmatpush1.msra.mxu0 %v2668
    %2734 = vmatprep.subr.mxu0 %v2665
    %2735 = vmatpush1.msra.mxu0 %v2664
    %2736 = vmatprep.subr.mxu0 %v2661
    %2737 = vmatpush1.msra.mxu0 %v2660
    %2738 = vmatprep.subr.mxu0 %v2657
    %2739 = vmatpush1.msra.mxu0 %v2656
    %2740 = vmatprep.subr.mxu0 %v2653
    %2741 = vmatpush1.msra.mxu0 %v2652
    %2742 = vmatprep.subr.mxu0 %v2649
    %2743 = vmatpush1.msra.mxu0 %v2648
    %2744 = vmatprep.subr.mxu0 0.0
    %2745 = vmatpush2.msra.mxu0 0.0
    %2746 = vmatprep.subr.mxu0 0.0
    %2747 = vmatpush2.msra.mxu0 0.0
    %2748 = vmatprep.subr.mxu0 0.0
    %2749 = vmatpush2.msra.mxu0 0.0
    %2750 = vmatprep.subr.mxu0 0.0
    %2751 = vmatpush2.msra.mxu0 0.0
    %2752 = vmatprep.subr.mxu0 0.0
    %2753 = vmatpush2.msra.mxu0 0.0
    %2754 = vmatprep.subr.mxu0 0.0
    %2755 = vmatpush2.msra.mxu0 0.0
    %2756 = vmatprep.subr.mxu0 0.0
    %2757 = vmatpush2.msra.mxu0 0.0
    %2758 = vmatprep.subr.mxu0 0.0
    %2759 = vmatpush2.msra.mxu0 0.0
    %2760 = vmatprep.subr.mxu0 0.0
    %2761 = vmatpush2.msra.mxu0 0.0
    %2762 = vmatprep.subr.mxu0 0.0
    %2763 = vmatpush2.msra.mxu0 0.0
    %2764 = vmatprep.subr.mxu0 0.0
    %2765 = vmatpush2.msra.mxu0 0.0
    %2766 = vmatprep.subr.mxu0 0.0
    %2767 = vmatpush2.msra.mxu0 0.0
    %2768 = vmatprep.subr.mxu0 0.0
    %2769 = vmatpush2.msra.mxu0 0.0
    %2770 = vmatprep.subr.mxu0 0.0
    %2771 = vmatpush2.msra.mxu0 0.0
    %2772 = vmatprep.subr.mxu0 0.0
    %2773 = vmatpush2.msra.mxu0 0.0
    %2774 = vmatprep.subr.mxu0 0.0
    %2775 = vmatpush2.msra.mxu0 0.0
    %2776 = vmatprep.mubr.f32.mxu0 0.0
    %2777 = vmatmul.mubr.f32.gmra.mxu0 %v2399
    %v2778 = vpop.f32.mrf.mxu0
    %v2779 = vadd.f32 0.0, %v2778
    %v2780 = vpop.f32.mrf.mxu0
    %v2781 = vadd.f32 0.0, %v2780
    %2782 = vdwg.mxu0
    %2783 = vmatprep.subr.mxu0 %v2711
    %2784 = vmatpush1.msra.mxu0 %v2710
    %2785 = vmatprep.subr.mxu0 %v2707
    %2786 = vmatpush1.msra.mxu0 %v2706
    %2787 = vmatprep.subr.mxu0 %v2703
    %2788 = vmatpush1.msra.mxu0 %v2702
    %2789 = vmatprep.subr.mxu0 %v2699
    %2790 = vmatpush1.msra.mxu0 %v2698
    %2791 = vmatprep.subr.mxu0 %v2695
    %2792 = vmatpush1.msra.mxu0 %v2694
    %2793 = vmatprep.subr.mxu0 %v2691
    %2794 = vmatpush1.msra.mxu0 %v2690
    %2795 = vmatprep.subr.mxu0 %v2687
    %2796 = vmatpush1.msra.mxu0 %v2686
    %2797 = vmatprep.subr.mxu0 %v2683
    %2798 = vmatpush1.msra.mxu0 %v2682
    %2799 = vmatprep.subr.mxu0 %v2679
    %2800 = vmatpush1.msra.mxu0 %v2678
    %2801 = vmatprep.subr.mxu0 %v2675
    %2802 = vmatpush1.msra.mxu0 %v2674
    %2803 = vmatprep.subr.mxu0 %v2671
    %2804 = vmatpush1.msra.mxu0 %v2670
    %2805 = vmatprep.subr.mxu0 %v2667
    %2806 = vmatpush1.msra.mxu0 %v2666
    %2807 = vmatprep.subr.mxu0 %v2663
    %2808 = vmatpush1.msra.mxu0 %v2662
    %2809 = vmatprep.subr.mxu0 %v2659
    %2810 = vmatpush1.msra.mxu0 %v2658
    %2811 = vmatprep.subr.mxu0 %v2655
    %2812 = vmatpush1.msra.mxu0 %v2654
    %2813 = vmatprep.subr.mxu0 %v2651
    %2814 = vmatpush1.msra.mxu0 %v2650
    %2815 = vmatprep.subr.mxu0 0.0
    %2816 = vmatpush2.msra.mxu0 0.0
    %2817 = vmatprep.subr.mxu0 0.0
    %2818 = vmatpush2.msra.mxu0 0.0
    %2819 = vmatprep.subr.mxu0 0.0
    %2820 = vmatpush2.msra.mxu0 0.0
    %2821 = vmatprep.subr.mxu0 0.0
    %2822 = vmatpush2.msra.mxu0 0.0
    %2823 = vmatprep.subr.mxu0 0.0
    %2824 = vmatpush2.msra.mxu0 0.0
    %2825 = vmatprep.subr.mxu0 0.0
    %2826 = vmatpush2.msra.mxu0 0.0
    %2827 = vmatprep.subr.mxu0 0.0
    %2828 = vmatpush2.msra.mxu0 0.0
    %2829 = vmatprep.subr.mxu0 0.0
    %2830 = vmatpush2.msra.mxu0 0.0
    %2831 = vmatprep.subr.mxu0 0.0
    %2832 = vmatpush2.msra.mxu0 0.0
    %2833 = vmatprep.subr.mxu0 0.0
    %2834 = vmatpush2.msra.mxu0 0.0
    %2835 = vmatprep.subr.mxu0 0.0
    %2836 = vmatpush2.msra.mxu0 0.0
    %2837 = vmatprep.subr.mxu0 0.0
    %2838 = vmatpush2.msra.mxu0 0.0
    %2839 = vmatprep.subr.mxu0 0.0
    %2840 = vmatpush2.msra.mxu0 0.0
    %2841 = vmatprep.subr.mxu0 0.0
    %2842 = vmatpush2.msra.mxu0 0.0
    %2843 = vmatprep.subr.mxu0 0.0
    %2844 = vmatpush2.msra.mxu0 0.0
    %2845 = vmatprep.subr.mxu0 0.0
    %2846 = vmatpush2.msra.mxu0 0.0
    %2847 = vmatprep.mubr.f32.mxu0 0.0
    %2848 = vmatmul.mubr.f32.gmra.mxu0 %v2399
    %v2849 = vpop.f32.mrf.mxu0
    %v2850 = vadd.f32 0.0, %v2849
    %v2851 = vpop.f32.mrf.mxu0
    %v2852 = vadd.f32 0.0, %v2851
    %2853 = vdwg.mxu0
    %v2854 = vadd.f32 %v2644, %v2779
    %v2855 = vadd.f32 %v2645, %v2781
    %v2856 = vadd.f32 %v2646, %v2850
    %v2857 = vadd.f32 %v2647, %v2852
    %v2858 = vxor.u32 %v2854, 2147483648
    %v2859 = vmul.f32 %v2858, 1.442695
    %v2860 = vpow.pop %v2859
    %v2861 = vadd.f32 %v2860, 1.0
    %v2862 = vrcp.pop %v2861
    %v2863 = vmul.f32 1.0, %v2862
    %v2864 = vxor.u32 %v2855, 2147483648
    %v2865 = vmul.f32 %v2864, 1.442695
    %v2866 = vpow.pop %v2865
    %v2867 = vadd.f32 %v2866, 1.0
    %v2868 = vrcp.pop %v2867
    %v2869 = vmul.f32 1.0, %v2868
    %v2870 = vtanh.pop %v2856
    %v2871 = vxor.u32 %v2857, 2147483648
    %v2872 = vmul.f32 %v2871, 1.442695
    %v2873 = vpow.pop %v2872
    %v2874 = vadd.f32 %v2873, 1.0
    %v2875 = vrcp.pop %v2874
    %v2876 = vmul.f32 1.0, %v2875
    %v2877 = vmul.f32 %v2869, %v2397
    %v2878 = vmul.f32 %v2863, %v2870
    %v2879 = vadd.f32 %v2877, %v2878
    %v2880 = vtanh.pop %v2879
    %v2881 = vmul.f32 %v2876, %v2880
    %s2882 = scalar_lea.vmem [#allocation3], 96
    %v2883 = vld [vmem:[%s2882] sm:$0xff]
    %v2884 = vld [vmem:[%s2882 + $0x8] sm:$0xff]
    %v2885 = vld [vmem:[%s2882 + $0x10] sm:$0xff]
    %v2886 = vld [vmem:[%s2882 + $0x18] sm:$0xff]
    %v2887 = vld [vmem:[#allocation10] sm:$0xff]
    %v2888 = vld [vmem:[#allocation10 + $0x8] sm:$0xff]
    %v2889 = vld [vmem:[#allocation10 + $0x10] sm:$0xff]
    %v2890 = vld [vmem:[#allocation10 + $0x18] sm:$0xff]
    %v2891 = vld [vmem:[#allocation10 + $0x20] sm:$0xff]
    %v2892 = vld [vmem:[#allocation10 + $0x28] sm:$0xff]
    %v2893 = vld [vmem:[#allocation10 + $0x30] sm:$0xff]
    %v2894 = vld [vmem:[#allocation10 + $0x38] sm:$0xff]
    %v2895 = vld [vmem:[#allocation10 + $0x40] sm:$0xff]
    %v2896 = vld [vmem:[#allocation10 + $0x48] sm:$0xff]
    %v2897 = vld [vmem:[#allocation10 + $0x50] sm:$0xff]
    %v2898 = vld [vmem:[#allocation10 + $0x58] sm:$0xff]
    %v2899 = vld [vmem:[#allocation10 + $0x60] sm:$0xff]
    %v2900 = vld [vmem:[#allocation10 + $0x68] sm:$0xff]
    %v2901 = vld [vmem:[#allocation10 + $0x70] sm:$0xff]
    %v2902 = vld [vmem:[#allocation10 + $0x78] sm:$0xff]
    %v2903 = vld [vmem:[#allocation10 + $0x80] sm:$0xff]
    %v2904 = vld [vmem:[#allocation10 + $0x88] sm:$0xff]
    %v2905 = vld [vmem:[#allocation10 + $0x90] sm:$0xff]
    %v2906 = vld [vmem:[#allocation10 + $0x98] sm:$0xff]
    %v2907 = vld [vmem:[#allocation10 + $0xa0] sm:$0xff]
    %v2908 = vld [vmem:[#allocation10 + $0xa8] sm:$0xff]
    %v2909 = vld [vmem:[#allocation10 + $0xb0] sm:$0xff]
    %v2910 = vld [vmem:[#allocation10 + $0xb8] sm:$0xff]
    %v2911 = vld [vmem:[#allocation10 + $0xc0] sm:$0xff]
    %v2912 = vld [vmem:[#allocation10 + $0xc8] sm:$0xff]
    %v2913 = vld [vmem:[#allocation10 + $0xd0] sm:$0xff]
    %v2914 = vld [vmem:[#allocation10 + $0xd8] sm:$0xff]
    %v2915 = vld [vmem:[#allocation10 + $0xe0] sm:$0xff]
    %v2916 = vld [vmem:[#allocation10 + $0xe8] sm:$0xff]
    %v2917 = vld [vmem:[#allocation10 + $0xf0] sm:$0xff]
    %v2918 = vld [vmem:[#allocation10 + $0xf8] sm:$0xff]
    %v2919 = vld [vmem:[#allocation10 + $0x100] sm:$0xff]
    %v2920 = vld [vmem:[#allocation10 + $0x108] sm:$0xff]
    %v2921 = vld [vmem:[#allocation10 + $0x110] sm:$0xff]
    %v2922 = vld [vmem:[#allocation10 + $0x118] sm:$0xff]
    %v2923 = vld [vmem:[#allocation10 + $0x120] sm:$0xff]
    %v2924 = vld [vmem:[#allocation10 + $0x128] sm:$0xff]
    %v2925 = vld [vmem:[#allocation10 + $0x130] sm:$0xff]
    %v2926 = vld [vmem:[#allocation10 + $0x138] sm:$0xff]
    %v2927 = vld [vmem:[#allocation10 + $0x140] sm:$0xff]
    %v2928 = vld [vmem:[#allocation10 + $0x148] sm:$0xff]
    %v2929 = vld [vmem:[#allocation10 + $0x150] sm:$0xff]
    %v2930 = vld [vmem:[#allocation10 + $0x158] sm:$0xff]
    %v2931 = vld [vmem:[#allocation10 + $0x160] sm:$0xff]
    %v2932 = vld [vmem:[#allocation10 + $0x168] sm:$0xff]
    %v2933 = vld [vmem:[#allocation10 + $0x170] sm:$0xff]
    %v2934 = vld [vmem:[#allocation10 + $0x178] sm:$0xff]
    %v2935 = vld [vmem:[#allocation10 + $0x180] sm:$0xff]
    %v2936 = vld [vmem:[#allocation10 + $0x188] sm:$0xff]
    %v2937 = vld [vmem:[#allocation10 + $0x190] sm:$0xff]
    %v2938 = vld [vmem:[#allocation10 + $0x198] sm:$0xff]
    %v2939 = vld [vmem:[#allocation10 + $0x1a0] sm:$0xff]
    %v2940 = vld [vmem:[#allocation10 + $0x1a8] sm:$0xff]
    %v2941 = vld [vmem:[#allocation10 + $0x1b0] sm:$0xff]
    %v2942 = vld [vmem:[#allocation10 + $0x1b8] sm:$0xff]
    %v2943 = vld [vmem:[#allocation10 + $0x1c0] sm:$0xff]
    %v2944 = vld [vmem:[#allocation10 + $0x1c8] sm:$0xff]
    %v2945 = vld [vmem:[#allocation10 + $0x1d0] sm:$0xff]
    %v2946 = vld [vmem:[#allocation10 + $0x1d8] sm:$0xff]
    %v2947 = vld [vmem:[#allocation10 + $0x1e0] sm:$0xff]
    %v2948 = vld [vmem:[#allocation10 + $0x1e8] sm:$0xff]
    %v2949 = vld [vmem:[#allocation10 + $0x1f0] sm:$0xff]
    %v2950 = vld [vmem:[#allocation10 + $0x1f8] sm:$0xff]
    %2951 = vmatprep.subr.mxu0 %v2948
    %2952 = vmatpush1.msra.mxu0 %v2947
    %2953 = vmatprep.subr.mxu0 %v2944
    %2954 = vmatpush1.msra.mxu0 %v2943
    %2955 = vmatprep.subr.mxu0 %v2940
    %2956 = vmatpush1.msra.mxu0 %v2939
    %2957 = vmatprep.subr.mxu0 %v2936
    %2958 = vmatpush1.msra.mxu0 %v2935
    %2959 = vmatprep.subr.mxu0 %v2932
    %2960 = vmatpush1.msra.mxu0 %v2931
    %2961 = vmatprep.subr.mxu0 %v2928
    %2962 = vmatpush1.msra.mxu0 %v2927
    %2963 = vmatprep.subr.mxu0 %v2924
    %2964 = vmatpush1.msra.mxu0 %v2923
    %2965 = vmatprep.subr.mxu0 %v2920
    %2966 = vmatpush1.msra.mxu0 %v2919
    %2967 = vmatprep.subr.mxu0 %v2916
    %2968 = vmatpush1.msra.mxu0 %v2915
    %2969 = vmatprep.subr.mxu0 %v2912
    %2970 = vmatpush1.msra.mxu0 %v2911
    %2971 = vmatprep.subr.mxu0 %v2908
    %2972 = vmatpush1.msra.mxu0 %v2907
    %2973 = vmatprep.subr.mxu0 %v2904
    %2974 = vmatpush1.msra.mxu0 %v2903
    %2975 = vmatprep.subr.mxu0 %v2900
    %2976 = vmatpush1.msra.mxu0 %v2899
    %2977 = vmatprep.subr.mxu0 %v2896
    %2978 = vmatpush1.msra.mxu0 %v2895
    %2979 = vmatprep.subr.mxu0 %v2892
    %2980 = vmatpush1.msra.mxu0 %v2891
    %2981 = vmatprep.subr.mxu0 %v2888
    %2982 = vmatpush1.msra.mxu0 %v2887
    %2983 = vmatprep.subr.mxu0 0.0
    %2984 = vmatpush2.msra.mxu0 0.0
    %2985 = vmatprep.subr.mxu0 0.0
    %2986 = vmatpush2.msra.mxu0 0.0
    %2987 = vmatprep.subr.mxu0 0.0
    %2988 = vmatpush2.msra.mxu0 0.0
    %2989 = vmatprep.subr.mxu0 0.0
    %2990 = vmatpush2.msra.mxu0 0.0
    %2991 = vmatprep.subr.mxu0 0.0
    %2992 = vmatpush2.msra.mxu0 0.0
    %2993 = vmatprep.subr.mxu0 0.0
    %2994 = vmatpush2.msra.mxu0 0.0
    %2995 = vmatprep.subr.mxu0 0.0
    %2996 = vmatpush2.msra.mxu0 0.0
    %2997 = vmatprep.subr.mxu0 0.0
    %2998 = vmatpush2.msra.mxu0 0.0
    %2999 = vmatprep.subr.mxu0 0.0
    %3000 = vmatpush2.msra.mxu0 0.0
    %3001 = vmatprep.subr.mxu0 0.0
    %3002 = vmatpush2.msra.mxu0 0.0
    %3003 = vmatprep.subr.mxu0 0.0
    %3004 = vmatpush2.msra.mxu0 0.0
    %3005 = vmatprep.subr.mxu0 0.0
    %3006 = vmatpush2.msra.mxu0 0.0
    %3007 = vmatprep.subr.mxu0 0.0
    %3008 = vmatpush2.msra.mxu0 0.0
    %3009 = vmatprep.subr.mxu0 0.0
    %3010 = vmatpush2.msra.mxu0 0.0
    %3011 = vmatprep.subr.mxu0 0.0
    %3012 = vmatpush2.msra.mxu0 0.0
    %3013 = vmatprep.subr.mxu0 0.0
    %3014 = vmatpush2.msra.mxu0 0.0
    %3015 = vmatprep.mubr.f32.mxu0 0.0
    %3016 = vmatmul.mubr.f32.gmra.mxu0 %v2638
    %v3017 = vpop.f32.mrf.mxu0
    %v3018 = vadd.f32 0.0, %v3017
    %v3019 = vpop.f32.mrf.mxu0
    %v3020 = vadd.f32 0.0, %v3019
    %3021 = vdwg.mxu0
    %3022 = vmatprep.subr.mxu0 %v2950
    %3023 = vmatpush1.msra.mxu0 %v2949
    %3024 = vmatprep.subr.mxu0 %v2946
    %3025 = vmatpush1.msra.mxu0 %v2945
    %3026 = vmatprep.subr.mxu0 %v2942
    %3027 = vmatpush1.msra.mxu0 %v2941
    %3028 = vmatprep.subr.mxu0 %v2938
    %3029 = vmatpush1.msra.mxu0 %v2937
    %3030 = vmatprep.subr.mxu0 %v2934
    %3031 = vmatpush1.msra.mxu0 %v2933
    %3032 = vmatprep.subr.mxu0 %v2930
    %3033 = vmatpush1.msra.mxu0 %v2929
    %3034 = vmatprep.subr.mxu0 %v2926
    %3035 = vmatpush1.msra.mxu0 %v2925
    %3036 = vmatprep.subr.mxu0 %v2922
    %3037 = vmatpush1.msra.mxu0 %v2921
    %3038 = vmatprep.subr.mxu0 %v2918
    %3039 = vmatpush1.msra.mxu0 %v2917
    %3040 = vmatprep.subr.mxu0 %v2914
    %3041 = vmatpush1.msra.mxu0 %v2913
    %3042 = vmatprep.subr.mxu0 %v2910
    %3043 = vmatpush1.msra.mxu0 %v2909
    %3044 = vmatprep.subr.mxu0 %v2906
    %3045 = vmatpush1.msra.mxu0 %v2905
    %3046 = vmatprep.subr.mxu0 %v2902
    %3047 = vmatpush1.msra.mxu0 %v2901
    %3048 = vmatprep.subr.mxu0 %v2898
    %3049 = vmatpush1.msra.mxu0 %v2897
    %3050 = vmatprep.subr.mxu0 %v2894
    %3051 = vmatpush1.msra.mxu0 %v2893
    %3052 = vmatprep.subr.mxu0 %v2890
    %3053 = vmatpush1.msra.mxu0 %v2889
    %3054 = vmatprep.subr.mxu0 0.0
    %3055 = vmatpush2.msra.mxu0 0.0
    %3056 = vmatprep.subr.mxu0 0.0
    %3057 = vmatpush2.msra.mxu0 0.0
    %3058 = vmatprep.subr.mxu0 0.0
    %3059 = vmatpush2.msra.mxu0 0.0
    %3060 = vmatprep.subr.mxu0 0.0
    %3061 = vmatpush2.msra.mxu0 0.0
    %3062 = vmatprep.subr.mxu0 0.0
    %3063 = vmatpush2.msra.mxu0 0.0
    %3064 = vmatprep.subr.mxu0 0.0
    %3065 = vmatpush2.msra.mxu0 0.0
    %3066 = vmatprep.subr.mxu0 0.0
    %3067 = vmatpush2.msra.mxu0 0.0
    %3068 = vmatprep.subr.mxu0 0.0
    %3069 = vmatpush2.msra.mxu0 0.0
    %3070 = vmatprep.subr.mxu0 0.0
    %3071 = vmatpush2.msra.mxu0 0.0
    %3072 = vmatprep.subr.mxu0 0.0
    %3073 = vmatpush2.msra.mxu0 0.0
    %3074 = vmatprep.subr.mxu0 0.0
    %3075 = vmatpush2.msra.mxu0 0.0
    %3076 = vmatprep.subr.mxu0 0.0
    %3077 = vmatpush2.msra.mxu0 0.0
    %3078 = vmatprep.subr.mxu0 0.0
    %3079 = vmatpush2.msra.mxu0 0.0
    %3080 = vmatprep.subr.mxu0 0.0
    %3081 = vmatpush2.msra.mxu0 0.0
    %3082 = vmatprep.subr.mxu0 0.0
    %3083 = vmatpush2.msra.mxu0 0.0
    %3084 = vmatprep.subr.mxu0 0.0
    %3085 = vmatpush2.msra.mxu0 0.0
    %3086 = vmatprep.mubr.f32.mxu0 0.0
    %3087 = vmatmul.mubr.f32.gmra.mxu0 %v2638
    %v3088 = vpop.f32.mrf.mxu0
    %v3089 = vadd.f32 0.0, %v3088
    %v3090 = vpop.f32.mrf.mxu0
    %v3091 = vadd.f32 0.0, %v3090
    %3092 = vdwg.mxu0
    %v3093 = vadd.f32 %v2883, %v3018
    %v3094 = vadd.f32 %v2884, %v3020
    %v3095 = vadd.f32 %v2885, %v3089
    %v3096 = vadd.f32 %v2886, %v3091
    %v3097 = vxor.u32 %v3093, 2147483648
    %v3098 = vmul.f32 %v3097, 1.442695
    %v3099 = vpow.pop %v3098
    %v3100 = vadd.f32 %v3099, 1.0
    %v3101 = vrcp.pop %v3100
    %v3102 = vmul.f32 1.0, %v3101
    %v3103 = vxor.u32 %v3094, 2147483648
    %v3104 = vmul.f32 %v3103, 1.442695
    %v3105 = vpow.pop %v3104
    %v3106 = vadd.f32 %v3105, 1.0
    %v3107 = vrcp.pop %v3106
    %v3108 = vmul.f32 1.0, %v3107
    %v3109 = vtanh.pop %v3095
    %v3110 = vxor.u32 %v3096, 2147483648
    %v3111 = vmul.f32 %v3110, 1.442695
    %v3112 = vpow.pop %v3111
    %v3113 = vadd.f32 %v3112, 1.0
    %v3114 = vrcp.pop %v3113
    %v3115 = vmul.f32 1.0, %v3114
    %v3116 = vmul.f32 %v3108, %v2636
    %v3117 = vmul.f32 %v3102, %v3109
    %v3118 = vadd.f32 %v3116, %v3117
    %v3119 = vtanh.pop %v3118
    %v3120 = vmul.f32 %v3115, %v3119
    %s3121 = scalar_lea.vmem [#allocation4], 32
    %3122 = vst [vmem:[%s3121] sm:$0xff] %v2881
    %s3123 = scalar_lea.vmem [#allocation5], 24
    %3124 = vst [vmem:[%s3123] sm:$0xff] %v3120
    %s3125 = scalar_lea.vmem [#allocation2], 160
    %v3126 = vld [vmem:[%s3125] sm:$0xff]
    %v3127 = vld [vmem:[%s3125 + $0x8] sm:$0xff]
    %v3128 = vld [vmem:[%s3125 + $0x10] sm:$0xff]
    %v3129 = vld [vmem:[%s3125 + $0x18] sm:$0xff]
    %v3130 = vld [vmem:[#allocation8] sm:$0xff]
    %v3131 = vld [vmem:[#allocation8 + $0x8] sm:$0xff]
    %v3132 = vld [vmem:[#allocation8 + $0x10] sm:$0xff]
    %v3133 = vld [vmem:[#allocation8 + $0x18] sm:$0xff]
    %v3134 = vld [vmem:[#allocation8 + $0x20] sm:$0xff]
    %v3135 = vld [vmem:[#allocation8 + $0x28] sm:$0xff]
    %v3136 = vld [vmem:[#allocation8 + $0x30] sm:$0xff]
    %v3137 = vld [vmem:[#allocation8 + $0x38] sm:$0xff]
    %v3138 = vld [vmem:[#allocation8 + $0x40] sm:$0xff]
    %v3139 = vld [vmem:[#allocation8 + $0x48] sm:$0xff]
    %v3140 = vld [vmem:[#allocation8 + $0x50] sm:$0xff]
    %v3141 = vld [vmem:[#allocation8 + $0x58] sm:$0xff]
    %v3142 = vld [vmem:[#allocation8 + $0x60] sm:$0xff]
    %v3143 = vld [vmem:[#allocation8 + $0x68] sm:$0xff]
    %v3144 = vld [vmem:[#allocation8 + $0x70] sm:$0xff]
    %v3145 = vld [vmem:[#allocation8 + $0x78] sm:$0xff]
    %v3146 = vld [vmem:[#allocation8 + $0x80] sm:$0xff]
    %v3147 = vld [vmem:[#allocation8 + $0x88] sm:$0xff]
    %v3148 = vld [vmem:[#allocation8 + $0x90] sm:$0xff]
    %v3149 = vld [vmem:[#allocation8 + $0x98] sm:$0xff]
    %v3150 = vld [vmem:[#allocation8 + $0xa0] sm:$0xff]
    %v3151 = vld [vmem:[#allocation8 + $0xa8] sm:$0xff]
    %v3152 = vld [vmem:[#allocation8 + $0xb0] sm:$0xff]
    %v3153 = vld [vmem:[#allocation8 + $0xb8] sm:$0xff]
    %v3154 = vld [vmem:[#allocation8 + $0xc0] sm:$0xff]
    %v3155 = vld [vmem:[#allocation8 + $0xc8] sm:$0xff]
    %v3156 = vld [vmem:[#allocation8 + $0xd0] sm:$0xff]
    %v3157 = vld [vmem:[#allocation8 + $0xd8] sm:$0xff]
    %v3158 = vld [vmem:[#allocation8 + $0xe0] sm:$0xff]
    %v3159 = vld [vmem:[#allocation8 + $0xe8] sm:$0xff]
    %v3160 = vld [vmem:[#allocation8 + $0xf0] sm:$0xff]
    %v3161 = vld [vmem:[#allocation8 + $0xf8] sm:$0xff]
    %v3162 = vld [vmem:[#allocation8 + $0x100] sm:$0xff]
    %v3163 = vld [vmem:[#allocation8 + $0x108] sm:$0xff]
    %v3164 = vld [vmem:[#allocation8 + $0x110] sm:$0xff]
    %v3165 = vld [vmem:[#allocation8 + $0x118] sm:$0xff]
    %v3166 = vld [vmem:[#allocation8 + $0x120] sm:$0xff]
    %v3167 = vld [vmem:[#allocation8 + $0x128] sm:$0xff]
    %v3168 = vld [vmem:[#allocation8 + $0x130] sm:$0xff]
    %v3169 = vld [vmem:[#allocation8 + $0x138] sm:$0xff]
    %v3170 = vld [vmem:[#allocation8 + $0x140] sm:$0xff]
    %v3171 = vld [vmem:[#allocation8 + $0x148] sm:$0xff]
    %v3172 = vld [vmem:[#allocation8 + $0x150] sm:$0xff]
    %v3173 = vld [vmem:[#allocation8 + $0x158] sm:$0xff]
    %v3174 = vld [vmem:[#allocation8 + $0x160] sm:$0xff]
    %v3175 = vld [vmem:[#allocation8 + $0x168] sm:$0xff]
    %v3176 = vld [vmem:[#allocation8 + $0x170] sm:$0xff]
    %v3177 = vld [vmem:[#allocation8 + $0x178] sm:$0xff]
    %v3178 = vld [vmem:[#allocation8 + $0x180] sm:$0xff]
    %v3179 = vld [vmem:[#allocation8 + $0x188] sm:$0xff]
    %v3180 = vld [vmem:[#allocation8 + $0x190] sm:$0xff]
    %v3181 = vld [vmem:[#allocation8 + $0x198] sm:$0xff]
    %v3182 = vld [vmem:[#allocation8 + $0x1a0] sm:$0xff]
    %v3183 = vld [vmem:[#allocation8 + $0x1a8] sm:$0xff]
    %v3184 = vld [vmem:[#allocation8 + $0x1b0] sm:$0xff]
    %v3185 = vld [vmem:[#allocation8 + $0x1b8] sm:$0xff]
    %v3186 = vld [vmem:[#allocation8 + $0x1c0] sm:$0xff]
    %v3187 = vld [vmem:[#allocation8 + $0x1c8] sm:$0xff]
    %v3188 = vld [vmem:[#allocation8 + $0x1d0] sm:$0xff]
    %v3189 = vld [vmem:[#allocation8 + $0x1d8] sm:$0xff]
    %v3190 = vld [vmem:[#allocation8 + $0x1e0] sm:$0xff]
    %v3191 = vld [vmem:[#allocation8 + $0x1e8] sm:$0xff]
    %v3192 = vld [vmem:[#allocation8 + $0x1f0] sm:$0xff]
    %v3193 = vld [vmem:[#allocation8 + $0x1f8] sm:$0xff]
    %3194 = vmatprep.subr.mxu0 %v3191
    %3195 = vmatpush1.msra.mxu0 %v3190
    %3196 = vmatprep.subr.mxu0 %v3187
    %3197 = vmatpush1.msra.mxu0 %v3186
    %3198 = vmatprep.subr.mxu0 %v3183
    %3199 = vmatpush1.msra.mxu0 %v3182
    %3200 = vmatprep.subr.mxu0 %v3179
    %3201 = vmatpush1.msra.mxu0 %v3178
    %3202 = vmatprep.subr.mxu0 %v3175
    %3203 = vmatpush1.msra.mxu0 %v3174
    %3204 = vmatprep.subr.mxu0 %v3171
    %3205 = vmatpush1.msra.mxu0 %v3170
    %3206 = vmatprep.subr.mxu0 %v3167
    %3207 = vmatpush1.msra.mxu0 %v3166
    %3208 = vmatprep.subr.mxu0 %v3163
    %3209 = vmatpush1.msra.mxu0 %v3162
    %3210 = vmatprep.subr.mxu0 %v3159
    %3211 = vmatpush1.msra.mxu0 %v3158
    %3212 = vmatprep.subr.mxu0 %v3155
    %3213 = vmatpush1.msra.mxu0 %v3154
    %3214 = vmatprep.subr.mxu0 %v3151
    %3215 = vmatpush1.msra.mxu0 %v3150
    %3216 = vmatprep.subr.mxu0 %v3147
    %3217 = vmatpush1.msra.mxu0 %v3146
    %3218 = vmatprep.subr.mxu0 %v3143
    %3219 = vmatpush1.msra.mxu0 %v3142
    %3220 = vmatprep.subr.mxu0 %v3139
    %3221 = vmatpush1.msra.mxu0 %v3138
    %3222 = vmatprep.subr.mxu0 %v3135
    %3223 = vmatpush1.msra.mxu0 %v3134
    %3224 = vmatprep.subr.mxu0 %v3131
    %3225 = vmatpush1.msra.mxu0 %v3130
    %3226 = vmatprep.subr.mxu0 0.0
    %3227 = vmatpush2.msra.mxu0 0.0
    %3228 = vmatprep.subr.mxu0 0.0
    %3229 = vmatpush2.msra.mxu0 0.0
    %3230 = vmatprep.subr.mxu0 0.0
    %3231 = vmatpush2.msra.mxu0 0.0
    %3232 = vmatprep.subr.mxu0 0.0
    %3233 = vmatpush2.msra.mxu0 0.0
    %3234 = vmatprep.subr.mxu0 0.0
    %3235 = vmatpush2.msra.mxu0 0.0
    %3236 = vmatprep.subr.mxu0 0.0
    %3237 = vmatpush2.msra.mxu0 0.0
    %3238 = vmatprep.subr.mxu0 0.0
    %3239 = vmatpush2.msra.mxu0 0.0
    %3240 = vmatprep.subr.mxu0 0.0
    %3241 = vmatpush2.msra.mxu0 0.0
    %3242 = vmatprep.subr.mxu0 0.0
    %3243 = vmatpush2.msra.mxu0 0.0
    %3244 = vmatprep.subr.mxu0 0.0
    %3245 = vmatpush2.msra.mxu0 0.0
    %3246 = vmatprep.subr.mxu0 0.0
    %3247 = vmatpush2.msra.mxu0 0.0
    %3248 = vmatprep.subr.mxu0 0.0
    %3249 = vmatpush2.msra.mxu0 0.0
    %3250 = vmatprep.subr.mxu0 0.0
    %3251 = vmatpush2.msra.mxu0 0.0
    %3252 = vmatprep.subr.mxu0 0.0
    %3253 = vmatpush2.msra.mxu0 0.0
    %3254 = vmatprep.subr.mxu0 0.0
    %3255 = vmatpush2.msra.mxu0 0.0
    %3256 = vmatprep.subr.mxu0 0.0
    %3257 = vmatpush2.msra.mxu0 0.0
    %3258 = vmatprep.mubr.f32.mxu0 0.0
    %3259 = vmatmul.mubr.f32.gmra.mxu0 %v2881
    %v3260 = vpop.f32.mrf.mxu0
    %v3261 = vadd.f32 0.0, %v3260
    %v3262 = vpop.f32.mrf.mxu0
    %v3263 = vadd.f32 0.0, %v3262
    %3264 = vdwg.mxu0
    %3265 = vmatprep.subr.mxu0 %v3193
    %3266 = vmatpush1.msra.mxu0 %v3192
    %3267 = vmatprep.subr.mxu0 %v3189
    %3268 = vmatpush1.msra.mxu0 %v3188
    %3269 = vmatprep.subr.mxu0 %v3185
    %3270 = vmatpush1.msra.mxu0 %v3184
    %3271 = vmatprep.subr.mxu0 %v3181
    %3272 = vmatpush1.msra.mxu0 %v3180
    %3273 = vmatprep.subr.mxu0 %v3177
    %3274 = vmatpush1.msra.mxu0 %v3176
    %3275 = vmatprep.subr.mxu0 %v3173
    %3276 = vmatpush1.msra.mxu0 %v3172
    %3277 = vmatprep.subr.mxu0 %v3169
    %3278 = vmatpush1.msra.mxu0 %v3168
    %3279 = vmatprep.subr.mxu0 %v3165
    %3280 = vmatpush1.msra.mxu0 %v3164
    %3281 = vmatprep.subr.mxu0 %v3161
    %3282 = vmatpush1.msra.mxu0 %v3160
    %3283 = vmatprep.subr.mxu0 %v3157
    %3284 = vmatpush1.msra.mxu0 %v3156
    %3285 = vmatprep.subr.mxu0 %v3153
    %3286 = vmatpush1.msra.mxu0 %v3152
    %3287 = vmatprep.subr.mxu0 %v3149
    %3288 = vmatpush1.msra.mxu0 %v3148
    %3289 = vmatprep.subr.mxu0 %v3145
    %3290 = vmatpush1.msra.mxu0 %v3144
    %3291 = vmatprep.subr.mxu0 %v3141
    %3292 = vmatpush1.msra.mxu0 %v3140
    %3293 = vmatprep.subr.mxu0 %v3137
    %3294 = vmatpush1.msra.mxu0 %v3136
    %3295 = vmatprep.subr.mxu0 %v3133
    %3296 = vmatpush1.msra.mxu0 %v3132
    %3297 = vmatprep.subr.mxu0 0.0
    %3298 = vmatpush2.msra.mxu0 0.0
    %3299 = vmatprep.subr.mxu0 0.0
    %3300 = vmatpush2.msra.mxu0 0.0
    %3301 = vmatprep.subr.mxu0 0.0
    %3302 = vmatpush2.msra.mxu0 0.0
    %3303 = vmatprep.subr.mxu0 0.0
    %3304 = vmatpush2.msra.mxu0 0.0
    %3305 = vmatprep.subr.mxu0 0.0
    %3306 = vmatpush2.msra.mxu0 0.0
    %3307 = vmatprep.subr.mxu0 0.0
    %3308 = vmatpush2.msra.mxu0 0.0
    %3309 = vmatprep.subr.mxu0 0.0
    %3310 = vmatpush2.msra.mxu0 0.0
    %3311 = vmatprep.subr.mxu0 0.0
    %3312 = vmatpush2.msra.mxu0 0.0
    %3313 = vmatprep.subr.mxu0 0.0
    %3314 = vmatpush2.msra.mxu0 0.0
    %3315 = vmatprep.subr.mxu0 0.0
    %3316 = vmatpush2.msra.mxu0 0.0
    %3317 = vmatprep.subr.mxu0 0.0
    %3318 = vmatpush2.msra.mxu0 0.0
    %3319 = vmatprep.subr.mxu0 0.0
    %3320 = vmatpush2.msra.mxu0 0.0
    %3321 = vmatprep.subr.mxu0 0.0
    %3322 = vmatpush2.msra.mxu0 0.0
    %3323 = vmatprep.subr.mxu0 0.0
    %3324 = vmatpush2.msra.mxu0 0.0
    %3325 = vmatprep.subr.mxu0 0.0
    %3326 = vmatpush2.msra.mxu0 0.0
    %3327 = vmatprep.subr.mxu0 0.0
    %3328 = vmatpush2.msra.mxu0 0.0
    %3329 = vmatprep.mubr.f32.mxu0 0.0
    %3330 = vmatmul.mubr.f32.gmra.mxu0 %v2881
    %v3331 = vpop.f32.mrf.mxu0
    %v3332 = vadd.f32 0.0, %v3331
    %v3333 = vpop.f32.mrf.mxu0
    %v3334 = vadd.f32 0.0, %v3333
    %3335 = vdwg.mxu0
    %v3336 = vadd.f32 %v3126, %v3261
    %v3337 = vadd.f32 %v3127, %v3263
    %v3338 = vadd.f32 %v3128, %v3332
    %v3339 = vadd.f32 %v3129, %v3334
    %v3340 = vxor.u32 %v3336, 2147483648
    %v3341 = vmul.f32 %v3340, 1.442695
    %v3342 = vpow.pop %v3341
    %v3343 = vadd.f32 %v3342, 1.0
    %v3344 = vrcp.pop %v3343
    %v3345 = vmul.f32 1.0, %v3344
    %v3346 = vxor.u32 %v3337, 2147483648
    %v3347 = vmul.f32 %v3346, 1.442695
    %v3348 = vpow.pop %v3347
    %v3349 = vadd.f32 %v3348, 1.0
    %v3350 = vrcp.pop %v3349
    %v3351 = vmul.f32 1.0, %v3350
    %v3352 = vtanh.pop %v3338
    %v3353 = vxor.u32 %v3339, 2147483648
    %v3354 = vmul.f32 %v3353, 1.442695
    %v3355 = vpow.pop %v3354
    %v3356 = vadd.f32 %v3355, 1.0
    %v3357 = vrcp.pop %v3356
    %v3358 = vmul.f32 1.0, %v3357
    %v3359 = vmul.f32 %v3351, %v2879
    %v3360 = vmul.f32 %v3345, %v3352
    %v3361 = vadd.f32 %v3359, %v3360
    %v3362 = vtanh.pop %v3361
    %v3363 = vmul.f32 %v3358, %v3362
    %s3364 = scalar_lea.vmem [#allocation3], 64
    %v3365 = vld [vmem:[%s3364] sm:$0xff]
    %v3366 = vld [vmem:[%s3364 + $0x8] sm:$0xff]
    %v3367 = vld [vmem:[%s3364 + $0x10] sm:$0xff]
    %v3368 = vld [vmem:[%s3364 + $0x18] sm:$0xff]
    %v3369 = vld [vmem:[#allocation10] sm:$0xff]
    %v3370 = vld [vmem:[#allocation10 + $0x8] sm:$0xff]
    %v3371 = vld [vmem:[#allocation10 + $0x10] sm:$0xff]
    %v3372 = vld [vmem:[#allocation10 + $0x18] sm:$0xff]
    %v3373 = vld [vmem:[#allocation10 + $0x20] sm:$0xff]
    %v3374 = vld [vmem:[#allocation10 + $0x28] sm:$0xff]
    %v3375 = vld [vmem:[#allocation10 + $0x30] sm:$0xff]
    %v3376 = vld [vmem:[#allocation10 + $0x38] sm:$0xff]
    %v3377 = vld [vmem:[#allocation10 + $0x40] sm:$0xff]
    %v3378 = vld [vmem:[#allocation10 + $0x48] sm:$0xff]
    %v3379 = vld [vmem:[#allocation10 + $0x50] sm:$0xff]
    %v3380 = vld [vmem:[#allocation10 + $0x58] sm:$0xff]
    %v3381 = vld [vmem:[#allocation10 + $0x60] sm:$0xff]
    %v3382 = vld [vmem:[#allocation10 + $0x68] sm:$0xff]
    %v3383 = vld [vmem:[#allocation10 + $0x70] sm:$0xff]
    %v3384 = vld [vmem:[#allocation10 + $0x78] sm:$0xff]
    %v3385 = vld [vmem:[#allocation10 + $0x80] sm:$0xff]
    %v3386 = vld [vmem:[#allocation10 + $0x88] sm:$0xff]
    %v3387 = vld [vmem:[#allocation10 + $0x90] sm:$0xff]
    %v3388 = vld [vmem:[#allocation10 + $0x98] sm:$0xff]
    %v3389 = vld [vmem:[#allocation10 + $0xa0] sm:$0xff]
    %v3390 = vld [vmem:[#allocation10 + $0xa8] sm:$0xff]
    %v3391 = vld [vmem:[#allocation10 + $0xb0] sm:$0xff]
    %v3392 = vld [vmem:[#allocation10 + $0xb8] sm:$0xff]
    %v3393 = vld [vmem:[#allocation10 + $0xc0] sm:$0xff]
    %v3394 = vld [vmem:[#allocation10 + $0xc8] sm:$0xff]
    %v3395 = vld [vmem:[#allocation10 + $0xd0] sm:$0xff]
    %v3396 = vld [vmem:[#allocation10 + $0xd8] sm:$0xff]
    %v3397 = vld [vmem:[#allocation10 + $0xe0] sm:$0xff]
    %v3398 = vld [vmem:[#allocation10 + $0xe8] sm:$0xff]
    %v3399 = vld [vmem:[#allocation10 + $0xf0] sm:$0xff]
    %v3400 = vld [vmem:[#allocation10 + $0xf8] sm:$0xff]
    %v3401 = vld [vmem:[#allocation10 + $0x100] sm:$0xff]
    %v3402 = vld [vmem:[#allocation10 + $0x108] sm:$0xff]
    %v3403 = vld [vmem:[#allocation10 + $0x110] sm:$0xff]
    %v3404 = vld [vmem:[#allocation10 + $0x118] sm:$0xff]
    %v3405 = vld [vmem:[#allocation10 + $0x120] sm:$0xff]
    %v3406 = vld [vmem:[#allocation10 + $0x128] sm:$0xff]
    %v3407 = vld [vmem:[#allocation10 + $0x130] sm:$0xff]
    %v3408 = vld [vmem:[#allocation10 + $0x138] sm:$0xff]
    %v3409 = vld [vmem:[#allocation10 + $0x140] sm:$0xff]
    %v3410 = vld [vmem:[#allocation10 + $0x148] sm:$0xff]
    %v3411 = vld [vmem:[#allocation10 + $0x150] sm:$0xff]
    %v3412 = vld [vmem:[#allocation10 + $0x158] sm:$0xff]
    %v3413 = vld [vmem:[#allocation10 + $0x160] sm:$0xff]
    %v3414 = vld [vmem:[#allocation10 + $0x168] sm:$0xff]
    %v3415 = vld [vmem:[#allocation10 + $0x170] sm:$0xff]
    %v3416 = vld [vmem:[#allocation10 + $0x178] sm:$0xff]
    %v3417 = vld [vmem:[#allocation10 + $0x180] sm:$0xff]
    %v3418 = vld [vmem:[#allocation10 + $0x188] sm:$0xff]
    %v3419 = vld [vmem:[#allocation10 + $0x190] sm:$0xff]
    %v3420 = vld [vmem:[#allocation10 + $0x198] sm:$0xff]
    %v3421 = vld [vmem:[#allocation10 + $0x1a0] sm:$0xff]
    %v3422 = vld [vmem:[#allocation10 + $0x1a8] sm:$0xff]
    %v3423 = vld [vmem:[#allocation10 + $0x1b0] sm:$0xff]
    %v3424 = vld [vmem:[#allocation10 + $0x1b8] sm:$0xff]
    %v3425 = vld [vmem:[#allocation10 + $0x1c0] sm:$0xff]
    %v3426 = vld [vmem:[#allocation10 + $0x1c8] sm:$0xff]
    %v3427 = vld [vmem:[#allocation10 + $0x1d0] sm:$0xff]
    %v3428 = vld [vmem:[#allocation10 + $0x1d8] sm:$0xff]
    %v3429 = vld [vmem:[#allocation10 + $0x1e0] sm:$0xff]
    %v3430 = vld [vmem:[#allocation10 + $0x1e8] sm:$0xff]
    %v3431 = vld [vmem:[#allocation10 + $0x1f0] sm:$0xff]
    %v3432 = vld [vmem:[#allocation10 + $0x1f8] sm:$0xff]
    %3433 = vmatprep.subr.mxu0 %v3430
    %3434 = vmatpush1.msra.mxu0 %v3429
    %3435 = vmatprep.subr.mxu0 %v3426
    %3436 = vmatpush1.msra.mxu0 %v3425
    %3437 = vmatprep.subr.mxu0 %v3422
    %3438 = vmatpush1.msra.mxu0 %v3421
    %3439 = vmatprep.subr.mxu0 %v3418
    %3440 = vmatpush1.msra.mxu0 %v3417
    %3441 = vmatprep.subr.mxu0 %v3414
    %3442 = vmatpush1.msra.mxu0 %v3413
    %3443 = vmatprep.subr.mxu0 %v3410
    %3444 = vmatpush1.msra.mxu0 %v3409
    %3445 = vmatprep.subr.mxu0 %v3406
    %3446 = vmatpush1.msra.mxu0 %v3405
    %3447 = vmatprep.subr.mxu0 %v3402
    %3448 = vmatpush1.msra.mxu0 %v3401
    %3449 = vmatprep.subr.mxu0 %v3398
    %3450 = vmatpush1.msra.mxu0 %v3397
    %3451 = vmatprep.subr.mxu0 %v3394
    %3452 = vmatpush1.msra.mxu0 %v3393
    %3453 = vmatprep.subr.mxu0 %v3390
    %3454 = vmatpush1.msra.mxu0 %v3389
    %3455 = vmatprep.subr.mxu0 %v3386
    %3456 = vmatpush1.msra.mxu0 %v3385
    %3457 = vmatprep.subr.mxu0 %v3382
    %3458 = vmatpush1.msra.mxu0 %v3381
    %3459 = vmatprep.subr.mxu0 %v3378
    %3460 = vmatpush1.msra.mxu0 %v3377
    %3461 = vmatprep.subr.mxu0 %v3374
    %3462 = vmatpush1.msra.mxu0 %v3373
    %3463 = vmatprep.subr.mxu0 %v3370
    %3464 = vmatpush1.msra.mxu0 %v3369
    %3465 = vmatprep.subr.mxu0 0.0
    %3466 = vmatpush2.msra.mxu0 0.0
    %3467 = vmatprep.subr.mxu0 0.0
    %3468 = vmatpush2.msra.mxu0 0.0
    %3469 = vmatprep.subr.mxu0 0.0
    %3470 = vmatpush2.msra.mxu0 0.0
    %3471 = vmatprep.subr.mxu0 0.0
    %3472 = vmatpush2.msra.mxu0 0.0
    %3473 = vmatprep.subr.mxu0 0.0
    %3474 = vmatpush2.msra.mxu0 0.0
    %3475 = vmatprep.subr.mxu0 0.0
    %3476 = vmatpush2.msra.mxu0 0.0
    %3477 = vmatprep.subr.mxu0 0.0
    %3478 = vmatpush2.msra.mxu0 0.0
    %3479 = vmatprep.subr.mxu0 0.0
    %3480 = vmatpush2.msra.mxu0 0.0
    %3481 = vmatprep.subr.mxu0 0.0
    %3482 = vmatpush2.msra.mxu0 0.0
    %3483 = vmatprep.subr.mxu0 0.0
    %3484 = vmatpush2.msra.mxu0 0.0
    %3485 = vmatprep.subr.mxu0 0.0
    %3486 = vmatpush2.msra.mxu0 0.0
    %3487 = vmatprep.subr.mxu0 0.0
    %3488 = vmatpush2.msra.mxu0 0.0
    %3489 = vmatprep.subr.mxu0 0.0
    %3490 = vmatpush2.msra.mxu0 0.0
    %3491 = vmatprep.subr.mxu0 0.0
    %3492 = vmatpush2.msra.mxu0 0.0
    %3493 = vmatprep.subr.mxu0 0.0
    %3494 = vmatpush2.msra.mxu0 0.0
    %3495 = vmatprep.subr.mxu0 0.0
    %3496 = vmatpush2.msra.mxu0 0.0
    %3497 = vmatprep.mubr.f32.mxu0 0.0
    %3498 = vmatmul.mubr.f32.gmra.mxu0 %v3120
    %v3499 = vpop.f32.mrf.mxu0
    %v3500 = vadd.f32 0.0, %v3499
    %v3501 = vpop.f32.mrf.mxu0
    %v3502 = vadd.f32 0.0, %v3501
    %3503 = vdwg.mxu0
    %3504 = vmatprep.subr.mxu0 %v3432
    %3505 = vmatpush1.msra.mxu0 %v3431
    %3506 = vmatprep.subr.mxu0 %v3428
    %3507 = vmatpush1.msra.mxu0 %v3427
    %3508 = vmatprep.subr.mxu0 %v3424
    %3509 = vmatpush1.msra.mxu0 %v3423
    %3510 = vmatprep.subr.mxu0 %v3420
    %3511 = vmatpush1.msra.mxu0 %v3419
    %3512 = vmatprep.subr.mxu0 %v3416
    %3513 = vmatpush1.msra.mxu0 %v3415
    %3514 = vmatprep.subr.mxu0 %v3412
    %3515 = vmatpush1.msra.mxu0 %v3411
    %3516 = vmatprep.subr.mxu0 %v3408
    %3517 = vmatpush1.msra.mxu0 %v3407
    %3518 = vmatprep.subr.mxu0 %v3404
    %3519 = vmatpush1.msra.mxu0 %v3403
    %3520 = vmatprep.subr.mxu0 %v3400
    %3521 = vmatpush1.msra.mxu0 %v3399
    %3522 = vmatprep.subr.mxu0 %v3396
    %3523 = vmatpush1.msra.mxu0 %v3395
    %3524 = vmatprep.subr.mxu0 %v3392
    %3525 = vmatpush1.msra.mxu0 %v3391
    %3526 = vmatprep.subr.mxu0 %v3388
    %3527 = vmatpush1.msra.mxu0 %v3387
    %3528 = vmatprep.subr.mxu0 %v3384
    %3529 = vmatpush1.msra.mxu0 %v3383
    %3530 = vmatprep.subr.mxu0 %v3380
    %3531 = vmatpush1.msra.mxu0 %v3379
    %3532 = vmatprep.subr.mxu0 %v3376
    %3533 = vmatpush1.msra.mxu0 %v3375
    %3534 = vmatprep.subr.mxu0 %v3372
    %3535 = vmatpush1.msra.mxu0 %v3371
    %3536 = vmatprep.subr.mxu0 0.0
    %3537 = vmatpush2.msra.mxu0 0.0
    %3538 = vmatprep.subr.mxu0 0.0
    %3539 = vmatpush2.msra.mxu0 0.0
    %3540 = vmatprep.subr.mxu0 0.0
    %3541 = vmatpush2.msra.mxu0 0.0
    %3542 = vmatprep.subr.mxu0 0.0
    %3543 = vmatpush2.msra.mxu0 0.0
    %3544 = vmatprep.subr.mxu0 0.0
    %3545 = vmatpush2.msra.mxu0 0.0
    %3546 = vmatprep.subr.mxu0 0.0
    %3547 = vmatpush2.msra.mxu0 0.0
    %3548 = vmatprep.subr.mxu0 0.0
    %3549 = vmatpush2.msra.mxu0 0.0
    %3550 = vmatprep.subr.mxu0 0.0
    %3551 = vmatpush2.msra.mxu0 0.0
    %3552 = vmatprep.subr.mxu0 0.0
    %3553 = vmatpush2.msra.mxu0 0.0
    %3554 = vmatprep.subr.mxu0 0.0
    %3555 = vmatpush2.msra.mxu0 0.0
    %3556 = vmatprep.subr.mxu0 0.0
    %3557 = vmatpush2.msra.mxu0 0.0
    %3558 = vmatprep.subr.mxu0 0.0
    %3559 = vmatpush2.msra.mxu0 0.0
    %3560 = vmatprep.subr.mxu0 0.0
    %3561 = vmatpush2.msra.mxu0 0.0
    %3562 = vmatprep.subr.mxu0 0.0
    %3563 = vmatpush2.msra.mxu0 0.0
    %3564 = vmatprep.subr.mxu0 0.0
    %3565 = vmatpush2.msra.mxu0 0.0
    %3566 = vmatprep.subr.mxu0 0.0
    %3567 = vmatpush2.msra.mxu0 0.0
    %3568 = vmatprep.mubr.f32.mxu0 0.0
    %3569 = vmatmul.mubr.f32.gmra.mxu0 %v3120
    %v3570 = vpop.f32.mrf.mxu0
    %v3571 = vadd.f32 0.0, %v3570
    %v3572 = vpop.f32.mrf.mxu0
    %v3573 = vadd.f32 0.0, %v3572
    %3574 = vdwg.mxu0
    %v3575 = vadd.f32 %v3365, %v3500
    %v3576 = vadd.f32 %v3366, %v3502
    %v3577 = vadd.f32 %v3367, %v3571
    %v3578 = vadd.f32 %v3368, %v3573
    %v3579 = vxor.u32 %v3575, 2147483648
    %v3580 = vmul.f32 %v3579, 1.442695
    %v3581 = vpow.pop %v3580
    %v3582 = vadd.f32 %v3581, 1.0
    %v3583 = vrcp.pop %v3582
    %v3584 = vmul.f32 1.0, %v3583
    %v3585 = vxor.u32 %v3576, 2147483648
    %v3586 = vmul.f32 %v3585, 1.442695
    %v3587 = vpow.pop %v3586
    %v3588 = vadd.f32 %v3587, 1.0
    %v3589 = vrcp.pop %v3588
    %v3590 = vmul.f32 1.0, %v3589
    %v3591 = vtanh.pop %v3577
    %v3592 = vxor.u32 %v3578, 2147483648
    %v3593 = vmul.f32 %v3592, 1.442695
    %v3594 = vpow.pop %v3593
    %v3595 = vadd.f32 %v3594, 1.0
    %v3596 = vrcp.pop %v3595
    %v3597 = vmul.f32 1.0, %v3596
    %v3598 = vmul.f32 %v3590, %v3118
    %v3599 = vmul.f32 %v3584, %v3591
    %v3600 = vadd.f32 %v3598, %v3599
    %v3601 = vtanh.pop %v3600
    %v3602 = vmul.f32 %v3597, %v3601
    %s3603 = scalar_lea.vmem [#allocation4], 40
    %3604 = vst [vmem:[%s3603] sm:$0xff] %v3363
    %s3605 = scalar_lea.vmem [#allocation5], 16
    %3606 = vst [vmem:[%s3605] sm:$0xff] %v3602
    %s3607 = scalar_lea.vmem [#allocation2], 192
    %v3608 = vld [vmem:[%s3607] sm:$0xff]
    %v3609 = vld [vmem:[%s3607 + $0x8] sm:$0xff]
    %v3610 = vld [vmem:[%s3607 + $0x10] sm:$0xff]
    %v3611 = vld [vmem:[%s3607 + $0x18] sm:$0xff]
    %v3612 = vld [vmem:[#allocation8] sm:$0xff]
    %v3613 = vld [vmem:[#allocation8 + $0x8] sm:$0xff]
    %v3614 = vld [vmem:[#allocation8 + $0x10] sm:$0xff]
    %v3615 = vld [vmem:[#allocation8 + $0x18] sm:$0xff]
    %v3616 = vld [vmem:[#allocation8 + $0x20] sm:$0xff]
    %v3617 = vld [vmem:[#allocation8 + $0x28] sm:$0xff]
    %v3618 = vld [vmem:[#allocation8 + $0x30] sm:$0xff]
    %v3619 = vld [vmem:[#allocation8 + $0x38] sm:$0xff]
    %v3620 = vld [vmem:[#allocation8 + $0x40] sm:$0xff]
    %v3621 = vld [vmem:[#allocation8 + $0x48] sm:$0xff]
    %v3622 = vld [vmem:[#allocation8 + $0x50] sm:$0xff]
    %v3623 = vld [vmem:[#allocation8 + $0x58] sm:$0xff]
    %v3624 = vld [vmem:[#allocation8 + $0x60] sm:$0xff]
    %v3625 = vld [vmem:[#allocation8 + $0x68] sm:$0xff]
    %v3626 = vld [vmem:[#allocation8 + $0x70] sm:$0xff]
    %v3627 = vld [vmem:[#allocation8 + $0x78] sm:$0xff]
    %v3628 = vld [vmem:[#allocation8 + $0x80] sm:$0xff]
    %v3629 = vld [vmem:[#allocation8 + $0x88] sm:$0xff]
    %v3630 = vld [vmem:[#allocation8 + $0x90] sm:$0xff]
    %v3631 = vld [vmem:[#allocation8 + $0x98] sm:$0xff]
    %v3632 = vld [vmem:[#allocation8 + $0xa0] sm:$0xff]
    %v3633 = vld [vmem:[#allocation8 + $0xa8] sm:$0xff]
    %v3634 = vld [vmem:[#allocation8 + $0xb0] sm:$0xff]
    %v3635 = vld [vmem:[#allocation8 + $0xb8] sm:$0xff]
    %v3636 = vld [vmem:[#allocation8 + $0xc0] sm:$0xff]
    %v3637 = vld [vmem:[#allocation8 + $0xc8] sm:$0xff]
    %v3638 = vld [vmem:[#allocation8 + $0xd0] sm:$0xff]
    %v3639 = vld [vmem:[#allocation8 + $0xd8] sm:$0xff]
    %v3640 = vld [vmem:[#allocation8 + $0xe0] sm:$0xff]
    %v3641 = vld [vmem:[#allocation8 + $0xe8] sm:$0xff]
    %v3642 = vld [vmem:[#allocation8 + $0xf0] sm:$0xff]
    %v3643 = vld [vmem:[#allocation8 + $0xf8] sm:$0xff]
    %v3644 = vld [vmem:[#allocation8 + $0x100] sm:$0xff]
    %v3645 = vld [vmem:[#allocation8 + $0x108] sm:$0xff]
    %v3646 = vld [vmem:[#allocation8 + $0x110] sm:$0xff]
    %v3647 = vld [vmem:[#allocation8 + $0x118] sm:$0xff]
    %v3648 = vld [vmem:[#allocation8 + $0x120] sm:$0xff]
    %v3649 = vld [vmem:[#allocation8 + $0x128] sm:$0xff]
    %v3650 = vld [vmem:[#allocation8 + $0x130] sm:$0xff]
    %v3651 = vld [vmem:[#allocation8 + $0x138] sm:$0xff]
    %v3652 = vld [vmem:[#allocation8 + $0x140] sm:$0xff]
    %v3653 = vld [vmem:[#allocation8 + $0x148] sm:$0xff]
    %v3654 = vld [vmem:[#allocation8 + $0x150] sm:$0xff]
    %v3655 = vld [vmem:[#allocation8 + $0x158] sm:$0xff]
    %v3656 = vld [vmem:[#allocation8 + $0x160] sm:$0xff]
    %v3657 = vld [vmem:[#allocation8 + $0x168] sm:$0xff]
    %v3658 = vld [vmem:[#allocation8 + $0x170] sm:$0xff]
    %v3659 = vld [vmem:[#allocation8 + $0x178] sm:$0xff]
    %v3660 = vld [vmem:[#allocation8 + $0x180] sm:$0xff]
    %v3661 = vld [vmem:[#allocation8 + $0x188] sm:$0xff]
    %v3662 = vld [vmem:[#allocation8 + $0x190] sm:$0xff]
    %v3663 = vld [vmem:[#allocation8 + $0x198] sm:$0xff]
    %v3664 = vld [vmem:[#allocation8 + $0x1a0] sm:$0xff]
    %v3665 = vld [vmem:[#allocation8 + $0x1a8] sm:$0xff]
    %v3666 = vld [vmem:[#allocation8 + $0x1b0] sm:$0xff]
    %v3667 = vld [vmem:[#allocation8 + $0x1b8] sm:$0xff]
    %v3668 = vld [vmem:[#allocation8 + $0x1c0] sm:$0xff]
    %v3669 = vld [vmem:[#allocation8 + $0x1c8] sm:$0xff]
    %v3670 = vld [vmem:[#allocation8 + $0x1d0] sm:$0xff]
    %v3671 = vld [vmem:[#allocation8 + $0x1d8] sm:$0xff]
    %v3672 = vld [vmem:[#allocation8 + $0x1e0] sm:$0xff]
    %v3673 = vld [vmem:[#allocation8 + $0x1e8] sm:$0xff]
    %v3674 = vld [vmem:[#allocation8 + $0x1f0] sm:$0xff]
    %v3675 = vld [vmem:[#allocation8 + $0x1f8] sm:$0xff]
    %3676 = vmatprep.subr.mxu0 %v3673
    %3677 = vmatpush1.msra.mxu0 %v3672
    %3678 = vmatprep.subr.mxu0 %v3669
    %3679 = vmatpush1.msra.mxu0 %v3668
    %3680 = vmatprep.subr.mxu0 %v3665
    %3681 = vmatpush1.msra.mxu0 %v3664
    %3682 = vmatprep.subr.mxu0 %v3661
    %3683 = vmatpush1.msra.mxu0 %v3660
    %3684 = vmatprep.subr.mxu0 %v3657
    %3685 = vmatpush1.msra.mxu0 %v3656
    %3686 = vmatprep.subr.mxu0 %v3653
    %3687 = vmatpush1.msra.mxu0 %v3652
    %3688 = vmatprep.subr.mxu0 %v3649
    %3689 = vmatpush1.msra.mxu0 %v3648
    %3690 = vmatprep.subr.mxu0 %v3645
    %3691 = vmatpush1.msra.mxu0 %v3644
    %3692 = vmatprep.subr.mxu0 %v3641
    %3693 = vmatpush1.msra.mxu0 %v3640
    %3694 = vmatprep.subr.mxu0 %v3637
    %3695 = vmatpush1.msra.mxu0 %v3636
    %3696 = vmatprep.subr.mxu0 %v3633
    %3697 = vmatpush1.msra.mxu0 %v3632
    %3698 = vmatprep.subr.mxu0 %v3629
    %3699 = vmatpush1.msra.mxu0 %v3628
    %3700 = vmatprep.subr.mxu0 %v3625
    %3701 = vmatpush1.msra.mxu0 %v3624
    %3702 = vmatprep.subr.mxu0 %v3621
    %3703 = vmatpush1.msra.mxu0 %v3620
    %3704 = vmatprep.subr.mxu0 %v3617
    %3705 = vmatpush1.msra.mxu0 %v3616
    %3706 = vmatprep.subr.mxu0 %v3613
    %3707 = vmatpush1.msra.mxu0 %v3612
    %3708 = vmatprep.subr.mxu0 0.0
    %3709 = vmatpush2.msra.mxu0 0.0
    %3710 = vmatprep.subr.mxu0 0.0
    %3711 = vmatpush2.msra.mxu0 0.0
    %3712 = vmatprep.subr.mxu0 0.0
    %3713 = vmatpush2.msra.mxu0 0.0
    %3714 = vmatprep.subr.mxu0 0.0
    %3715 = vmatpush2.msra.mxu0 0.0
    %3716 = vmatprep.subr.mxu0 0.0
    %3717 = vmatpush2.msra.mxu0 0.0
    %3718 = vmatprep.subr.mxu0 0.0
    %3719 = vmatpush2.msra.mxu0 0.0
    %3720 = vmatprep.subr.mxu0 0.0
    %3721 = vmatpush2.msra.mxu0 0.0
    %3722 = vmatprep.subr.mxu0 0.0
    %3723 = vmatpush2.msra.mxu0 0.0
    %3724 = vmatprep.subr.mxu0 0.0
    %3725 = vmatpush2.msra.mxu0 0.0
    %3726 = vmatprep.subr.mxu0 0.0
    %3727 = vmatpush2.msra.mxu0 0.0
    %3728 = vmatprep.subr.mxu0 0.0
    %3729 = vmatpush2.msra.mxu0 0.0
    %3730 = vmatprep.subr.mxu0 0.0
    %3731 = vmatpush2.msra.mxu0 0.0
    %3732 = vmatprep.subr.mxu0 0.0
    %3733 = vmatpush2.msra.mxu0 0.0
    %3734 = vmatprep.subr.mxu0 0.0
    %3735 = vmatpush2.msra.mxu0 0.0
    %3736 = vmatprep.subr.mxu0 0.0
    %3737 = vmatpush2.msra.mxu0 0.0
    %3738 = vmatprep.subr.mxu0 0.0
    %3739 = vmatpush2.msra.mxu0 0.0
    %3740 = vmatprep.mubr.f32.mxu0 0.0
    %3741 = vmatmul.mubr.f32.gmra.mxu0 %v3363
    %v3742 = vpop.f32.mrf.mxu0
    %v3743 = vadd.f32 0.0, %v3742
    %v3744 = vpop.f32.mrf.mxu0
    %v3745 = vadd.f32 0.0, %v3744
    %3746 = vdwg.mxu0
    %3747 = vmatprep.subr.mxu0 %v3675
    %3748 = vmatpush1.msra.mxu0 %v3674
    %3749 = vmatprep.subr.mxu0 %v3671
    %3750 = vmatpush1.msra.mxu0 %v3670
    %3751 = vmatprep.subr.mxu0 %v3667
    %3752 = vmatpush1.msra.mxu0 %v3666
    %3753 = vmatprep.subr.mxu0 %v3663
    %3754 = vmatpush1.msra.mxu0 %v3662
    %3755 = vmatprep.subr.mxu0 %v3659
    %3756 = vmatpush1.msra.mxu0 %v3658
    %3757 = vmatprep.subr.mxu0 %v3655
    %3758 = vmatpush1.msra.mxu0 %v3654
    %3759 = vmatprep.subr.mxu0 %v3651
    %3760 = vmatpush1.msra.mxu0 %v3650
    %3761 = vmatprep.subr.mxu0 %v3647
    %3762 = vmatpush1.msra.mxu0 %v3646
    %3763 = vmatprep.subr.mxu0 %v3643
    %3764 = vmatpush1.msra.mxu0 %v3642
    %3765 = vmatprep.subr.mxu0 %v3639
    %3766 = vmatpush1.msra.mxu0 %v3638
    %3767 = vmatprep.subr.mxu0 %v3635
    %3768 = vmatpush1.msra.mxu0 %v3634
    %3769 = vmatprep.subr.mxu0 %v3631
    %3770 = vmatpush1.msra.mxu0 %v3630
    %3771 = vmatprep.subr.mxu0 %v3627
    %3772 = vmatpush1.msra.mxu0 %v3626
    %3773 = vmatprep.subr.mxu0 %v3623
    %3774 = vmatpush1.msra.mxu0 %v3622
    %3775 = vmatprep.subr.mxu0 %v3619
    %3776 = vmatpush1.msra.mxu0 %v3618
    %3777 = vmatprep.subr.mxu0 %v3615
    %3778 = vmatpush1.msra.mxu0 %v3614
    %3779 = vmatprep.subr.mxu0 0.0
    %3780 = vmatpush2.msra.mxu0 0.0
    %3781 = vmatprep.subr.mxu0 0.0
    %3782 = vmatpush2.msra.mxu0 0.0
    %3783 = vmatprep.subr.mxu0 0.0
    %3784 = vmatpush2.msra.mxu0 0.0
    %3785 = vmatprep.subr.mxu0 0.0
    %3786 = vmatpush2.msra.mxu0 0.0
    %3787 = vmatprep.subr.mxu0 0.0
    %3788 = vmatpush2.msra.mxu0 0.0
    %3789 = vmatprep.subr.mxu0 0.0
    %3790 = vmatpush2.msra.mxu0 0.0
    %3791 = vmatprep.subr.mxu0 0.0
    %3792 = vmatpush2.msra.mxu0 0.0
    %3793 = vmatprep.subr.mxu0 0.0
    %3794 = vmatpush2.msra.mxu0 0.0
    %3795 = vmatprep.subr.mxu0 0.0
    %3796 = vmatpush2.msra.mxu0 0.0
    %3797 = vmatprep.subr.mxu0 0.0
    %3798 = vmatpush2.msra.mxu0 0.0
    %3799 = vmatprep.subr.mxu0 0.0
    %3800 = vmatpush2.msra.mxu0 0.0
    %3801 = vmatprep.subr.mxu0 0.0
    %3802 = vmatpush2.msra.mxu0 0.0
    %3803 = vmatprep.subr.mxu0 0.0
    %3804 = vmatpush2.msra.mxu0 0.0
    %3805 = vmatprep.subr.mxu0 0.0
    %3806 = vmatpush2.msra.mxu0 0.0
    %3807 = vmatprep.subr.mxu0 0.0
    %3808 = vmatpush2.msra.mxu0 0.0
    %3809 = vmatprep.subr.mxu0 0.0
    %3810 = vmatpush2.msra.mxu0 0.0
    %3811 = vmatprep.mubr.f32.mxu0 0.0
    %3812 = vmatmul.mubr.f32.gmra.mxu0 %v3363
    %v3813 = vpop.f32.mrf.mxu0
    %v3814 = vadd.f32 0.0, %v3813
    %v3815 = vpop.f32.mrf.mxu0
    %v3816 = vadd.f32 0.0, %v3815
    %3817 = vdwg.mxu0
    %v3818 = vadd.f32 %v3608, %v3743
    %v3819 = vadd.f32 %v3609, %v3745
    %v3820 = vadd.f32 %v3610, %v3814
    %v3821 = vadd.f32 %v3611, %v3816
    %v3822 = vxor.u32 %v3818, 2147483648
    %v3823 = vmul.f32 %v3822, 1.442695
    %v3824 = vpow.pop %v3823
    %v3825 = vadd.f32 %v3824, 1.0
    %v3826 = vrcp.pop %v3825
    %v3827 = vmul.f32 1.0, %v3826
    %v3828 = vxor.u32 %v3819, 2147483648
    %v3829 = vmul.f32 %v3828, 1.442695
    %v3830 = vpow.pop %v3829
    %v3831 = vadd.f32 %v3830, 1.0
    %v3832 = vrcp.pop %v3831
    %v3833 = vmul.f32 1.0, %v3832
    %v3834 = vtanh.pop %v3820
    %v3835 = vxor.u32 %v3821, 2147483648
    %v3836 = vmul.f32 %v3835, 1.442695
    %v3837 = vpow.pop %v3836
    %v3838 = vadd.f32 %v3837, 1.0
    %v3839 = vrcp.pop %v3838
    %v3840 = vmul.f32 1.0, %v3839
    %v3841 = vmul.f32 %v3833, %v3361
    %v3842 = vmul.f32 %v3827, %v3834
    %v3843 = vadd.f32 %v3841, %v3842
    %v3844 = vtanh.pop %v3843
    %v3845 = vmul.f32 %v3840, %v3844
    %s3846 = scalar_lea.vmem [#allocation3], 32
    %v3847 = vld [vmem:[%s3846] sm:$0xff]
    %v3848 = vld [vmem:[%s3846 + $0x8] sm:$0xff]
    %v3849 = vld [vmem:[%s3846 + $0x10] sm:$0xff]
    %v3850 = vld [vmem:[%s3846 + $0x18] sm:$0xff]
    %v3851 = vld [vmem:[#allocation10] sm:$0xff]
    %v3852 = vld [vmem:[#allocation10 + $0x8] sm:$0xff]
    %v3853 = vld [vmem:[#allocation10 + $0x10] sm:$0xff]
    %v3854 = vld [vmem:[#allocation10 + $0x18] sm:$0xff]
    %v3855 = vld [vmem:[#allocation10 + $0x20] sm:$0xff]
    %v3856 = vld [vmem:[#allocation10 + $0x28] sm:$0xff]
    %v3857 = vld [vmem:[#allocation10 + $0x30] sm:$0xff]
    %v3858 = vld [vmem:[#allocation10 + $0x38] sm:$0xff]
    %v3859 = vld [vmem:[#allocation10 + $0x40] sm:$0xff]
    %v3860 = vld [vmem:[#allocation10 + $0x48] sm:$0xff]
    %v3861 = vld [vmem:[#allocation10 + $0x50] sm:$0xff]
    %v3862 = vld [vmem:[#allocation10 + $0x58] sm:$0xff]
    %v3863 = vld [vmem:[#allocation10 + $0x60] sm:$0xff]
    %v3864 = vld [vmem:[#allocation10 + $0x68] sm:$0xff]
    %v3865 = vld [vmem:[#allocation10 + $0x70] sm:$0xff]
    %v3866 = vld [vmem:[#allocation10 + $0x78] sm:$0xff]
    %v3867 = vld [vmem:[#allocation10 + $0x80] sm:$0xff]
    %v3868 = vld [vmem:[#allocation10 + $0x88] sm:$0xff]
    %v3869 = vld [vmem:[#allocation10 + $0x90] sm:$0xff]
    %v3870 = vld [vmem:[#allocation10 + $0x98] sm:$0xff]
    %v3871 = vld [vmem:[#allocation10 + $0xa0] sm:$0xff]
    %v3872 = vld [vmem:[#allocation10 + $0xa8] sm:$0xff]
    %v3873 = vld [vmem:[#allocation10 + $0xb0] sm:$0xff]
    %v3874 = vld [vmem:[#allocation10 + $0xb8] sm:$0xff]
    %v3875 = vld [vmem:[#allocation10 + $0xc0] sm:$0xff]
    %v3876 = vld [vmem:[#allocation10 + $0xc8] sm:$0xff]
    %v3877 = vld [vmem:[#allocation10 + $0xd0] sm:$0xff]
    %v3878 = vld [vmem:[#allocation10 + $0xd8] sm:$0xff]
    %v3879 = vld [vmem:[#allocation10 + $0xe0] sm:$0xff]
    %v3880 = vld [vmem:[#allocation10 + $0xe8] sm:$0xff]
    %v3881 = vld [vmem:[#allocation10 + $0xf0] sm:$0xff]
    %v3882 = vld [vmem:[#allocation10 + $0xf8] sm:$0xff]
    %v3883 = vld [vmem:[#allocation10 + $0x100] sm:$0xff]
    %v3884 = vld [vmem:[#allocation10 + $0x108] sm:$0xff]
    %v3885 = vld [vmem:[#allocation10 + $0x110] sm:$0xff]
    %v3886 = vld [vmem:[#allocation10 + $0x118] sm:$0xff]
    %v3887 = vld [vmem:[#allocation10 + $0x120] sm:$0xff]
    %v3888 = vld [vmem:[#allocation10 + $0x128] sm:$0xff]
    %v3889 = vld [vmem:[#allocation10 + $0x130] sm:$0xff]
    %v3890 = vld [vmem:[#allocation10 + $0x138] sm:$0xff]
    %v3891 = vld [vmem:[#allocation10 + $0x140] sm:$0xff]
    %v3892 = vld [vmem:[#allocation10 + $0x148] sm:$0xff]
    %v3893 = vld [vmem:[#allocation10 + $0x150] sm:$0xff]
    %v3894 = vld [vmem:[#allocation10 + $0x158] sm:$0xff]
    %v3895 = vld [vmem:[#allocation10 + $0x160] sm:$0xff]
    %v3896 = vld [vmem:[#allocation10 + $0x168] sm:$0xff]
    %v3897 = vld [vmem:[#allocation10 + $0x170] sm:$0xff]
    %v3898 = vld [vmem:[#allocation10 + $0x178] sm:$0xff]
    %v3899 = vld [vmem:[#allocation10 + $0x180] sm:$0xff]
    %v3900 = vld [vmem:[#allocation10 + $0x188] sm:$0xff]
    %v3901 = vld [vmem:[#allocation10 + $0x190] sm:$0xff]
    %v3902 = vld [vmem:[#allocation10 + $0x198] sm:$0xff]
    %v3903 = vld [vmem:[#allocation10 + $0x1a0] sm:$0xff]
    %v3904 = vld [vmem:[#allocation10 + $0x1a8] sm:$0xff]
    %v3905 = vld [vmem:[#allocation10 + $0x1b0] sm:$0xff]
    %v3906 = vld [vmem:[#allocation10 + $0x1b8] sm:$0xff]
    %v3907 = vld [vmem:[#allocation10 + $0x1c0] sm:$0xff]
    %v3908 = vld [vmem:[#allocation10 + $0x1c8] sm:$0xff]
    %v3909 = vld [vmem:[#allocation10 + $0x1d0] sm:$0xff]
    %v3910 = vld [vmem:[#allocation10 + $0x1d8] sm:$0xff]
    %v3911 = vld [vmem:[#allocation10 + $0x1e0] sm:$0xff]
    %v3912 = vld [vmem:[#allocation10 + $0x1e8] sm:$0xff]
    %v3913 = vld [vmem:[#allocation10 + $0x1f0] sm:$0xff]
    %v3914 = vld [vmem:[#allocation10 + $0x1f8] sm:$0xff]
    %3915 = vmatprep.subr.mxu0 %v3912
    %3916 = vmatpush1.msra.mxu0 %v3911
    %3917 = vmatprep.subr.mxu0 %v3908
    %3918 = vmatpush1.msra.mxu0 %v3907
    %3919 = vmatprep.subr.mxu0 %v3904
    %3920 = vmatpush1.msra.mxu0 %v3903
    %3921 = vmatprep.subr.mxu0 %v3900
    %3922 = vmatpush1.msra.mxu0 %v3899
    %3923 = vmatprep.subr.mxu0 %v3896
    %3924 = vmatpush1.msra.mxu0 %v3895
    %3925 = vmatprep.subr.mxu0 %v3892
    %3926 = vmatpush1.msra.mxu0 %v3891
    %3927 = vmatprep.subr.mxu0 %v3888
    %3928 = vmatpush1.msra.mxu0 %v3887
    %3929 = vmatprep.subr.mxu0 %v3884
    %3930 = vmatpush1.msra.mxu0 %v3883
    %3931 = vmatprep.subr.mxu0 %v3880
    %3932 = vmatpush1.msra.mxu0 %v3879
    %3933 = vmatprep.subr.mxu0 %v3876
    %3934 = vmatpush1.msra.mxu0 %v3875
    %3935 = vmatprep.subr.mxu0 %v3872
    %3936 = vmatpush1.msra.mxu0 %v3871
    %3937 = vmatprep.subr.mxu0 %v3868
    %3938 = vmatpush1.msra.mxu0 %v3867
    %3939 = vmatprep.subr.mxu0 %v3864
    %3940 = vmatpush1.msra.mxu0 %v3863
    %3941 = vmatprep.subr.mxu0 %v3860
    %3942 = vmatpush1.msra.mxu0 %v3859
    %3943 = vmatprep.subr.mxu0 %v3856
    %3944 = vmatpush1.msra.mxu0 %v3855
    %3945 = vmatprep.subr.mxu0 %v3852
    %3946 = vmatpush1.msra.mxu0 %v3851
    %3947 = vmatprep.subr.mxu0 0.0
    %3948 = vmatpush2.msra.mxu0 0.0
    %3949 = vmatprep.subr.mxu0 0.0
    %3950 = vmatpush2.msra.mxu0 0.0
    %3951 = vmatprep.subr.mxu0 0.0
    %3952 = vmatpush2.msra.mxu0 0.0
    %3953 = vmatprep.subr.mxu0 0.0
    %3954 = vmatpush2.msra.mxu0 0.0
    %3955 = vmatprep.subr.mxu0 0.0
    %3956 = vmatpush2.msra.mxu0 0.0
    %3957 = vmatprep.subr.mxu0 0.0
    %3958 = vmatpush2.msra.mxu0 0.0
    %3959 = vmatprep.subr.mxu0 0.0
    %3960 = vmatpush2.msra.mxu0 0.0
    %3961 = vmatprep.subr.mxu0 0.0
    %3962 = vmatpush2.msra.mxu0 0.0
    %3963 = vmatprep.subr.mxu0 0.0
    %3964 = vmatpush2.msra.mxu0 0.0
    %3965 = vmatprep.subr.mxu0 0.0
    %3966 = vmatpush2.msra.mxu0 0.0
    %3967 = vmatprep.subr.mxu0 0.0
    %3968 = vmatpush2.msra.mxu0 0.0
    %3969 = vmatprep.subr.mxu0 0.0
    %3970 = vmatpush2.msra.mxu0 0.0
    %3971 = vmatprep.subr.mxu0 0.0
    %3972 = vmatpush2.msra.mxu0 0.0
    %3973 = vmatprep.subr.mxu0 0.0
    %3974 = vmatpush2.msra.mxu0 0.0
    %3975 = vmatprep.subr.mxu0 0.0
    %3976 = vmatpush2.msra.mxu0 0.0
    %3977 = vmatprep.subr.mxu0 0.0
    %3978 = vmatpush2.msra.mxu0 0.0
    %3979 = vmatprep.mubr.f32.mxu0 0.0
    %3980 = vmatmul.mubr.f32.gmra.mxu0 %v3602
    %v3981 = vpop.f32.mrf.mxu0
    %v3982 = vadd.f32 0.0, %v3981
    %v3983 = vpop.f32.mrf.mxu0
    %v3984 = vadd.f32 0.0, %v3983
    %3985 = vdwg.mxu0
    %3986 = vmatprep.subr.mxu0 %v3914
    %3987 = vmatpush1.msra.mxu0 %v3913
    %3988 = vmatprep.subr.mxu0 %v3910
    %3989 = vmatpush1.msra.mxu0 %v3909
    %3990 = vmatprep.subr.mxu0 %v3906
    %3991 = vmatpush1.msra.mxu0 %v3905
    %3992 = vmatprep.subr.mxu0 %v3902
    %3993 = vmatpush1.msra.mxu0 %v3901
    %3994 = vmatprep.subr.mxu0 %v3898
    %3995 = vmatpush1.msra.mxu0 %v3897
    %3996 = vmatprep.subr.mxu0 %v3894
    %3997 = vmatpush1.msra.mxu0 %v3893
    %3998 = vmatprep.subr.mxu0 %v3890
    %3999 = vmatpush1.msra.mxu0 %v3889
    %4000 = vmatprep.subr.mxu0 %v3886
    %4001 = vmatpush1.msra.mxu0 %v3885
    %4002 = vmatprep.subr.mxu0 %v3882
    %4003 = vmatpush1.msra.mxu0 %v3881
    %4004 = vmatprep.subr.mxu0 %v3878
    %4005 = vmatpush1.msra.mxu0 %v3877
    %4006 = vmatprep.subr.mxu0 %v3874
    %4007 = vmatpush1.msra.mxu0 %v3873
    %4008 = vmatprep.subr.mxu0 %v3870
    %4009 = vmatpush1.msra.mxu0 %v3869
    %4010 = vmatprep.subr.mxu0 %v3866
    %4011 = vmatpush1.msra.mxu0 %v3865
    %4012 = vmatprep.subr.mxu0 %v3862
    %4013 = vmatpush1.msra.mxu0 %v3861
    %4014 = vmatprep.subr.mxu0 %v3858
    %4015 = vmatpush1.msra.mxu0 %v3857
    %4016 = vmatprep.subr.mxu0 %v3854
    %4017 = vmatpush1.msra.mxu0 %v3853
    %4018 = vmatprep.subr.mxu0 0.0
    %4019 = vmatpush2.msra.mxu0 0.0
    %4020 = vmatprep.subr.mxu0 0.0
    %4021 = vmatpush2.msra.mxu0 0.0
    %4022 = vmatprep.subr.mxu0 0.0
    %4023 = vmatpush2.msra.mxu0 0.0
    %4024 = vmatprep.subr.mxu0 0.0
    %4025 = vmatpush2.msra.mxu0 0.0
    %4026 = vmatprep.subr.mxu0 0.0
    %4027 = vmatpush2.msra.mxu0 0.0
    %4028 = vmatprep.subr.mxu0 0.0
    %4029 = vmatpush2.msra.mxu0 0.0
    %4030 = vmatprep.subr.mxu0 0.0
    %4031 = vmatpush2.msra.mxu0 0.0
    %4032 = vmatprep.subr.mxu0 0.0
    %4033 = vmatpush2.msra.mxu0 0.0
    %4034 = vmatprep.subr.mxu0 0.0
    %4035 = vmatpush2.msra.mxu0 0.0
    %4036 = vmatprep.subr.mxu0 0.0
    %4037 = vmatpush2.msra.mxu0 0.0
    %4038 = vmatprep.subr.mxu0 0.0
    %4039 = vmatpush2.msra.mxu0 0.0
    %4040 = vmatprep.subr.mxu0 0.0
    %4041 = vmatpush2.msra.mxu0 0.0
    %4042 = vmatprep.subr.mxu0 0.0
    %4043 = vmatpush2.msra.mxu0 0.0
    %4044 = vmatprep.subr.mxu0 0.0
    %4045 = vmatpush2.msra.mxu0 0.0
    %4046 = vmatprep.subr.mxu0 0.0
    %4047 = vmatpush2.msra.mxu0 0.0
    %4048 = vmatprep.subr.mxu0 0.0
    %4049 = vmatpush2.msra.mxu0 0.0
    %4050 = vmatprep.mubr.f32.mxu0 0.0
    %4051 = vmatmul.mubr.f32.gmra.mxu0 %v3602
    %v4052 = vpop.f32.mrf.mxu0
    %v4053 = vadd.f32 0.0, %v4052
    %v4054 = vpop.f32.mrf.mxu0
    %v4055 = vadd.f32 0.0, %v4054
    %4056 = vdwg.mxu0
    %v4057 = vadd.f32 %v3847, %v3982
    %v4058 = vadd.f32 %v3848, %v3984
    %v4059 = vadd.f32 %v3849, %v4053
    %v4060 = vadd.f32 %v3850, %v4055
    %v4061 = vxor.u32 %v4057, 2147483648
    %v4062 = vmul.f32 %v4061, 1.442695
    %v4063 = vpow.pop %v4062
    %v4064 = vadd.f32 %v4063, 1.0
    %v4065 = vrcp.pop %v4064
    %v4066 = vmul.f32 1.0, %v4065
    %v4067 = vxor.u32 %v4058, 2147483648
    %v4068 = vmul.f32 %v4067, 1.442695
    %v4069 = vpow.pop %v4068
    %v4070 = vadd.f32 %v4069, 1.0
    %v4071 = vrcp.pop %v4070
    %v4072 = vmul.f32 1.0, %v4071
    %v4073 = vtanh.pop %v4059
    %v4074 = vxor.u32 %v4060, 2147483648
    %v4075 = vmul.f32 %v4074, 1.442695
    %v4076 = vpow.pop %v4075
    %v4077 = vadd.f32 %v4076, 1.0
    %v4078 = vrcp.pop %v4077
    %v4079 = vmul.f32 1.0, %v4078
    %v4080 = vmul.f32 %v4072, %v3600
    %v4081 = vmul.f32 %v4066, %v4073
    %v4082 = vadd.f32 %v4080, %v4081
    %v4083 = vtanh.pop %v4082
    %v4084 = vmul.f32 %v4079, %v4083
    %s4085 = scalar_lea.vmem [#allocation4], 48
    %4086 = vst [vmem:[%s4085] sm:$0xff] %v3845
    %s4087 = scalar_lea.vmem [#allocation5], 8
    %4088 = vst [vmem:[%s4087] sm:$0xff] %v4084
    %s4089 = scalar_lea.vmem [#allocation2], 224
    %v4090 = vld [vmem:[%s4089] sm:$0xff]
    %v4091 = vld [vmem:[%s4089 + $0x8] sm:$0xff]
    %v4092 = vld [vmem:[%s4089 + $0x10] sm:$0xff]
    %v4093 = vld [vmem:[%s4089 + $0x18] sm:$0xff]
    %v4094 = vld [vmem:[#allocation8] sm:$0xff]
    %v4095 = vld [vmem:[#allocation8 + $0x8] sm:$0xff]
    %v4096 = vld [vmem:[#allocation8 + $0x10] sm:$0xff]
    %v4097 = vld [vmem:[#allocation8 + $0x18] sm:$0xff]
    %v4098 = vld [vmem:[#allocation8 + $0x20] sm:$0xff]
    %v4099 = vld [vmem:[#allocation8 + $0x28] sm:$0xff]
    %v4100 = vld [vmem:[#allocation8 + $0x30] sm:$0xff]
    %v4101 = vld [vmem:[#allocation8 + $0x38] sm:$0xff]
    %v4102 = vld [vmem:[#allocation8 + $0x40] sm:$0xff]
    %v4103 = vld [vmem:[#allocation8 + $0x48] sm:$0xff]
    %v4104 = vld [vmem:[#allocation8 + $0x50] sm:$0xff]
    %v4105 = vld [vmem:[#allocation8 + $0x58] sm:$0xff]
    %v4106 = vld [vmem:[#allocation8 + $0x60] sm:$0xff]
    %v4107 = vld [vmem:[#allocation8 + $0x68] sm:$0xff]
    %v4108 = vld [vmem:[#allocation8 + $0x70] sm:$0xff]
    %v4109 = vld [vmem:[#allocation8 + $0x78] sm:$0xff]
    %v4110 = vld [vmem:[#allocation8 + $0x80] sm:$0xff]
    %v4111 = vld [vmem:[#allocation8 + $0x88] sm:$0xff]
    %v4112 = vld [vmem:[#allocation8 + $0x90] sm:$0xff]
    %v4113 = vld [vmem:[#allocation8 + $0x98] sm:$0xff]
    %v4114 = vld [vmem:[#allocation8 + $0xa0] sm:$0xff]
    %v4115 = vld [vmem:[#allocation8 + $0xa8] sm:$0xff]
    %v4116 = vld [vmem:[#allocation8 + $0xb0] sm:$0xff]
    %v4117 = vld [vmem:[#allocation8 + $0xb8] sm:$0xff]
    %v4118 = vld [vmem:[#allocation8 + $0xc0] sm:$0xff]
    %v4119 = vld [vmem:[#allocation8 + $0xc8] sm:$0xff]
    %v4120 = vld [vmem:[#allocation8 + $0xd0] sm:$0xff]
    %v4121 = vld [vmem:[#allocation8 + $0xd8] sm:$0xff]
    %v4122 = vld [vmem:[#allocation8 + $0xe0] sm:$0xff]
    %v4123 = vld [vmem:[#allocation8 + $0xe8] sm:$0xff]
    %v4124 = vld [vmem:[#allocation8 + $0xf0] sm:$0xff]
    %v4125 = vld [vmem:[#allocation8 + $0xf8] sm:$0xff]
    %v4126 = vld [vmem:[#allocation8 + $0x100] sm:$0xff]
    %v4127 = vld [vmem:[#allocation8 + $0x108] sm:$0xff]
    %v4128 = vld [vmem:[#allocation8 + $0x110] sm:$0xff]
    %v4129 = vld [vmem:[#allocation8 + $0x118] sm:$0xff]
    %v4130 = vld [vmem:[#allocation8 + $0x120] sm:$0xff]
    %v4131 = vld [vmem:[#allocation8 + $0x128] sm:$0xff]
    %v4132 = vld [vmem:[#allocation8 + $0x130] sm:$0xff]
    %v4133 = vld [vmem:[#allocation8 + $0x138] sm:$0xff]
    %v4134 = vld [vmem:[#allocation8 + $0x140] sm:$0xff]
    %v4135 = vld [vmem:[#allocation8 + $0x148] sm:$0xff]
    %v4136 = vld [vmem:[#allocation8 + $0x150] sm:$0xff]
    %v4137 = vld [vmem:[#allocation8 + $0x158] sm:$0xff]
    %v4138 = vld [vmem:[#allocation8 + $0x160] sm:$0xff]
    %v4139 = vld [vmem:[#allocation8 + $0x168] sm:$0xff]
    %v4140 = vld [vmem:[#allocation8 + $0x170] sm:$0xff]
    %v4141 = vld [vmem:[#allocation8 + $0x178] sm:$0xff]
    %v4142 = vld [vmem:[#allocation8 + $0x180] sm:$0xff]
    %v4143 = vld [vmem:[#allocation8 + $0x188] sm:$0xff]
    %v4144 = vld [vmem:[#allocation8 + $0x190] sm:$0xff]
    %v4145 = vld [vmem:[#allocation8 + $0x198] sm:$0xff]
    %v4146 = vld [vmem:[#allocation8 + $0x1a0] sm:$0xff]
    %v4147 = vld [vmem:[#allocation8 + $0x1a8] sm:$0xff]
    %v4148 = vld [vmem:[#allocation8 + $0x1b0] sm:$0xff]
    %v4149 = vld [vmem:[#allocation8 + $0x1b8] sm:$0xff]
    %v4150 = vld [vmem:[#allocation8 + $0x1c0] sm:$0xff]
    %v4151 = vld [vmem:[#allocation8 + $0x1c8] sm:$0xff]
    %v4152 = vld [vmem:[#allocation8 + $0x1d0] sm:$0xff]
    %v4153 = vld [vmem:[#allocation8 + $0x1d8] sm:$0xff]
    %v4154 = vld [vmem:[#allocation8 + $0x1e0] sm:$0xff]
    %v4155 = vld [vmem:[#allocation8 + $0x1e8] sm:$0xff]
    %v4156 = vld [vmem:[#allocation8 + $0x1f0] sm:$0xff]
    %v4157 = vld [vmem:[#allocation8 + $0x1f8] sm:$0xff]
    %4158 = vmatprep.subr.mxu0 %v4155
    %4159 = vmatpush1.msra.mxu0 %v4154
    %4160 = vmatprep.subr.mxu0 %v4151
    %4161 = vmatpush1.msra.mxu0 %v4150
    %4162 = vmatprep.subr.mxu0 %v4147
    %4163 = vmatpush1.msra.mxu0 %v4146
    %4164 = vmatprep.subr.mxu0 %v4143
    %4165 = vmatpush1.msra.mxu0 %v4142
    %4166 = vmatprep.subr.mxu0 %v4139
    %4167 = vmatpush1.msra.mxu0 %v4138
    %4168 = vmatprep.subr.mxu0 %v4135
    %4169 = vmatpush1.msra.mxu0 %v4134
    %4170 = vmatprep.subr.mxu0 %v4131
    %4171 = vmatpush1.msra.mxu0 %v4130
    %4172 = vmatprep.subr.mxu0 %v4127
    %4173 = vmatpush1.msra.mxu0 %v4126
    %4174 = vmatprep.subr.mxu0 %v4123
    %4175 = vmatpush1.msra.mxu0 %v4122
    %4176 = vmatprep.subr.mxu0 %v4119
    %4177 = vmatpush1.msra.mxu0 %v4118
    %4178 = vmatprep.subr.mxu0 %v4115
    %4179 = vmatpush1.msra.mxu0 %v4114
    %4180 = vmatprep.subr.mxu0 %v4111
    %4181 = vmatpush1.msra.mxu0 %v4110
    %4182 = vmatprep.subr.mxu0 %v4107
    %4183 = vmatpush1.msra.mxu0 %v4106
    %4184 = vmatprep.subr.mxu0 %v4103
    %4185 = vmatpush1.msra.mxu0 %v4102
    %4186 = vmatprep.subr.mxu0 %v4099
    %4187 = vmatpush1.msra.mxu0 %v4098
    %4188 = vmatprep.subr.mxu0 %v4095
    %4189 = vmatpush1.msra.mxu0 %v4094
    %4190 = vmatprep.subr.mxu0 0.0
    %4191 = vmatpush2.msra.mxu0 0.0
    %4192 = vmatprep.subr.mxu0 0.0
    %4193 = vmatpush2.msra.mxu0 0.0
    %4194 = vmatprep.subr.mxu0 0.0
    %4195 = vmatpush2.msra.mxu0 0.0
    %4196 = vmatprep.subr.mxu0 0.0
    %4197 = vmatpush2.msra.mxu0 0.0
    %4198 = vmatprep.subr.mxu0 0.0
    %4199 = vmatpush2.msra.mxu0 0.0
    %4200 = vmatprep.subr.mxu0 0.0
    %4201 = vmatpush2.msra.mxu0 0.0
    %4202 = vmatprep.subr.mxu0 0.0
    %4203 = vmatpush2.msra.mxu0 0.0
    %4204 = vmatprep.subr.mxu0 0.0
    %4205 = vmatpush2.msra.mxu0 0.0
    %4206 = vmatprep.subr.mxu0 0.0
    %4207 = vmatpush2.msra.mxu0 0.0
    %4208 = vmatprep.subr.mxu0 0.0
    %4209 = vmatpush2.msra.mxu0 0.0
    %4210 = vmatprep.subr.mxu0 0.0
    %4211 = vmatpush2.msra.mxu0 0.0
    %4212 = vmatprep.subr.mxu0 0.0
    %4213 = vmatpush2.msra.mxu0 0.0
    %4214 = vmatprep.subr.mxu0 0.0
    %4215 = vmatpush2.msra.mxu0 0.0
    %4216 = vmatprep.subr.mxu0 0.0
    %4217 = vmatpush2.msra.mxu0 0.0
    %4218 = vmatprep.subr.mxu0 0.0
    %4219 = vmatpush2.msra.mxu0 0.0
    %4220 = vmatprep.subr.mxu0 0.0
    %4221 = vmatpush2.msra.mxu0 0.0
    %4222 = vmatprep.mubr.f32.mxu0 0.0
    %4223 = vmatmul.mubr.f32.gmra.mxu0 %v3845
    %v4224 = vpop.f32.mrf.mxu0
    %v4225 = vadd.f32 0.0, %v4224
    %v4226 = vpop.f32.mrf.mxu0
    %v4227 = vadd.f32 0.0, %v4226
    %4228 = vdwg.mxu0
    %4229 = vmatprep.subr.mxu0 %v4157
    %4230 = vmatpush1.msra.mxu0 %v4156
    %4231 = vmatprep.subr.mxu0 %v4153
    %4232 = vmatpush1.msra.mxu0 %v4152
    %4233 = vmatprep.subr.mxu0 %v4149
    %4234 = vmatpush1.msra.mxu0 %v4148
    %4235 = vmatprep.subr.mxu0 %v4145
    %4236 = vmatpush1.msra.mxu0 %v4144
    %4237 = vmatprep.subr.mxu0 %v4141
    %4238 = vmatpush1.msra.mxu0 %v4140
    %4239 = vmatprep.subr.mxu0 %v4137
    %4240 = vmatpush1.msra.mxu0 %v4136
    %4241 = vmatprep.subr.mxu0 %v4133
    %4242 = vmatpush1.msra.mxu0 %v4132
    %4243 = vmatprep.subr.mxu0 %v4129
    %4244 = vmatpush1.msra.mxu0 %v4128
    %4245 = vmatprep.subr.mxu0 %v4125
    %4246 = vmatpush1.msra.mxu0 %v4124
    %4247 = vmatprep.subr.mxu0 %v4121
    %4248 = vmatpush1.msra.mxu0 %v4120
    %4249 = vmatprep.subr.mxu0 %v4117
    %4250 = vmatpush1.msra.mxu0 %v4116
    %4251 = vmatprep.subr.mxu0 %v4113
    %4252 = vmatpush1.msra.mxu0 %v4112
    %4253 = vmatprep.subr.mxu0 %v4109
    %4254 = vmatpush1.msra.mxu0 %v4108
    %4255 = vmatprep.subr.mxu0 %v4105
    %4256 = vmatpush1.msra.mxu0 %v4104
    %4257 = vmatprep.subr.mxu0 %v4101
    %4258 = vmatpush1.msra.mxu0 %v4100
    %4259 = vmatprep.subr.mxu0 %v4097
    %4260 = vmatpush1.msra.mxu0 %v4096
    %4261 = vmatprep.subr.mxu0 0.0
    %4262 = vmatpush2.msra.mxu0 0.0
    %4263 = vmatprep.subr.mxu0 0.0
    %4264 = vmatpush2.msra.mxu0 0.0
    %4265 = vmatprep.subr.mxu0 0.0
    %4266 = vmatpush2.msra.mxu0 0.0
    %4267 = vmatprep.subr.mxu0 0.0
    %4268 = vmatpush2.msra.mxu0 0.0
    %4269 = vmatprep.subr.mxu0 0.0
    %4270 = vmatpush2.msra.mxu0 0.0
    %4271 = vmatprep.subr.mxu0 0.0
    %4272 = vmatpush2.msra.mxu0 0.0
    %4273 = vmatprep.subr.mxu0 0.0
    %4274 = vmatpush2.msra.mxu0 0.0
    %4275 = vmatprep.subr.mxu0 0.0
    %4276 = vmatpush2.msra.mxu0 0.0
    %4277 = vmatprep.subr.mxu0 0.0
    %4278 = vmatpush2.msra.mxu0 0.0
    %4279 = vmatprep.subr.mxu0 0.0
    %4280 = vmatpush2.msra.mxu0 0.0
    %4281 = vmatprep.subr.mxu0 0.0
    %4282 = vmatpush2.msra.mxu0 0.0
    %4283 = vmatprep.subr.mxu0 0.0
    %4284 = vmatpush2.msra.mxu0 0.0
    %4285 = vmatprep.subr.mxu0 0.0
    %4286 = vmatpush2.msra.mxu0 0.0
    %4287 = vmatprep.subr.mxu0 0.0
    %4288 = vmatpush2.msra.mxu0 0.0
    %4289 = vmatprep.subr.mxu0 0.0
    %4290 = vmatpush2.msra.mxu0 0.0
    %4291 = vmatprep.subr.mxu0 0.0
    %4292 = vmatpush2.msra.mxu0 0.0
    %4293 = vmatprep.mubr.f32.mxu0 0.0
    %4294 = vmatmul.mubr.f32.gmra.mxu0 %v3845
    %v4295 = vpop.f32.mrf.mxu0
    %v4296 = vadd.f32 0.0, %v4295
    %v4297 = vpop.f32.mrf.mxu0
    %v4298 = vadd.f32 0.0, %v4297
    %4299 = vdwg.mxu0
    %v4300 = vadd.f32 %v4090, %v4225
    %v4301 = vadd.f32 %v4091, %v4227
    %v4302 = vadd.f32 %v4092, %v4296
    %v4303 = vadd.f32 %v4093, %v4298
    %v4304 = vxor.u32 %v4300, 2147483648
    %v4305 = vmul.f32 %v4304, 1.442695
    %v4306 = vpow.pop %v4305
    %v4307 = vadd.f32 %v4306, 1.0
    %v4308 = vrcp.pop %v4307
    %v4309 = vmul.f32 1.0, %v4308
    %v4310 = vxor.u32 %v4301, 2147483648
    %v4311 = vmul.f32 %v4310, 1.442695
    %v4312 = vpow.pop %v4311
    %v4313 = vadd.f32 %v4312, 1.0
    %v4314 = vrcp.pop %v4313
    %v4315 = vmul.f32 1.0, %v4314
    %v4316 = vtanh.pop %v4302
    %v4317 = vxor.u32 %v4303, 2147483648
    %v4318 = vmul.f32 %v4317, 1.442695
    %v4319 = vpow.pop %v4318
    %v4320 = vadd.f32 %v4319, 1.0
    %v4321 = vrcp.pop %v4320
    %v4322 = vmul.f32 1.0, %v4321
    %v4323 = vmul.f32 %v4315, %v3843
    %v4324 = vmul.f32 %v4309, %v4316
    %v4325 = vadd.f32 %v4323, %v4324
    %v4326 = vtanh.pop %v4325
    %v4327 = vmul.f32 %v4322, %v4326
    %v4328 = vld [vmem:[#allocation3] sm:$0xff]
    %v4329 = vld [vmem:[#allocation3 + $0x8] sm:$0xff]
    %v4330 = vld [vmem:[#allocation3 + $0x10] sm:$0xff]
    %v4331 = vld [vmem:[#allocation3 + $0x18] sm:$0xff]
    %v4332 = vld [vmem:[#allocation10] sm:$0xff]
    %v4333 = vld [vmem:[#allocation10 + $0x8] sm:$0xff]
    %v4334 = vld [vmem:[#allocation10 + $0x10] sm:$0xff]
    %v4335 = vld [vmem:[#allocation10 + $0x18] sm:$0xff]
    %v4336 = vld [vmem:[#allocation10 + $0x20] sm:$0xff]
    %v4337 = vld [vmem:[#allocation10 + $0x28] sm:$0xff]
    %v4338 = vld [vmem:[#allocation10 + $0x30] sm:$0xff]
    %v4339 = vld [vmem:[#allocation10 + $0x38] sm:$0xff]
    %v4340 = vld [vmem:[#allocation10 + $0x40] sm:$0xff]
    %v4341 = vld [vmem:[#allocation10 + $0x48] sm:$0xff]
    %v4342 = vld [vmem:[#allocation10 + $0x50] sm:$0xff]
    %v4343 = vld [vmem:[#allocation10 + $0x58] sm:$0xff]
    %v4344 = vld [vmem:[#allocation10 + $0x60] sm:$0xff]
    %v4345 = vld [vmem:[#allocation10 + $0x68] sm:$0xff]
    %v4346 = vld [vmem:[#allocation10 + $0x70] sm:$0xff]
    %v4347 = vld [vmem:[#allocation10 + $0x78] sm:$0xff]
    %v4348 = vld [vmem:[#allocation10 + $0x80] sm:$0xff]
    %v4349 = vld [vmem:[#allocation10 + $0x88] sm:$0xff]
    %v4350 = vld [vmem:[#allocation10 + $0x90] sm:$0xff]
    %v4351 = vld [vmem:[#allocation10 + $0x98] sm:$0xff]
    %v4352 = vld [vmem:[#allocation10 + $0xa0] sm:$0xff]
    %v4353 = vld [vmem:[#allocation10 + $0xa8] sm:$0xff]
    %v4354 = vld [vmem:[#allocation10 + $0xb0] sm:$0xff]
    %v4355 = vld [vmem:[#allocation10 + $0xb8] sm:$0xff]
    %v4356 = vld [vmem:[#allocation10 + $0xc0] sm:$0xff]
    %v4357 = vld [vmem:[#allocation10 + $0xc8] sm:$0xff]
    %v4358 = vld [vmem:[#allocation10 + $0xd0] sm:$0xff]
    %v4359 = vld [vmem:[#allocation10 + $0xd8] sm:$0xff]
    %v4360 = vld [vmem:[#allocation10 + $0xe0] sm:$0xff]
    %v4361 = vld [vmem:[#allocation10 + $0xe8] sm:$0xff]
    %v4362 = vld [vmem:[#allocation10 + $0xf0] sm:$0xff]
    %v4363 = vld [vmem:[#allocation10 + $0xf8] sm:$0xff]
    %v4364 = vld [vmem:[#allocation10 + $0x100] sm:$0xff]
    %v4365 = vld [vmem:[#allocation10 + $0x108] sm:$0xff]
    %v4366 = vld [vmem:[#allocation10 + $0x110] sm:$0xff]
    %v4367 = vld [vmem:[#allocation10 + $0x118] sm:$0xff]
    %v4368 = vld [vmem:[#allocation10 + $0x120] sm:$0xff]
    %v4369 = vld [vmem:[#allocation10 + $0x128] sm:$0xff]
    %v4370 = vld [vmem:[#allocation10 + $0x130] sm:$0xff]
    %v4371 = vld [vmem:[#allocation10 + $0x138] sm:$0xff]
    %v4372 = vld [vmem:[#allocation10 + $0x140] sm:$0xff]
    %v4373 = vld [vmem:[#allocation10 + $0x148] sm:$0xff]
    %v4374 = vld [vmem:[#allocation10 + $0x150] sm:$0xff]
    %v4375 = vld [vmem:[#allocation10 + $0x158] sm:$0xff]
    %v4376 = vld [vmem:[#allocation10 + $0x160] sm:$0xff]
    %v4377 = vld [vmem:[#allocation10 + $0x168] sm:$0xff]
    %v4378 = vld [vmem:[#allocation10 + $0x170] sm:$0xff]
    %v4379 = vld [vmem:[#allocation10 + $0x178] sm:$0xff]
    %v4380 = vld [vmem:[#allocation10 + $0x180] sm:$0xff]
    %v4381 = vld [vmem:[#allocation10 + $0x188] sm:$0xff]
    %v4382 = vld [vmem:[#allocation10 + $0x190] sm:$0xff]
    %v4383 = vld [vmem:[#allocation10 + $0x198] sm:$0xff]
    %v4384 = vld [vmem:[#allocation10 + $0x1a0] sm:$0xff]
    %v4385 = vld [vmem:[#allocation10 + $0x1a8] sm:$0xff]
    %v4386 = vld [vmem:[#allocation10 + $0x1b0] sm:$0xff]
    %v4387 = vld [vmem:[#allocation10 + $0x1b8] sm:$0xff]
    %v4388 = vld [vmem:[#allocation10 + $0x1c0] sm:$0xff]
    %v4389 = vld [vmem:[#allocation10 + $0x1c8] sm:$0xff]
    %v4390 = vld [vmem:[#allocation10 + $0x1d0] sm:$0xff]
    %v4391 = vld [vmem:[#allocation10 + $0x1d8] sm:$0xff]
    %v4392 = vld [vmem:[#allocation10 + $0x1e0] sm:$0xff]
    %v4393 = vld [vmem:[#allocation10 + $0x1e8] sm:$0xff]
    %v4394 = vld [vmem:[#allocation10 + $0x1f0] sm:$0xff]
    %v4395 = vld [vmem:[#allocation10 + $0x1f8] sm:$0xff]
    %4396 = vmatprep.subr.mxu0 %v4393
    %4397 = vmatpush1.msra.mxu0 %v4392
    %4398 = vmatprep.subr.mxu0 %v4389
    %4399 = vmatpush1.msra.mxu0 %v4388
    %4400 = vmatprep.subr.mxu0 %v4385
    %4401 = vmatpush1.msra.mxu0 %v4384
    %4402 = vmatprep.subr.mxu0 %v4381
    %4403 = vmatpush1.msra.mxu0 %v4380
    %4404 = vmatprep.subr.mxu0 %v4377
    %4405 = vmatpush1.msra.mxu0 %v4376
    %4406 = vmatprep.subr.mxu0 %v4373
    %4407 = vmatpush1.msra.mxu0 %v4372
    %4408 = vmatprep.subr.mxu0 %v4369
    %4409 = vmatpush1.msra.mxu0 %v4368
    %4410 = vmatprep.subr.mxu0 %v4365
    %4411 = vmatpush1.msra.mxu0 %v4364
    %4412 = vmatprep.subr.mxu0 %v4361
    %4413 = vmatpush1.msra.mxu0 %v4360
    %4414 = vmatprep.subr.mxu0 %v4357
    %4415 = vmatpush1.msra.mxu0 %v4356
    %4416 = vmatprep.subr.mxu0 %v4353
    %4417 = vmatpush1.msra.mxu0 %v4352
    %4418 = vmatprep.subr.mxu0 %v4349
    %4419 = vmatpush1.msra.mxu0 %v4348
    %4420 = vmatprep.subr.mxu0 %v4345
    %4421 = vmatpush1.msra.mxu0 %v4344
    %4422 = vmatprep.subr.mxu0 %v4341
    %4423 = vmatpush1.msra.mxu0 %v4340
    %4424 = vmatprep.subr.mxu0 %v4337
    %4425 = vmatpush1.msra.mxu0 %v4336
    %4426 = vmatprep.subr.mxu0 %v4333
    %4427 = vmatpush1.msra.mxu0 %v4332
    %4428 = vmatprep.subr.mxu0 0.0
    %4429 = vmatpush2.msra.mxu0 0.0
    %4430 = vmatprep.subr.mxu0 0.0
    %4431 = vmatpush2.msra.mxu0 0.0
    %4432 = vmatprep.subr.mxu0 0.0
    %4433 = vmatpush2.msra.mxu0 0.0
    %4434 = vmatprep.subr.mxu0 0.0
    %4435 = vmatpush2.msra.mxu0 0.0
    %4436 = vmatprep.subr.mxu0 0.0
    %4437 = vmatpush2.msra.mxu0 0.0
    %4438 = vmatprep.subr.mxu0 0.0
    %4439 = vmatpush2.msra.mxu0 0.0
    %4440 = vmatprep.subr.mxu0 0.0
    %4441 = vmatpush2.msra.mxu0 0.0
    %4442 = vmatprep.subr.mxu0 0.0
    %4443 = vmatpush2.msra.mxu0 0.0
    %4444 = vmatprep.subr.mxu0 0.0
    %4445 = vmatpush2.msra.mxu0 0.0
    %4446 = vmatprep.subr.mxu0 0.0
    %4447 = vmatpush2.msra.mxu0 0.0
    %4448 = vmatprep.subr.mxu0 0.0
    %4449 = vmatpush2.msra.mxu0 0.0
    %4450 = vmatprep.subr.mxu0 0.0
    %4451 = vmatpush2.msra.mxu0 0.0
    %4452 = vmatprep.subr.mxu0 0.0
    %4453 = vmatpush2.msra.mxu0 0.0
    %4454 = vmatprep.subr.mxu0 0.0
    %4455 = vmatpush2.msra.mxu0 0.0
    %4456 = vmatprep.subr.mxu0 0.0
    %4457 = vmatpush2.msra.mxu0 0.0
    %4458 = vmatprep.subr.mxu0 0.0
    %4459 = vmatpush2.msra.mxu0 0.0
    %4460 = vmatprep.mubr.f32.mxu0 0.0
    %4461 = vmatmul.mubr.f32.gmra.mxu0 %v4084
    %v4462 = vpop.f32.mrf.mxu0
    %v4463 = vadd.f32 0.0, %v4462
    %v4464 = vpop.f32.mrf.mxu0
    %v4465 = vadd.f32 0.0, %v4464
    %4466 = vdwg.mxu0
    %4467 = vmatprep.subr.mxu0 %v4395
    %4468 = vmatpush1.msra.mxu0 %v4394
    %4469 = vmatprep.subr.mxu0 %v4391
    %4470 = vmatpush1.msra.mxu0 %v4390
    %4471 = vmatprep.subr.mxu0 %v4387
    %4472 = vmatpush1.msra.mxu0 %v4386
    %4473 = vmatprep.subr.mxu0 %v4383
    %4474 = vmatpush1.msra.mxu0 %v4382
    %4475 = vmatprep.subr.mxu0 %v4379
    %4476 = vmatpush1.msra.mxu0 %v4378
    %4477 = vmatprep.subr.mxu0 %v4375
    %4478 = vmatpush1.msra.mxu0 %v4374
    %4479 = vmatprep.subr.mxu0 %v4371
    %4480 = vmatpush1.msra.mxu0 %v4370
    %4481 = vmatprep.subr.mxu0 %v4367
    %4482 = vmatpush1.msra.mxu0 %v4366
    %4483 = vmatprep.subr.mxu0 %v4363
    %4484 = vmatpush1.msra.mxu0 %v4362
    %4485 = vmatprep.subr.mxu0 %v4359
    %4486 = vmatpush1.msra.mxu0 %v4358
    %4487 = vmatprep.subr.mxu0 %v4355
    %4488 = vmatpush1.msra.mxu0 %v4354
    %4489 = vmatprep.subr.mxu0 %v4351
    %4490 = vmatpush1.msra.mxu0 %v4350
    %4491 = vmatprep.subr.mxu0 %v4347
    %4492 = vmatpush1.msra.mxu0 %v4346
    %4493 = vmatprep.subr.mxu0 %v4343
    %4494 = vmatpush1.msra.mxu0 %v4342
    %4495 = vmatprep.subr.mxu0 %v4339
    %4496 = vmatpush1.msra.mxu0 %v4338
    %4497 = vmatprep.subr.mxu0 %v4335
    %4498 = vmatpush1.msra.mxu0 %v4334
    %4499 = vmatprep.subr.mxu0 0.0
    %4500 = vmatpush2.msra.mxu0 0.0
    %4501 = vmatprep.subr.mxu0 0.0
    %4502 = vmatpush2.msra.mxu0 0.0
    %4503 = vmatprep.subr.mxu0 0.0
    %4504 = vmatpush2.msra.mxu0 0.0
    %4505 = vmatprep.subr.mxu0 0.0
    %4506 = vmatpush2.msra.mxu0 0.0
    %4507 = vmatprep.subr.mxu0 0.0
    %4508 = vmatpush2.msra.mxu0 0.0
    %4509 = vmatprep.subr.mxu0 0.0
    %4510 = vmatpush2.msra.mxu0 0.0
    %4511 = vmatprep.subr.mxu0 0.0
    %4512 = vmatpush2.msra.mxu0 0.0
    %4513 = vmatprep.subr.mxu0 0.0
    %4514 = vmatpush2.msra.mxu0 0.0
    %4515 = vmatprep.subr.mxu0 0.0
    %4516 = vmatpush2.msra.mxu0 0.0
    %4517 = vmatprep.subr.mxu0 0.0
    %4518 = vmatpush2.msra.mxu0 0.0
    %4519 = vmatprep.subr.mxu0 0.0
    %4520 = vmatpush2.msra.mxu0 0.0
    %4521 = vmatprep.subr.mxu0 0.0
    %4522 = vmatpush2.msra.mxu0 0.0
    %4523 = vmatprep.subr.mxu0 0.0
    %4524 = vmatpush2.msra.mxu0 0.0
    %4525 = vmatprep.subr.mxu0 0.0
    %4526 = vmatpush2.msra.mxu0 0.0
    %4527 = vmatprep.subr.mxu0 0.0
    %4528 = vmatpush2.msra.mxu0 0.0
    %4529 = vmatprep.subr.mxu0 0.0
    %4530 = vmatpush2.msra.mxu0 0.0
    %4531 = vmatprep.mubr.f32.mxu0 0.0
    %4532 = vmatmul.mubr.f32.gmra.mxu0 %v4084
    %v4533 = vpop.f32.mrf.mxu0
    %v4534 = vadd.f32 0.0, %v4533
    %v4535 = vpop.f32.mrf.mxu0
    %v4536 = vadd.f32 0.0, %v4535
    %4537 = vdwg.mxu0
    %v4538 = vadd.f32 %v4328, %v4463
    %v4539 = vadd.f32 %v4329, %v4465
    %v4540 = vadd.f32 %v4330, %v4534
    %v4541 = vadd.f32 %v4331, %v4536
    %v4542 = vxor.u32 %v4538, 2147483648
    %v4543 = vmul.f32 %v4542, 1.442695
    %v4544 = vpow.pop %v4543
    %v4545 = vadd.f32 %v4544, 1.0
    %v4546 = vrcp.pop %v4545
    %v4547 = vmul.f32 1.0, %v4546
    %v4548 = vxor.u32 %v4539, 2147483648
    %v4549 = vmul.f32 %v4548, 1.442695
    %v4550 = vpow.pop %v4549
    %v4551 = vadd.f32 %v4550, 1.0
    %v4552 = vrcp.pop %v4551
    %v4553 = vmul.f32 1.0, %v4552
    %v4554 = vtanh.pop %v4540
    %v4555 = vxor.u32 %v4541, 2147483648
    %v4556 = vmul.f32 %v4555, 1.442695
    %v4557 = vpow.pop %v4556
    %v4558 = vadd.f32 %v4557, 1.0
    %v4559 = vrcp.pop %v4558
    %v4560 = vmul.f32 1.0, %v4559
    %v4561 = vmul.f32 %v4553, %v4082
    %v4562 = vmul.f32 %v4547, %v4554
    %v4563 = vadd.f32 %v4561, %v4562
    %v4564 = vtanh.pop %v4563
    %v4565 = vmul.f32 %v4560, %v4564
    %s4566 = scalar_lea.vmem [#allocation4], 56
    %4567 = vst [vmem:[%s4566] sm:$0xff] %v4327
    %4568 = vst [vmem:[#allocation5] sm:$0xff] %v4565
    %v4569 = vcvt.s32.f32 0
    %v4570 = vcvt.s32.f32 1
    %v4571 = vcvt.s32.f32 2
    %v4572 = vcvt.s32.f32 3
    %v4573 = vcvt.s32.f32 4
    %v4574 = vcvt.s32.f32 5
    %v4575 = vcvt.s32.f32 6
    %v4576 = vcvt.s32.f32 7
    %v4577 = vmul.f32 %v4569, 0.14285715
    %v4578 = vmul.f32 %v4570, 0.14285715
    %v4579 = vmul.f32 %v4571, 0.14285715
    %v4580 = vmul.f32 %v4572, 0.14285715
    %v4581 = vmul.f32 %v4573, 0.14285715
    %v4582 = vmul.f32 %v4574, 0.14285715
    %v4583 = vmul.f32 %v4575, 0.14285715
    %v4584 = vmul.f32 %v4576, 0.14285715
    %v4585 = vld [vmem:[#allocation4] sm:$0xff]
    %v4586 = vld [vmem:[#allocation4 + $0x8] sm:$0xff]
    %v4587 = vld [vmem:[#allocation4 + $0x10] sm:$0xff]
    %v4588 = vld [vmem:[#allocation4 + $0x18] sm:$0xff]
    %v4589 = vld [vmem:[#allocation4 + $0x20] sm:$0xff]
    %v4590 = vld [vmem:[#allocation4 + $0x28] sm:$0xff]
    %v4591 = vld [vmem:[#allocation4 + $0x30] sm:$0xff]
    %v4592 = vld [vmem:[#allocation4 + $0x38] sm:$0xff]
    %v4593 = vmul.f32 %v4585, %v4577
    %v4594 = vmul.f32 %v4586, %v4578
    %v4595 = vmul.f32 %v4587, %v4579
    %v4596 = vmul.f32 %v4588, %v4580
    %v4597 = vmul.f32 %v4589, %v4581
    %v4598 = vmul.f32 %v4590, %v4582
    %v4599 = vmul.f32 %v4591, %v4583
    %v4600 = vmul.f32 %v4592, %v4584
    %v4601 = vld [vmem:[#allocation5] sm:$0xff]
    %v4602 = vld [vmem:[#allocation5 + $0x8] sm:$0xff]
    %v4603 = vld [vmem:[#allocation5 + $0x10] sm:$0xff]
    %v4604 = vld [vmem:[#allocation5 + $0x18] sm:$0xff]
    %v4605 = vld [vmem:[#allocation5 + $0x20] sm:$0xff]
    %v4606 = vld [vmem:[#allocation5 + $0x28] sm:$0xff]
    %v4607 = vld [vmem:[#allocation5 + $0x30] sm:$0xff]
    %v4608 = vld [vmem:[#allocation5 + $0x38] sm:$0xff]
    %v4609 = vsub.f32 1.0, %v4577
    %v4610 = vsub.f32 1.0, %v4578
    %v4611 = vsub.f32 1.0, %v4579
    %v4612 = vsub.f32 1.0, %v4580
    %v4613 = vsub.f32 1.0, %v4581
    %v4614 = vsub.f32 1.0, %v4582
    %v4615 = vsub.f32 1.0, %v4583
    %v4616 = vsub.f32 1.0, %v4584
    %v4617 = vmul.f32 %v4601, %v4609
    %v4618 = vmul.f32 %v4602, %v4610
    %v4619 = vmul.f32 %v4603, %v4611
    %v4620 = vmul.f32 %v4604, %v4612
    %v4621 = vmul.f32 %v4605, %v4613
    %v4622 = vmul.f32 %v4606, %v4614
    %v4623 = vmul.f32 %v4607, %v4615
    %v4624 = vmul.f32 %v4608, %v4616
    %v4625 = vld [vmem:[#allocation11] sm:$0xff]
    %v4626 = vld [vmem:[#allocation11 + $0x8] sm:$0xff]
    %v4627 = vld [vmem:[#allocation11 + $0x10] sm:$0xff]
    %v4628 = vld [vmem:[#allocation11 + $0x18] sm:$0xff]
    %v4629 = vld [vmem:[#allocation11 + $0x20] sm:$0xff]
    %v4630 = vld [vmem:[#allocation11 + $0x28] sm:$0xff]
    %v4631 = vld [vmem:[#allocation11 + $0x30] sm:$0xff]
    %v4632 = vld [vmem:[#allocation11 + $0x38] sm:$0xff]
    %v4633 = vld [vmem:[#allocation11 + $0x40] sm:$0xff]
    %v4634 = vld [vmem:[#allocation11 + $0x48] sm:$0xff]
    %v4635 = vld [vmem:[#allocation11 + $0x50] sm:$0xff]
    %v4636 = vld [vmem:[#allocation11 + $0x58] sm:$0xff]
    %v4637 = vld [vmem:[#allocation11 + $0x60] sm:$0xff]
    %v4638 = vld [vmem:[#allocation11 + $0x68] sm:$0xff]
    %v4639 = vld [vmem:[#allocation11 + $0x70] sm:$0xff]
    %v4640 = vld [vmem:[#allocation11 + $0x78] sm:$0xff]
    %v4641 = vld [vmem:[#allocation13] sm:$0xff]
    %v4642 = vld [vmem:[#allocation13 + $0x8] sm:$0xff]
    %v4643 = vld [vmem:[#allocation13 + $0x10] sm:$0xff]
    %v4644 = vld [vmem:[#allocation13 + $0x18] sm:$0xff]
    %v4645 = vld [vmem:[#allocation13 + $0x20] sm:$0xff]
    %v4646 = vld [vmem:[#allocation13 + $0x28] sm:$0xff]
    %v4647 = vld [vmem:[#allocation13 + $0x30] sm:$0xff]
    %v4648 = vld [vmem:[#allocation13 + $0x38] sm:$0xff]
    %v4649 = vld [vmem:[#allocation13 + $0x40] sm:$0xff]
    %v4650 = vld [vmem:[#allocation13 + $0x48] sm:$0xff]
    %v4651 = vld [vmem:[#allocation13 + $0x50] sm:$0xff]
    %v4652 = vld [vmem:[#allocation13 + $0x58] sm:$0xff]
    %v4653 = vld [vmem:[#allocation13 + $0x60] sm:$0xff]
    %v4654 = vld [vmem:[#allocation13 + $0x68] sm:$0xff]
    %v4655 = vld [vmem:[#allocation13 + $0x70] sm:$0xff]
    %v4656 = vld [vmem:[#allocation13 + $0x78] sm:$0xff]
    %4657 = vmatprep.subr.mxu0 0.0
    %4658 = vmatpush1.msra.mxu0 %v4656
    %4659 = vmatprep.subr.mxu0 0.0
    %4660 = vmatpush1.msra.mxu0 %v4655
    %4661 = vmatprep.subr.mxu0 0.0
    %4662 = vmatpush1.msra.mxu0 %v4654
    %4663 = vmatprep.subr.mxu0 0.0
    %4664 = vmatpush1.msra.mxu0 %v4653
    %4665 = vmatprep.subr.mxu0 0.0
    %4666 = vmatpush1.msra.mxu0 %v4652
    %4667 = vmatprep.subr.mxu0 0.0
    %4668 = vmatpush1.msra.mxu0 %v4651
    %4669 = vmatprep.subr.mxu0 0.0
    %4670 = vmatpush1.msra.mxu0 %v4650
    %4671 = vmatprep.subr.mxu0 0.0
    %4672 = vmatpush1.msra.mxu0 %v4649
    %4673 = vmatprep.subr.mxu0 0.0
    %4674 = vmatpush1.msra.mxu0 %v4648
    %4675 = vmatprep.subr.mxu0 0.0
    %4676 = vmatpush1.msra.mxu0 %v4647
    %4677 = vmatprep.subr.mxu0 0.0
    %4678 = vmatpush1.msra.mxu0 %v4646
    %4679 = vmatprep.subr.mxu0 0.0
    %4680 = vmatpush1.msra.mxu0 %v4645
    %4681 = vmatprep.subr.mxu0 0.0
    %4682 = vmatpush1.msra.mxu0 %v4644
    %4683 = vmatprep.subr.mxu0 0.0
    %4684 = vmatpush1.msra.mxu0 %v4643
    %4685 = vmatprep.subr.mxu0 0.0
    %4686 = vmatpush1.msra.mxu0 %v4642
    %4687 = vmatprep.subr.mxu0 0.0
    %4688 = vmatpush1.msra.mxu0 %v4641
    %4689 = vmatprep.subr.mxu0 0.0
    %4690 = vmatpush2.msra.mxu0 0.0
    %4691 = vmatprep.subr.mxu0 0.0
    %4692 = vmatpush2.msra.mxu0 0.0
    %4693 = vmatprep.subr.mxu0 0.0
    %4694 = vmatpush2.msra.mxu0 0.0
    %4695 = vmatprep.subr.mxu0 0.0
    %4696 = vmatpush2.msra.mxu0 0.0
    %4697 = vmatprep.subr.mxu0 0.0
    %4698 = vmatpush2.msra.mxu0 0.0
    %4699 = vmatprep.subr.mxu0 0.0
    %4700 = vmatpush2.msra.mxu0 0.0
    %4701 = vmatprep.subr.mxu0 0.0
    %4702 = vmatpush2.msra.mxu0 0.0
    %4703 = vmatprep.subr.mxu0 0.0
    %4704 = vmatpush2.msra.mxu0 0.0
    %4705 = vmatprep.subr.mxu0 0.0
    %4706 = vmatpush2.msra.mxu0 0.0
    %4707 = vmatprep.subr.mxu0 0.0
    %4708 = vmatpush2.msra.mxu0 0.0
    %4709 = vmatprep.subr.mxu0 0.0
    %4710 = vmatpush2.msra.mxu0 0.0
    %4711 = vmatprep.subr.mxu0 0.0
    %4712 = vmatpush2.msra.mxu0 0.0
    %4713 = vmatprep.subr.mxu0 0.0
    %4714 = vmatpush2.msra.mxu0 0.0
    %4715 = vmatprep.subr.mxu0 0.0
    %4716 = vmatpush2.msra.mxu0 0.0
    %4717 = vmatprep.subr.mxu0 0.0
    %4718 = vmatpush2.msra.mxu0 0.0
    %4719 = vmatprep.subr.mxu0 0.0
    %4720 = vmatpush2.msra.mxu0 0.0
    %4721 = vmatprep.mubr.f32.mxu0 0.0
    %4722 = vmatmul.mubr.f32.gmra.mxu0 %v4617
    %v4723 = vpop.f32.mrf.mxu0
    %v4724 = vadd.f32 0.0, %v4723
    %v4725 = vpop.f32.mrf.mxu0
    %4726 = vmatprep.mubr.f32.mxu0 0.0
    %4727 = vmatmul.mubr.f32.gmra.mxu0 %v4618
    %v4728 = vpop.f32.mrf.mxu0
    %v4729 = vadd.f32 0.0, %v4728
    %v4730 = vpop.f32.mrf.mxu0
    %4731 = vmatprep.mubr.f32.mxu0 0.0
    %4732 = vmatmul.mubr.f32.gmra.mxu0 %v4619
    %v4733 = vpop.f32.mrf.mxu0
    %v4734 = vadd.f32 0.0, %v4733
    %v4735 = vpop.f32.mrf.mxu0
    %4736 = vmatprep.mubr.f32.mxu0 0.0
    %4737 = vmatmul.mubr.f32.gmra.mxu0 %v4620
    %v4738 = vpop.f32.mrf.mxu0
    %v4739 = vadd.f32 0.0, %v4738
    %v4740 = vpop.f32.mrf.mxu0
    %4741 = vmatprep.mubr.f32.mxu0 0.0
    %4742 = vmatmul.mubr.f32.gmra.mxu0 %v4621
    %v4743 = vpop.f32.mrf.mxu0
    %v4744 = vadd.f32 0.0, %v4743
    %v4745 = vpop.f32.mrf.mxu0
    %4746 = vmatprep.mubr.f32.mxu0 0.0
    %4747 = vmatmul.mubr.f32.gmra.mxu0 %v4622
    %v4748 = vpop.f32.mrf.mxu0
    %v4749 = vadd.f32 0.0, %v4748
    %v4750 = vpop.f32.mrf.mxu0
    %4751 = vmatprep.mubr.f32.mxu0 0.0
    %4752 = vmatmul.mubr.f32.gmra.mxu0 %v4623
    %v4753 = vpop.f32.mrf.mxu0
    %v4754 = vadd.f32 0.0, %v4753
    %v4755 = vpop.f32.mrf.mxu0
    %4756 = vmatprep.mubr.f32.mxu0 0.0
    %4757 = vmatmul.mubr.f32.gmra.mxu0 %v4624
    %v4758 = vpop.f32.mrf.mxu0
    %v4759 = vadd.f32 0.0, %v4758
    %v4760 = vpop.f32.mrf.mxu0
    %4761 = vdwg.mxu0
    %4762 = vmatprep.subr.mxu0 0.0
    %4763 = vmatpush1.msra.mxu0 %v4640
    %4764 = vmatprep.subr.mxu0 0.0
    %4765 = vmatpush1.msra.mxu0 %v4639
    %4766 = vmatprep.subr.mxu0 0.0
    %4767 = vmatpush1.msra.mxu0 %v4638
    %4768 = vmatprep.subr.mxu0 0.0
    %4769 = vmatpush1.msra.mxu0 %v4637
    %4770 = vmatprep.subr.mxu0 0.0
    %4771 = vmatpush1.msra.mxu0 %v4636
    %4772 = vmatprep.subr.mxu0 0.0
    %4773 = vmatpush1.msra.mxu0 %v4635
    %4774 = vmatprep.subr.mxu0 0.0
    %4775 = vmatpush1.msra.mxu0 %v4634
    %4776 = vmatprep.subr.mxu0 0.0
    %4777 = vmatpush1.msra.mxu0 %v4633
    %4778 = vmatprep.subr.mxu0 0.0
    %4779 = vmatpush1.msra.mxu0 %v4632
    %4780 = vmatprep.subr.mxu0 0.0
    %4781 = vmatpush1.msra.mxu0 %v4631
    %4782 = vmatprep.subr.mxu0 0.0
    %4783 = vmatpush1.msra.mxu0 %v4630
    %4784 = vmatprep.subr.mxu0 0.0
    %4785 = vmatpush1.msra.mxu0 %v4629
    %4786 = vmatprep.subr.mxu0 0.0
    %4787 = vmatpush1.msra.mxu0 %v4628
    %4788 = vmatprep.subr.mxu0 0.0
    %4789 = vmatpush1.msra.mxu0 %v4627
    %4790 = vmatprep.subr.mxu0 0.0
    %4791 = vmatpush1.msra.mxu0 %v4626
    %4792 = vmatprep.subr.mxu0 0.0
    %4793 = vmatpush1.msra.mxu0 %v4625
    %4794 = vmatprep.subr.mxu0 0.0
    %4795 = vmatpush2.msra.mxu0 0.0
    %4796 = vmatprep.subr.mxu0 0.0
    %4797 = vmatpush2.msra.mxu0 0.0
    %4798 = vmatprep.subr.mxu0 0.0
    %4799 = vmatpush2.msra.mxu0 0.0
    %4800 = vmatprep.subr.mxu0 0.0
    %4801 = vmatpush2.msra.mxu0 0.0
    %4802 = vmatprep.subr.mxu0 0.0
    %4803 = vmatpush2.msra.mxu0 0.0
    %4804 = vmatprep.subr.mxu0 0.0
    %4805 = vmatpush2.msra.mxu0 0.0
    %4806 = vmatprep.subr.mxu0 0.0
    %4807 = vmatpush2.msra.mxu0 0.0
    %4808 = vmatprep.subr.mxu0 0.0
    %4809 = vmatpush2.msra.mxu0 0.0
    %4810 = vmatprep.subr.mxu0 0.0
    %4811 = vmatpush2.msra.mxu0 0.0
    %4812 = vmatprep.subr.mxu0 0.0
    %4813 = vmatpush2.msra.mxu0 0.0
    %4814 = vmatprep.subr.mxu0 0.0
    %4815 = vmatpush2.msra.mxu0 0.0
    %4816 = vmatprep.subr.mxu0 0.0
    %4817 = vmatpush2.msra.mxu0 0.0
    %4818 = vmatprep.subr.mxu0 0.0
    %4819 = vmatpush2.msra.mxu0 0.0
    %4820 = vmatprep.subr.mxu0 0.0
    %4821 = vmatpush2.msra.mxu0 0.0
    %4822 = vmatprep.subr.mxu0 0.0
    %4823 = vmatpush2.msra.mxu0 0.0
    %4824 = vmatprep.subr.mxu0 0.0
    %4825 = vmatpush2.msra.mxu0 0.0
    %4826 = vmatprep.mubr.f32.mxu0 0.0
    %4827 = vmatmul.mubr.f32.gmra.mxu0 %v4593
    %v4828 = vpop.f32.mrf.mxu0
    %v4829 = vadd.f32 %v4724, %v4828
    %v4830 = vpop.f32.mrf.mxu0
    %4831 = vmatprep.mubr.f32.mxu0 0.0
    %4832 = vmatmul.mubr.f32.gmra.mxu0 %v4594
    %v4833 = vpop.f32.mrf.mxu0
    %v4834 = vadd.f32 %v4729, %v4833
    %v4835 = vpop.f32.mrf.mxu0
    %4836 = vmatprep.mubr.f32.mxu0 0.0
    %4837 = vmatmul.mubr.f32.gmra.mxu0 %v4595
    %v4838 = vpop.f32.mrf.mxu0
    %v4839 = vadd.f32 %v4734, %v4838
    %v4840 = vpop.f32.mrf.mxu0
    %4841 = vmatprep.mubr.f32.mxu0 0.0
    %4842 = vmatmul.mubr.f32.gmra.mxu0 %v4596
    %v4843 = vpop.f32.mrf.mxu0
    %v4844 = vadd.f32 %v4739, %v4843
    %v4845 = vpop.f32.mrf.mxu0
    %4846 = vmatprep.mubr.f32.mxu0 0.0
    %4847 = vmatmul.mubr.f32.gmra.mxu0 %v4597
    %v4848 = vpop.f32.mrf.mxu0
    %v4849 = vadd.f32 %v4744, %v4848
    %v4850 = vpop.f32.mrf.mxu0
    %4851 = vmatprep.mubr.f32.mxu0 0.0
    %4852 = vmatmul.mubr.f32.gmra.mxu0 %v4598
    %v4853 = vpop.f32.mrf.mxu0
    %v4854 = vadd.f32 %v4749, %v4853
    %v4855 = vpop.f32.mrf.mxu0
    %4856 = vmatprep.mubr.f32.mxu0 0.0
    %4857 = vmatmul.mubr.f32.gmra.mxu0 %v4599
    %v4858 = vpop.f32.mrf.mxu0
    %v4859 = vadd.f32 %v4754, %v4858
    %v4860 = vpop.f32.mrf.mxu0
    %4861 = vmatprep.mubr.f32.mxu0 0.0
    %4862 = vmatmul.mubr.f32.gmra.mxu0 %v4600
    %v4863 = vpop.f32.mrf.mxu0
    %v4864 = vadd.f32 %v4759, %v4863
    %v4865 = vpop.f32.mrf.mxu0
    %4866 = vdwg.mxu0
    %v4867 = vadd.f32 %v4829, 0.0
    %v4868 = vadd.f32 %v4834, 0.0
    %v4869 = vadd.f32 %v4839, 0.0
    %v4870 = vadd.f32 %v4844, 0.0
    %v4871 = vadd.f32 %v4849, 0.0
    %v4872 = vadd.f32 %v4854, 0.0
    %v4873 = vadd.f32 %v4859, 0.0
    %v4874 = vadd.f32 %v4864, 0.0
    %4875 = vst [vmem:[%s7] sm:$0xff] %v4867
    %4876 = vst [vmem:[%s7 + $0x8] sm:$0xff] %v4868
    %4877 = vst [vmem:[%s7 + $0x10] sm:$0xff] %v4869
    %4878 = vst [vmem:[%s7 + $0x18] sm:$0xff] %v4870
    %4879 = vst [vmem:[%s7 + $0x20] sm:$0xff] %v4871
    %4880 = vst [vmem:[%s7 + $0x28] sm:$0xff] %v4872
    %4881 = vst [vmem:[%s7 + $0x30] sm:$0xff] %v4873
    %4882 = vst [vmem:[%s7 + $0x38] sm:$0xff] %v4874
    // Predicated region
    $region50: #{run.1} parent=1 // pred_check
      _
    $region51: #{run.1} parent=1 // pred_check_branch
      %4884 = sbr.rel (0) target = $region53
    $region52: #{run.1} parent=1 // pred_region
      _
    $region53: #{run.1} parent=1 // pred_fallthru
      _
    // Predicated region
    $region54: #{run.1} parent=1 // pred_check
      _
    $region55: #{run.1} parent=1 // pred_check_branch
      %4886 = sbr.rel (0) target = $region57
    $region56: #{run.1} parent=1 // pred_region
      _
    $region57: #{run.1} parent=1 // pred_fallthru
      _
    %4887 = vsyncpa [#allocation7], 1
    %4888 = vsyncpa [#allocation9], 1
    %4889 = vsyncpa [#allocation12], 1

</llo_original>
